<compile_context>
chip_gen: v6e
topology: v6e:2x2x1
jax: 0.10.0
libtpu: 0.0.40
codegen_flags: <defaults>
</compile_context>

<pallas_src>
import functools

import jax
import jax.numpy as jnp
from jax.experimental import pallas as pl
from jax.experimental.pallas import tpu as pltpu

NEG_SLOPE = 0.01  # torch.nn.functional.leaky_relu default negative_slope


# ---------------------------------------------------------------------------
# Pallas kernels
# ---------------------------------------------------------------------------
def _dual_subpel_conv_kernel(x_ref, w_ref, b_ref, o_ref, pad_ref,
                             *, H, W, Ncomb, dt):
    """Both subpel 3x3 convs (main + skip branch) as one im2col matmul.

    x_ref   : (1, H, W, Cin)   unpadded input tile (one batch element)
    w_ref   : (9*Cin, Ncomb)   rows = (dy, dx, cin); cols = (i, j, branch, c)
    b_ref   : (1, Ncomb)
    o_ref   : (1, H, W, Ncomb)
    pad_ref : (H+2, W+2, Cin)  VMEM scratch holding the zero halo
    """
    # zero-filled VMEM halo (no host-side jnp.pad -> no extra HBM pass)
    pad_ref[...] = jnp.zeros_like(pad_ref)
    pad_ref[1:H + 1, 1:W + 1, :] = x_ref[0]
    xp = pad_ref[...]

    # im2col patch: (H*W, 9*Cin); column order matches w_ref row order
    patch = jnp.concatenate(
        [xp[dy:dy + H, dx:dx + W, :].reshape(H * W, -1)
         for dy in range(3) for dx in range(3)], axis=-1)

    y = jnp.dot(patch.astype(dt), w_ref[...].astype(dt),
                preferred_element_type=jnp.float32)
    y = y + b_ref[...]
    o_ref[0] = y.reshape(H, W, Ncomb)


def _lrelu_conv_igdn_add_kernel(au_ref, w_ref, b_ref, g_ref, beta_ref,
                                o_ref, pad_ref, *, H, W, C, dt):
    """Fused tail: LeakyReLU -> conv3x3 (im2col) -> inverse GDN -> + skip.

    au_ref   : (1, H, W, 2*C)  pixel-shuffled dual-branch tensor:
                               [..., :C] = subpel_conv output (pre-activation)
                               [..., C:] = upsample skip branch
    w_ref    : (9*C, C)        conv3x3 weights, rows = (dy, dx, cin)
    b_ref    : (1, C)
    g_ref    : (C, C)          GDN gamma as (c_in, c_out) matmul matrix
    beta_ref : (1, C)
    o_ref    : (1, H, W, C)
    pad_ref  : (H+2, W+2, C)   VMEM scratch holding the zero halo
    """
    au = au_ref[0]
    a = au[:, :, :C]
    a = jnp.where(a > 0, a, NEG_SLOPE * a)           # LeakyReLU (f32 epilogue)

    pad_ref[...] = jnp.zeros_like(pad_ref)
    pad_ref[1:H + 1, 1:W + 1, :] = a
    xp = pad_ref[...]

    patch = jnp.concatenate(
        [xp[dy:dy + H, dx:dx + W, :].reshape(H * W, -1)
         for dy in range(3) for dx in range(3)], axis=-1)    # (H*W, 9*C)

    t = jnp.dot(patch.astype(dt), w_ref[...].astype(dt),
                preferred_element_type=jnp.float32)
    t = t + b_ref[...]                                       # conv3x3 output

    # inverse GDN: out = t * sqrt((t^2) @ gamma + beta), then add skip branch
    norm = jnp.dot(t * t, g_ref[...], preferred_element_type=jnp.float32)
    norm = norm + beta_ref[...]
    out = t * jnp.sqrt(norm) + au[:, :, C:].reshape(H * W, C)
    o_ref[0] = out.reshape(H, W, C)


# ---------------------------------------------------------------------------
# pallas_call wrappers
# ---------------------------------------------------------------------------
def dual_subpel_conv_pallas(x, w_comb, b_comb, matmul_dtype=jnp.float32):
    """x: (N,H,W,Cin); w_comb: (9*Cin, 2*r^2*C); b_comb: (1, 2*r^2*C)."""
    N, H, W, Cin = x.shape
    Ncomb = w_comb.shape[-1]
    kernel = functools.partial(_dual_subpel_conv_kernel,
                               H=H, W=W, Ncomb=Ncomb, dt=matmul_dtype)
    return pl.pallas_call(
        kernel,
        out_shape=jax.ShapeDtypeStruct((N, H, W, Ncomb), jnp.float32),
        grid=(N,),
        in_specs=[
            pl.BlockSpec((1, H, W, Cin), lambda n: (n, 0, 0, 0)),
            pl.BlockSpec((9 * Cin, Ncomb), lambda n: (0, 0)),
            pl.BlockSpec((1, Ncomb), lambda n: (0, 0)),
        ],
        out_specs=pl.BlockSpec((1, H, W, Ncomb), lambda n: (n, 0, 0, 0)),
        scratch_shapes=[pltpu.VMEM((H + 2, W + 2, Cin), jnp.float32)],
        compiler_params=pltpu.CompilerParams(
            dimension_semantics=("parallel",),
            vmem_limit_bytes=32 * 1024 * 1024),
    )(x, w_comb, b_comb)


def lrelu_conv_igdn_add_pallas(au, w_conv, b_conv, gamma_mat, beta,
                               matmul_dtype=jnp.float32):
    """au: (N,H,W,2*C) combined [main | skip] pixel-shuffled tensor."""
    N, H, W, C2 = au.shape
    C = C2 // 2
    kernel = functools.partial(_lrelu_conv_igdn_add_kernel,
                               H=H, W=W, C=C, dt=matmul_dtype)
    return pl.pallas_call(
        kernel,
        out_shape=jax.ShapeDtypeStruct((N, H, W, C), jnp.float32),
        grid=(N,),
        in_specs=[
            pl.BlockSpec((1, H, W, C2), lambda n: (n, 0, 0, 0)),
            pl.BlockSpec((9 * C, C), lambda n: (0, 0)),
            pl.BlockSpec((1, C), lambda n: (0, 0)),
            pl.BlockSpec((C, C), lambda n: (0, 0)),
            pl.BlockSpec((1, C), lambda n: (0, 0)),
        ],
        out_specs=pl.BlockSpec((1, H, W, C), lambda n: (n, 0, 0, 0)),
        scratch_shapes=[pltpu.VMEM((H + 2, W + 2, C), jnp.float32)],
        compiler_params=pltpu.CompilerParams(
            dimension_semantics=("parallel",),
            vmem_limit_bytes=32 * 1024 * 1024),
    )(au, w_conv, b_conv, gamma_mat, beta)


# ---------------------------------------------------------------------------
# Parameters (synthetic, deterministic) + packing for the kernels
# ---------------------------------------------------------------------------
def init_params(key, in_channels, out_channels, upsample):
    Cin, C, r = in_channels, out_channels, upsample
    r2 = r * r
    ks = jax.random.split(key, 6)

    # HWIO conv weights (3,3,cin,cout); out-channel index of the subpel convs
    # follows torch PixelShuffle semantics: k = c*r*r + i*r + j
    w_subpel = 0.1 * jax.random.normal(ks[0], (3, 3, Cin, C * r2), jnp.float32)
    b_subpel = 0.05 * jax.random.normal(ks[1], (C * r2,), jnp.float32)
    w_up = 0.1 * jax.random.normal(ks[2], (3, 3, Cin, C * r2), jnp.float32)
    b_up = 0.05 * jax.random.normal(ks[3], (C * r2,), jnp.float32)
    w_conv = 0.1 * jax.random.normal(ks[4], (3, 3, C, C), jnp.float32)
    b_conv = 0.05 * jax.random.normal(ks[5], (C,), jnp.float32)

    # GDN params (non-negative, as the NonNegativeParametrizer guarantees).
    # torch: norm_i = sum_j gamma[i,j]*x_j^2 + beta_i  ->  matmul form x2 @ gamma.T
    gamma = 0.1 * jnp.eye(C, dtype=jnp.float32) + 0.01
    beta = jnp.ones((C,), jnp.float32)

    # --- pack for the Pallas kernels --------------------------------------
    def subpel_w_cols(w):                       # (3,3,Cin,C*r*r) -> (3,3,Cin,r,r,C)
        w = w.reshape(3, 3, Cin, C, r, r)       # out-chan = c*r*r + i*r + j
        return w.transpose(0, 1, 2, 4, 5, 3)    # (dy,dx,cin,i,j,c)

    def subpel_b_cols(b):                       # (C*r*r,) -> (r,r,C) = (i,j,c)
        return b.reshape(C, r, r).transpose(1, 2, 0)

    # combined dual-branch weight: rows (dy,dx,cin), cols (i,j,branch,c)
    w_comb = jnp.stack([subpel_w_cols(w_subpel), subpel_w_cols(w_up)], axis=5)
    w_comb = w_comb.reshape(9 * Cin, 2 * r2 * C)
    b_comb = jnp.stack([subpel_b_cols(b_subpel), subpel_b_cols(b_up)], axis=2)
    b_comb = b_comb.reshape(1, 2 * r2 * C)

    return dict(
        w_comb=w_comb, b_comb=b_comb,
        w_conv=w_conv.reshape(9 * C, C), b_conv=b_conv.reshape(1, C),
        gamma_mat=gamma.T, beta=beta.reshape(1, C),
        # plain-layout copies for the pure-JAX reference check
        _w_subpel=w_subpel, _b_subpel=b_subpel,
        _w_up=w_up, _b_up=b_up,
        _w_conv=w_conv, _b_conv=b_conv,
    )


# ---------------------------------------------------------------------------
# Full forward
# ---------------------------------------------------------------------------
def residual_block_upsample(x_nchw, params, upsample=2,
                            matmul_dtype=jnp.float32):
    r = upsample
    x = jnp.transpose(x_nchw, (0, 2, 3, 1)).astype(jnp.float32)  # NCHW -> NHWC
    N, H, W, _ = x.shape
    C = params["w_conv"].shape[-1]

    # fused dual subpel conv (both branches, one kernel, in-kernel halo)
    comb = dual_subpel_conv_pallas(x, params["w_comb"], params["b_comb"],
                                   matmul_dtype)                 # (N,H,W,r*r*2C)

    # single pixel shuffle for BOTH branches (channel order (i, j, branch, c))
    # TODO(synk): fold this relayout into the producing kernel's output store.
    comb = comb.reshape(N, H, W, r, r, 2 * C)
    comb = comb.transpose(0, 1, 3, 2, 4, 5).reshape(N, H * r, W * r, 2 * C)

    # fused LeakyReLU -> conv3x3 -> IGDN -> + skip
    out = lrelu_conv_igdn_add_pallas(comb, params["w_conv"], params["b_conv"],
                                     params["gamma_mat"], params["beta"],
                                     matmul_dtype)
    return jnp.transpose(out, (0, 3, 1, 2))                      # NHWC -> NCHW


# ---------------------------------------------------------------------------
# Pure-JAX reference (correctness check only)
# ---------------------------------------------------------------------------
def _ref_conv3x3(x, w_hwio, b):
    y = jax.lax.conv_general_dilated(
        x, w_hwio, window_strides=(1, 1), padding=((1, 1), (1, 1)),
        dimension_numbers=("NHWC", "HWIO", "NHWC"))
    return y + b


def _ref_pixel_shuffle_nhwc(x, r):
    N, H, W, Crr = x.shape
    C = Crr // (r * r)
    x = x.reshape(N, H, W, C, r, r)            # channel = c*r*r + i*r + j
    x = x.transpose(0, 1, 4, 2, 5, 3)          # (N, H, i, W, j, C)
    return x.reshape(N, H * r, W * r, C)


def reference_forward(x_nchw, params, upsample=2):
    x = jnp.transpose(x_nchw, (0, 2, 3, 1)).astype(jnp.float32)
    a = _ref_pixel_shuffle_nhwc(
        _ref_conv3x3(x, params["_w_subpel"], params["_b_subpel"]), upsample)
    a = jnp.where(a > 0, a, NEG_SLOPE * a)
    t = _ref_conv3x3(a, params["_w_conv"], params["_b_conv"])
    norm = jnp.einsum("nhwc,cd->nhwd", t * t, params["gamma_mat"]) + params["beta"][0]
    out = t * jnp.sqrt(norm)
    up = _ref_pixel_shuffle_nhwc(
        _ref_conv3x3(x, params["_w_up"], params["_b_up"]), upsample)
    return jnp.transpose(out + up, (0, 3, 1, 2))


# ---------------------------------------------------------------------------
if __name__ == "__main__":
    key = jax.random.PRNGKey(0)
    k_x, k_p = jax.random.split(key)

    N, Cin, H, W = 2, 4, 16, 16
    Cout, UP = 4, 2

    x = jax.random.normal(k_x, (N, Cin, H, W), jnp.float32)       # NCHW input
    params = init_params(k_p, Cin, Cout, UP)

    fwd = jax.jit(functools.partial(residual_block_upsample, upsample=UP))
    out = jax.block_until_ready(fwd(x, params))
    assert out.shape == (N, Cout, H * UP, W * UP), out.shape

    ref = jax.block_until_ready(reference_forward(x, params, upsample=UP))
    err = float(jnp.max(jnp.abs(out - ref)))
    assert jnp.allclose(out, ref, atol=1e-3, rtol=1e-3), err

    print("KERNEL_OK")
</pallas_src>

<mosaic_0001>
module attributes {stable_mosaic.version = 11 : i64} {
  func.func @_dual_subpel_conv_kernel(%arg0: i32, %arg1: memref<1x16x16x4xf32, #tpu.memory_space<vmem>>, %arg2: memref<36x32xf32, #tpu.memory_space<vmem>>, %arg3: memref<1x32xf32, #tpu.memory_space<vmem>>, %arg4: memref<1x16x16x32xf32, #tpu.memory_space<vmem>>, %arg5: memref<18x18x4xf32, #tpu.memory_space<vmem>>) attributes {dimension_semantics = [#tpu.dimension_semantics<parallel>], iteration_bounds = array<i64: 2>, scalar_prefetch = 0 : i64, scratch_operands = 1 : i64, tpu.core_type = #tpu.core_type<tc>, window_params = [{transform_indices = @transform_0, window_bounds = array<i64: 1, 16, 16, 4>}, {pipeline_mode = #tpu.pipeline_mode<synchronous>, transform_indices = @transform_1, window_bounds = array<i64: 36, 32>}, {pipeline_mode = #tpu.pipeline_mode<synchronous>, transform_indices = @transform_2, window_bounds = array<i64: 1, 32>}, {transform_indices = @transform_3, window_bounds = array<i64: 1, 16, 16, 32>}]} {
    %cst = arith.constant 0.000000e+00 : f32
    %0 = vector.broadcast %cst : f32 to vector<18x18x4xf32>
    %c0 = arith.constant 0 : index
    %c0_0 = arith.constant 0 : index
    %c0_1 = arith.constant 0 : index
    %1 = vector.load %arg5[%c0, %c0_0, %c0_1] : memref<18x18x4xf32, #tpu.memory_space<vmem>>, vector<18x18x4xf32>
    tpu.vector_store %arg5[%c0, %c0_0, %c0_1], %0 {strides = array<i32>} : memref<18x18x4xf32, #tpu.memory_space<vmem>>, vector<18x18x4xf32>,
    %c0_2 = arith.constant 0 : index
    %c0_3 = arith.constant 0 : index
    %c0_4 = arith.constant 0 : index
    %c0_5 = arith.constant 0 : index
    %2 = vector.load %arg1[%c0_2, %c0_3, %c0_4, %c0_5] : memref<1x16x16x4xf32, #tpu.memory_space<vmem>>, vector<1x16x16x4xf32>
    %3 = vector.shape_cast %2 : vector<1x16x16x4xf32> to vector<16x16x4xf32>
    %c1 = arith.constant 1 : index
    %c1_6 = arith.constant 1 : index
    %c0_7 = arith.constant 0 : index
    %4 = vector.load %arg5[%c1, %c1_6, %c0_7] : memref<18x18x4xf32, #tpu.memory_space<vmem>>, vector<16x16x4xf32>
    tpu.vector_store %arg5[%c1, %c1_6, %c0_7], %3 {strides = array<i32>} : memref<18x18x4xf32, #tpu.memory_space<vmem>>, vector<16x16x4xf32>,
    %c0_8 = arith.constant 0 : index
    %c0_9 = arith.constant 0 : index
    %c0_10 = arith.constant 0 : index
    %5 = vector.load %arg5[%c0_8, %c0_9, %c0_10] : memref<18x18x4xf32, #tpu.memory_space<vmem>>, vector<18x18x4xf32>
    %6 = vector.extract_strided_slice %5 {offsets = [0, 0, 0], sizes = [16, 16, 4], strides = [1, 1, 1]} : vector<18x18x4xf32> to vector<16x16x4xf32>
    %7 = vector.shape_cast %6 : vector<16x16x4xf32> to vector<256x4xf32>
    %8 = vector.extract_strided_slice %5 {offsets = [0, 1, 0], sizes = [16, 16, 4], strides = [1, 1, 1]} : vector<18x18x4xf32> to vector<16x16x4xf32>
    %9 = vector.shape_cast %8 : vector<16x16x4xf32> to vector<256x4xf32>
    %10 = vector.extract_strided_slice %5 {offsets = [0, 2, 0], sizes = [16, 16, 4], strides = [1, 1, 1]} : vector<18x18x4xf32> to vector<16x16x4xf32>
    %11 = vector.shape_cast %10 : vector<16x16x4xf32> to vector<256x4xf32>
    %12 = vector.extract_strided_slice %5 {offsets = [1, 0, 0], sizes = [16, 16, 4], strides = [1, 1, 1]} : vector<18x18x4xf32> to vector<16x16x4xf32>
    %13 = vector.shape_cast %12 : vector<16x16x4xf32> to vector<256x4xf32>
    %14 = vector.extract_strided_slice %5 {offsets = [1, 1, 0], sizes = [16, 16, 4], strides = [1, 1, 1]} : vector<18x18x4xf32> to vector<16x16x4xf32>
    %15 = vector.shape_cast %14 : vector<16x16x4xf32> to vector<256x4xf32>
    %16 = vector.extract_strided_slice %5 {offsets = [1, 2, 0], sizes = [16, 16, 4], strides = [1, 1, 1]} : vector<18x18x4xf32> to vector<16x16x4xf32>
    %17 = vector.shape_cast %16 : vector<16x16x4xf32> to vector<256x4xf32>
    %18 = vector.extract_strided_slice %5 {offsets = [2, 0, 0], sizes = [16, 16, 4], strides = [1, 1, 1]} : vector<18x18x4xf32> to vector<16x16x4xf32>
    %19 = vector.shape_cast %18 : vector<16x16x4xf32> to vector<256x4xf32>
    %20 = vector.extract_strided_slice %5 {offsets = [2, 1, 0], sizes = [16, 16, 4], strides = [1, 1, 1]} : vector<18x18x4xf32> to vector<16x16x4xf32>
    %21 = vector.shape_cast %20 : vector<16x16x4xf32> to vector<256x4xf32>
    %22 = vector.extract_strided_slice %5 {offsets = [2, 2, 0], sizes = [16, 16, 4], strides = [1, 1, 1]} : vector<18x18x4xf32> to vector<16x16x4xf32>
    %23 = vector.shape_cast %22 : vector<16x16x4xf32> to vector<256x4xf32>
    %24 = tpu.concatenate %7, %9, %11, %13, %15, %17, %19, %21, %23 in 1 : vector<256x4xf32>, vector<256x4xf32>, vector<256x4xf32>, vector<256x4xf32>, vector<256x4xf32>, vector<256x4xf32>, vector<256x4xf32>, vector<256x4xf32>, vector<256x4xf32> -> vector<256x36xf32>
    %c0_11 = arith.constant 0 : index
    %c0_12 = arith.constant 0 : index
    %25 = vector.load %arg2[%c0_11, %c0_12] : memref<36x32xf32, #tpu.memory_space<vmem>>, vector<36x32xf32>
    %cst_13 = arith.constant dense<0.000000e+00> : vector<256x32xf32>
    %26 = tpu.matmul %24, %25, %cst_13 {dimension_numbers = #tpu.dot_dimension_numbers<[1], [0], [0], [1], [0, 0, 1, 1], [], []>} : vector<256x36xf32>, vector<36x32xf32>, vector<256x32xf32> -> vector<256x32xf32>
    %c0_14 = arith.constant 0 : index
    %c0_15 = arith.constant 0 : index
    %27 = vector.load %arg3[%c0_14, %c0_15] : memref<1x32xf32, #tpu.memory_space<vmem>>, vector<1x32xf32>
    %28 = vector.broadcast %27 : vector<1x32xf32> to vector<256x32xf32>
    %29 = arith.addf %26, %28 : vector<256x32xf32>
    %30 = vector.shape_cast %29 : vector<256x32xf32> to vector<16x16x32xf32>
    %c0_16 = arith.constant 0 : index
    %c0_17 = arith.constant 0 : index
    %c0_18 = arith.constant 0 : index
    %c0_19 = arith.constant 0 : index
    %31 = vector.load %arg4[%c0_16, %c0_17, %c0_18, %c0_19] : memref<1x16x16x32xf32, #tpu.memory_space<vmem>>, vector<1x16x16x32xf32>
    %32 = vector.shape_cast %31 : vector<1x16x16x32xf32> to vector<16x16x32xf32>
    %33 = vector.shape_cast %30 : vector<16x16x32xf32> to vector<1x16x16x32xf32>
    tpu.vector_store %arg4[%c0_16, %c0_17, %c0_18, %c0_19], %33 {strides = array<i32>} : memref<1x16x16x32xf32, #tpu.memory_space<vmem>>, vector<1x16x16x32xf32>,
    return
  }
  func.func @transform_0(%arg0: i32) -> (i32, i32, i32, i32) {
    %c0_i32 = arith.constant 0 : i32
    %c0_i32_0 = arith.constant 0 : i32
    %c0_i32_1 = arith.constant 0 : i32
    %c0_i32_2 = arith.constant 0 : i32
    return %arg0, %c0_i32, %c0_i32_0, %c0_i32_1 : i32, i32, i32, i32
  }
  func.func @transform_1(%arg0: i32) -> (i32, i32) {
    %c0_i32 = arith.constant 0 : i32
    %c0_i32_0 = arith.constant 0 : i32
    %c0_i32_1 = arith.constant 0 : i32
    return %c0_i32, %c0_i32_0 : i32, i32
  }
  func.func @transform_2(%arg0: i32) -> (i32, i32) {
    %c0_i32 = arith.constant 0 : i32
    %c0_i32_0 = arith.constant 0 : i32
    %c0_i32_1 = arith.constant 0 : i32
    return %c0_i32, %c0_i32_0 : i32, i32
  }
  func.func @transform_3(%arg0: i32) -> (i32, i32, i32, i32) {
    %c0_i32 = arith.constant 0 : i32
    %c0_i32_0 = arith.constant 0 : i32
    %c0_i32_1 = arith.constant 0 : i32
    %c0_i32_2 = arith.constant 0 : i32
    return %arg0, %c0_i32, %c0_i32_0, %c0_i32_1 : i32, i32, i32, i32
  }
}

module attributes {stable_mosaic.version = 11 : i64} {
  func.func @_lrelu_conv_igdn_add_kernel(%arg0: i32, %arg1: memref<1x32x32x8xf32, #tpu.memory_space<vmem>>, %arg2: memref<36x4xf32, #tpu.memory_space<vmem>>, %arg3: memref<1x4xf32, #tpu.memory_space<vmem>>, %arg4: memref<4x4xf32, #tpu.memory_space<vmem>>, %arg5: memref<1x4xf32, #tpu.memory_space<vmem>>, %arg6: memref<1x32x32x4xf32, #tpu.memory_space<vmem>>, %arg7: memref<34x34x4xf32, #tpu.memory_space<vmem>>) attributes {dimension_semantics = [#tpu.dimension_semantics<parallel>], iteration_bounds = array<i64: 2>, scalar_prefetch = 0 : i64, scratch_operands = 1 : i64, tpu.core_type = #tpu.core_type<tc>, window_params = [{transform_indices = @transform_0, window_bounds = array<i64: 1, 32, 32, 8>}, {pipeline_mode = #tpu.pipeline_mode<synchronous>, transform_indices = @transform_1, window_bounds = array<i64: 36, 4>}, {pipeline_mode = #tpu.pipeline_mode<synchronous>, transform_indices = @transform_2, window_bounds = array<i64: 1, 4>}, {pipeline_mode = #tpu.pipeline_mode<synchronous>, transform_indices = @transform_3, window_bounds = array<i64: 4, 4>}, {pipeline_mode = #tpu.pipeline_mode<synchronous>, transform_indices = @transform_4, window_bounds = array<i64: 1, 4>}, {transform_indices = @transform_5, window_bounds = array<i64: 1, 32, 32, 4>}]} {
    %c0 = arith.constant 0 : index
    %c0_0 = arith.constant 0 : index
    %c0_1 = arith.constant 0 : index
    %c0_2 = arith.constant 0 : index
    %0 = vector.load %arg1[%c0, %c0_0, %c0_1, %c0_2] : memref<1x32x32x8xf32, #tpu.memory_space<vmem>>, vector<1x32x32x8xf32>
    %1 = vector.shape_cast %0 : vector<1x32x32x8xf32> to vector<32x32x8xf32>
    %2 = vector.extract_strided_slice %1 {offsets = [0, 0, 0], sizes = [32, 32, 4], strides = [1, 1, 1]} : vector<32x32x8xf32> to vector<32x32x4xf32>
    %cst = arith.constant 0.000000e+00 : f32
    %3 = vector.broadcast %cst : f32 to vector<32x32x4xf32>
    %4 = arith.cmpf ogt, %2, %3 : vector<32x32x4xf32>
    %cst_3 = arith.constant 0.00999999977 : f32
    %5 = vector.broadcast %cst_3 : f32 to vector<32x32x4xf32>
    %6 = arith.mulf %5, %2 : vector<32x32x4xf32>
    %7 = arith.select %4, %2, %6 : vector<32x32x4xi1>, vector<32x32x4xf32>
    %cst_4 = arith.constant 0.000000e+00 : f32
    %8 = vector.broadcast %cst_4 : f32 to vector<34x34x4xf32>
    %c0_5 = arith.constant 0 : index
    %c0_6 = arith.constant 0 : index
    %c0_7 = arith.constant 0 : index
    %9 = vector.load %arg7[%c0_5, %c0_6, %c0_7] : memref<34x34x4xf32, #tpu.memory_space<vmem>>, vector<34x34x4xf32>
    tpu.vector_store %arg7[%c0_5, %c0_6, %c0_7], %8 {strides = array<i32>} : memref<34x34x4xf32, #tpu.memory_space<vmem>>, vector<34x34x4xf32>,
    %c1 = arith.constant 1 : index
    %c1_8 = arith.constant 1 : index
    %c0_9 = arith.constant 0 : index
    %10 = vector.load %arg7[%c1, %c1_8, %c0_9] : memref<34x34x4xf32, #tpu.memory_space<vmem>>, vector<32x32x4xf32>
    tpu.vector_store %arg7[%c1, %c1_8, %c0_9], %7 {strides = array<i32>} : memref<34x34x4xf32, #tpu.memory_space<vmem>>, vector<32x32x4xf32>,
    %c0_10 = arith.constant 0 : index
    %c0_11 = arith.constant 0 : index
    %c0_12 = arith.constant 0 : index
    %11 = vector.load %arg7[%c0_10, %c0_11, %c0_12] : memref<34x34x4xf32, #tpu.memory_space<vmem>>, vector<34x34x4xf32>
    %12 = vector.extract_strided_slice %11 {offsets = [0, 0, 0], sizes = [32, 32, 4], strides = [1, 1, 1]} : vector<34x34x4xf32> to vector<32x32x4xf32>
    %13 = vector.shape_cast %12 : vector<32x32x4xf32> to vector<1024x4xf32>
    %14 = vector.extract_strided_slice %11 {offsets = [0, 1, 0], sizes = [32, 32, 4], strides = [1, 1, 1]} : vector<34x34x4xf32> to vector<32x32x4xf32>
    %15 = vector.shape_cast %14 : vector<32x32x4xf32> to vector<1024x4xf32>
    %16 = vector.extract_strided_slice %11 {offsets = [0, 2, 0], sizes = [32, 32, 4], strides = [1, 1, 1]} : vector<34x34x4xf32> to vector<32x32x4xf32>
    %17 = vector.shape_cast %16 : vector<32x32x4xf32> to vector<1024x4xf32>
    %18 = vector.extract_strided_slice %11 {offsets = [1, 0, 0], sizes = [32, 32, 4], strides = [1, 1, 1]} : vector<34x34x4xf32> to vector<32x32x4xf32>
    %19 = vector.shape_cast %18 : vector<32x32x4xf32> to vector<1024x4xf32>
    %20 = vector.extract_strided_slice %11 {offsets = [1, 1, 0], sizes = [32, 32, 4], strides = [1, 1, 1]} : vector<34x34x4xf32> to vector<32x32x4xf32>
    %21 = vector.shape_cast %20 : vector<32x32x4xf32> to vector<1024x4xf32>
    %22 = vector.extract_strided_slice %11 {offsets = [1, 2, 0], sizes = [32, 32, 4], strides = [1, 1, 1]} : vector<34x34x4xf32> to vector<32x32x4xf32>
    %23 = vector.shape_cast %22 : vector<32x32x4xf32> to vector<1024x4xf32>
    %24 = vector.extract_strided_slice %11 {offsets = [2, 0, 0], sizes = [32, 32, 4], strides = [1, 1, 1]} : vector<34x34x4xf32> to vector<32x32x4xf32>
    %25 = vector.shape_cast %24 : vector<32x32x4xf32> to vector<1024x4xf32>
    %26 = vector.extract_strided_slice %11 {offsets = [2, 1, 0], sizes = [32, 32, 4], strides = [1, 1, 1]} : vector<34x34x4xf32> to vector<32x32x4xf32>
    %27 = vector.shape_cast %26 : vector<32x32x4xf32> to vector<1024x4xf32>
    %28 = vector.extract_strided_slice %11 {offsets = [2, 2, 0], sizes = [32, 32, 4], strides = [1, 1, 1]} : vector<34x34x4xf32> to vector<32x32x4xf32>
    %29 = vector.shape_cast %28 : vector<32x32x4xf32> to vector<1024x4xf32>
    %30 = tpu.concatenate %13, %15, %17, %19, %21, %23, %25, %27, %29 in 1 : vector<1024x4xf32>, vector<1024x4xf32>, vector<1024x4xf32>, vector<1024x4xf32>, vector<1024x4xf32>, vector<1024x4xf32>, vector<1024x4xf32>, vector<1024x4xf32>, vector<1024x4xf32> -> vector<1024x36xf32>
    %c0_13 = arith.constant 0 : index
    %c0_14 = arith.constant 0 : index
    %31 = vector.load %arg2[%c0_13, %c0_14] : memref<36x4xf32, #tpu.memory_space<vmem>>, vector<36x4xf32>
    %cst_15 = arith.constant dense<0.000000e+00> : vector<1024x4xf32>
    %32 = tpu.matmul %30, %31, %cst_15 {dimension_numbers = #tpu.dot_dimension_numbers<[1], [0], [0], [1], [0, 0, 1, 1], [], []>} : vector<1024x36xf32>, vector<36x4xf32>, vector<1024x4xf32> -> vector<1024x4xf32>
    %c0_16 = arith.constant 0 : index
    %c0_17 = arith.constant 0 : index
    %33 = vector.load %arg3[%c0_16, %c0_17] : memref<1x4xf32, #tpu.memory_space<vmem>>, vector<1x4xf32>
    %34 = vector.broadcast %33 : vector<1x4xf32> to vector<1024x4xf32>
    %35 = arith.addf %32, %34 : vector<1024x4xf32>
    %36 = arith.mulf %35, %35 : vector<1024x4xf32>
    %c0_18 = arith.constant 0 : index
    %c0_19 = arith.constant 0 : index
    %37 = vector.load %arg4[%c0_18, %c0_19] : memref<4x4xf32, #tpu.memory_space<vmem>>, vector<4x4xf32>
    %cst_20 = arith.constant dense<0.000000e+00> : vector<1024x4xf32>
    %38 = tpu.matmul %36, %37, %cst_20 {dimension_numbers = #tpu.dot_dimension_numbers<[1], [0], [0], [1], [0, 0, 1, 1], [], []>} : vector<1024x4xf32>, vector<4x4xf32>, vector<1024x4xf32> -> vector<1024x4xf32>
    %c0_21 = arith.constant 0 : index
    %c0_22 = arith.constant 0 : index
    %39 = vector.load %arg5[%c0_21, %c0_22] : memref<1x4xf32, #tpu.memory_space<vmem>>, vector<1x4xf32>
    %40 = vector.broadcast %39 : vector<1x4xf32> to vector<1024x4xf32>
    %41 = arith.addf %38, %40 : vector<1024x4xf32>
    %42 = math.sqrt %41 : vector<1024x4xf32>
    %43 = arith.mulf %35, %42 : vector<1024x4xf32>
    %44 = vector.extract_strided_slice %1 {offsets = [0, 0, 4], sizes = [32, 32, 4], strides = [1, 1, 1]} : vector<32x32x8xf32> to vector<32x32x4xf32>
    %45 = vector.shape_cast %44 : vector<32x32x4xf32> to vector<1024x4xf32>
    %46 = arith.addf %43, %45 : vector<1024x4xf32>
    %47 = vector.shape_cast %46 : vector<1024x4xf32> to vector<32x32x4xf32>
    %c0_23 = arith.constant 0 : index
    %c0_24 = arith.constant 0 : index
    %c0_25 = arith.constant 0 : index
    %c0_26 = arith.constant 0 : index
    %48 = vector.load %arg6[%c0_23, %c0_24, %c0_25, %c0_26] : memref<1x32x32x4xf32, #tpu.memory_space<vmem>>, vector<1x32x32x4xf32>
    %49 = vector.shape_cast %48 : vector<1x32x32x4xf32> to vector<32x32x4xf32>
    %50 = vector.shape_cast %47 : vector<32x32x4xf32> to vector<1x32x32x4xf32>
    tpu.vector_store %arg6[%c0_23, %c0_24, %c0_25, %c0_26], %50 {strides = array<i32>} : memref<1x32x32x4xf32, #tpu.memory_space<vmem>>, vector<1x32x32x4xf32>,
    return
  }
  func.func @transform_0(%arg0: i32) -> (i32, i32, i32, i32) {
    %c0_i32 = arith.constant 0 : i32
    %c0_i32_0 = arith.constant 0 : i32
    %c0_i32_1 = arith.constant 0 : i32
    %c0_i32_2 = arith.constant 0 : i32
    return %arg0, %c0_i32, %c0_i32_0, %c0_i32_1 : i32, i32, i32, i32
  }
  func.func @transform_1(%arg0: i32) -> (i32, i32) {
    %c0_i32 = arith.constant 0 : i32
    %c0_i32_0 = arith.constant 0 : i32
    %c0_i32_1 = arith.constant 0 : i32
    return %c0_i32, %c0_i32_0 : i32, i32
  }
  func.func @transform_2(%arg0: i32) -> (i32, i32) {
    %c0_i32 = arith.constant 0 : i32
    %c0_i32_0 = arith.constant 0 : i32
    %c0_i32_1 = arith.constant 0 : i32
    return %c0_i32, %c0_i32_0 : i32, i32
  }
  func.func @transform_3(%arg0: i32) -> (i32, i32) {
    %c0_i32 = arith.constant 0 : i32
    %c0_i32_0 = arith.constant 0 : i32
    %c0_i32_1 = arith.constant 0 : i32
    return %c0_i32, %c0_i32_0 : i32, i32
  }
  func.func @transform_4(%arg0: i32) -> (i32, i32) {
    %c0_i32 = arith.constant 0 : i32
    %c0_i32_0 = arith.constant 0 : i32
    %c0_i32_1 = arith.constant 0 : i32
    return %c0_i32, %c0_i32_0 : i32, i32
  }
  func.func @transform_5(%arg0: i32) -> (i32, i32, i32, i32) {
    %c0_i32 = arith.constant 0 : i32
    %c0_i32_0 = arith.constant 0 : i32
    %c0_i32_1 = arith.constant 0 : i32
    %c0_i32_2 = arith.constant 0 : i32
    return %arg0, %c0_i32, %c0_i32_0, %c0_i32_1 : i32, i32, i32, i32
  }
}

</mosaic_0001>

<llo_original>
// kernel: residual_block_upsample.2
$region0: #{residual_block_upsample.2}
  #allocation0 [shape = 'u32[]', space=smem, size = 0x4, offset = 0x4, fixed_abs, tag = 'smem constant byte address 0x4 - core index']
  #allocation1 [shape = 'u32[144,128]{1,0:T(1,128)}', space=vmem, size = 0x12000, scoped, tag = 'internal scratch']
  #allocation2 [shape = 'f32[18,18,4]{2,1,0:T(8,128)}', space=vmem, size = 0x36000, scoped, tag = 'scratch operand']
  %s0 = inlined_call_operand.vmem [shape: f32[2,16,16,4], index: 0, kind: input, shape index: {}]
  %s1 = inlined_call_operand.vmem [shape: f32[36,32], index: 1, kind: input, shape index: {}]
  %s2 = inlined_call_operand.vmem [shape: f32[1,32], index: 2, kind: input, shape index: {}]
  %s3 = inlined_call_operand.vmem [shape: f32[2,16,16,32], index: 3, kind: output, shape index: {}]
  %s4 = sld [smem:[#allocation0]]
  $region45: #{residual_block_upsample.2} parent=0
    _
  %s6 = ssub.s32 1, %s4
  %s7 = scalar_select 0, %s6, %s4
  loop: start=0, step=1, limit=4
  $region2: #{residual_block_upsample.2} parent=0 // loop_pre_header
    _
  $region3: #{residual_block_upsample.2} parent=0 // loop_header
    %s9 = sphi 0, %s13
    %p10 = scmp.ge.s32.totalorder %s9, 4
    %s19 = sphi 0, %s21
    %s22 = sphi 0, %s19
    %s23 = sphi 0, %s22
    %s39 = sphi 0, %s23
    %s43 = sphi 0, %s43
    %s45 = sphi 0, %s43
    %s46 = sphi 0, %s45
    %s60 = sphi 0, %s46
    %s64 = sphi 0, %s64
    %s66 = sphi 0, %s64
    %s67 = sphi 0, %s66
    %s81 = sphi 0, %s67
    %s87 = sphi 0, %s89
    %s90 = sphi 0, %s87
    %s91 = sphi 0, %s90
    %s107 = sphi 0, %s91
  $region4: #{residual_block_upsample.2} parent=0 // loop_header_branch
    %12 = sbr.rel (%p10) target = $region8
  $region5: #{residual_block_upsample.2} parent=0 // loop_body
    %s14 = ssub.s32 %s9, 1
    %s15 = ssub.s32 %s9, 2
    %s16 = sadd.s32 %s9, 1
    %s17 = ssub.s32 %s9, %s16
    %p18 = scmp.eq.s32.totalorder %s17, 0
    %s20 = sadd.s32 %s19, 1
    %s21 = scalar_select %p18, %s19, %s20
    %p24 = pneg %p18
    %p25 = scmp.eq.s32.totalorder %s9, 1
    %p26 = por %p24, %p25
    %p27 = scmp.ne.s32.totalorder %s19, %s22
    %p28 = scmp.eq.s32.totalorder %s9, 0
    %p29 = por %p27, %p28
    %p30 = scmp.ne.s32.totalorder %s19, %s22
    %p31 = scmp.eq.s32.totalorder %s14, 1
    %p32 = por %p30, %p31
    %p33 = scmp.ne.s32.totalorder %s22, %s23
    %p34 = scmp.eq.s32.totalorder %s14, 0
    %p35 = por %p33, %p34
    %p36 = scmp.ne.s32.totalorder %s22, %s23
    %p37 = scmp.eq.s32.totalorder %s15, 1
    %p38 = por %p36, %p37
    %p40 = scmp.ne.s32.totalorder %s23, %s39
    %p41 = scmp.eq.s32.totalorder %s15, 0
    %p42 = por %p40, %p41
    %s44 = sadd.s32 %s43, 1
    %p47 = scmp.eq.s32.totalorder %s9, 1
    %p48 = scmp.ne.s32.totalorder %s43, %s45
    %p49 = scmp.eq.s32.totalorder %s9, 0
    %p50 = por %p48, %p49
    %p51 = scmp.ne.s32.totalorder %s43, %s45
    %p52 = scmp.eq.s32.totalorder %s14, 1
    %p53 = por %p51, %p52
    %p54 = scmp.ne.s32.totalorder %s45, %s46
    %p55 = scmp.eq.s32.totalorder %s14, 0
    %p56 = por %p54, %p55
    %p57 = scmp.ne.s32.totalorder %s45, %s46
    %p58 = scmp.eq.s32.totalorder %s15, 1
    %p59 = por %p57, %p58
    %p61 = scmp.ne.s32.totalorder %s46, %s60
    %p62 = scmp.eq.s32.totalorder %s15, 0
    %p63 = por %p61, %p62
    %s65 = sadd.s32 %s64, 1
    %p68 = scmp.eq.s32.totalorder %s9, 1
    %p69 = scmp.ne.s32.totalorder %s64, %s66
    %p70 = scmp.eq.s32.totalorder %s9, 0
    %p71 = por %p69, %p70
    %p72 = scmp.ne.s32.totalorder %s64, %s66
    %p73 = scmp.eq.s32.totalorder %s14, 1
    %p74 = por %p72, %p73
    %p75 = scmp.ne.s32.totalorder %s66, %s67
    %p76 = scmp.eq.s32.totalorder %s14, 0
    %p77 = por %p75, %p76
    %p78 = scmp.ne.s32.totalorder %s66, %s67
    %p79 = scmp.eq.s32.totalorder %s15, 1
    %p80 = por %p78, %p79
    %p82 = scmp.ne.s32.totalorder %s67, %s81
    %p83 = scmp.eq.s32.totalorder %s15, 0
    %p84 = por %p82, %p83
    %s85 = ssub.s32 %s9, %s16
    %p86 = scmp.eq.s32.totalorder %s85, 0
    %s88 = sadd.s32 %s87, 1
    %s89 = scalar_select %p86, %s87, %s88
    %p92 = pneg %p86
    %p93 = scmp.eq.s32.totalorder %s9, 1
    %p94 = por %p92, %p93
    %p95 = scmp.ne.s32.totalorder %s87, %s90
    %p96 = scmp.eq.s32.totalorder %s9, 0
    %p97 = por %p95, %p96
    %p98 = scmp.ne.s32.totalorder %s87, %s90
    %p99 = scmp.eq.s32.totalorder %s14, 1
    %p100 = por %p98, %p99
    %p101 = scmp.ne.s32.totalorder %s90, %s91
    %p102 = scmp.eq.s32.totalorder %s14, 0
    %p103 = por %p101, %p102
    %p104 = scmp.ne.s32.totalorder %s90, %s91
    %p105 = scmp.eq.s32.totalorder %s15, 1
    %p106 = por %p104, %p105
    %p108 = scmp.ne.s32.totalorder %s91, %s107
    %p109 = scmp.eq.s32.totalorder %s15, 0
    %p110 = por %p108, %p109
    %p111 = scmp.le.s32.totalorder 1, %s9
    %p112 = scmp.lt.s32.totalorder %s9, 3
    %p113 = pnand %p111, %p112
    %p114 = pneg %p113
    // Predicated region
    $region9: #{residual_block_upsample.2} parent=5 // pred_check
      _
    $region10: #{residual_block_upsample.2} parent=5 // pred_check_branch
      %116 = sbr.rel (%p113) target = $region12
    $region11: #{residual_block_upsample.2} parent=5 // pred_region
      %s117 = ssub.s32 %s9, 1
      // Predicated region
      $region13: #{residual_block_upsample.2} parent=11 // pred_check
        %p118 = pneg %p56
      $region14: #{residual_block_upsample.2} parent=11 // pred_check_branch
        %120 = sbr.rel (%p118) target = $region16
      $region15: #{residual_block_upsample.2} parent=11 // pred_region
        _
      $region16: #{residual_block_upsample.2} parent=11 // pred_fallthru
        _
      // Predicated region
      $region17: #{residual_block_upsample.2} parent=11 // pred_check
        %p121 = pneg %p77
      $region18: #{residual_block_upsample.2} parent=11 // pred_check_branch
        %123 = sbr.rel (%p121) target = $region20
      $region19: #{residual_block_upsample.2} parent=11 // pred_region
        _
      $region20: #{residual_block_upsample.2} parent=11 // pred_fallthru
        _
    $region12: #{residual_block_upsample.2} parent=5 // pred_fallthru
      _
    %p124 = scmp.lt.s32.totalorder %s9, 2
    // Predicated region
    $region21: #{residual_block_upsample.2} parent=5 // pred_check
      %p125 = pneg %p124
    $region22: #{residual_block_upsample.2} parent=5 // pred_check_branch
      %127 = sbr.rel (%p125) target = $region24
    $region23: #{residual_block_upsample.2} parent=5 // pred_region
      // Predicated region
      $region25: #{residual_block_upsample.2} parent=23 // pred_check
        %p128 = pneg %p29
      $region26: #{residual_block_upsample.2} parent=23 // pred_check_branch
        %130 = sbr.rel (%p128) target = $region28
      $region27: #{residual_block_upsample.2} parent=23 // pred_region
        %p131 = scmp.lt.s32.totalorder %s9, 1
        %s132 = scalar_select %p131, %s9, 1
        %s133 = smul.addr %s132, 32
        %s134 = smul.addr %s133, 8
        %s135 = scalar_lea.vmem %s0, %s134
      $region28: #{residual_block_upsample.2} parent=23 // pred_fallthru
        _
    $region24: #{residual_block_upsample.2} parent=5 // pred_fallthru
      _
    %p136 = scmp.le.s32.totalorder 1, %s9
    %p137 = scmp.lt.s32.totalorder %s9, 3
    %p138 = pnand %p136, %p137
    %p139 = pneg %p138
    // Predicated region
    $region29: #{residual_block_upsample.2} parent=5 // pred_check
      _
    $region30: #{residual_block_upsample.2} parent=5 // pred_check_branch
      %141 = sbr.rel (%p138) target = $region32
    $region31: #{residual_block_upsample.2} parent=5 // pred_region
      %s142 = ssub.s32 %s9, 1
      %p143 = scmp.lt.s32.totalorder %s14, 1
      %s144 = scalar_select %p143, %s14, 1
      %s145 = smul.addr %s144, 32
      %s146 = smul.addr %s145, 8
      %s147 = scalar_lea.vmem %s0, %s146
      %p148 = pneg %p35
      %p149 = pneg %p32
      %p150 = pneg %p56
      %p151 = pneg %p53
      %p152 = pneg %p77
      %p153 = pneg %p74
      %p154 = pneg %p103
      %p155 = pneg %p100
      %p156 = scmp.lt.s32.totalorder %s14, 1
      %s157 = scalar_select %p156, %s14, 1
      %s158 = smul.addr %s157, 32
      %s159 = smul.addr %s158, 8
      %s160 = scalar_lea.vmem %s3, %s159
      %p161 = scmp.lt.s32.totalorder %s14, 1
      %s162 = scalar_select %p161, %s14, 1
      %s163 = smul.addr %s162, 32
      %s164 = smul.addr %s163, 8
      %s165 = scalar_lea.vmem %s0, %s164
      %p166 = scmp.lt.s32.totalorder %s14, 1
      %s167 = scalar_select %p166, %s14, 1
      %s168 = smul.addr %s167, 32
      %s169 = smul.addr %s168, 8
      %s170 = scalar_lea.vmem %s3, %s169
      %vm171 = vcmask 31744
      %172 = vst.msk [vmem:[#allocation2] sm:$0xff] %vm171, 0.0
      %173 = vst.msk [vmem:[#allocation2 + $0x8] sm:$0xff] %vm171, 0.0
      %vm174 = vcmask 25600
      %175 = vst.msk [vmem:[#allocation2 + $0x10] sm:$0x3] %vm174, 0.0
      %176 = vst.msk [vmem:[#allocation2 + $0x18] sm:$0xff] %vm171, 0.0
      %177 = vst.msk [vmem:[#allocation2 + $0x20] sm:$0xff] %vm171, 0.0
      %178 = vst.msk [vmem:[#allocation2 + $0x28] sm:$0x3] %vm174, 0.0
      %179 = vst.msk [vmem:[#allocation2 + $0x30] sm:$0xff] %vm171, 0.0
      %180 = vst.msk [vmem:[#allocation2 + $0x38] sm:$0xff] %vm171, 0.0
      %181 = vst.msk [vmem:[#allocation2 + $0x40] sm:$0x3] %vm174, 0.0
      %182 = vst.msk [vmem:[#allocation2 + $0x48] sm:$0xff] %vm171, 0.0
      %183 = vst.msk [vmem:[#allocation2 + $0x50] sm:$0xff] %vm171, 0.0
      %184 = vst.msk [vmem:[#allocation2 + $0x58] sm:$0x3] %vm174, 0.0
      %185 = vst.msk [vmem:[#allocation2 + $0x60] sm:$0xff] %vm171, 0.0
      %186 = vst.msk [vmem:[#allocation2 + $0x68] sm:$0xff] %vm171, 0.0
      %187 = vst.msk [vmem:[#allocation2 + $0x70] sm:$0x3] %vm174, 0.0
      %188 = vst.msk [vmem:[#allocation2 + $0x78] sm:$0xff] %vm171, 0.0
      %189 = vst.msk [vmem:[#allocation2 + $0x80] sm:$0xff] %vm171, 0.0
      %190 = vst.msk [vmem:[#allocation2 + $0x88] sm:$0x3] %vm174, 0.0
      %191 = vst.msk [vmem:[#allocation2 + $0x90] sm:$0xff] %vm171, 0.0
      %192 = vst.msk [vmem:[#allocation2 + $0x98] sm:$0xff] %vm171, 0.0
      %193 = vst.msk [vmem:[#allocation2 + $0xa0] sm:$0x3] %vm174, 0.0
      %194 = vst.msk [vmem:[#allocation2 + $0xa8] sm:$0xff] %vm171, 0.0
      %195 = vst.msk [vmem:[#allocation2 + $0xb0] sm:$0xff] %vm171, 0.0
      %196 = vst.msk [vmem:[#allocation2 + $0xb8] sm:$0x3] %vm174, 0.0
      %197 = vst.msk [vmem:[#allocation2 + $0xc0] sm:$0xff] %vm171, 0.0
      %198 = vst.msk [vmem:[#allocation2 + $0xc8] sm:$0xff] %vm171, 0.0
      %199 = vst.msk [vmem:[#allocation2 + $0xd0] sm:$0x3] %vm174, 0.0
      %200 = vst.msk [vmem:[#allocation2 + $0xd8] sm:$0xff] %vm171, 0.0
      %201 = vst.msk [vmem:[#allocation2 + $0xe0] sm:$0xff] %vm171, 0.0
      %202 = vst.msk [vmem:[#allocation2 + $0xe8] sm:$0x3] %vm174, 0.0
      %203 = vst.msk [vmem:[#allocation2 + $0xf0] sm:$0xff] %vm171, 0.0
      %204 = vst.msk [vmem:[#allocation2 + $0xf8] sm:$0xff] %vm171, 0.0
      %205 = vst.msk [vmem:[#allocation2 + $0x100] sm:$0x3] %vm174, 0.0
      %206 = vst.msk [vmem:[#allocation2 + $0x108] sm:$0xff] %vm171, 0.0
      %207 = vst.msk [vmem:[#allocation2 + $0x110] sm:$0xff] %vm171, 0.0
      %208 = vst.msk [vmem:[#allocation2 + $0x118] sm:$0x3] %vm174, 0.0
      %209 = vst.msk [vmem:[#allocation2 + $0x120] sm:$0xff] %vm171, 0.0
      %210 = vst.msk [vmem:[#allocation2 + $0x128] sm:$0xff] %vm171, 0.0
      %211 = vst.msk [vmem:[#allocation2 + $0x130] sm:$0x3] %vm174, 0.0
      %212 = vst.msk [vmem:[#allocation2 + $0x138] sm:$0xff] %vm171, 0.0
      %213 = vst.msk [vmem:[#allocation2 + $0x140] sm:$0xff] %vm171, 0.0
      %214 = vst.msk [vmem:[#allocation2 + $0x148] sm:$0x3] %vm174, 0.0
      %215 = vst.msk [vmem:[#allocation2 + $0x150] sm:$0xff] %vm171, 0.0
      %216 = vst.msk [vmem:[#allocation2 + $0x158] sm:$0xff] %vm171, 0.0
      %217 = vst.msk [vmem:[#allocation2 + $0x160] sm:$0x3] %vm174, 0.0
      %218 = vst.msk [vmem:[#allocation2 + $0x168] sm:$0xff] %vm171, 0.0
      %219 = vst.msk [vmem:[#allocation2 + $0x170] sm:$0xff] %vm171, 0.0
      %220 = vst.msk [vmem:[#allocation2 + $0x178] sm:$0x3] %vm174, 0.0
      %221 = vst.msk [vmem:[#allocation2 + $0x180] sm:$0xff] %vm171, 0.0
      %222 = vst.msk [vmem:[#allocation2 + $0x188] sm:$0xff] %vm171, 0.0
      %223 = vst.msk [vmem:[#allocation2 + $0x190] sm:$0x3] %vm174, 0.0
      %224 = vst.msk [vmem:[#allocation2 + $0x198] sm:$0xff] %vm171, 0.0
      %225 = vst.msk [vmem:[#allocation2 + $0x1a0] sm:$0xff] %vm171, 0.0
      %226 = vst.msk [vmem:[#allocation2 + $0x1a8] sm:$0x3] %vm174, 0.0
      %v227 = vld [vmem:[%s165] sm:$0xff]
      %v228 = vld [vmem:[%s165 + $0x8] sm:$0xff]
      %v229 = vld [vmem:[%s165 + $0x10] sm:$0xff]
      %v230 = vld [vmem:[%s165 + $0x18] sm:$0xff]
      %v231 = vld [vmem:[%s165 + $0x20] sm:$0xff]
      %v232 = vld [vmem:[%s165 + $0x28] sm:$0xff]
      %v233 = vld [vmem:[%s165 + $0x30] sm:$0xff]
      %v234 = vld [vmem:[%s165 + $0x38] sm:$0xff]
      %v235 = vld [vmem:[%s165 + $0x40] sm:$0xff]
      %v236 = vld [vmem:[%s165 + $0x48] sm:$0xff]
      %v237 = vld [vmem:[%s165 + $0x50] sm:$0xff]
      %v238 = vld [vmem:[%s165 + $0x58] sm:$0xff]
      %v239 = vld [vmem:[%s165 + $0x60] sm:$0xff]
      %v240 = vld [vmem:[%s165 + $0x68] sm:$0xff]
      %v241 = vld [vmem:[%s165 + $0x70] sm:$0xff]
      %v242 = vld [vmem:[%s165 + $0x78] sm:$0xff]
      %v243 = vld [vmem:[%s165 + $0x80] sm:$0xff]
      %v244 = vld [vmem:[%s165 + $0x88] sm:$0xff]
      %v245 = vld [vmem:[%s165 + $0x90] sm:$0xff]
      %v246 = vld [vmem:[%s165 + $0x98] sm:$0xff]
      %v247 = vld [vmem:[%s165 + $0xa0] sm:$0xff]
      %v248 = vld [vmem:[%s165 + $0xa8] sm:$0xff]
      %v249 = vld [vmem:[%s165 + $0xb0] sm:$0xff]
      %v250 = vld [vmem:[%s165 + $0xb8] sm:$0xff]
      %v251 = vld [vmem:[%s165 + $0xc0] sm:$0xff]
      %v252 = vld [vmem:[%s165 + $0xc8] sm:$0xff]
      %v253 = vld [vmem:[%s165 + $0xd0] sm:$0xff]
      %v254 = vld [vmem:[%s165 + $0xd8] sm:$0xff]
      %v255 = vld [vmem:[%s165 + $0xe0] sm:$0xff]
      %v256 = vld [vmem:[%s165 + $0xe8] sm:$0xff]
      %v257 = vld [vmem:[%s165 + $0xf0] sm:$0xff]
      %v258 = vld [vmem:[%s165 + $0xf8] sm:$0xff]
      %s259 = scalar_lea.vmem [#allocation2], 24
      %260 = vst.msk [vmem:[%s259 + $0x1] sm:$0xff] %vm171, %v227
      %261 = vst.msk [vmem:[%s259 + $0x9] sm:$0xff] %vm171, %v228
      %262 = vst.msk [vmem:[%s259 + $0x19] sm:$0xff] %vm171, %v229
      %263 = vst.msk [vmem:[%s259 + $0x21] sm:$0xff] %vm171, %v230
      %264 = vst.msk [vmem:[%s259 + $0x31] sm:$0xff] %vm171, %v231
      %265 = vst.msk [vmem:[%s259 + $0x39] sm:$0xff] %vm171, %v232
      %266 = vst.msk [vmem:[%s259 + $0x49] sm:$0xff] %vm171, %v233
      %267 = vst.msk [vmem:[%s259 + $0x51] sm:$0xff] %vm171, %v234
      %268 = vst.msk [vmem:[%s259 + $0x61] sm:$0xff] %vm171, %v235
      %269 = vst.msk [vmem:[%s259 + $0x69] sm:$0xff] %vm171, %v236
      %270 = vst.msk [vmem:[%s259 + $0x79] sm:$0xff] %vm171, %v237
      %271 = vst.msk [vmem:[%s259 + $0x81] sm:$0xff] %vm171, %v238
      %272 = vst.msk [vmem:[%s259 + $0x91] sm:$0xff] %vm171, %v239
      %273 = vst.msk [vmem:[%s259 + $0x99] sm:$0xff] %vm171, %v240
      %274 = vst.msk [vmem:[%s259 + $0xa9] sm:$0xff] %vm171, %v241
      %275 = vst.msk [vmem:[%s259 + $0xb1] sm:$0xff] %vm171, %v242
      %276 = vst.msk [vmem:[%s259 + $0xc1] sm:$0xff] %vm171, %v243
      %277 = vst.msk [vmem:[%s259 + $0xc9] sm:$0xff] %vm171, %v244
      %278 = vst.msk [vmem:[%s259 + $0xd9] sm:$0xff] %vm171, %v245
      %279 = vst.msk [vmem:[%s259 + $0xe1] sm:$0xff] %vm171, %v246
      %280 = vst.msk [vmem:[%s259 + $0xf1] sm:$0xff] %vm171, %v247
      %281 = vst.msk [vmem:[%s259 + $0xf9] sm:$0xff] %vm171, %v248
      %282 = vst.msk [vmem:[%s259 + $0x109] sm:$0xff] %vm171, %v249
      %283 = vst.msk [vmem:[%s259 + $0x111] sm:$0xff] %vm171, %v250
      %284 = vst.msk [vmem:[%s259 + $0x121] sm:$0xff] %vm171, %v251
      %285 = vst.msk [vmem:[%s259 + $0x129] sm:$0xff] %vm171, %v252
      %286 = vst.msk [vmem:[%s259 + $0x139] sm:$0xff] %vm171, %v253
      %287 = vst.msk [vmem:[%s259 + $0x141] sm:$0xff] %vm171, %v254
      %288 = vst.msk [vmem:[%s259 + $0x151] sm:$0xff] %vm171, %v255
      %289 = vst.msk [vmem:[%s259 + $0x159] sm:$0xff] %vm171, %v256
      %290 = vst.msk [vmem:[%s259 + $0x169] sm:$0xff] %vm171, %v257
      %291 = vst.msk [vmem:[%s259 + $0x171] sm:$0xff] %vm171, %v258
      %v292 = vld [vmem:[#allocation2] sm:$0xff]
      %v293 = vld [vmem:[#allocation2 + $0x8] sm:$0xff]
      %v294 = vld [vmem:[#allocation2 + $0x10] sm:$0x3]
      %v295 = vld [vmem:[#allocation2 + $0x18] sm:$0xff]
      %v296 = vld [vmem:[#allocation2 + $0x20] sm:$0xff]
      %v297 = vld [vmem:[#allocation2 + $0x28] sm:$0x3]
      %v298 = vld [vmem:[#allocation2 + $0x30] sm:$0xff]
      %v299 = vld [vmem:[#allocation2 + $0x38] sm:$0xff]
      %v300 = vld [vmem:[#allocation2 + $0x40] sm:$0x3]
      %v301 = vld [vmem:[#allocation2 + $0x48] sm:$0xff]
      %v302 = vld [vmem:[#allocation2 + $0x50] sm:$0xff]
      %v303 = vld [vmem:[#allocation2 + $0x58] sm:$0x3]
      %v304 = vld [vmem:[#allocation2 + $0x60] sm:$0xff]
      %v305 = vld [vmem:[#allocation2 + $0x68] sm:$0xff]
      %v306 = vld [vmem:[#allocation2 + $0x70] sm:$0x3]
      %v307 = vld [vmem:[#allocation2 + $0x78] sm:$0xff]
      %v308 = vld [vmem:[#allocation2 + $0x80] sm:$0xff]
      %v309 = vld [vmem:[#allocation2 + $0x88] sm:$0x3]
      %v310 = vld [vmem:[#allocation2 + $0x90] sm:$0xff]
      %v311 = vld [vmem:[#allocation2 + $0x98] sm:$0xff]
      %v312 = vld [vmem:[#allocation2 + $0xa0] sm:$0x3]
      %v313 = vld [vmem:[#allocation2 + $0xa8] sm:$0xff]
      %v314 = vld [vmem:[#allocation2 + $0xb0] sm:$0xff]
      %v315 = vld [vmem:[#allocation2 + $0xb8] sm:$0x3]
      %v316 = vld [vmem:[#allocation2 + $0xc0] sm:$0xff]
      %v317 = vld [vmem:[#allocation2 + $0xc8] sm:$0xff]
      %v318 = vld [vmem:[#allocation2 + $0xd0] sm:$0x3]
      %v319 = vld [vmem:[#allocation2 + $0xd8] sm:$0xff]
      %v320 = vld [vmem:[#allocation2 + $0xe0] sm:$0xff]
      %v321 = vld [vmem:[#allocation2 + $0xe8] sm:$0x3]
      %v322 = vld [vmem:[#allocation2 + $0xf0] sm:$0xff]
      %v323 = vld [vmem:[#allocation2 + $0xf8] sm:$0xff]
      %v324 = vld [vmem:[#allocation2 + $0x100] sm:$0x3]
      %v325 = vld [vmem:[#allocation2 + $0x108] sm:$0xff]
      %v326 = vld [vmem:[#allocation2 + $0x110] sm:$0xff]
      %v327 = vld [vmem:[#allocation2 + $0x118] sm:$0x3]
      %v328 = vld [vmem:[#allocation2 + $0x120] sm:$0xff]
      %v329 = vld [vmem:[#allocation2 + $0x128] sm:$0xff]
      %v330 = vld [vmem:[#allocation2 + $0x130] sm:$0x3]
      %v331 = vld [vmem:[#allocation2 + $0x138] sm:$0xff]
      %v332 = vld [vmem:[#allocation2 + $0x140] sm:$0xff]
      %v333 = vld [vmem:[#allocation2 + $0x148] sm:$0x3]
      %v334 = vld [vmem:[#allocation2 + $0x150] sm:$0xff]
      %v335 = vld [vmem:[#allocation2 + $0x158] sm:$0xff]
      %v336 = vld [vmem:[#allocation2 + $0x160] sm:$0x3]
      %v337 = vld [vmem:[#allocation2 + $0x168] sm:$0xff]
      %v338 = vld [vmem:[#allocation2 + $0x170] sm:$0xff]
      %v339 = vld [vmem:[#allocation2 + $0x178] sm:$0x3]
      %v340 = vld [vmem:[#allocation2 + $0x180] sm:$0xff]
      %v341 = vld [vmem:[#allocation2 + $0x188] sm:$0xff]
      %v342 = vld [vmem:[#allocation2 + $0x190] sm:$0x3]
      %v343 = vld [vmem:[#allocation2 + $0x198] sm:$0xff]
      %v344 = vld [vmem:[#allocation2 + $0x1a0] sm:$0xff]
      %v345 = vld [vmem:[#allocation2 + $0x1a8] sm:$0x3]
      %vm394 = vcmask 1046528
      %v395 = vrot.slane %v292, 1
      %v396 = vrot.slane %v293, 1
      %v397 = vsel %vm394, %v395, %v396
      %v398 = vrot.slane %v294, 1
      %v399 = vsel %vm394, %v396, %v398
      %v400 = vrot.slane %v295, 1
      %v401 = vrot.slane %v296, 1
      %v402 = vsel %vm394, %v400, %v401
      %v403 = vrot.slane %v297, 1
      %v404 = vsel %vm394, %v401, %v403
      %v405 = vrot.slane %v298, 1
      %v406 = vrot.slane %v299, 1
      %v407 = vsel %vm394, %v405, %v406
      %v408 = vrot.slane %v300, 1
      %v409 = vsel %vm394, %v406, %v408
      %v410 = vrot.slane %v301, 1
      %v411 = vrot.slane %v302, 1
      %v412 = vsel %vm394, %v410, %v411
      %v413 = vrot.slane %v303, 1
      %v414 = vsel %vm394, %v411, %v413
      %v415 = vrot.slane %v304, 1
      %v416 = vrot.slane %v305, 1
      %v417 = vsel %vm394, %v415, %v416
      %v418 = vrot.slane %v306, 1
      %v419 = vsel %vm394, %v416, %v418
      %v420 = vrot.slane %v307, 1
      %v421 = vrot.slane %v308, 1
      %v422 = vsel %vm394, %v420, %v421
      %v423 = vrot.slane %v309, 1
      %v424 = vsel %vm394, %v421, %v423
      %v425 = vrot.slane %v310, 1
      %v426 = vrot.slane %v311, 1
      %v427 = vsel %vm394, %v425, %v426
      %v428 = vrot.slane %v312, 1
      %v429 = vsel %vm394, %v426, %v428
      %v430 = vrot.slane %v313, 1
      %v431 = vrot.slane %v314, 1
      %v432 = vsel %vm394, %v430, %v431
      %v433 = vrot.slane %v315, 1
      %v434 = vsel %vm394, %v431, %v433
      %v435 = vrot.slane %v316, 1
      %v436 = vrot.slane %v317, 1
      %v437 = vsel %vm394, %v435, %v436
      %v438 = vrot.slane %v318, 1
      %v439 = vsel %vm394, %v436, %v438
      %v440 = vrot.slane %v319, 1
      %v441 = vrot.slane %v320, 1
      %v442 = vsel %vm394, %v440, %v441
      %v443 = vrot.slane %v321, 1
      %v444 = vsel %vm394, %v441, %v443
      %v445 = vrot.slane %v322, 1
      %v446 = vrot.slane %v323, 1
      %v447 = vsel %vm394, %v445, %v446
      %v448 = vrot.slane %v324, 1
      %v449 = vsel %vm394, %v446, %v448
      %v450 = vrot.slane %v325, 1
      %v451 = vrot.slane %v326, 1
      %v452 = vsel %vm394, %v450, %v451
      %v453 = vrot.slane %v327, 1
      %v454 = vsel %vm394, %v451, %v453
      %v455 = vrot.slane %v328, 1
      %v456 = vrot.slane %v329, 1
      %v457 = vsel %vm394, %v455, %v456
      %v458 = vrot.slane %v330, 1
      %v459 = vsel %vm394, %v456, %v458
      %v460 = vrot.slane %v331, 1
      %v461 = vrot.slane %v332, 1
      %v462 = vsel %vm394, %v460, %v461
      %v463 = vrot.slane %v333, 1
      %v464 = vsel %vm394, %v461, %v463
      %v465 = vrot.slane %v334, 1
      %v466 = vrot.slane %v335, 1
      %v467 = vsel %vm394, %v465, %v466
      %v468 = vrot.slane %v336, 1
      %v469 = vsel %vm394, %v466, %v468
      %v470 = vrot.slane %v337, 1
      %v471 = vrot.slane %v338, 1
      %v472 = vsel %vm394, %v470, %v471
      %v473 = vrot.slane %v339, 1
      %v474 = vsel %vm394, %v471, %v473
      %vm475 = vcmask 1045504
      %v476 = vrot.slane %v292, 2
      %v477 = vrot.slane %v293, 2
      %v478 = vsel %vm475, %v476, %v477
      %v479 = vrot.slane %v294, 2
      %v480 = vsel %vm475, %v477, %v479
      %v481 = vrot.slane %v295, 2
      %v482 = vrot.slane %v296, 2
      %v483 = vsel %vm475, %v481, %v482
      %v484 = vrot.slane %v297, 2
      %v485 = vsel %vm475, %v482, %v484
      %v486 = vrot.slane %v298, 2
      %v487 = vrot.slane %v299, 2
      %v488 = vsel %vm475, %v486, %v487
      %v489 = vrot.slane %v300, 2
      %v490 = vsel %vm475, %v487, %v489
      %v491 = vrot.slane %v301, 2
      %v492 = vrot.slane %v302, 2
      %v493 = vsel %vm475, %v491, %v492
      %v494 = vrot.slane %v303, 2
      %v495 = vsel %vm475, %v492, %v494
      %v496 = vrot.slane %v304, 2
      %v497 = vrot.slane %v305, 2
      %v498 = vsel %vm475, %v496, %v497
      %v499 = vrot.slane %v306, 2
      %v500 = vsel %vm475, %v497, %v499
      %v501 = vrot.slane %v307, 2
      %v502 = vrot.slane %v308, 2
      %v503 = vsel %vm475, %v501, %v502
      %v504 = vrot.slane %v309, 2
      %v505 = vsel %vm475, %v502, %v504
      %v506 = vrot.slane %v310, 2
      %v507 = vrot.slane %v311, 2
      %v508 = vsel %vm475, %v506, %v507
      %v509 = vrot.slane %v312, 2
      %v510 = vsel %vm475, %v507, %v509
      %v511 = vrot.slane %v313, 2
      %v512 = vrot.slane %v314, 2
      %v513 = vsel %vm475, %v511, %v512
      %v514 = vrot.slane %v315, 2
      %v515 = vsel %vm475, %v512, %v514
      %v516 = vrot.slane %v316, 2
      %v517 = vrot.slane %v317, 2
      %v518 = vsel %vm475, %v516, %v517
      %v519 = vrot.slane %v318, 2
      %v520 = vsel %vm475, %v517, %v519
      %v521 = vrot.slane %v319, 2
      %v522 = vrot.slane %v320, 2
      %v523 = vsel %vm475, %v521, %v522
      %v524 = vrot.slane %v321, 2
      %v525 = vsel %vm475, %v522, %v524
      %v526 = vrot.slane %v322, 2
      %v527 = vrot.slane %v323, 2
      %v528 = vsel %vm475, %v526, %v527
      %v529 = vrot.slane %v324, 2
      %v530 = vsel %vm475, %v527, %v529
      %v531 = vrot.slane %v325, 2
      %v532 = vrot.slane %v326, 2
      %v533 = vsel %vm475, %v531, %v532
      %v534 = vrot.slane %v327, 2
      %v535 = vsel %vm475, %v532, %v534
      %v536 = vrot.slane %v328, 2
      %v537 = vrot.slane %v329, 2
      %v538 = vsel %vm475, %v536, %v537
      %v539 = vrot.slane %v330, 2
      %v540 = vsel %vm475, %v537, %v539
      %v541 = vrot.slane %v331, 2
      %v542 = vrot.slane %v332, 2
      %v543 = vsel %vm475, %v541, %v542
      %v544 = vrot.slane %v333, 2
      %v545 = vsel %vm475, %v542, %v544
      %v546 = vrot.slane %v334, 2
      %v547 = vrot.slane %v335, 2
      %v548 = vsel %vm475, %v546, %v547
      %v549 = vrot.slane %v336, 2
      %v550 = vsel %vm475, %v547, %v549
      %v551 = vrot.slane %v337, 2
      %v552 = vrot.slane %v338, 2
      %v553 = vsel %vm475, %v551, %v552
      %v554 = vrot.slane %v339, 2
      %v555 = vsel %vm475, %v552, %v554
      %v559 = vrot.slane %v340, 1
      %v560 = vrot.slane %v341, 1
      %v561 = vsel %vm394, %v559, %v560
      %v562 = vrot.slane %v342, 1
      %v563 = vsel %vm394, %v560, %v562
      %v564 = vrot.slane %v340, 2
      %v565 = vrot.slane %v341, 2
      %v566 = vsel %vm475, %v564, %v565
      %v567 = vrot.slane %v342, 2
      %v568 = vsel %vm475, %v565, %v567
      %v572 = vrot.slane %v343, 1
      %v573 = vrot.slane %v344, 1
      %v574 = vsel %vm394, %v572, %v573
      %v575 = vrot.slane %v345, 1
      %v576 = vsel %vm394, %v573, %v575
      %v577 = vrot.slane %v343, 2
      %v578 = vrot.slane %v344, 2
      %v579 = vsel %vm475, %v577, %v578
      %v580 = vrot.slane %v345, 2
      %v581 = vsel %vm475, %v578, %v580
      %582 = vrot.lane.b32.xlu0 %v397, 4
      %v583 = vpop.permute.xlu0 %582
      %584 = vrot.lane.b32.xlu0 %v399, 4
      %v585 = vpop.permute.xlu0 %584
      %586 = vrot.lane.b32.xlu0 %v402, 4
      %v587 = vpop.permute.xlu0 %586
      %588 = vrot.lane.b32.xlu0 %v404, 4
      %v589 = vpop.permute.xlu0 %588
      %590 = vrot.lane.b32.xlu0 %v407, 4
      %v591 = vpop.permute.xlu0 %590
      %592 = vrot.lane.b32.xlu0 %v409, 4
      %v593 = vpop.permute.xlu0 %592
      %594 = vrot.lane.b32.xlu0 %v412, 4
      %v595 = vpop.permute.xlu0 %594
      %596 = vrot.lane.b32.xlu0 %v414, 4
      %v597 = vpop.permute.xlu0 %596
      %598 = vrot.lane.b32.xlu0 %v417, 4
      %v599 = vpop.permute.xlu0 %598
      %600 = vrot.lane.b32.xlu0 %v419, 4
      %v601 = vpop.permute.xlu0 %600
      %602 = vrot.lane.b32.xlu0 %v422, 4
      %v603 = vpop.permute.xlu0 %602
      %604 = vrot.lane.b32.xlu0 %v424, 4
      %v605 = vpop.permute.xlu0 %604
      %606 = vrot.lane.b32.xlu0 %v427, 4
      %v607 = vpop.permute.xlu0 %606
      %608 = vrot.lane.b32.xlu0 %v429, 4
      %v609 = vpop.permute.xlu0 %608
      %610 = vrot.lane.b32.xlu0 %v432, 4
      %v611 = vpop.permute.xlu0 %610
      %612 = vrot.lane.b32.xlu0 %v434, 4
      %v613 = vpop.permute.xlu0 %612
      %614 = vrot.lane.b32.xlu0 %v437, 4
      %v615 = vpop.permute.xlu0 %614
      %616 = vrot.lane.b32.xlu0 %v439, 4
      %v617 = vpop.permute.xlu0 %616
      %618 = vrot.lane.b32.xlu0 %v442, 4
      %v619 = vpop.permute.xlu0 %618
      %620 = vrot.lane.b32.xlu0 %v444, 4
      %v621 = vpop.permute.xlu0 %620
      %622 = vrot.lane.b32.xlu0 %v447, 4
      %v623 = vpop.permute.xlu0 %622
      %624 = vrot.lane.b32.xlu0 %v449, 4
      %v625 = vpop.permute.xlu0 %624
      %626 = vrot.lane.b32.xlu0 %v452, 4
      %v627 = vpop.permute.xlu0 %626
      %628 = vrot.lane.b32.xlu0 %v454, 4
      %v629 = vpop.permute.xlu0 %628
      %630 = vrot.lane.b32.xlu0 %v457, 4
      %v631 = vpop.permute.xlu0 %630
      %632 = vrot.lane.b32.xlu0 %v459, 4
      %v633 = vpop.permute.xlu0 %632
      %634 = vrot.lane.b32.xlu0 %v462, 4
      %v635 = vpop.permute.xlu0 %634
      %636 = vrot.lane.b32.xlu0 %v464, 4
      %v637 = vpop.permute.xlu0 %636
      %638 = vrot.lane.b32.xlu0 %v467, 4
      %v639 = vpop.permute.xlu0 %638
      %640 = vrot.lane.b32.xlu0 %v469, 4
      %v641 = vpop.permute.xlu0 %640
      %642 = vrot.lane.b32.xlu0 %v472, 4
      %v643 = vpop.permute.xlu0 %642
      %644 = vrot.lane.b32.xlu0 %v474, 4
      %v645 = vpop.permute.xlu0 %644
      %678 = vrot.lane.b32.xlu0 %v478, 8
      %v679 = vpop.permute.xlu0 %678
      %680 = vrot.lane.b32.xlu0 %v480, 8
      %v681 = vpop.permute.xlu0 %680
      %682 = vrot.lane.b32.xlu0 %v483, 8
      %v683 = vpop.permute.xlu0 %682
      %684 = vrot.lane.b32.xlu0 %v485, 8
      %v685 = vpop.permute.xlu0 %684
      %686 = vrot.lane.b32.xlu0 %v488, 8
      %v687 = vpop.permute.xlu0 %686
      %688 = vrot.lane.b32.xlu0 %v490, 8
      %v689 = vpop.permute.xlu0 %688
      %690 = vrot.lane.b32.xlu0 %v493, 8
      %v691 = vpop.permute.xlu0 %690
      %692 = vrot.lane.b32.xlu0 %v495, 8
      %v693 = vpop.permute.xlu0 %692
      %694 = vrot.lane.b32.xlu0 %v498, 8
      %v695 = vpop.permute.xlu0 %694
      %696 = vrot.lane.b32.xlu0 %v500, 8
      %v697 = vpop.permute.xlu0 %696
      %698 = vrot.lane.b32.xlu0 %v503, 8
      %v699 = vpop.permute.xlu0 %698
      %700 = vrot.lane.b32.xlu0 %v505, 8
      %v701 = vpop.permute.xlu0 %700
      %702 = vrot.lane.b32.xlu0 %v508, 8
      %v703 = vpop.permute.xlu0 %702
      %704 = vrot.lane.b32.xlu0 %v510, 8
      %v705 = vpop.permute.xlu0 %704
      %706 = vrot.lane.b32.xlu0 %v513, 8
      %v707 = vpop.permute.xlu0 %706
      %708 = vrot.lane.b32.xlu0 %v515, 8
      %v709 = vpop.permute.xlu0 %708
      %710 = vrot.lane.b32.xlu0 %v518, 8
      %v711 = vpop.permute.xlu0 %710
      %712 = vrot.lane.b32.xlu0 %v520, 8
      %v713 = vpop.permute.xlu0 %712
      %714 = vrot.lane.b32.xlu0 %v523, 8
      %v715 = vpop.permute.xlu0 %714
      %716 = vrot.lane.b32.xlu0 %v525, 8
      %v717 = vpop.permute.xlu0 %716
      %718 = vrot.lane.b32.xlu0 %v528, 8
      %v719 = vpop.permute.xlu0 %718
      %720 = vrot.lane.b32.xlu0 %v530, 8
      %v721 = vpop.permute.xlu0 %720
      %722 = vrot.lane.b32.xlu0 %v533, 8
      %v723 = vpop.permute.xlu0 %722
      %724 = vrot.lane.b32.xlu0 %v535, 8
      %v725 = vpop.permute.xlu0 %724
      %726 = vrot.lane.b32.xlu0 %v538, 8
      %v727 = vpop.permute.xlu0 %726
      %728 = vrot.lane.b32.xlu0 %v540, 8
      %v729 = vpop.permute.xlu0 %728
      %730 = vrot.lane.b32.xlu0 %v543, 8
      %v731 = vpop.permute.xlu0 %730
      %732 = vrot.lane.b32.xlu0 %v545, 8
      %v733 = vpop.permute.xlu0 %732
      %734 = vrot.lane.b32.xlu0 %v548, 8
      %v735 = vpop.permute.xlu0 %734
      %736 = vrot.lane.b32.xlu0 %v550, 8
      %v737 = vpop.permute.xlu0 %736
      %738 = vrot.lane.b32.xlu0 %v553, 8
      %v739 = vpop.permute.xlu0 %738
      %740 = vrot.lane.b32.xlu0 %v555, 8
      %v741 = vpop.permute.xlu0 %740
      %774 = vrot.lane.b32.xlu0 %v295, 12
      %v775 = vpop.permute.xlu0 %774
      %776 = vrot.lane.b32.xlu0 %v296, 12
      %v777 = vpop.permute.xlu0 %776
      %778 = vrot.lane.b32.xlu0 %v298, 12
      %v779 = vpop.permute.xlu0 %778
      %780 = vrot.lane.b32.xlu0 %v299, 12
      %v781 = vpop.permute.xlu0 %780
      %782 = vrot.lane.b32.xlu0 %v301, 12
      %v783 = vpop.permute.xlu0 %782
      %784 = vrot.lane.b32.xlu0 %v302, 12
      %v785 = vpop.permute.xlu0 %784
      %786 = vrot.lane.b32.xlu0 %v304, 12
      %v787 = vpop.permute.xlu0 %786
      %788 = vrot.lane.b32.xlu0 %v305, 12
      %v789 = vpop.permute.xlu0 %788
      %790 = vrot.lane.b32.xlu0 %v307, 12
      %v791 = vpop.permute.xlu0 %790
      %792 = vrot.lane.b32.xlu0 %v308, 12
      %v793 = vpop.permute.xlu0 %792
      %794 = vrot.lane.b32.xlu0 %v310, 12
      %v795 = vpop.permute.xlu0 %794
      %796 = vrot.lane.b32.xlu0 %v311, 12
      %v797 = vpop.permute.xlu0 %796
      %798 = vrot.lane.b32.xlu0 %v313, 12
      %v799 = vpop.permute.xlu0 %798
      %800 = vrot.lane.b32.xlu0 %v314, 12
      %v801 = vpop.permute.xlu0 %800
      %802 = vrot.lane.b32.xlu0 %v316, 12
      %v803 = vpop.permute.xlu0 %802
      %804 = vrot.lane.b32.xlu0 %v317, 12
      %v805 = vpop.permute.xlu0 %804
      %806 = vrot.lane.b32.xlu0 %v319, 12
      %v807 = vpop.permute.xlu0 %806
      %808 = vrot.lane.b32.xlu0 %v320, 12
      %v809 = vpop.permute.xlu0 %808
      %810 = vrot.lane.b32.xlu0 %v322, 12
      %v811 = vpop.permute.xlu0 %810
      %812 = vrot.lane.b32.xlu0 %v323, 12
      %v813 = vpop.permute.xlu0 %812
      %814 = vrot.lane.b32.xlu0 %v325, 12
      %v815 = vpop.permute.xlu0 %814
      %816 = vrot.lane.b32.xlu0 %v326, 12
      %v817 = vpop.permute.xlu0 %816
      %818 = vrot.lane.b32.xlu0 %v328, 12
      %v819 = vpop.permute.xlu0 %818
      %820 = vrot.lane.b32.xlu0 %v329, 12
      %v821 = vpop.permute.xlu0 %820
      %822 = vrot.lane.b32.xlu0 %v331, 12
      %v823 = vpop.permute.xlu0 %822
      %824 = vrot.lane.b32.xlu0 %v332, 12
      %v825 = vpop.permute.xlu0 %824
      %826 = vrot.lane.b32.xlu0 %v334, 12
      %v827 = vpop.permute.xlu0 %826
      %828 = vrot.lane.b32.xlu0 %v335, 12
      %v829 = vpop.permute.xlu0 %828
      %830 = vrot.lane.b32.xlu0 %v337, 12
      %v831 = vpop.permute.xlu0 %830
      %832 = vrot.lane.b32.xlu0 %v338, 12
      %v833 = vpop.permute.xlu0 %832
      %834 = vrot.lane.b32.xlu0 %v340, 12
      %v835 = vpop.permute.xlu0 %834
      %836 = vrot.lane.b32.xlu0 %v341, 12
      %v837 = vpop.permute.xlu0 %836
      %870 = vrot.lane.b32.xlu0 %v402, 16
      %v871 = vpop.permute.xlu0 %870
      %872 = vrot.lane.b32.xlu0 %v404, 16
      %v873 = vpop.permute.xlu0 %872
      %874 = vrot.lane.b32.xlu0 %v407, 16
      %v875 = vpop.permute.xlu0 %874
      %876 = vrot.lane.b32.xlu0 %v409, 16
      %v877 = vpop.permute.xlu0 %876
      %878 = vrot.lane.b32.xlu0 %v412, 16
      %v879 = vpop.permute.xlu0 %878
      %880 = vrot.lane.b32.xlu0 %v414, 16
      %v881 = vpop.permute.xlu0 %880
      %882 = vrot.lane.b32.xlu0 %v417, 16
      %v883 = vpop.permute.xlu0 %882
      %884 = vrot.lane.b32.xlu0 %v419, 16
      %v885 = vpop.permute.xlu0 %884
      %886 = vrot.lane.b32.xlu0 %v422, 16
      %v887 = vpop.permute.xlu0 %886
      %888 = vrot.lane.b32.xlu0 %v424, 16
      %v889 = vpop.permute.xlu0 %888
      %890 = vrot.lane.b32.xlu0 %v427, 16
      %v891 = vpop.permute.xlu0 %890
      %892 = vrot.lane.b32.xlu0 %v429, 16
      %v893 = vpop.permute.xlu0 %892
      %894 = vrot.lane.b32.xlu0 %v432, 16
      %v895 = vpop.permute.xlu0 %894
      %896 = vrot.lane.b32.xlu0 %v434, 16
      %v897 = vpop.permute.xlu0 %896
      %898 = vrot.lane.b32.xlu0 %v437, 16
      %v899 = vpop.permute.xlu0 %898
      %900 = vrot.lane.b32.xlu0 %v439, 16
      %v901 = vpop.permute.xlu0 %900
      %902 = vrot.lane.b32.xlu0 %v442, 16
      %v903 = vpop.permute.xlu0 %902
      %904 = vrot.lane.b32.xlu0 %v444, 16
      %v905 = vpop.permute.xlu0 %904
      %906 = vrot.lane.b32.xlu0 %v447, 16
      %v907 = vpop.permute.xlu0 %906
      %908 = vrot.lane.b32.xlu0 %v449, 16
      %v909 = vpop.permute.xlu0 %908
      %910 = vrot.lane.b32.xlu0 %v452, 16
      %v911 = vpop.permute.xlu0 %910
      %912 = vrot.lane.b32.xlu0 %v454, 16
      %v913 = vpop.permute.xlu0 %912
      %914 = vrot.lane.b32.xlu0 %v457, 16
      %v915 = vpop.permute.xlu0 %914
      %916 = vrot.lane.b32.xlu0 %v459, 16
      %v917 = vpop.permute.xlu0 %916
      %918 = vrot.lane.b32.xlu0 %v462, 16
      %v919 = vpop.permute.xlu0 %918
      %920 = vrot.lane.b32.xlu0 %v464, 16
      %v921 = vpop.permute.xlu0 %920
      %922 = vrot.lane.b32.xlu0 %v467, 16
      %v923 = vpop.permute.xlu0 %922
      %924 = vrot.lane.b32.xlu0 %v469, 16
      %v925 = vpop.permute.xlu0 %924
      %926 = vrot.lane.b32.xlu0 %v472, 16
      %v927 = vpop.permute.xlu0 %926
      %928 = vrot.lane.b32.xlu0 %v474, 16
      %v929 = vpop.permute.xlu0 %928
      %930 = vrot.lane.b32.xlu0 %v561, 16
      %v931 = vpop.permute.xlu0 %930
      %932 = vrot.lane.b32.xlu0 %v563, 16
      %v933 = vpop.permute.xlu0 %932
      %966 = vrot.lane.b32.xlu0 %v483, 20
      %v967 = vpop.permute.xlu0 %966
      %968 = vrot.lane.b32.xlu0 %v485, 20
      %v969 = vpop.permute.xlu0 %968
      %970 = vrot.lane.b32.xlu0 %v488, 20
      %v971 = vpop.permute.xlu0 %970
      %972 = vrot.lane.b32.xlu0 %v490, 20
      %v973 = vpop.permute.xlu0 %972
      %974 = vrot.lane.b32.xlu0 %v493, 20
      %v975 = vpop.permute.xlu0 %974
      %976 = vrot.lane.b32.xlu0 %v495, 20
      %v977 = vpop.permute.xlu0 %976
      %978 = vrot.lane.b32.xlu0 %v498, 20
      %v979 = vpop.permute.xlu0 %978
      %980 = vrot.lane.b32.xlu0 %v500, 20
      %v981 = vpop.permute.xlu0 %980
      %982 = vrot.lane.b32.xlu0 %v503, 20
      %v983 = vpop.permute.xlu0 %982
      %984 = vrot.lane.b32.xlu0 %v505, 20
      %v985 = vpop.permute.xlu0 %984
      %986 = vrot.lane.b32.xlu0 %v508, 20
      %v987 = vpop.permute.xlu0 %986
      %988 = vrot.lane.b32.xlu0 %v510, 20
      %v989 = vpop.permute.xlu0 %988
      %990 = vrot.lane.b32.xlu0 %v513, 20
      %v991 = vpop.permute.xlu0 %990
      %992 = vrot.lane.b32.xlu0 %v515, 20
      %v993 = vpop.permute.xlu0 %992
      %994 = vrot.lane.b32.xlu0 %v518, 20
      %v995 = vpop.permute.xlu0 %994
      %996 = vrot.lane.b32.xlu0 %v520, 20
      %v997 = vpop.permute.xlu0 %996
      %998 = vrot.lane.b32.xlu0 %v523, 20
      %v999 = vpop.permute.xlu0 %998
      %1000 = vrot.lane.b32.xlu0 %v525, 20
      %v1001 = vpop.permute.xlu0 %1000
      %1002 = vrot.lane.b32.xlu0 %v528, 20
      %v1003 = vpop.permute.xlu0 %1002
      %1004 = vrot.lane.b32.xlu0 %v530, 20
      %v1005 = vpop.permute.xlu0 %1004
      %1006 = vrot.lane.b32.xlu0 %v533, 20
      %v1007 = vpop.permute.xlu0 %1006
      %1008 = vrot.lane.b32.xlu0 %v535, 20
      %v1009 = vpop.permute.xlu0 %1008
      %1010 = vrot.lane.b32.xlu0 %v538, 20
      %v1011 = vpop.permute.xlu0 %1010
      %1012 = vrot.lane.b32.xlu0 %v540, 20
      %v1013 = vpop.permute.xlu0 %1012
      %1014 = vrot.lane.b32.xlu0 %v543, 20
      %v1015 = vpop.permute.xlu0 %1014
      %1016 = vrot.lane.b32.xlu0 %v545, 20
      %v1017 = vpop.permute.xlu0 %1016
      %1018 = vrot.lane.b32.xlu0 %v548, 20
      %v1019 = vpop.permute.xlu0 %1018
      %1020 = vrot.lane.b32.xlu0 %v550, 20
      %v1021 = vpop.permute.xlu0 %1020
      %1022 = vrot.lane.b32.xlu0 %v553, 20
      %v1023 = vpop.permute.xlu0 %1022
      %1024 = vrot.lane.b32.xlu0 %v555, 20
      %v1025 = vpop.permute.xlu0 %1024
      %1026 = vrot.lane.b32.xlu0 %v566, 20
      %v1027 = vpop.permute.xlu0 %1026
      %1028 = vrot.lane.b32.xlu0 %v568, 20
      %v1029 = vpop.permute.xlu0 %1028
      %1062 = vrot.lane.b32.xlu0 %v298, 24
      %v1063 = vpop.permute.xlu0 %1062
      %1064 = vrot.lane.b32.xlu0 %v299, 24
      %v1065 = vpop.permute.xlu0 %1064
      %1066 = vrot.lane.b32.xlu0 %v301, 24
      %v1067 = vpop.permute.xlu0 %1066
      %1068 = vrot.lane.b32.xlu0 %v302, 24
      %v1069 = vpop.permute.xlu0 %1068
      %1070 = vrot.lane.b32.xlu0 %v304, 24
      %v1071 = vpop.permute.xlu0 %1070
      %1072 = vrot.lane.b32.xlu0 %v305, 24
      %v1073 = vpop.permute.xlu0 %1072
      %1074 = vrot.lane.b32.xlu0 %v307, 24
      %v1075 = vpop.permute.xlu0 %1074
      %1076 = vrot.lane.b32.xlu0 %v308, 24
      %v1077 = vpop.permute.xlu0 %1076
      %1078 = vrot.lane.b32.xlu0 %v310, 24
      %v1079 = vpop.permute.xlu0 %1078
      %1080 = vrot.lane.b32.xlu0 %v311, 24
      %v1081 = vpop.permute.xlu0 %1080
      %1082 = vrot.lane.b32.xlu0 %v313, 24
      %v1083 = vpop.permute.xlu0 %1082
      %1084 = vrot.lane.b32.xlu0 %v314, 24
      %v1085 = vpop.permute.xlu0 %1084
      %1086 = vrot.lane.b32.xlu0 %v316, 24
      %v1087 = vpop.permute.xlu0 %1086
      %1088 = vrot.lane.b32.xlu0 %v317, 24
      %v1089 = vpop.permute.xlu0 %1088
      %1090 = vrot.lane.b32.xlu0 %v319, 24
      %v1091 = vpop.permute.xlu0 %1090
      %1092 = vrot.lane.b32.xlu0 %v320, 24
      %v1093 = vpop.permute.xlu0 %1092
      %1094 = vrot.lane.b32.xlu0 %v322, 24
      %v1095 = vpop.permute.xlu0 %1094
      %1096 = vrot.lane.b32.xlu0 %v323, 24
      %v1097 = vpop.permute.xlu0 %1096
      %1098 = vrot.lane.b32.xlu0 %v325, 24
      %v1099 = vpop.permute.xlu0 %1098
      %1100 = vrot.lane.b32.xlu0 %v326, 24
      %v1101 = vpop.permute.xlu0 %1100
      %1102 = vrot.lane.b32.xlu0 %v328, 24
      %v1103 = vpop.permute.xlu0 %1102
      %1104 = vrot.lane.b32.xlu0 %v329, 24
      %v1105 = vpop.permute.xlu0 %1104
      %1106 = vrot.lane.b32.xlu0 %v331, 24
      %v1107 = vpop.permute.xlu0 %1106
      %1108 = vrot.lane.b32.xlu0 %v332, 24
      %v1109 = vpop.permute.xlu0 %1108
      %1110 = vrot.lane.b32.xlu0 %v334, 24
      %v1111 = vpop.permute.xlu0 %1110
      %1112 = vrot.lane.b32.xlu0 %v335, 24
      %v1113 = vpop.permute.xlu0 %1112
      %1114 = vrot.lane.b32.xlu0 %v337, 24
      %v1115 = vpop.permute.xlu0 %1114
      %1116 = vrot.lane.b32.xlu0 %v338, 24
      %v1117 = vpop.permute.xlu0 %1116
      %1118 = vrot.lane.b32.xlu0 %v340, 24
      %v1119 = vpop.permute.xlu0 %1118
      %1120 = vrot.lane.b32.xlu0 %v341, 24
      %v1121 = vpop.permute.xlu0 %1120
      %1122 = vrot.lane.b32.xlu0 %v343, 24
      %v1123 = vpop.permute.xlu0 %1122
      %1124 = vrot.lane.b32.xlu0 %v344, 24
      %v1125 = vpop.permute.xlu0 %1124
      %1158 = vrot.lane.b32.xlu0 %v407, 28
      %v1159 = vpop.permute.xlu0 %1158
      %1160 = vrot.lane.b32.xlu0 %v409, 28
      %v1161 = vpop.permute.xlu0 %1160
      %1162 = vrot.lane.b32.xlu0 %v412, 28
      %v1163 = vpop.permute.xlu0 %1162
      %1164 = vrot.lane.b32.xlu0 %v414, 28
      %v1165 = vpop.permute.xlu0 %1164
      %1166 = vrot.lane.b32.xlu0 %v417, 28
      %v1167 = vpop.permute.xlu0 %1166
      %1168 = vrot.lane.b32.xlu0 %v419, 28
      %v1169 = vpop.permute.xlu0 %1168
      %1170 = vrot.lane.b32.xlu0 %v422, 28
      %v1171 = vpop.permute.xlu0 %1170
      %1172 = vrot.lane.b32.xlu0 %v424, 28
      %v1173 = vpop.permute.xlu0 %1172
      %1174 = vrot.lane.b32.xlu0 %v427, 28
      %v1175 = vpop.permute.xlu0 %1174
      %1176 = vrot.lane.b32.xlu0 %v429, 28
      %v1177 = vpop.permute.xlu0 %1176
      %1178 = vrot.lane.b32.xlu0 %v432, 28
      %v1179 = vpop.permute.xlu0 %1178
      %1180 = vrot.lane.b32.xlu0 %v434, 28
      %v1181 = vpop.permute.xlu0 %1180
      %1182 = vrot.lane.b32.xlu0 %v437, 28
      %v1183 = vpop.permute.xlu0 %1182
      %1184 = vrot.lane.b32.xlu0 %v439, 28
      %v1185 = vpop.permute.xlu0 %1184
      %1186 = vrot.lane.b32.xlu0 %v442, 28
      %v1187 = vpop.permute.xlu0 %1186
      %1188 = vrot.lane.b32.xlu0 %v444, 28
      %v1189 = vpop.permute.xlu0 %1188
      %1190 = vrot.lane.b32.xlu0 %v447, 28
      %v1191 = vpop.permute.xlu0 %1190
      %1192 = vrot.lane.b32.xlu0 %v449, 28
      %v1193 = vpop.permute.xlu0 %1192
      %1194 = vrot.lane.b32.xlu0 %v452, 28
      %v1195 = vpop.permute.xlu0 %1194
      %1196 = vrot.lane.b32.xlu0 %v454, 28
      %v1197 = vpop.permute.xlu0 %1196
      %1198 = vrot.lane.b32.xlu0 %v457, 28
      %v1199 = vpop.permute.xlu0 %1198
      %1200 = vrot.lane.b32.xlu0 %v459, 28
      %v1201 = vpop.permute.xlu0 %1200
      %1202 = vrot.lane.b32.xlu0 %v462, 28
      %v1203 = vpop.permute.xlu0 %1202
      %1204 = vrot.lane.b32.xlu0 %v464, 28
      %v1205 = vpop.permute.xlu0 %1204
      %1206 = vrot.lane.b32.xlu0 %v467, 28
      %v1207 = vpop.permute.xlu0 %1206
      %1208 = vrot.lane.b32.xlu0 %v469, 28
      %v1209 = vpop.permute.xlu0 %1208
      %1210 = vrot.lane.b32.xlu0 %v472, 28
      %v1211 = vpop.permute.xlu0 %1210
      %1212 = vrot.lane.b32.xlu0 %v474, 28
      %v1213 = vpop.permute.xlu0 %1212
      %1214 = vrot.lane.b32.xlu0 %v561, 28
      %v1215 = vpop.permute.xlu0 %1214
      %1216 = vrot.lane.b32.xlu0 %v563, 28
      %v1217 = vpop.permute.xlu0 %1216
      %1218 = vrot.lane.b32.xlu0 %v574, 28
      %v1219 = vpop.permute.xlu0 %1218
      %1220 = vrot.lane.b32.xlu0 %v576, 28
      %v1221 = vpop.permute.xlu0 %1220
      %1254 = vrot.lane.b32.xlu0 %v488, 32
      %v1255 = vpop.permute.xlu0 %1254
      %1256 = vrot.lane.b32.xlu0 %v490, 32
      %v1257 = vpop.permute.xlu0 %1256
      %1258 = vrot.lane.b32.xlu0 %v493, 32
      %v1259 = vpop.permute.xlu0 %1258
      %1260 = vrot.lane.b32.xlu0 %v495, 32
      %v1261 = vpop.permute.xlu0 %1260
      %1262 = vrot.lane.b32.xlu0 %v498, 32
      %v1263 = vpop.permute.xlu0 %1262
      %1264 = vrot.lane.b32.xlu0 %v500, 32
      %v1265 = vpop.permute.xlu0 %1264
      %1266 = vrot.lane.b32.xlu0 %v503, 32
      %v1267 = vpop.permute.xlu0 %1266
      %1268 = vrot.lane.b32.xlu0 %v505, 32
      %v1269 = vpop.permute.xlu0 %1268
      %1270 = vrot.lane.b32.xlu0 %v508, 32
      %v1271 = vpop.permute.xlu0 %1270
      %1272 = vrot.lane.b32.xlu0 %v510, 32
      %v1273 = vpop.permute.xlu0 %1272
      %1274 = vrot.lane.b32.xlu0 %v513, 32
      %v1275 = vpop.permute.xlu0 %1274
      %1276 = vrot.lane.b32.xlu0 %v515, 32
      %v1277 = vpop.permute.xlu0 %1276
      %1278 = vrot.lane.b32.xlu0 %v518, 32
      %v1279 = vpop.permute.xlu0 %1278
      %1280 = vrot.lane.b32.xlu0 %v520, 32
      %v1281 = vpop.permute.xlu0 %1280
      %1282 = vrot.lane.b32.xlu0 %v523, 32
      %v1283 = vpop.permute.xlu0 %1282
      %1284 = vrot.lane.b32.xlu0 %v525, 32
      %v1285 = vpop.permute.xlu0 %1284
      %1286 = vrot.lane.b32.xlu0 %v528, 32
      %v1287 = vpop.permute.xlu0 %1286
      %1288 = vrot.lane.b32.xlu0 %v530, 32
      %v1289 = vpop.permute.xlu0 %1288
      %1290 = vrot.lane.b32.xlu0 %v533, 32
      %v1291 = vpop.permute.xlu0 %1290
      %1292 = vrot.lane.b32.xlu0 %v535, 32
      %v1293 = vpop.permute.xlu0 %1292
      %1294 = vrot.lane.b32.xlu0 %v538, 32
      %v1295 = vpop.permute.xlu0 %1294
      %1296 = vrot.lane.b32.xlu0 %v540, 32
      %v1297 = vpop.permute.xlu0 %1296
      %1298 = vrot.lane.b32.xlu0 %v543, 32
      %v1299 = vpop.permute.xlu0 %1298
      %1300 = vrot.lane.b32.xlu0 %v545, 32
      %v1301 = vpop.permute.xlu0 %1300
      %1302 = vrot.lane.b32.xlu0 %v548, 32
      %v1303 = vpop.permute.xlu0 %1302
      %1304 = vrot.lane.b32.xlu0 %v550, 32
      %v1305 = vpop.permute.xlu0 %1304
      %1306 = vrot.lane.b32.xlu0 %v553, 32
      %v1307 = vpop.permute.xlu0 %1306
      %1308 = vrot.lane.b32.xlu0 %v555, 32
      %v1309 = vpop.permute.xlu0 %1308
      %1310 = vrot.lane.b32.xlu0 %v566, 32
      %v1311 = vpop.permute.xlu0 %1310
      %1312 = vrot.lane.b32.xlu0 %v568, 32
      %v1313 = vpop.permute.xlu0 %1312
      %1314 = vrot.lane.b32.xlu0 %v579, 32
      %v1315 = vpop.permute.xlu0 %1314
      %1316 = vrot.lane.b32.xlu0 %v581, 32
      %v1317 = vpop.permute.xlu0 %1316
      %v1350 = vsel %vm171, %v292, %v583
      %v1351 = vsel %vm171, %v293, %v585
      %v1352 = vsel %vm171, %v295, %v587
      %v1353 = vsel %vm171, %v296, %v589
      %v1354 = vsel %vm171, %v298, %v591
      %v1355 = vsel %vm171, %v299, %v593
      %v1356 = vsel %vm171, %v301, %v595
      %v1357 = vsel %vm171, %v302, %v597
      %v1358 = vsel %vm171, %v304, %v599
      %v1359 = vsel %vm171, %v305, %v601
      %v1360 = vsel %vm171, %v307, %v603
      %v1361 = vsel %vm171, %v308, %v605
      %v1362 = vsel %vm171, %v310, %v607
      %v1363 = vsel %vm171, %v311, %v609
      %v1364 = vsel %vm171, %v313, %v611
      %v1365 = vsel %vm171, %v314, %v613
      %v1366 = vsel %vm171, %v316, %v615
      %v1367 = vsel %vm171, %v317, %v617
      %v1368 = vsel %vm171, %v319, %v619
      %v1369 = vsel %vm171, %v320, %v621
      %v1370 = vsel %vm171, %v322, %v623
      %v1371 = vsel %vm171, %v323, %v625
      %v1372 = vsel %vm171, %v325, %v627
      %v1373 = vsel %vm171, %v326, %v629
      %v1374 = vsel %vm171, %v328, %v631
      %v1375 = vsel %vm171, %v329, %v633
      %v1376 = vsel %vm171, %v331, %v635
      %v1377 = vsel %vm171, %v332, %v637
      %v1378 = vsel %vm171, %v334, %v639
      %v1379 = vsel %vm171, %v335, %v641
      %v1380 = vsel %vm171, %v337, %v643
      %v1381 = vsel %vm171, %v338, %v645
      %vm1382 = vcmask 64512
      %v1383 = vsel %vm1382, %v1350, %v679
      %v1384 = vsel %vm1382, %v1351, %v681
      %v1385 = vsel %vm1382, %v1352, %v683
      %v1386 = vsel %vm1382, %v1353, %v685
      %v1387 = vsel %vm1382, %v1354, %v687
      %v1388 = vsel %vm1382, %v1355, %v689
      %v1389 = vsel %vm1382, %v1356, %v691
      %v1390 = vsel %vm1382, %v1357, %v693
      %v1391 = vsel %vm1382, %v1358, %v695
      %v1392 = vsel %vm1382, %v1359, %v697
      %v1393 = vsel %vm1382, %v1360, %v699
      %v1394 = vsel %vm1382, %v1361, %v701
      %v1395 = vsel %vm1382, %v1362, %v703
      %v1396 = vsel %vm1382, %v1363, %v705
      %v1397 = vsel %vm1382, %v1364, %v707
      %v1398 = vsel %vm1382, %v1365, %v709
      %v1399 = vsel %vm1382, %v1366, %v711
      %v1400 = vsel %vm1382, %v1367, %v713
      %v1401 = vsel %vm1382, %v1368, %v715
      %v1402 = vsel %vm1382, %v1369, %v717
      %v1403 = vsel %vm1382, %v1370, %v719
      %v1404 = vsel %vm1382, %v1371, %v721
      %v1405 = vsel %vm1382, %v1372, %v723
      %v1406 = vsel %vm1382, %v1373, %v725
      %v1407 = vsel %vm1382, %v1374, %v727
      %v1408 = vsel %vm1382, %v1375, %v729
      %v1409 = vsel %vm1382, %v1376, %v731
      %v1410 = vsel %vm1382, %v1377, %v733
      %v1411 = vsel %vm1382, %v1378, %v735
      %v1412 = vsel %vm1382, %v1379, %v737
      %v1413 = vsel %vm1382, %v1380, %v739
      %v1414 = vsel %vm1382, %v1381, %v741
      %vm1415 = vcmask 97280
      %v1416 = vsel %vm1415, %v1383, %v775
      %v1417 = vsel %vm1415, %v1384, %v777
      %v1418 = vsel %vm1415, %v1385, %v779
      %v1419 = vsel %vm1415, %v1386, %v781
      %v1420 = vsel %vm1415, %v1387, %v783
      %v1421 = vsel %vm1415, %v1388, %v785
      %v1422 = vsel %vm1415, %v1389, %v787
      %v1423 = vsel %vm1415, %v1390, %v789
      %v1424 = vsel %vm1415, %v1391, %v791
      %v1425 = vsel %vm1415, %v1392, %v793
      %v1426 = vsel %vm1415, %v1393, %v795
      %v1427 = vsel %vm1415, %v1394, %v797
      %v1428 = vsel %vm1415, %v1395, %v799
      %v1429 = vsel %vm1415, %v1396, %v801
      %v1430 = vsel %vm1415, %v1397, %v803
      %v1431 = vsel %vm1415, %v1398, %v805
      %v1432 = vsel %vm1415, %v1399, %v807
      %v1433 = vsel %vm1415, %v1400, %v809
      %v1434 = vsel %vm1415, %v1401, %v811
      %v1435 = vsel %vm1415, %v1402, %v813
      %v1436 = vsel %vm1415, %v1403, %v815
      %v1437 = vsel %vm1415, %v1404, %v817
      %v1438 = vsel %vm1415, %v1405, %v819
      %v1439 = vsel %vm1415, %v1406, %v821
      %v1440 = vsel %vm1415, %v1407, %v823
      %v1441 = vsel %vm1415, %v1408, %v825
      %v1442 = vsel %vm1415, %v1409, %v827
      %v1443 = vsel %vm1415, %v1410, %v829
      %v1444 = vsel %vm1415, %v1411, %v831
      %v1445 = vsel %vm1415, %v1412, %v833
      %v1446 = vsel %vm1415, %v1413, %v835
      %v1447 = vsel %vm1415, %v1414, %v837
      %vm1448 = vcmask 130048
      %v1449 = vsel %vm1448, %v1416, %v871
      %v1450 = vsel %vm1448, %v1417, %v873
      %v1451 = vsel %vm1448, %v1418, %v875
      %v1452 = vsel %vm1448, %v1419, %v877
      %v1453 = vsel %vm1448, %v1420, %v879
      %v1454 = vsel %vm1448, %v1421, %v881
      %v1455 = vsel %vm1448, %v1422, %v883
      %v1456 = vsel %vm1448, %v1423, %v885
      %v1457 = vsel %vm1448, %v1424, %v887
      %v1458 = vsel %vm1448, %v1425, %v889
      %v1459 = vsel %vm1448, %v1426, %v891
      %v1460 = vsel %vm1448, %v1427, %v893
      %v1461 = vsel %vm1448, %v1428, %v895
      %v1462 = vsel %vm1448, %v1429, %v897
      %v1463 = vsel %vm1448, %v1430, %v899
      %v1464 = vsel %vm1448, %v1431, %v901
      %v1465 = vsel %vm1448, %v1432, %v903
      %v1466 = vsel %vm1448, %v1433, %v905
      %v1467 = vsel %vm1448, %v1434, %v907
      %v1468 = vsel %vm1448, %v1435, %v909
      %v1469 = vsel %vm1448, %v1436, %v911
      %v1470 = vsel %vm1448, %v1437, %v913
      %v1471 = vsel %vm1448, %v1438, %v915
      %v1472 = vsel %vm1448, %v1439, %v917
      %v1473 = vsel %vm1448, %v1440, %v919
      %v1474 = vsel %vm1448, %v1441, %v921
      %v1475 = vsel %vm1448, %v1442, %v923
      %v1476 = vsel %vm1448, %v1443, %v925
      %v1477 = vsel %vm1448, %v1444, %v927
      %v1478 = vsel %vm1448, %v1445, %v929
      %v1479 = vsel %vm1448, %v1446, %v931
      %v1480 = vsel %vm1448, %v1447, %v933
      %vm1481 = vcmask 162816
      %v1482 = vsel %vm1481, %v1449, %v967
      %v1483 = vsel %vm1481, %v1450, %v969
      %v1484 = vsel %vm1481, %v1451, %v971
      %v1485 = vsel %vm1481, %v1452, %v973
      %v1486 = vsel %vm1481, %v1453, %v975
      %v1487 = vsel %vm1481, %v1454, %v977
      %v1488 = vsel %vm1481, %v1455, %v979
      %v1489 = vsel %vm1481, %v1456, %v981
      %v1490 = vsel %vm1481, %v1457, %v983
      %v1491 = vsel %vm1481, %v1458, %v985
      %v1492 = vsel %vm1481, %v1459, %v987
      %v1493 = vsel %vm1481, %v1460, %v989
      %v1494 = vsel %vm1481, %v1461, %v991
      %v1495 = vsel %vm1481, %v1462, %v993
      %v1496 = vsel %vm1481, %v1463, %v995
      %v1497 = vsel %vm1481, %v1464, %v997
      %v1498 = vsel %vm1481, %v1465, %v999
      %v1499 = vsel %vm1481, %v1466, %v1001
      %v1500 = vsel %vm1481, %v1467, %v1003
      %v1501 = vsel %vm1481, %v1468, %v1005
      %v1502 = vsel %vm1481, %v1469, %v1007
      %v1503 = vsel %vm1481, %v1470, %v1009
      %v1504 = vsel %vm1481, %v1471, %v1011
      %v1505 = vsel %vm1481, %v1472, %v1013
      %v1506 = vsel %vm1481, %v1473, %v1015
      %v1507 = vsel %vm1481, %v1474, %v1017
      %v1508 = vsel %vm1481, %v1475, %v1019
      %v1509 = vsel %vm1481, %v1476, %v1021
      %v1510 = vsel %vm1481, %v1477, %v1023
      %v1511 = vsel %vm1481, %v1478, %v1025
      %v1512 = vsel %vm1481, %v1479, %v1027
      %v1513 = vsel %vm1481, %v1480, %v1029
      %vm1514 = vcmask 195584
      %v1515 = vsel %vm1514, %v1482, %v1063
      %v1516 = vsel %vm1514, %v1483, %v1065
      %v1517 = vsel %vm1514, %v1484, %v1067
      %v1518 = vsel %vm1514, %v1485, %v1069
      %v1519 = vsel %vm1514, %v1486, %v1071
      %v1520 = vsel %vm1514, %v1487, %v1073
      %v1521 = vsel %vm1514, %v1488, %v1075
      %v1522 = vsel %vm1514, %v1489, %v1077
      %v1523 = vsel %vm1514, %v1490, %v1079
      %v1524 = vsel %vm1514, %v1491, %v1081
      %v1525 = vsel %vm1514, %v1492, %v1083
      %v1526 = vsel %vm1514, %v1493, %v1085
      %v1527 = vsel %vm1514, %v1494, %v1087
      %v1528 = vsel %vm1514, %v1495, %v1089
      %v1529 = vsel %vm1514, %v1496, %v1091
      %v1530 = vsel %vm1514, %v1497, %v1093
      %v1531 = vsel %vm1514, %v1498, %v1095
      %v1532 = vsel %vm1514, %v1499, %v1097
      %v1533 = vsel %vm1514, %v1500, %v1099
      %v1534 = vsel %vm1514, %v1501, %v1101
      %v1535 = vsel %vm1514, %v1502, %v1103
      %v1536 = vsel %vm1514, %v1503, %v1105
      %v1537 = vsel %vm1514, %v1504, %v1107
      %v1538 = vsel %vm1514, %v1505, %v1109
      %v1539 = vsel %vm1514, %v1506, %v1111
      %v1540 = vsel %vm1514, %v1507, %v1113
      %v1541 = vsel %vm1514, %v1508, %v1115
      %v1542 = vsel %vm1514, %v1509, %v1117
      %v1543 = vsel %vm1514, %v1510, %v1119
      %v1544 = vsel %vm1514, %v1511, %v1121
      %v1545 = vsel %vm1514, %v1512, %v1123
      %v1546 = vsel %vm1514, %v1513, %v1125
      %vm1547 = vcmask 228352
      %v1548 = vsel %vm1547, %v1515, %v1159
      %v1549 = vsel %vm1547, %v1516, %v1161
      %v1550 = vsel %vm1547, %v1517, %v1163
      %v1551 = vsel %vm1547, %v1518, %v1165
      %v1552 = vsel %vm1547, %v1519, %v1167
      %v1553 = vsel %vm1547, %v1520, %v1169
      %v1554 = vsel %vm1547, %v1521, %v1171
      %v1555 = vsel %vm1547, %v1522, %v1173
      %v1556 = vsel %vm1547, %v1523, %v1175
      %v1557 = vsel %vm1547, %v1524, %v1177
      %v1558 = vsel %vm1547, %v1525, %v1179
      %v1559 = vsel %vm1547, %v1526, %v1181
      %v1560 = vsel %vm1547, %v1527, %v1183
      %v1561 = vsel %vm1547, %v1528, %v1185
      %v1562 = vsel %vm1547, %v1529, %v1187
      %v1563 = vsel %vm1547, %v1530, %v1189
      %v1564 = vsel %vm1547, %v1531, %v1191
      %v1565 = vsel %vm1547, %v1532, %v1193
      %v1566 = vsel %vm1547, %v1533, %v1195
      %v1567 = vsel %vm1547, %v1534, %v1197
      %v1568 = vsel %vm1547, %v1535, %v1199
      %v1569 = vsel %vm1547, %v1536, %v1201
      %v1570 = vsel %vm1547, %v1537, %v1203
      %v1571 = vsel %vm1547, %v1538, %v1205
      %v1572 = vsel %vm1547, %v1539, %v1207
      %v1573 = vsel %vm1547, %v1540, %v1209
      %v1574 = vsel %vm1547, %v1541, %v1211
      %v1575 = vsel %vm1547, %v1542, %v1213
      %v1576 = vsel %vm1547, %v1543, %v1215
      %v1577 = vsel %vm1547, %v1544, %v1217
      %v1578 = vsel %vm1547, %v1545, %v1219
      %v1579 = vsel %vm1547, %v1546, %v1221
      %vm1580 = vcmask 261120
      %v1581 = vsel %vm1580, %v1548, %v1255
      %v1582 = vsel %vm1580, %v1549, %v1257
      %v1583 = vsel %vm1580, %v1550, %v1259
      %v1584 = vsel %vm1580, %v1551, %v1261
      %v1585 = vsel %vm1580, %v1552, %v1263
      %v1586 = vsel %vm1580, %v1553, %v1265
      %v1587 = vsel %vm1580, %v1554, %v1267
      %v1588 = vsel %vm1580, %v1555, %v1269
      %v1589 = vsel %vm1580, %v1556, %v1271
      %v1590 = vsel %vm1580, %v1557, %v1273
      %v1591 = vsel %vm1580, %v1558, %v1275
      %v1592 = vsel %vm1580, %v1559, %v1277
      %v1593 = vsel %vm1580, %v1560, %v1279
      %v1594 = vsel %vm1580, %v1561, %v1281
      %v1595 = vsel %vm1580, %v1562, %v1283
      %v1596 = vsel %vm1580, %v1563, %v1285
      %v1597 = vsel %vm1580, %v1564, %v1287
      %v1598 = vsel %vm1580, %v1565, %v1289
      %v1599 = vsel %vm1580, %v1566, %v1291
      %v1600 = vsel %vm1580, %v1567, %v1293
      %v1601 = vsel %vm1580, %v1568, %v1295
      %v1602 = vsel %vm1580, %v1569, %v1297
      %v1603 = vsel %vm1580, %v1570, %v1299
      %v1604 = vsel %vm1580, %v1571, %v1301
      %v1605 = vsel %vm1580, %v1572, %v1303
      %v1606 = vsel %vm1580, %v1573, %v1305
      %v1607 = vsel %vm1580, %v1574, %v1307
      %v1608 = vsel %vm1580, %v1575, %v1309
      %v1609 = vsel %vm1580, %v1576, %v1311
      %v1610 = vsel %vm1580, %v1577, %v1313
      %v1611 = vsel %vm1580, %v1578, %v1315
      %v1612 = vsel %vm1580, %v1579, %v1317
      %v1613 = vld [vmem:[%s1] sm:$0xff]
      %v1614 = vld [vmem:[%s1 + $0x8] sm:$0xff]
      %v1615 = vld [vmem:[%s1 + $0x10] sm:$0xff]
      %v1616 = vld [vmem:[%s1 + $0x18] sm:$0xff]
      %v1617 = vld [vmem:[%s1 + $0x20] sm:$0xf]
      %v1618 = vld [vmem:[%s2] sm:$0x1]
      %v1620 = vlaneseq
      %v1621 = vshrl.u32 %v1620, 7
      %v1622 = vsub.s32 0, %v1621
      %v1623 = vrot.slane %v1618, %v1622
      %vm1625 = vcmask 293888
      %v1627 = vsel %vm1625, %v1581, 0
      %v1630 = vsel %vm1625, %v1582, 0
      %v1633 = vsel %vm1625, %v1583, 0
      %v1636 = vsel %vm1625, %v1584, 0
      %v1639 = vsel %vm1625, %v1585, 0
      %v1642 = vsel %vm1625, %v1586, 0
      %v1645 = vsel %vm1625, %v1587, 0
      %v1648 = vsel %vm1625, %v1588, 0
      %v1651 = vsel %vm1625, %v1589, 0
      %v1654 = vsel %vm1625, %v1590, 0
      %v1657 = vsel %vm1625, %v1591, 0
      %v1660 = vsel %vm1625, %v1592, 0
      %v1663 = vsel %vm1625, %v1593, 0
      %v1666 = vsel %vm1625, %v1594, 0
      %v1669 = vsel %vm1625, %v1595, 0
      %v1672 = vsel %vm1625, %v1596, 0
      %v1675 = vsel %vm1625, %v1597, 0
      %v1678 = vsel %vm1625, %v1598, 0
      %v1681 = vsel %vm1625, %v1599, 0
      %v1684 = vsel %vm1625, %v1600, 0
      %v1687 = vsel %vm1625, %v1601, 0
      %v1690 = vsel %vm1625, %v1602, 0
      %v1693 = vsel %vm1625, %v1603, 0
      %v1696 = vsel %vm1625, %v1604, 0
      %v1699 = vsel %vm1625, %v1605, 0
      %v1702 = vsel %vm1625, %v1606, 0
      %v1705 = vsel %vm1625, %v1607, 0
      %v1708 = vsel %vm1625, %v1608, 0
      %v1711 = vsel %vm1625, %v1609, 0
      %v1714 = vsel %vm1625, %v1610, 0
      %v1717 = vsel %vm1625, %v1611, 0
      %v1720 = vsel %vm1625, %v1612, 0
      %vm1722 = vcmask 1043456
      %v1724 = vsel %vm1722, %v1617, 0
      %1726 = vmatprep.subr.mxu0 0.0
      %1727 = vmatpush1.msra.mxu0 0.0
      %1728 = vmatprep.subr.mxu0 0.0
      %1729 = vmatpush1.msra.mxu0 0.0
      %1730 = vmatprep.subr.mxu0 0.0
      %1731 = vmatpush1.msra.mxu0 0.0
      %1732 = vmatprep.subr.mxu0 0.0
      %1733 = vmatpush1.msra.mxu0 0.0
      %1734 = vmatprep.subr.mxu0 0.0
      %1735 = vmatpush1.msra.mxu0 0.0
      %1736 = vmatprep.subr.mxu0 0.0
      %1737 = vmatpush1.msra.mxu0 0.0
      %1738 = vmatprep.subr.mxu0 0.0
      %1739 = vmatpush1.msra.mxu0 0.0
      %1740 = vmatprep.subr.mxu0 0.0
      %1741 = vmatpush1.msra.mxu0 0.0
      %1742 = vmatprep.subr.mxu0 0.0
      %1743 = vmatpush1.msra.mxu0 0.0
      %1744 = vmatprep.subr.mxu0 0.0
      %1745 = vmatpush1.msra.mxu0 0.0
      %1746 = vmatprep.subr.mxu0 0.0
      %1747 = vmatpush1.msra.mxu0 0.0
      %1748 = vmatprep.subr.mxu0 0.0
      %1749 = vmatpush1.msra.mxu0 %v1724
      %1750 = vmatprep.subr.mxu0 0.0
      %1751 = vmatpush1.msra.mxu0 %v1616
      %1752 = vmatprep.subr.mxu0 0.0
      %1753 = vmatpush1.msra.mxu0 %v1615
      %1754 = vmatprep.subr.mxu0 0.0
      %1755 = vmatpush1.msra.mxu0 %v1614
      %1756 = vmatprep.subr.mxu0 0.0
      %1757 = vmatpush1.msra.mxu0 %v1613
      %1758 = vmatprep.subr.mxu0 0.0
      %1759 = vmatpush2.msra.mxu0 0.0
      %1760 = vmatprep.subr.mxu0 0.0
      %1761 = vmatpush2.msra.mxu0 0.0
      %1762 = vmatprep.subr.mxu0 0.0
      %1763 = vmatpush2.msra.mxu0 0.0
      %1764 = vmatprep.subr.mxu0 0.0
      %1765 = vmatpush2.msra.mxu0 0.0
      %1766 = vmatprep.subr.mxu0 0.0
      %1767 = vmatpush2.msra.mxu0 0.0
      %1768 = vmatprep.subr.mxu0 0.0
      %1769 = vmatpush2.msra.mxu0 0.0
      %1770 = vmatprep.subr.mxu0 0.0
      %1771 = vmatpush2.msra.mxu0 0.0
      %1772 = vmatprep.subr.mxu0 0.0
      %1773 = vmatpush2.msra.mxu0 0.0
      %1774 = vmatprep.subr.mxu0 0.0
      %1775 = vmatpush2.msra.mxu0 0.0
      %1776 = vmatprep.subr.mxu0 0.0
      %1777 = vmatpush2.msra.mxu0 0.0
      %1778 = vmatprep.subr.mxu0 0.0
      %1779 = vmatpush2.msra.mxu0 0.0
      %1780 = vmatprep.subr.mxu0 0.0
      %1781 = vmatpush2.msra.mxu0 0.0
      %1782 = vmatprep.subr.mxu0 0.0
      %1783 = vmatpush2.msra.mxu0 0.0
      %1784 = vmatprep.subr.mxu0 0.0
      %1785 = vmatpush2.msra.mxu0 0.0
      %1786 = vmatprep.subr.mxu0 0.0
      %1787 = vmatpush2.msra.mxu0 0.0
      %1788 = vmatprep.subr.mxu0 0.0
      %1789 = vmatpush2.msra.mxu0 0.0
      %1790 = vmatprep.mubr.f32.mxu0 0.0
      %1791 = vmatmul.mubr.f32.gmra.mxu0 %v1627
      %v1792 = vpop.f32.mrf.mxu0
      %v1793 = vadd.f32 %v1623, %v1792
      %v1794 = vpop.f32.mrf.mxu0
      %1795 = vmatprep.mubr.f32.mxu0 0.0
      %1796 = vmatmul.mubr.f32.gmra.mxu0 %v1630
      %v1797 = vpop.f32.mrf.mxu0
      %v1798 = vadd.f32 %v1623, %v1797
      %v1799 = vpop.f32.mrf.mxu0
      %1800 = vmatprep.mubr.f32.mxu0 0.0
      %1801 = vmatmul.mubr.f32.gmra.mxu0 %v1633
      %v1802 = vpop.f32.mrf.mxu0
      %v1803 = vadd.f32 %v1623, %v1802
      %v1804 = vpop.f32.mrf.mxu0
      %1805 = vmatprep.mubr.f32.mxu0 0.0
      %1806 = vmatmul.mubr.f32.gmra.mxu0 %v1636
      %v1807 = vpop.f32.mrf.mxu0
      %v1808 = vadd.f32 %v1623, %v1807
      %v1809 = vpop.f32.mrf.mxu0
      %1810 = vmatprep.mubr.f32.mxu0 0.0
      %1811 = vmatmul.mubr.f32.gmra.mxu0 %v1639
      %v1812 = vpop.f32.mrf.mxu0
      %v1813 = vadd.f32 %v1623, %v1812
      %v1814 = vpop.f32.mrf.mxu0
      %1815 = vmatprep.mubr.f32.mxu0 0.0
      %1816 = vmatmul.mubr.f32.gmra.mxu0 %v1642
      %v1817 = vpop.f32.mrf.mxu0
      %v1818 = vadd.f32 %v1623, %v1817
      %v1819 = vpop.f32.mrf.mxu0
      %1820 = vmatprep.mubr.f32.mxu0 0.0
      %1821 = vmatmul.mubr.f32.gmra.mxu0 %v1645
      %v1822 = vpop.f32.mrf.mxu0
      %v1823 = vadd.f32 %v1623, %v1822
      %v1824 = vpop.f32.mrf.mxu0
      %1825 = vmatprep.mubr.f32.mxu0 0.0
      %1826 = vmatmul.mubr.f32.gmra.mxu0 %v1648
      %v1827 = vpop.f32.mrf.mxu0
      %v1828 = vadd.f32 %v1623, %v1827
      %v1829 = vpop.f32.mrf.mxu0
      %1830 = vmatprep.mubr.f32.mxu0 0.0
      %1831 = vmatmul.mubr.f32.gmra.mxu0 %v1651
      %v1832 = vpop.f32.mrf.mxu0
      %v1833 = vadd.f32 %v1623, %v1832
      %v1834 = vpop.f32.mrf.mxu0
      %1835 = vmatprep.mubr.f32.mxu0 0.0
      %1836 = vmatmul.mubr.f32.gmra.mxu0 %v1654
      %v1837 = vpop.f32.mrf.mxu0
      %v1838 = vadd.f32 %v1623, %v1837
      %v1839 = vpop.f32.mrf.mxu0
      %1840 = vmatprep.mubr.f32.mxu0 0.0
      %1841 = vmatmul.mubr.f32.gmra.mxu0 %v1657
      %v1842 = vpop.f32.mrf.mxu0
      %v1843 = vadd.f32 %v1623, %v1842
      %v1844 = vpop.f32.mrf.mxu0
      %1845 = vmatprep.mubr.f32.mxu0 0.0
      %1846 = vmatmul.mubr.f32.gmra.mxu0 %v1660
      %v1847 = vpop.f32.mrf.mxu0
      %v1848 = vadd.f32 %v1623, %v1847
      %v1849 = vpop.f32.mrf.mxu0
      %1850 = vmatprep.mubr.f32.mxu0 0.0
      %1851 = vmatmul.mubr.f32.gmra.mxu0 %v1663
      %v1852 = vpop.f32.mrf.mxu0
      %v1853 = vadd.f32 %v1623, %v1852
      %v1854 = vpop.f32.mrf.mxu0
      %1855 = vmatprep.mubr.f32.mxu0 0.0
      %1856 = vmatmul.mubr.f32.gmra.mxu0 %v1666
      %v1857 = vpop.f32.mrf.mxu0
      %v1858 = vadd.f32 %v1623, %v1857
      %v1859 = vpop.f32.mrf.mxu0
      %1860 = vmatprep.mubr.f32.mxu0 0.0
      %1861 = vmatmul.mubr.f32.gmra.mxu0 %v1669
      %v1862 = vpop.f32.mrf.mxu0
      %v1863 = vadd.f32 %v1623, %v1862
      %v1864 = vpop.f32.mrf.mxu0
      %1865 = vmatprep.mubr.f32.mxu0 0.0
      %1866 = vmatmul.mubr.f32.gmra.mxu0 %v1672
      %v1867 = vpop.f32.mrf.mxu0
      %v1868 = vadd.f32 %v1623, %v1867
      %v1869 = vpop.f32.mrf.mxu0
      %1870 = vmatprep.mubr.f32.mxu0 0.0
      %1871 = vmatmul.mubr.f32.gmra.mxu0 %v1675
      %v1872 = vpop.f32.mrf.mxu0
      %v1873 = vadd.f32 %v1623, %v1872
      %v1874 = vpop.f32.mrf.mxu0
      %1875 = vmatprep.mubr.f32.mxu0 0.0
      %1876 = vmatmul.mubr.f32.gmra.mxu0 %v1678
      %v1877 = vpop.f32.mrf.mxu0
      %v1878 = vadd.f32 %v1623, %v1877
      %v1879 = vpop.f32.mrf.mxu0
      %1880 = vmatprep.mubr.f32.mxu0 0.0
      %1881 = vmatmul.mubr.f32.gmra.mxu0 %v1681
      %v1882 = vpop.f32.mrf.mxu0
      %v1883 = vadd.f32 %v1623, %v1882
      %v1884 = vpop.f32.mrf.mxu0
      %1885 = vmatprep.mubr.f32.mxu0 0.0
      %1886 = vmatmul.mubr.f32.gmra.mxu0 %v1684
      %v1887 = vpop.f32.mrf.mxu0
      %v1888 = vadd.f32 %v1623, %v1887
      %v1889 = vpop.f32.mrf.mxu0
      %1890 = vmatprep.mubr.f32.mxu0 0.0
      %1891 = vmatmul.mubr.f32.gmra.mxu0 %v1687
      %v1892 = vpop.f32.mrf.mxu0
      %v1893 = vadd.f32 %v1623, %v1892
      %v1894 = vpop.f32.mrf.mxu0
      %1895 = vmatprep.mubr.f32.mxu0 0.0
      %1896 = vmatmul.mubr.f32.gmra.mxu0 %v1690
      %v1897 = vpop.f32.mrf.mxu0
      %v1898 = vadd.f32 %v1623, %v1897
      %v1899 = vpop.f32.mrf.mxu0
      %1900 = vmatprep.mubr.f32.mxu0 0.0
      %1901 = vmatmul.mubr.f32.gmra.mxu0 %v1693
      %v1902 = vpop.f32.mrf.mxu0
      %v1903 = vadd.f32 %v1623, %v1902
      %v1904 = vpop.f32.mrf.mxu0
      %1905 = vmatprep.mubr.f32.mxu0 0.0
      %1906 = vmatmul.mubr.f32.gmra.mxu0 %v1696
      %v1907 = vpop.f32.mrf.mxu0
      %v1908 = vadd.f32 %v1623, %v1907
      %v1909 = vpop.f32.mrf.mxu0
      %1910 = vmatprep.mubr.f32.mxu0 0.0
      %1911 = vmatmul.mubr.f32.gmra.mxu0 %v1699
      %v1912 = vpop.f32.mrf.mxu0
      %v1913 = vadd.f32 %v1623, %v1912
      %v1914 = vpop.f32.mrf.mxu0
      %1915 = vmatprep.mubr.f32.mxu0 0.0
      %1916 = vmatmul.mubr.f32.gmra.mxu0 %v1702
      %v1917 = vpop.f32.mrf.mxu0
      %v1918 = vadd.f32 %v1623, %v1917
      %v1919 = vpop.f32.mrf.mxu0
      %1920 = vmatprep.mubr.f32.mxu0 0.0
      %1921 = vmatmul.mubr.f32.gmra.mxu0 %v1705
      %v1922 = vpop.f32.mrf.mxu0
      %v1923 = vadd.f32 %v1623, %v1922
      %v1924 = vpop.f32.mrf.mxu0
      %1925 = vmatprep.mubr.f32.mxu0 0.0
      %1926 = vmatmul.mubr.f32.gmra.mxu0 %v1708
      %v1927 = vpop.f32.mrf.mxu0
      %v1928 = vadd.f32 %v1623, %v1927
      %v1929 = vpop.f32.mrf.mxu0
      %1930 = vmatprep.mubr.f32.mxu0 0.0
      %1931 = vmatmul.mubr.f32.gmra.mxu0 %v1711
      %v1932 = vpop.f32.mrf.mxu0
      %v1933 = vadd.f32 %v1623, %v1932
      %v1934 = vpop.f32.mrf.mxu0
      %1935 = vmatprep.mubr.f32.mxu0 0.0
      %1936 = vmatmul.mubr.f32.gmra.mxu0 %v1714
      %v1937 = vpop.f32.mrf.mxu0
      %v1938 = vadd.f32 %v1623, %v1937
      %v1939 = vpop.f32.mrf.mxu0
      %1940 = vmatprep.mubr.f32.mxu0 0.0
      %1941 = vmatmul.mubr.f32.gmra.mxu0 %v1717
      %v1942 = vpop.f32.mrf.mxu0
      %v1943 = vadd.f32 %v1623, %v1942
      %v1944 = vpop.f32.mrf.mxu0
      %1945 = vmatprep.mubr.f32.mxu0 0.0
      %1946 = vmatmul.mubr.f32.gmra.mxu0 %v1720
      %v1947 = vpop.f32.mrf.mxu0
      %v1948 = vadd.f32 %v1623, %v1947
      %v1949 = vpop.f32.mrf.mxu0
      %1950 = vdwg.mxu0
      %1951 = vst.msk [vmem:[%s170] sm:$0xff] %vm1580, %v1793
      %1952 = vst.msk [vmem:[%s170 + $0x8] sm:$0xff] %vm1580, %v1798
      %1953 = vst.msk [vmem:[%s170 + $0x10] sm:$0xff] %vm1580, %v1803
      %1954 = vst.msk [vmem:[%s170 + $0x18] sm:$0xff] %vm1580, %v1808
      %1955 = vst.msk [vmem:[%s170 + $0x20] sm:$0xff] %vm1580, %v1813
      %1956 = vst.msk [vmem:[%s170 + $0x28] sm:$0xff] %vm1580, %v1818
      %1957 = vst.msk [vmem:[%s170 + $0x30] sm:$0xff] %vm1580, %v1823
      %1958 = vst.msk [vmem:[%s170 + $0x38] sm:$0xff] %vm1580, %v1828
      %1959 = vst.msk [vmem:[%s170 + $0x40] sm:$0xff] %vm1580, %v1833
      %1960 = vst.msk [vmem:[%s170 + $0x48] sm:$0xff] %vm1580, %v1838
      %1961 = vst.msk [vmem:[%s170 + $0x50] sm:$0xff] %vm1580, %v1843
      %1962 = vst.msk [vmem:[%s170 + $0x58] sm:$0xff] %vm1580, %v1848
      %1963 = vst.msk [vmem:[%s170 + $0x60] sm:$0xff] %vm1580, %v1853
      %1964 = vst.msk [vmem:[%s170 + $0x68] sm:$0xff] %vm1580, %v1858
      %1965 = vst.msk [vmem:[%s170 + $0x70] sm:$0xff] %vm1580, %v1863
      %1966 = vst.msk [vmem:[%s170 + $0x78] sm:$0xff] %vm1580, %v1868
      %1967 = vst.msk [vmem:[%s170 + $0x80] sm:$0xff] %vm1580, %v1873
      %1968 = vst.msk [vmem:[%s170 + $0x88] sm:$0xff] %vm1580, %v1878
      %1969 = vst.msk [vmem:[%s170 + $0x90] sm:$0xff] %vm1580, %v1883
      %1970 = vst.msk [vmem:[%s170 + $0x98] sm:$0xff] %vm1580, %v1888
      %1971 = vst.msk [vmem:[%s170 + $0xa0] sm:$0xff] %vm1580, %v1893
      %1972 = vst.msk [vmem:[%s170 + $0xa8] sm:$0xff] %vm1580, %v1898
      %1973 = vst.msk [vmem:[%s170 + $0xb0] sm:$0xff] %vm1580, %v1903
      %1974 = vst.msk [vmem:[%s170 + $0xb8] sm:$0xff] %vm1580, %v1908
      %1975 = vst.msk [vmem:[%s170 + $0xc0] sm:$0xff] %vm1580, %v1913
      %1976 = vst.msk [vmem:[%s170 + $0xc8] sm:$0xff] %vm1580, %v1918
      %1977 = vst.msk [vmem:[%s170 + $0xd0] sm:$0xff] %vm1580, %v1923
      %1978 = vst.msk [vmem:[%s170 + $0xd8] sm:$0xff] %vm1580, %v1928
      %1979 = vst.msk [vmem:[%s170 + $0xe0] sm:$0xff] %vm1580, %v1933
      %1980 = vst.msk [vmem:[%s170 + $0xe8] sm:$0xff] %vm1580, %v1938
      %1981 = vst.msk [vmem:[%s170 + $0xf0] sm:$0xff] %vm1580, %v1943
      %1982 = vst.msk [vmem:[%s170 + $0xf8] sm:$0xff] %vm1580, %v1948
      %p1983 = scmp.lt.s32.totalorder %s14, 1
      %s1984 = scalar_select %p1983, %s14, 1
      %s1985 = smul.addr %s1984, 32
      %s1986 = smul.addr %s1985, 8
      %s1987 = scalar_lea.vmem %s3, %s1986
      // Predicated region
      $region33: #{residual_block_upsample.2} parent=31 // pred_check
        %p1988 = pneg %p100
      $region34: #{residual_block_upsample.2} parent=31 // pred_check_branch
        %1990 = sbr.rel (%p1988) target = $region36
      $region35: #{residual_block_upsample.2} parent=31 // pred_region
        _
      $region36: #{residual_block_upsample.2} parent=31 // pred_fallthru
        _
    $region32: #{residual_block_upsample.2} parent=5 // pred_fallthru
      _
    %p1991 = scmp.le.s32.totalorder 2, %s9
    // Predicated region
    $region37: #{residual_block_upsample.2} parent=5 // pred_check
      %p1992 = pneg %p1991
    $region38: #{residual_block_upsample.2} parent=5 // pred_check_branch
      %1994 = sbr.rel (%p1992) target = $region40
    $region39: #{residual_block_upsample.2} parent=5 // pred_region
      %s1995 = ssub.s32 %s9, 2
      // Predicated region
      $region41: #{residual_block_upsample.2} parent=39 // pred_check
        %p1996 = pneg %p106
      $region42: #{residual_block_upsample.2} parent=39 // pred_check_branch
        %1998 = sbr.rel (%p1996) target = $region44
      $region43: #{residual_block_upsample.2} parent=39 // pred_region
        %p1999 = scmp.lt.s32.totalorder %s15, 1
        %s2000 = scalar_select %p1999, %s15, 1
        %s2001 = smul.addr %s2000, 32
        %s2002 = smul.addr %s2001, 8
        %s2003 = scalar_lea.vmem %s3, %s2002
      $region44: #{residual_block_upsample.2} parent=39 // pred_fallthru
        _
    $region40: #{residual_block_upsample.2} parent=5 // pred_fallthru
      _
  $region6: #{residual_block_upsample.2} parent=0 // loop_footer
    %s13 = sadd.s32 1, %s9
  $region7: #{residual_block_upsample.2} parent=0 // loop_footer_branch
    %8 = sbr.rel target = $region3
  $region8: #{residual_block_upsample.2} parent=0 // loop_exit
    _

// kernel: residual_block_upsample.3
$region0: #{residual_block_upsample.3}
  #allocation0 [shape = 'u32[]', space=smem, size = 0x4, offset = 0x4, fixed_abs, tag = 'smem constant byte address 0x4 - core index']
  #allocation1 [shape = 'u32[144,128]{1,0:T(1,128)}', space=vmem, size = 0x12000, scoped, tag = 'internal scratch']
  #allocation2 [shape = 'f32[34,34,4]{2,1,0:T(8,128)}', space=vmem, size = 0xaa000, scoped, tag = 'scratch operand']
  %s0 = inlined_call_operand.vmem [shape: f32[2,32,32,8], index: 0, kind: input, shape index: {}]
  %s1 = inlined_call_operand.vmem [shape: f32[36,4], index: 1, kind: input, shape index: {}]
  %s2 = inlined_call_operand.vmem [shape: f32[1,4], index: 2, kind: input, shape index: {}]
  %s3 = inlined_call_operand.vmem [shape: f32[4,4], index: 3, kind: input, shape index: {}]
  %s4 = inlined_call_operand.vmem [shape: f32[1,4], index: 4, kind: input, shape index: {}]
  %s5 = inlined_call_operand.vmem [shape: f32[2,32,32,4], index: 5, kind: output, shape index: {}]
  %s6 = sld [smem:[#allocation0]]
  $region53: #{residual_block_upsample.3} parent=0
    _
  %s8 = ssub.s32 1, %s6
  %s9 = scalar_select 0, %s8, %s6
  loop: start=0, step=1, limit=4
  $region2: #{residual_block_upsample.3} parent=0 // loop_pre_header
    _
  $region3: #{residual_block_upsample.3} parent=0 // loop_header
    %s11 = sphi 0, %s15
    %p12 = scmp.ge.s32.totalorder %s11, 4
    %s21 = sphi 0, %s23
    %s24 = sphi 0, %s21
    %s25 = sphi 0, %s24
    %s41 = sphi 0, %s25
    %s45 = sphi 0, %s45
    %s47 = sphi 0, %s45
    %s48 = sphi 0, %s47
    %s62 = sphi 0, %s48
    %s66 = sphi 0, %s66
    %s68 = sphi 0, %s66
    %s69 = sphi 0, %s68
    %s83 = sphi 0, %s69
    %s87 = sphi 0, %s87
    %s89 = sphi 0, %s87
    %s90 = sphi 0, %s89
    %s104 = sphi 0, %s90
    %s108 = sphi 0, %s108
    %s110 = sphi 0, %s108
    %s111 = sphi 0, %s110
    %s125 = sphi 0, %s111
    %s131 = sphi 0, %s133
    %s134 = sphi 0, %s131
    %s135 = sphi 0, %s134
    %s151 = sphi 0, %s135
  $region4: #{residual_block_upsample.3} parent=0 // loop_header_branch
    %14 = sbr.rel (%p12) target = $region8
  $region5: #{residual_block_upsample.3} parent=0 // loop_body
    %s16 = ssub.s32 %s11, 1
    %s17 = ssub.s32 %s11, 2
    %s18 = sadd.s32 %s11, 1
    %s19 = ssub.s32 %s11, %s18
    %p20 = scmp.eq.s32.totalorder %s19, 0
    %s22 = sadd.s32 %s21, 1
    %s23 = scalar_select %p20, %s21, %s22
    %p26 = pneg %p20
    %p27 = scmp.eq.s32.totalorder %s11, 1
    %p28 = por %p26, %p27
    %p29 = scmp.ne.s32.totalorder %s21, %s24
    %p30 = scmp.eq.s32.totalorder %s11, 0
    %p31 = por %p29, %p30
    %p32 = scmp.ne.s32.totalorder %s21, %s24
    %p33 = scmp.eq.s32.totalorder %s16, 1
    %p34 = por %p32, %p33
    %p35 = scmp.ne.s32.totalorder %s24, %s25
    %p36 = scmp.eq.s32.totalorder %s16, 0
    %p37 = por %p35, %p36
    %p38 = scmp.ne.s32.totalorder %s24, %s25
    %p39 = scmp.eq.s32.totalorder %s17, 1
    %p40 = por %p38, %p39
    %p42 = scmp.ne.s32.totalorder %s25, %s41
    %p43 = scmp.eq.s32.totalorder %s17, 0
    %p44 = por %p42, %p43
    %s46 = sadd.s32 %s45, 1
    %p49 = scmp.eq.s32.totalorder %s11, 1
    %p50 = scmp.ne.s32.totalorder %s45, %s47
    %p51 = scmp.eq.s32.totalorder %s11, 0
    %p52 = por %p50, %p51
    %p53 = scmp.ne.s32.totalorder %s45, %s47
    %p54 = scmp.eq.s32.totalorder %s16, 1
    %p55 = por %p53, %p54
    %p56 = scmp.ne.s32.totalorder %s47, %s48
    %p57 = scmp.eq.s32.totalorder %s16, 0
    %p58 = por %p56, %p57
    %p59 = scmp.ne.s32.totalorder %s47, %s48
    %p60 = scmp.eq.s32.totalorder %s17, 1
    %p61 = por %p59, %p60
    %p63 = scmp.ne.s32.totalorder %s48, %s62
    %p64 = scmp.eq.s32.totalorder %s17, 0
    %p65 = por %p63, %p64
    %s67 = sadd.s32 %s66, 1
    %p70 = scmp.eq.s32.totalorder %s11, 1
    %p71 = scmp.ne.s32.totalorder %s66, %s68
    %p72 = scmp.eq.s32.totalorder %s11, 0
    %p73 = por %p71, %p72
    %p74 = scmp.ne.s32.totalorder %s66, %s68
    %p75 = scmp.eq.s32.totalorder %s16, 1
    %p76 = por %p74, %p75
    %p77 = scmp.ne.s32.totalorder %s68, %s69
    %p78 = scmp.eq.s32.totalorder %s16, 0
    %p79 = por %p77, %p78
    %p80 = scmp.ne.s32.totalorder %s68, %s69
    %p81 = scmp.eq.s32.totalorder %s17, 1
    %p82 = por %p80, %p81
    %p84 = scmp.ne.s32.totalorder %s69, %s83
    %p85 = scmp.eq.s32.totalorder %s17, 0
    %p86 = por %p84, %p85
    %s88 = sadd.s32 %s87, 1
    %p91 = scmp.eq.s32.totalorder %s11, 1
    %p92 = scmp.ne.s32.totalorder %s87, %s89
    %p93 = scmp.eq.s32.totalorder %s11, 0
    %p94 = por %p92, %p93
    %p95 = scmp.ne.s32.totalorder %s87, %s89
    %p96 = scmp.eq.s32.totalorder %s16, 1
    %p97 = por %p95, %p96
    %p98 = scmp.ne.s32.totalorder %s89, %s90
    %p99 = scmp.eq.s32.totalorder %s16, 0
    %p100 = por %p98, %p99
    %p101 = scmp.ne.s32.totalorder %s89, %s90
    %p102 = scmp.eq.s32.totalorder %s17, 1
    %p103 = por %p101, %p102
    %p105 = scmp.ne.s32.totalorder %s90, %s104
    %p106 = scmp.eq.s32.totalorder %s17, 0
    %p107 = por %p105, %p106
    %s109 = sadd.s32 %s108, 1
    %p112 = scmp.eq.s32.totalorder %s11, 1
    %p113 = scmp.ne.s32.totalorder %s108, %s110
    %p114 = scmp.eq.s32.totalorder %s11, 0
    %p115 = por %p113, %p114
    %p116 = scmp.ne.s32.totalorder %s108, %s110
    %p117 = scmp.eq.s32.totalorder %s16, 1
    %p118 = por %p116, %p117
    %p119 = scmp.ne.s32.totalorder %s110, %s111
    %p120 = scmp.eq.s32.totalorder %s16, 0
    %p121 = por %p119, %p120
    %p122 = scmp.ne.s32.totalorder %s110, %s111
    %p123 = scmp.eq.s32.totalorder %s17, 1
    %p124 = por %p122, %p123
    %p126 = scmp.ne.s32.totalorder %s111, %s125
    %p127 = scmp.eq.s32.totalorder %s17, 0
    %p128 = por %p126, %p127
    %s129 = ssub.s32 %s11, %s18
    %p130 = scmp.eq.s32.totalorder %s129, 0
    %s132 = sadd.s32 %s131, 1
    %s133 = scalar_select %p130, %s131, %s132
    %p136 = pneg %p130
    %p137 = scmp.eq.s32.totalorder %s11, 1
    %p138 = por %p136, %p137
    %p139 = scmp.ne.s32.totalorder %s131, %s134
    %p140 = scmp.eq.s32.totalorder %s11, 0
    %p141 = por %p139, %p140
    %p142 = scmp.ne.s32.totalorder %s131, %s134
    %p143 = scmp.eq.s32.totalorder %s16, 1
    %p144 = por %p142, %p143
    %p145 = scmp.ne.s32.totalorder %s134, %s135
    %p146 = scmp.eq.s32.totalorder %s16, 0
    %p147 = por %p145, %p146
    %p148 = scmp.ne.s32.totalorder %s134, %s135
    %p149 = scmp.eq.s32.totalorder %s17, 1
    %p150 = por %p148, %p149
    %p152 = scmp.ne.s32.totalorder %s135, %s151
    %p153 = scmp.eq.s32.totalorder %s17, 0
    %p154 = por %p152, %p153
    %p155 = scmp.le.s32.totalorder 1, %s11
    %p156 = scmp.lt.s32.totalorder %s11, 3
    %p157 = pnand %p155, %p156
    %p158 = pneg %p157
    // Predicated region
    $region9: #{residual_block_upsample.3} parent=5 // pred_check
      _
    $region10: #{residual_block_upsample.3} parent=5 // pred_check_branch
      %160 = sbr.rel (%p157) target = $region12
    $region11: #{residual_block_upsample.3} parent=5 // pred_region
      %s161 = ssub.s32 %s11, 1
      // Predicated region
      $region13: #{residual_block_upsample.3} parent=11 // pred_check
        %p162 = pneg %p58
      $region14: #{residual_block_upsample.3} parent=11 // pred_check_branch
        %164 = sbr.rel (%p162) target = $region16
      $region15: #{residual_block_upsample.3} parent=11 // pred_region
        _
      $region16: #{residual_block_upsample.3} parent=11 // pred_fallthru
        _
      // Predicated region
      $region17: #{residual_block_upsample.3} parent=11 // pred_check
        %p165 = pneg %p79
      $region18: #{residual_block_upsample.3} parent=11 // pred_check_branch
        %167 = sbr.rel (%p165) target = $region20
      $region19: #{residual_block_upsample.3} parent=11 // pred_region
        _
      $region20: #{residual_block_upsample.3} parent=11 // pred_fallthru
        _
      // Predicated region
      $region21: #{residual_block_upsample.3} parent=11 // pred_check
        %p168 = pneg %p100
      $region22: #{residual_block_upsample.3} parent=11 // pred_check_branch
        %170 = sbr.rel (%p168) target = $region24
      $region23: #{residual_block_upsample.3} parent=11 // pred_region
        _
      $region24: #{residual_block_upsample.3} parent=11 // pred_fallthru
        _
      // Predicated region
      $region25: #{residual_block_upsample.3} parent=11 // pred_check
        %p171 = pneg %p121
      $region26: #{residual_block_upsample.3} parent=11 // pred_check_branch
        %173 = sbr.rel (%p171) target = $region28
      $region27: #{residual_block_upsample.3} parent=11 // pred_region
        _
      $region28: #{residual_block_upsample.3} parent=11 // pred_fallthru
        _
    $region12: #{residual_block_upsample.3} parent=5 // pred_fallthru
      _
    %p174 = scmp.lt.s32.totalorder %s11, 2
    // Predicated region
    $region29: #{residual_block_upsample.3} parent=5 // pred_check
      %p175 = pneg %p174
    $region30: #{residual_block_upsample.3} parent=5 // pred_check_branch
      %177 = sbr.rel (%p175) target = $region32
    $region31: #{residual_block_upsample.3} parent=5 // pred_region
      // Predicated region
      $region33: #{residual_block_upsample.3} parent=31 // pred_check
        %p178 = pneg %p31
      $region34: #{residual_block_upsample.3} parent=31 // pred_check_branch
        %180 = sbr.rel (%p178) target = $region36
      $region35: #{residual_block_upsample.3} parent=31 // pred_region
        %p181 = scmp.lt.s32.totalorder %s11, 1
        %s182 = scalar_select %p181, %s11, 1
        %s183 = smul.addr %s182, 128
        %s184 = smul.addr %s183, 8
        %s185 = scalar_lea.vmem %s0, %s184
      $region36: #{residual_block_upsample.3} parent=31 // pred_fallthru
        _
    $region32: #{residual_block_upsample.3} parent=5 // pred_fallthru
      _
    %p186 = scmp.le.s32.totalorder 1, %s11
    %p187 = scmp.lt.s32.totalorder %s11, 3
    %p188 = pnand %p186, %p187
    %p189 = pneg %p188
    // Predicated region
    $region37: #{residual_block_upsample.3} parent=5 // pred_check
      _
    $region38: #{residual_block_upsample.3} parent=5 // pred_check_branch
      %191 = sbr.rel (%p188) target = $region40
    $region39: #{residual_block_upsample.3} parent=5 // pred_region
      %s192 = ssub.s32 %s11, 1
      %p193 = scmp.lt.s32.totalorder %s16, 1
      %s194 = scalar_select %p193, %s16, 1
      %s195 = smul.addr %s194, 128
      %s196 = smul.addr %s195, 8
      %s197 = scalar_lea.vmem %s0, %s196
      %p198 = pneg %p37
      %p199 = pneg %p34
      %p200 = pneg %p58
      %p201 = pneg %p55
      %p202 = pneg %p79
      %p203 = pneg %p76
      %p204 = pneg %p100
      %p205 = pneg %p97
      %p206 = pneg %p121
      %p207 = pneg %p118
      %p208 = pneg %p147
      %p209 = pneg %p144
      %p210 = scmp.lt.s32.totalorder %s16, 1
      %s211 = scalar_select %p210, %s16, 1
      %s212 = smul.addr %s211, 128
      %s213 = smul.addr %s212, 8
      %s214 = scalar_lea.vmem %s5, %s213
      %p215 = scmp.lt.s32.totalorder %s16, 1
      %s216 = scalar_select %p215, %s16, 1
      %s217 = smul.addr %s216, 128
      %s218 = smul.addr %s217, 8
      %s219 = scalar_lea.vmem %s0, %s218
      %p220 = scmp.lt.s32.totalorder %s16, 1
      %s221 = scalar_select %p220, %s16, 1
      %s222 = smul.addr %s221, 128
      %s223 = smul.addr %s222, 8
      %s224 = scalar_lea.vmem %s5, %s223
      %v225 = vld [vmem:[%s219] sm:$0xff]
      %v226 = vld [vmem:[%s219 + $0x8] sm:$0xff]
      %v227 = vld [vmem:[%s219 + $0x10] sm:$0xff]
      %v228 = vld [vmem:[%s219 + $0x18] sm:$0xff]
      %v229 = vld [vmem:[%s219 + $0x20] sm:$0xff]
      %v230 = vld [vmem:[%s219 + $0x28] sm:$0xff]
      %v231 = vld [vmem:[%s219 + $0x30] sm:$0xff]
      %v232 = vld [vmem:[%s219 + $0x38] sm:$0xff]
      %v233 = vld [vmem:[%s219 + $0x40] sm:$0xff]
      %v234 = vld [vmem:[%s219 + $0x48] sm:$0xff]
      %v235 = vld [vmem:[%s219 + $0x50] sm:$0xff]
      %v236 = vld [vmem:[%s219 + $0x58] sm:$0xff]
      %v237 = vld [vmem:[%s219 + $0x60] sm:$0xff]
      %v238 = vld [vmem:[%s219 + $0x68] sm:$0xff]
      %v239 = vld [vmem:[%s219 + $0x70] sm:$0xff]
      %v240 = vld [vmem:[%s219 + $0x78] sm:$0xff]
      %v241 = vld [vmem:[%s219 + $0x80] sm:$0xff]
      %v242 = vld [vmem:[%s219 + $0x88] sm:$0xff]
      %v243 = vld [vmem:[%s219 + $0x90] sm:$0xff]
      %v244 = vld [vmem:[%s219 + $0x98] sm:$0xff]
      %v245 = vld [vmem:[%s219 + $0xa0] sm:$0xff]
      %v246 = vld [vmem:[%s219 + $0xa8] sm:$0xff]
      %v247 = vld [vmem:[%s219 + $0xb0] sm:$0xff]
      %v248 = vld [vmem:[%s219 + $0xb8] sm:$0xff]
      %v249 = vld [vmem:[%s219 + $0xc0] sm:$0xff]
      %v250 = vld [vmem:[%s219 + $0xc8] sm:$0xff]
      %v251 = vld [vmem:[%s219 + $0xd0] sm:$0xff]
      %v252 = vld [vmem:[%s219 + $0xd8] sm:$0xff]
      %v253 = vld [vmem:[%s219 + $0xe0] sm:$0xff]
      %v254 = vld [vmem:[%s219 + $0xe8] sm:$0xff]
      %v255 = vld [vmem:[%s219 + $0xf0] sm:$0xff]
      %v256 = vld [vmem:[%s219 + $0xf8] sm:$0xff]
      %v257 = vld [vmem:[%s219 + $0x100] sm:$0xff]
      %v258 = vld [vmem:[%s219 + $0x108] sm:$0xff]
      %v259 = vld [vmem:[%s219 + $0x110] sm:$0xff]
      %v260 = vld [vmem:[%s219 + $0x118] sm:$0xff]
      %v261 = vld [vmem:[%s219 + $0x120] sm:$0xff]
      %v262 = vld [vmem:[%s219 + $0x128] sm:$0xff]
      %v263 = vld [vmem:[%s219 + $0x130] sm:$0xff]
      %v264 = vld [vmem:[%s219 + $0x138] sm:$0xff]
      %v265 = vld [vmem:[%s219 + $0x140] sm:$0xff]
      %v266 = vld [vmem:[%s219 + $0x148] sm:$0xff]
      %v267 = vld [vmem:[%s219 + $0x150] sm:$0xff]
      %v268 = vld [vmem:[%s219 + $0x158] sm:$0xff]
      %v269 = vld [vmem:[%s219 + $0x160] sm:$0xff]
      %v270 = vld [vmem:[%s219 + $0x168] sm:$0xff]
      %v271 = vld [vmem:[%s219 + $0x170] sm:$0xff]
      %v272 = vld [vmem:[%s219 + $0x178] sm:$0xff]
      %v273 = vld [vmem:[%s219 + $0x180] sm:$0xff]
      %v274 = vld [vmem:[%s219 + $0x188] sm:$0xff]
      %v275 = vld [vmem:[%s219 + $0x190] sm:$0xff]
      %v276 = vld [vmem:[%s219 + $0x198] sm:$0xff]
      %v277 = vld [vmem:[%s219 + $0x1a0] sm:$0xff]
      %v278 = vld [vmem:[%s219 + $0x1a8] sm:$0xff]
      %v279 = vld [vmem:[%s219 + $0x1b0] sm:$0xff]
      %v280 = vld [vmem:[%s219 + $0x1b8] sm:$0xff]
      %v281 = vld [vmem:[%s219 + $0x1c0] sm:$0xff]
      %v282 = vld [vmem:[%s219 + $0x1c8] sm:$0xff]
      %v283 = vld [vmem:[%s219 + $0x1d0] sm:$0xff]
      %v284 = vld [vmem:[%s219 + $0x1d8] sm:$0xff]
      %v285 = vld [vmem:[%s219 + $0x1e0] sm:$0xff]
      %v286 = vld [vmem:[%s219 + $0x1e8] sm:$0xff]
      %v287 = vld [vmem:[%s219 + $0x1f0] sm:$0xff]
      %v288 = vld [vmem:[%s219 + $0x1f8] sm:$0xff]
      %v289 = vld [vmem:[%s219 + $0x200] sm:$0xff]
      %v290 = vld [vmem:[%s219 + $0x208] sm:$0xff]
      %v291 = vld [vmem:[%s219 + $0x210] sm:$0xff]
      %v292 = vld [vmem:[%s219 + $0x218] sm:$0xff]
      %v293 = vld [vmem:[%s219 + $0x220] sm:$0xff]
      %v294 = vld [vmem:[%s219 + $0x228] sm:$0xff]
      %v295 = vld [vmem:[%s219 + $0x230] sm:$0xff]
      %v296 = vld [vmem:[%s219 + $0x238] sm:$0xff]
      %v297 = vld [vmem:[%s219 + $0x240] sm:$0xff]
      %v298 = vld [vmem:[%s219 + $0x248] sm:$0xff]
      %v299 = vld [vmem:[%s219 + $0x250] sm:$0xff]
      %v300 = vld [vmem:[%s219 + $0x258] sm:$0xff]
      %v301 = vld [vmem:[%s219 + $0x260] sm:$0xff]
      %v302 = vld [vmem:[%s219 + $0x268] sm:$0xff]
      %v303 = vld [vmem:[%s219 + $0x270] sm:$0xff]
      %v304 = vld [vmem:[%s219 + $0x278] sm:$0xff]
      %v305 = vld [vmem:[%s219 + $0x280] sm:$0xff]
      %v306 = vld [vmem:[%s219 + $0x288] sm:$0xff]
      %v307 = vld [vmem:[%s219 + $0x290] sm:$0xff]
      %v308 = vld [vmem:[%s219 + $0x298] sm:$0xff]
      %v309 = vld [vmem:[%s219 + $0x2a0] sm:$0xff]
      %v310 = vld [vmem:[%s219 + $0x2a8] sm:$0xff]
      %v311 = vld [vmem:[%s219 + $0x2b0] sm:$0xff]
      %v312 = vld [vmem:[%s219 + $0x2b8] sm:$0xff]
      %v313 = vld [vmem:[%s219 + $0x2c0] sm:$0xff]
      %v314 = vld [vmem:[%s219 + $0x2c8] sm:$0xff]
      %v315 = vld [vmem:[%s219 + $0x2d0] sm:$0xff]
      %v316 = vld [vmem:[%s219 + $0x2d8] sm:$0xff]
      %v317 = vld [vmem:[%s219 + $0x2e0] sm:$0xff]
      %v318 = vld [vmem:[%s219 + $0x2e8] sm:$0xff]
      %v319 = vld [vmem:[%s219 + $0x2f0] sm:$0xff]
      %v320 = vld [vmem:[%s219 + $0x2f8] sm:$0xff]
      %v321 = vld [vmem:[%s219 + $0x300] sm:$0xff]
      %v322 = vld [vmem:[%s219 + $0x308] sm:$0xff]
      %v323 = vld [vmem:[%s219 + $0x310] sm:$0xff]
      %v324 = vld [vmem:[%s219 + $0x318] sm:$0xff]
      %v325 = vld [vmem:[%s219 + $0x320] sm:$0xff]
      %v326 = vld [vmem:[%s219 + $0x328] sm:$0xff]
      %v327 = vld [vmem:[%s219 + $0x330] sm:$0xff]
      %v328 = vld [vmem:[%s219 + $0x338] sm:$0xff]
      %v329 = vld [vmem:[%s219 + $0x340] sm:$0xff]
      %v330 = vld [vmem:[%s219 + $0x348] sm:$0xff]
      %v331 = vld [vmem:[%s219 + $0x350] sm:$0xff]
      %v332 = vld [vmem:[%s219 + $0x358] sm:$0xff]
      %v333 = vld [vmem:[%s219 + $0x360] sm:$0xff]
      %v334 = vld [vmem:[%s219 + $0x368] sm:$0xff]
      %v335 = vld [vmem:[%s219 + $0x370] sm:$0xff]
      %v336 = vld [vmem:[%s219 + $0x378] sm:$0xff]
      %v337 = vld [vmem:[%s219 + $0x380] sm:$0xff]
      %v338 = vld [vmem:[%s219 + $0x388] sm:$0xff]
      %v339 = vld [vmem:[%s219 + $0x390] sm:$0xff]
      %v340 = vld [vmem:[%s219 + $0x398] sm:$0xff]
      %v341 = vld [vmem:[%s219 + $0x3a0] sm:$0xff]
      %v342 = vld [vmem:[%s219 + $0x3a8] sm:$0xff]
      %v343 = vld [vmem:[%s219 + $0x3b0] sm:$0xff]
      %v344 = vld [vmem:[%s219 + $0x3b8] sm:$0xff]
      %v345 = vld [vmem:[%s219 + $0x3c0] sm:$0xff]
      %v346 = vld [vmem:[%s219 + $0x3c8] sm:$0xff]
      %v347 = vld [vmem:[%s219 + $0x3d0] sm:$0xff]
      %v348 = vld [vmem:[%s219 + $0x3d8] sm:$0xff]
      %v349 = vld [vmem:[%s219 + $0x3e0] sm:$0xff]
      %v350 = vld [vmem:[%s219 + $0x3e8] sm:$0xff]
      %v351 = vld [vmem:[%s219 + $0x3f0] sm:$0xff]
      %v352 = vld [vmem:[%s219 + $0x3f8] sm:$0xff]
      %vm353 = vcmp.gt.f32.partialorder %v225, 0.0
      %vm354 = vcmp.gt.f32.partialorder %v226, 0.0
      %vm355 = vcmp.gt.f32.partialorder %v227, 0.0
      %vm356 = vcmp.gt.f32.partialorder %v228, 0.0
      %vm357 = vcmp.gt.f32.partialorder %v229, 0.0
      %vm358 = vcmp.gt.f32.partialorder %v230, 0.0
      %vm359 = vcmp.gt.f32.partialorder %v231, 0.0
      %vm360 = vcmp.gt.f32.partialorder %v232, 0.0
      %vm361 = vcmp.gt.f32.partialorder %v233, 0.0
      %vm362 = vcmp.gt.f32.partialorder %v234, 0.0
      %vm363 = vcmp.gt.f32.partialorder %v235, 0.0
      %vm364 = vcmp.gt.f32.partialorder %v236, 0.0
      %vm365 = vcmp.gt.f32.partialorder %v237, 0.0
      %vm366 = vcmp.gt.f32.partialorder %v238, 0.0
      %vm367 = vcmp.gt.f32.partialorder %v239, 0.0
      %vm368 = vcmp.gt.f32.partialorder %v240, 0.0
      %vm369 = vcmp.gt.f32.partialorder %v241, 0.0
      %vm370 = vcmp.gt.f32.partialorder %v242, 0.0
      %vm371 = vcmp.gt.f32.partialorder %v243, 0.0
      %vm372 = vcmp.gt.f32.partialorder %v244, 0.0
      %vm373 = vcmp.gt.f32.partialorder %v245, 0.0
      %vm374 = vcmp.gt.f32.partialorder %v246, 0.0
      %vm375 = vcmp.gt.f32.partialorder %v247, 0.0
      %vm376 = vcmp.gt.f32.partialorder %v248, 0.0
      %vm377 = vcmp.gt.f32.partialorder %v249, 0.0
      %vm378 = vcmp.gt.f32.partialorder %v250, 0.0
      %vm379 = vcmp.gt.f32.partialorder %v251, 0.0
      %vm380 = vcmp.gt.f32.partialorder %v252, 0.0
      %vm381 = vcmp.gt.f32.partialorder %v253, 0.0
      %vm382 = vcmp.gt.f32.partialorder %v254, 0.0
      %vm383 = vcmp.gt.f32.partialorder %v255, 0.0
      %vm384 = vcmp.gt.f32.partialorder %v256, 0.0
      %vm385 = vcmp.gt.f32.partialorder %v257, 0.0
      %vm386 = vcmp.gt.f32.partialorder %v258, 0.0
      %vm387 = vcmp.gt.f32.partialorder %v259, 0.0
      %vm388 = vcmp.gt.f32.partialorder %v260, 0.0
      %vm389 = vcmp.gt.f32.partialorder %v261, 0.0
      %vm390 = vcmp.gt.f32.partialorder %v262, 0.0
      %vm391 = vcmp.gt.f32.partialorder %v263, 0.0
      %vm392 = vcmp.gt.f32.partialorder %v264, 0.0
      %vm393 = vcmp.gt.f32.partialorder %v265, 0.0
      %vm394 = vcmp.gt.f32.partialorder %v266, 0.0
      %vm395 = vcmp.gt.f32.partialorder %v267, 0.0
      %vm396 = vcmp.gt.f32.partialorder %v268, 0.0
      %vm397 = vcmp.gt.f32.partialorder %v269, 0.0
      %vm398 = vcmp.gt.f32.partialorder %v270, 0.0
      %vm399 = vcmp.gt.f32.partialorder %v271, 0.0
      %vm400 = vcmp.gt.f32.partialorder %v272, 0.0
      %vm401 = vcmp.gt.f32.partialorder %v273, 0.0
      %vm402 = vcmp.gt.f32.partialorder %v274, 0.0
      %vm403 = vcmp.gt.f32.partialorder %v275, 0.0
      %vm404 = vcmp.gt.f32.partialorder %v276, 0.0
      %vm405 = vcmp.gt.f32.partialorder %v277, 0.0
      %vm406 = vcmp.gt.f32.partialorder %v278, 0.0
      %vm407 = vcmp.gt.f32.partialorder %v279, 0.0
      %vm408 = vcmp.gt.f32.partialorder %v280, 0.0
      %vm409 = vcmp.gt.f32.partialorder %v281, 0.0
      %vm410 = vcmp.gt.f32.partialorder %v282, 0.0
      %vm411 = vcmp.gt.f32.partialorder %v283, 0.0
      %vm412 = vcmp.gt.f32.partialorder %v284, 0.0
      %vm413 = vcmp.gt.f32.partialorder %v285, 0.0
      %vm414 = vcmp.gt.f32.partialorder %v286, 0.0
      %vm415 = vcmp.gt.f32.partialorder %v287, 0.0
      %vm416 = vcmp.gt.f32.partialorder %v288, 0.0
      %vm417 = vcmp.gt.f32.partialorder %v289, 0.0
      %vm418 = vcmp.gt.f32.partialorder %v290, 0.0
      %vm419 = vcmp.gt.f32.partialorder %v291, 0.0
      %vm420 = vcmp.gt.f32.partialorder %v292, 0.0
      %vm421 = vcmp.gt.f32.partialorder %v293, 0.0
      %vm422 = vcmp.gt.f32.partialorder %v294, 0.0
      %vm423 = vcmp.gt.f32.partialorder %v295, 0.0
      %vm424 = vcmp.gt.f32.partialorder %v296, 0.0
      %vm425 = vcmp.gt.f32.partialorder %v297, 0.0
      %vm426 = vcmp.gt.f32.partialorder %v298, 0.0
      %vm427 = vcmp.gt.f32.partialorder %v299, 0.0
      %vm428 = vcmp.gt.f32.partialorder %v300, 0.0
      %vm429 = vcmp.gt.f32.partialorder %v301, 0.0
      %vm430 = vcmp.gt.f32.partialorder %v302, 0.0
      %vm431 = vcmp.gt.f32.partialorder %v303, 0.0
      %vm432 = vcmp.gt.f32.partialorder %v304, 0.0
      %vm433 = vcmp.gt.f32.partialorder %v305, 0.0
      %vm434 = vcmp.gt.f32.partialorder %v306, 0.0
      %vm435 = vcmp.gt.f32.partialorder %v307, 0.0
      %vm436 = vcmp.gt.f32.partialorder %v308, 0.0
      %vm437 = vcmp.gt.f32.partialorder %v309, 0.0
      %vm438 = vcmp.gt.f32.partialorder %v310, 0.0
      %vm439 = vcmp.gt.f32.partialorder %v311, 0.0
      %vm440 = vcmp.gt.f32.partialorder %v312, 0.0
      %vm441 = vcmp.gt.f32.partialorder %v313, 0.0
      %vm442 = vcmp.gt.f32.partialorder %v314, 0.0
      %vm443 = vcmp.gt.f32.partialorder %v315, 0.0
      %vm444 = vcmp.gt.f32.partialorder %v316, 0.0
      %vm445 = vcmp.gt.f32.partialorder %v317, 0.0
      %vm446 = vcmp.gt.f32.partialorder %v318, 0.0
      %vm447 = vcmp.gt.f32.partialorder %v319, 0.0
      %vm448 = vcmp.gt.f32.partialorder %v320, 0.0
      %vm449 = vcmp.gt.f32.partialorder %v321, 0.0
      %vm450 = vcmp.gt.f32.partialorder %v322, 0.0
      %vm451 = vcmp.gt.f32.partialorder %v323, 0.0
      %vm452 = vcmp.gt.f32.partialorder %v324, 0.0
      %vm453 = vcmp.gt.f32.partialorder %v325, 0.0
      %vm454 = vcmp.gt.f32.partialorder %v326, 0.0
      %vm455 = vcmp.gt.f32.partialorder %v327, 0.0
      %vm456 = vcmp.gt.f32.partialorder %v328, 0.0
      %vm457 = vcmp.gt.f32.partialorder %v329, 0.0
      %vm458 = vcmp.gt.f32.partialorder %v330, 0.0
      %vm459 = vcmp.gt.f32.partialorder %v331, 0.0
      %vm460 = vcmp.gt.f32.partialorder %v332, 0.0
      %vm461 = vcmp.gt.f32.partialorder %v333, 0.0
      %vm462 = vcmp.gt.f32.partialorder %v334, 0.0
      %vm463 = vcmp.gt.f32.partialorder %v335, 0.0
      %vm464 = vcmp.gt.f32.partialorder %v336, 0.0
      %vm465 = vcmp.gt.f32.partialorder %v337, 0.0
      %vm466 = vcmp.gt.f32.partialorder %v338, 0.0
      %vm467 = vcmp.gt.f32.partialorder %v339, 0.0
      %vm468 = vcmp.gt.f32.partialorder %v340, 0.0
      %vm469 = vcmp.gt.f32.partialorder %v341, 0.0
      %vm470 = vcmp.gt.f32.partialorder %v342, 0.0
      %vm471 = vcmp.gt.f32.partialorder %v343, 0.0
      %vm472 = vcmp.gt.f32.partialorder %v344, 0.0
      %vm473 = vcmp.gt.f32.partialorder %v345, 0.0
      %vm474 = vcmp.gt.f32.partialorder %v346, 0.0
      %vm475 = vcmp.gt.f32.partialorder %v347, 0.0
      %vm476 = vcmp.gt.f32.partialorder %v348, 0.0
      %vm477 = vcmp.gt.f32.partialorder %v349, 0.0
      %vm478 = vcmp.gt.f32.partialorder %v350, 0.0
      %vm479 = vcmp.gt.f32.partialorder %v351, 0.0
      %vm480 = vcmp.gt.f32.partialorder %v352, 0.0
      %v481 = vmul.f32 %v225, 0.01
      %v482 = vmul.f32 %v226, 0.01
      %v483 = vmul.f32 %v227, 0.01
      %v484 = vmul.f32 %v228, 0.01
      %v485 = vmul.f32 %v229, 0.01
      %v486 = vmul.f32 %v230, 0.01
      %v487 = vmul.f32 %v231, 0.01
      %v488 = vmul.f32 %v232, 0.01
      %v489 = vmul.f32 %v233, 0.01
      %v490 = vmul.f32 %v234, 0.01
      %v491 = vmul.f32 %v235, 0.01
      %v492 = vmul.f32 %v236, 0.01
      %v493 = vmul.f32 %v237, 0.01
      %v494 = vmul.f32 %v238, 0.01
      %v495 = vmul.f32 %v239, 0.01
      %v496 = vmul.f32 %v240, 0.01
      %v497 = vmul.f32 %v241, 0.01
      %v498 = vmul.f32 %v242, 0.01
      %v499 = vmul.f32 %v243, 0.01
      %v500 = vmul.f32 %v244, 0.01
      %v501 = vmul.f32 %v245, 0.01
      %v502 = vmul.f32 %v246, 0.01
      %v503 = vmul.f32 %v247, 0.01
      %v504 = vmul.f32 %v248, 0.01
      %v505 = vmul.f32 %v249, 0.01
      %v506 = vmul.f32 %v250, 0.01
      %v507 = vmul.f32 %v251, 0.01
      %v508 = vmul.f32 %v252, 0.01
      %v509 = vmul.f32 %v253, 0.01
      %v510 = vmul.f32 %v254, 0.01
      %v511 = vmul.f32 %v255, 0.01
      %v512 = vmul.f32 %v256, 0.01
      %v513 = vmul.f32 %v257, 0.01
      %v514 = vmul.f32 %v258, 0.01
      %v515 = vmul.f32 %v259, 0.01
      %v516 = vmul.f32 %v260, 0.01
      %v517 = vmul.f32 %v261, 0.01
      %v518 = vmul.f32 %v262, 0.01
      %v519 = vmul.f32 %v263, 0.01
      %v520 = vmul.f32 %v264, 0.01
      %v521 = vmul.f32 %v265, 0.01
      %v522 = vmul.f32 %v266, 0.01
      %v523 = vmul.f32 %v267, 0.01
      %v524 = vmul.f32 %v268, 0.01
      %v525 = vmul.f32 %v269, 0.01
      %v526 = vmul.f32 %v270, 0.01
      %v527 = vmul.f32 %v271, 0.01
      %v528 = vmul.f32 %v272, 0.01
      %v529 = vmul.f32 %v273, 0.01
      %v530 = vmul.f32 %v274, 0.01
      %v531 = vmul.f32 %v275, 0.01
      %v532 = vmul.f32 %v276, 0.01
      %v533 = vmul.f32 %v277, 0.01
      %v534 = vmul.f32 %v278, 0.01
      %v535 = vmul.f32 %v279, 0.01
      %v536 = vmul.f32 %v280, 0.01
      %v537 = vmul.f32 %v281, 0.01
      %v538 = vmul.f32 %v282, 0.01
      %v539 = vmul.f32 %v283, 0.01
      %v540 = vmul.f32 %v284, 0.01
      %v541 = vmul.f32 %v285, 0.01
      %v542 = vmul.f32 %v286, 0.01
      %v543 = vmul.f32 %v287, 0.01
      %v544 = vmul.f32 %v288, 0.01
      %v545 = vmul.f32 %v289, 0.01
      %v546 = vmul.f32 %v290, 0.01
      %v547 = vmul.f32 %v291, 0.01
      %v548 = vmul.f32 %v292, 0.01
      %v549 = vmul.f32 %v293, 0.01
      %v550 = vmul.f32 %v294, 0.01
      %v551 = vmul.f32 %v295, 0.01
      %v552 = vmul.f32 %v296, 0.01
      %v553 = vmul.f32 %v297, 0.01
      %v554 = vmul.f32 %v298, 0.01
      %v555 = vmul.f32 %v299, 0.01
      %v556 = vmul.f32 %v300, 0.01
      %v557 = vmul.f32 %v301, 0.01
      %v558 = vmul.f32 %v302, 0.01
      %v559 = vmul.f32 %v303, 0.01
      %v560 = vmul.f32 %v304, 0.01
      %v561 = vmul.f32 %v305, 0.01
      %v562 = vmul.f32 %v306, 0.01
      %v563 = vmul.f32 %v307, 0.01
      %v564 = vmul.f32 %v308, 0.01
      %v565 = vmul.f32 %v309, 0.01
      %v566 = vmul.f32 %v310, 0.01
      %v567 = vmul.f32 %v311, 0.01
      %v568 = vmul.f32 %v312, 0.01
      %v569 = vmul.f32 %v313, 0.01
      %v570 = vmul.f32 %v314, 0.01
      %v571 = vmul.f32 %v315, 0.01
      %v572 = vmul.f32 %v316, 0.01
      %v573 = vmul.f32 %v317, 0.01
      %v574 = vmul.f32 %v318, 0.01
      %v575 = vmul.f32 %v319, 0.01
      %v576 = vmul.f32 %v320, 0.01
      %v577 = vmul.f32 %v321, 0.01
      %v578 = vmul.f32 %v322, 0.01
      %v579 = vmul.f32 %v323, 0.01
      %v580 = vmul.f32 %v324, 0.01
      %v581 = vmul.f32 %v325, 0.01
      %v582 = vmul.f32 %v326, 0.01
      %v583 = vmul.f32 %v327, 0.01
      %v584 = vmul.f32 %v328, 0.01
      %v585 = vmul.f32 %v329, 0.01
      %v586 = vmul.f32 %v330, 0.01
      %v587 = vmul.f32 %v331, 0.01
      %v588 = vmul.f32 %v332, 0.01
      %v589 = vmul.f32 %v333, 0.01
      %v590 = vmul.f32 %v334, 0.01
      %v591 = vmul.f32 %v335, 0.01
      %v592 = vmul.f32 %v336, 0.01
      %v593 = vmul.f32 %v337, 0.01
      %v594 = vmul.f32 %v338, 0.01
      %v595 = vmul.f32 %v339, 0.01
      %v596 = vmul.f32 %v340, 0.01
      %v597 = vmul.f32 %v341, 0.01
      %v598 = vmul.f32 %v342, 0.01
      %v599 = vmul.f32 %v343, 0.01
      %v600 = vmul.f32 %v344, 0.01
      %v601 = vmul.f32 %v345, 0.01
      %v602 = vmul.f32 %v346, 0.01
      %v603 = vmul.f32 %v347, 0.01
      %v604 = vmul.f32 %v348, 0.01
      %v605 = vmul.f32 %v349, 0.01
      %v606 = vmul.f32 %v350, 0.01
      %v607 = vmul.f32 %v351, 0.01
      %v608 = vmul.f32 %v352, 0.01
      %v609 = vsel %vm353, %v225, %v481
      %v610 = vsel %vm354, %v226, %v482
      %v611 = vsel %vm355, %v227, %v483
      %v612 = vsel %vm356, %v228, %v484
      %v613 = vsel %vm357, %v229, %v485
      %v614 = vsel %vm358, %v230, %v486
      %v615 = vsel %vm359, %v231, %v487
      %v616 = vsel %vm360, %v232, %v488
      %v617 = vsel %vm361, %v233, %v489
      %v618 = vsel %vm362, %v234, %v490
      %v619 = vsel %vm363, %v235, %v491
      %v620 = vsel %vm364, %v236, %v492
      %v621 = vsel %vm365, %v237, %v493
      %v622 = vsel %vm366, %v238, %v494
      %v623 = vsel %vm367, %v239, %v495
      %v624 = vsel %vm368, %v240, %v496
      %v625 = vsel %vm369, %v241, %v497
      %v626 = vsel %vm370, %v242, %v498
      %v627 = vsel %vm371, %v243, %v499
      %v628 = vsel %vm372, %v244, %v500
      %v629 = vsel %vm373, %v245, %v501
      %v630 = vsel %vm374, %v246, %v502
      %v631 = vsel %vm375, %v247, %v503
      %v632 = vsel %vm376, %v248, %v504
      %v633 = vsel %vm377, %v249, %v505
      %v634 = vsel %vm378, %v250, %v506
      %v635 = vsel %vm379, %v251, %v507
      %v636 = vsel %vm380, %v252, %v508
      %v637 = vsel %vm381, %v253, %v509
      %v638 = vsel %vm382, %v254, %v510
      %v639 = vsel %vm383, %v255, %v511
      %v640 = vsel %vm384, %v256, %v512
      %v641 = vsel %vm385, %v257, %v513
      %v642 = vsel %vm386, %v258, %v514
      %v643 = vsel %vm387, %v259, %v515
      %v644 = vsel %vm388, %v260, %v516
      %v645 = vsel %vm389, %v261, %v517
      %v646 = vsel %vm390, %v262, %v518
      %v647 = vsel %vm391, %v263, %v519
      %v648 = vsel %vm392, %v264, %v520
      %v649 = vsel %vm393, %v265, %v521
      %v650 = vsel %vm394, %v266, %v522
      %v651 = vsel %vm395, %v267, %v523
      %v652 = vsel %vm396, %v268, %v524
      %v653 = vsel %vm397, %v269, %v525
      %v654 = vsel %vm398, %v270, %v526
      %v655 = vsel %vm399, %v271, %v527
      %v656 = vsel %vm400, %v272, %v528
      %v657 = vsel %vm401, %v273, %v529
      %v658 = vsel %vm402, %v274, %v530
      %v659 = vsel %vm403, %v275, %v531
      %v660 = vsel %vm404, %v276, %v532
      %v661 = vsel %vm405, %v277, %v533
      %v662 = vsel %vm406, %v278, %v534
      %v663 = vsel %vm407, %v279, %v535
      %v664 = vsel %vm408, %v280, %v536
      %v665 = vsel %vm409, %v281, %v537
      %v666 = vsel %vm410, %v282, %v538
      %v667 = vsel %vm411, %v283, %v539
      %v668 = vsel %vm412, %v284, %v540
      %v669 = vsel %vm413, %v285, %v541
      %v670 = vsel %vm414, %v286, %v542
      %v671 = vsel %vm415, %v287, %v543
      %v672 = vsel %vm416, %v288, %v544
      %v673 = vsel %vm417, %v289, %v545
      %v674 = vsel %vm418, %v290, %v546
      %v675 = vsel %vm419, %v291, %v547
      %v676 = vsel %vm420, %v292, %v548
      %v677 = vsel %vm421, %v293, %v549
      %v678 = vsel %vm422, %v294, %v550
      %v679 = vsel %vm423, %v295, %v551
      %v680 = vsel %vm424, %v296, %v552
      %v681 = vsel %vm425, %v297, %v553
      %v682 = vsel %vm426, %v298, %v554
      %v683 = vsel %vm427, %v299, %v555
      %v684 = vsel %vm428, %v300, %v556
      %v685 = vsel %vm429, %v301, %v557
      %v686 = vsel %vm430, %v302, %v558
      %v687 = vsel %vm431, %v303, %v559
      %v688 = vsel %vm432, %v304, %v560
      %v689 = vsel %vm433, %v305, %v561
      %v690 = vsel %vm434, %v306, %v562
      %v691 = vsel %vm435, %v307, %v563
      %v692 = vsel %vm436, %v308, %v564
      %v693 = vsel %vm437, %v309, %v565
      %v694 = vsel %vm438, %v310, %v566
      %v695 = vsel %vm439, %v311, %v567
      %v696 = vsel %vm440, %v312, %v568
      %v697 = vsel %vm441, %v313, %v569
      %v698 = vsel %vm442, %v314, %v570
      %v699 = vsel %vm443, %v315, %v571
      %v700 = vsel %vm444, %v316, %v572
      %v701 = vsel %vm445, %v317, %v573
      %v702 = vsel %vm446, %v318, %v574
      %v703 = vsel %vm447, %v319, %v575
      %v704 = vsel %vm448, %v320, %v576
      %v705 = vsel %vm449, %v321, %v577
      %v706 = vsel %vm450, %v322, %v578
      %v707 = vsel %vm451, %v323, %v579
      %v708 = vsel %vm452, %v324, %v580
      %v709 = vsel %vm453, %v325, %v581
      %v710 = vsel %vm454, %v326, %v582
      %v711 = vsel %vm455, %v327, %v583
      %v712 = vsel %vm456, %v328, %v584
      %v713 = vsel %vm457, %v329, %v585
      %v714 = vsel %vm458, %v330, %v586
      %v715 = vsel %vm459, %v331, %v587
      %v716 = vsel %vm460, %v332, %v588
      %v717 = vsel %vm461, %v333, %v589
      %v718 = vsel %vm462, %v334, %v590
      %v719 = vsel %vm463, %v335, %v591
      %v720 = vsel %vm464, %v336, %v592
      %v721 = vsel %vm465, %v337, %v593
      %v722 = vsel %vm466, %v338, %v594
      %v723 = vsel %vm467, %v339, %v595
      %v724 = vsel %vm468, %v340, %v596
      %v725 = vsel %vm469, %v341, %v597
      %v726 = vsel %vm470, %v342, %v598
      %v727 = vsel %vm471, %v343, %v599
      %v728 = vsel %vm472, %v344, %v600
      %v729 = vsel %vm473, %v345, %v601
      %v730 = vsel %vm474, %v346, %v602
      %v731 = vsel %vm475, %v347, %v603
      %v732 = vsel %vm476, %v348, %v604
      %v733 = vsel %vm477, %v349, %v605
      %v734 = vsel %vm478, %v350, %v606
      %v735 = vsel %vm479, %v351, %v607
      %v736 = vsel %vm480, %v352, %v608
      %vm737 = vcmask 31744
      %738 = vst.msk [vmem:[#allocation2] sm:$0xff] %vm737, 0.0
      %739 = vst.msk [vmem:[#allocation2 + $0x8] sm:$0xff] %vm737, 0.0
      %740 = vst.msk [vmem:[#allocation2 + $0x10] sm:$0xff] %vm737, 0.0
      %741 = vst.msk [vmem:[#allocation2 + $0x18] sm:$0xff] %vm737, 0.0
      %vm742 = vcmask 25600
      %743 = vst.msk [vmem:[#allocation2 + $0x20] sm:$0x3] %vm742, 0.0
      %744 = vst.msk [vmem:[#allocation2 + $0x28] sm:$0xff] %vm737, 0.0
      %745 = vst.msk [vmem:[#allocation2 + $0x30] sm:$0xff] %vm737, 0.0
      %746 = vst.msk [vmem:[#allocation2 + $0x38] sm:$0xff] %vm737, 0.0
      %747 = vst.msk [vmem:[#allocation2 + $0x40] sm:$0xff] %vm737, 0.0
      %748 = vst.msk [vmem:[#allocation2 + $0x48] sm:$0x3] %vm742, 0.0
      %749 = vst.msk [vmem:[#allocation2 + $0x50] sm:$0xff] %vm737, 0.0
      %750 = vst.msk [vmem:[#allocation2 + $0x58] sm:$0xff] %vm737, 0.0
      %751 = vst.msk [vmem:[#allocation2 + $0x60] sm:$0xff] %vm737, 0.0
      %752 = vst.msk [vmem:[#allocation2 + $0x68] sm:$0xff] %vm737, 0.0
      %753 = vst.msk [vmem:[#allocation2 + $0x70] sm:$0x3] %vm742, 0.0
      %754 = vst.msk [vmem:[#allocation2 + $0x78] sm:$0xff] %vm737, 0.0
      %755 = vst.msk [vmem:[#allocation2 + $0x80] sm:$0xff] %vm737, 0.0
      %756 = vst.msk [vmem:[#allocation2 + $0x88] sm:$0xff] %vm737, 0.0
      %757 = vst.msk [vmem:[#allocation2 + $0x90] sm:$0xff] %vm737, 0.0
      %758 = vst.msk [vmem:[#allocation2 + $0x98] sm:$0x3] %vm742, 0.0
      %759 = vst.msk [vmem:[#allocation2 + $0xa0] sm:$0xff] %vm737, 0.0
      %760 = vst.msk [vmem:[#allocation2 + $0xa8] sm:$0xff] %vm737, 0.0
      %761 = vst.msk [vmem:[#allocation2 + $0xb0] sm:$0xff] %vm737, 0.0
      %762 = vst.msk [vmem:[#allocation2 + $0xb8] sm:$0xff] %vm737, 0.0
      %763 = vst.msk [vmem:[#allocation2 + $0xc0] sm:$0x3] %vm742, 0.0
      %764 = vst.msk [vmem:[#allocation2 + $0xc8] sm:$0xff] %vm737, 0.0
      %765 = vst.msk [vmem:[#allocation2 + $0xd0] sm:$0xff] %vm737, 0.0
      %766 = vst.msk [vmem:[#allocation2 + $0xd8] sm:$0xff] %vm737, 0.0
      %767 = vst.msk [vmem:[#allocation2 + $0xe0] sm:$0xff] %vm737, 0.0
      %768 = vst.msk [vmem:[#allocation2 + $0xe8] sm:$0x3] %vm742, 0.0
      %769 = vst.msk [vmem:[#allocation2 + $0xf0] sm:$0xff] %vm737, 0.0
      %770 = vst.msk [vmem:[#allocation2 + $0xf8] sm:$0xff] %vm737, 0.0
      %771 = vst.msk [vmem:[#allocation2 + $0x100] sm:$0xff] %vm737, 0.0
      %772 = vst.msk [vmem:[#allocation2 + $0x108] sm:$0xff] %vm737, 0.0
      %773 = vst.msk [vmem:[#allocation2 + $0x110] sm:$0x3] %vm742, 0.0
      %774 = vst.msk [vmem:[#allocation2 + $0x118] sm:$0xff] %vm737, 0.0
      %775 = vst.msk [vmem:[#allocation2 + $0x120] sm:$0xff] %vm737, 0.0
      %776 = vst.msk [vmem:[#allocation2 + $0x128] sm:$0xff] %vm737, 0.0
      %777 = vst.msk [vmem:[#allocation2 + $0x130] sm:$0xff] %vm737, 0.0
      %778 = vst.msk [vmem:[#allocation2 + $0x138] sm:$0x3] %vm742, 0.0
      %779 = vst.msk [vmem:[#allocation2 + $0x140] sm:$0xff] %vm737, 0.0
      %780 = vst.msk [vmem:[#allocation2 + $0x148] sm:$0xff] %vm737, 0.0
      %781 = vst.msk [vmem:[#allocation2 + $0x150] sm:$0xff] %vm737, 0.0
      %782 = vst.msk [vmem:[#allocation2 + $0x158] sm:$0xff] %vm737, 0.0
      %783 = vst.msk [vmem:[#allocation2 + $0x160] sm:$0x3] %vm742, 0.0
      %784 = vst.msk [vmem:[#allocation2 + $0x168] sm:$0xff] %vm737, 0.0
      %785 = vst.msk [vmem:[#allocation2 + $0x170] sm:$0xff] %vm737, 0.0
      %786 = vst.msk [vmem:[#allocation2 + $0x178] sm:$0xff] %vm737, 0.0
      %787 = vst.msk [vmem:[#allocation2 + $0x180] sm:$0xff] %vm737, 0.0
      %788 = vst.msk [vmem:[#allocation2 + $0x188] sm:$0x3] %vm742, 0.0
      %789 = vst.msk [vmem:[#allocation2 + $0x190] sm:$0xff] %vm737, 0.0
      %790 = vst.msk [vmem:[#allocation2 + $0x198] sm:$0xff] %vm737, 0.0
      %791 = vst.msk [vmem:[#allocation2 + $0x1a0] sm:$0xff] %vm737, 0.0
      %792 = vst.msk [vmem:[#allocation2 + $0x1a8] sm:$0xff] %vm737, 0.0
      %793 = vst.msk [vmem:[#allocation2 + $0x1b0] sm:$0x3] %vm742, 0.0
      %794 = vst.msk [vmem:[#allocation2 + $0x1b8] sm:$0xff] %vm737, 0.0
      %795 = vst.msk [vmem:[#allocation2 + $0x1c0] sm:$0xff] %vm737, 0.0
      %796 = vst.msk [vmem:[#allocation2 + $0x1c8] sm:$0xff] %vm737, 0.0
      %797 = vst.msk [vmem:[#allocation2 + $0x1d0] sm:$0xff] %vm737, 0.0
      %798 = vst.msk [vmem:[#allocation2 + $0x1d8] sm:$0x3] %vm742, 0.0
      %799 = vst.msk [vmem:[#allocation2 + $0x1e0] sm:$0xff] %vm737, 0.0
      %800 = vst.msk [vmem:[#allocation2 + $0x1e8] sm:$0xff] %vm737, 0.0
      %801 = vst.msk [vmem:[#allocation2 + $0x1f0] sm:$0xff] %vm737, 0.0
      %802 = vst.msk [vmem:[#allocation2 + $0x1f8] sm:$0xff] %vm737, 0.0
      %803 = vst.msk [vmem:[#allocation2 + $0x200] sm:$0x3] %vm742, 0.0
      %804 = vst.msk [vmem:[#allocation2 + $0x208] sm:$0xff] %vm737, 0.0
      %805 = vst.msk [vmem:[#allocation2 + $0x210] sm:$0xff] %vm737, 0.0
      %806 = vst.msk [vmem:[#allocation2 + $0x218] sm:$0xff] %vm737, 0.0
      %807 = vst.msk [vmem:[#allocation2 + $0x220] sm:$0xff] %vm737, 0.0
      %808 = vst.msk [vmem:[#allocation2 + $0x228] sm:$0x3] %vm742, 0.0
      %809 = vst.msk [vmem:[#allocation2 + $0x230] sm:$0xff] %vm737, 0.0
      %810 = vst.msk [vmem:[#allocation2 + $0x238] sm:$0xff] %vm737, 0.0
      %811 = vst.msk [vmem:[#allocation2 + $0x240] sm:$0xff] %vm737, 0.0
      %812 = vst.msk [vmem:[#allocation2 + $0x248] sm:$0xff] %vm737, 0.0
      %813 = vst.msk [vmem:[#allocation2 + $0x250] sm:$0x3] %vm742, 0.0
      %814 = vst.msk [vmem:[#allocation2 + $0x258] sm:$0xff] %vm737, 0.0
      %815 = vst.msk [vmem:[#allocation2 + $0x260] sm:$0xff] %vm737, 0.0
      %816 = vst.msk [vmem:[#allocation2 + $0x268] sm:$0xff] %vm737, 0.0
      %817 = vst.msk [vmem:[#allocation2 + $0x270] sm:$0xff] %vm737, 0.0
      %818 = vst.msk [vmem:[#allocation2 + $0x278] sm:$0x3] %vm742, 0.0
      %819 = vst.msk [vmem:[#allocation2 + $0x280] sm:$0xff] %vm737, 0.0
      %820 = vst.msk [vmem:[#allocation2 + $0x288] sm:$0xff] %vm737, 0.0
      %821 = vst.msk [vmem:[#allocation2 + $0x290] sm:$0xff] %vm737, 0.0
      %822 = vst.msk [vmem:[#allocation2 + $0x298] sm:$0xff] %vm737, 0.0
      %823 = vst.msk [vmem:[#allocation2 + $0x2a0] sm:$0x3] %vm742, 0.0
      %824 = vst.msk [vmem:[#allocation2 + $0x2a8] sm:$0xff] %vm737, 0.0
      %825 = vst.msk [vmem:[#allocation2 + $0x2b0] sm:$0xff] %vm737, 0.0
      %826 = vst.msk [vmem:[#allocation2 + $0x2b8] sm:$0xff] %vm737, 0.0
      %827 = vst.msk [vmem:[#allocation2 + $0x2c0] sm:$0xff] %vm737, 0.0
      %828 = vst.msk [vmem:[#allocation2 + $0x2c8] sm:$0x3] %vm742, 0.0
      %829 = vst.msk [vmem:[#allocation2 + $0x2d0] sm:$0xff] %vm737, 0.0
      %830 = vst.msk [vmem:[#allocation2 + $0x2d8] sm:$0xff] %vm737, 0.0
      %831 = vst.msk [vmem:[#allocation2 + $0x2e0] sm:$0xff] %vm737, 0.0
      %832 = vst.msk [vmem:[#allocation2 + $0x2e8] sm:$0xff] %vm737, 0.0
      %833 = vst.msk [vmem:[#allocation2 + $0x2f0] sm:$0x3] %vm742, 0.0
      %834 = vst.msk [vmem:[#allocation2 + $0x2f8] sm:$0xff] %vm737, 0.0
      %835 = vst.msk [vmem:[#allocation2 + $0x300] sm:$0xff] %vm737, 0.0
      %836 = vst.msk [vmem:[#allocation2 + $0x308] sm:$0xff] %vm737, 0.0
      %837 = vst.msk [vmem:[#allocation2 + $0x310] sm:$0xff] %vm737, 0.0
      %838 = vst.msk [vmem:[#allocation2 + $0x318] sm:$0x3] %vm742, 0.0
      %839 = vst.msk [vmem:[#allocation2 + $0x320] sm:$0xff] %vm737, 0.0
      %840 = vst.msk [vmem:[#allocation2 + $0x328] sm:$0xff] %vm737, 0.0
      %841 = vst.msk [vmem:[#allocation2 + $0x330] sm:$0xff] %vm737, 0.0
      %842 = vst.msk [vmem:[#allocation2 + $0x338] sm:$0xff] %vm737, 0.0
      %843 = vst.msk [vmem:[#allocation2 + $0x340] sm:$0x3] %vm742, 0.0
      %844 = vst.msk [vmem:[#allocation2 + $0x348] sm:$0xff] %vm737, 0.0
      %845 = vst.msk [vmem:[#allocation2 + $0x350] sm:$0xff] %vm737, 0.0
      %846 = vst.msk [vmem:[#allocation2 + $0x358] sm:$0xff] %vm737, 0.0
      %847 = vst.msk [vmem:[#allocation2 + $0x360] sm:$0xff] %vm737, 0.0
      %848 = vst.msk [vmem:[#allocation2 + $0x368] sm:$0x3] %vm742, 0.0
      %849 = vst.msk [vmem:[#allocation2 + $0x370] sm:$0xff] %vm737, 0.0
      %850 = vst.msk [vmem:[#allocation2 + $0x378] sm:$0xff] %vm737, 0.0
      %851 = vst.msk [vmem:[#allocation2 + $0x380] sm:$0xff] %vm737, 0.0
      %852 = vst.msk [vmem:[#allocation2 + $0x388] sm:$0xff] %vm737, 0.0
      %853 = vst.msk [vmem:[#allocation2 + $0x390] sm:$0x3] %vm742, 0.0
      %854 = vst.msk [vmem:[#allocation2 + $0x398] sm:$0xff] %vm737, 0.0
      %855 = vst.msk [vmem:[#allocation2 + $0x3a0] sm:$0xff] %vm737, 0.0
      %856 = vst.msk [vmem:[#allocation2 + $0x3a8] sm:$0xff] %vm737, 0.0
      %857 = vst.msk [vmem:[#allocation2 + $0x3b0] sm:$0xff] %vm737, 0.0
      %858 = vst.msk [vmem:[#allocation2 + $0x3b8] sm:$0x3] %vm742, 0.0
      %859 = vst.msk [vmem:[#allocation2 + $0x3c0] sm:$0xff] %vm737, 0.0
      %860 = vst.msk [vmem:[#allocation2 + $0x3c8] sm:$0xff] %vm737, 0.0
      %861 = vst.msk [vmem:[#allocation2 + $0x3d0] sm:$0xff] %vm737, 0.0
      %862 = vst.msk [vmem:[#allocation2 + $0x3d8] sm:$0xff] %vm737, 0.0
      %863 = vst.msk [vmem:[#allocation2 + $0x3e0] sm:$0x3] %vm742, 0.0
      %864 = vst.msk [vmem:[#allocation2 + $0x3e8] sm:$0xff] %vm737, 0.0
      %865 = vst.msk [vmem:[#allocation2 + $0x3f0] sm:$0xff] %vm737, 0.0
      %866 = vst.msk [vmem:[#allocation2 + $0x3f8] sm:$0xff] %vm737, 0.0
      %867 = vst.msk [vmem:[#allocation2 + $0x400] sm:$0xff] %vm737, 0.0
      %868 = vst.msk [vmem:[#allocation2 + $0x408] sm:$0x3] %vm742, 0.0
      %869 = vst.msk [vmem:[#allocation2 + $0x410] sm:$0xff] %vm737, 0.0
      %870 = vst.msk [vmem:[#allocation2 + $0x418] sm:$0xff] %vm737, 0.0
      %871 = vst.msk [vmem:[#allocation2 + $0x420] sm:$0xff] %vm737, 0.0
      %872 = vst.msk [vmem:[#allocation2 + $0x428] sm:$0xff] %vm737, 0.0
      %873 = vst.msk [vmem:[#allocation2 + $0x430] sm:$0x3] %vm742, 0.0
      %874 = vst.msk [vmem:[#allocation2 + $0x438] sm:$0xff] %vm737, 0.0
      %875 = vst.msk [vmem:[#allocation2 + $0x440] sm:$0xff] %vm737, 0.0
      %876 = vst.msk [vmem:[#allocation2 + $0x448] sm:$0xff] %vm737, 0.0
      %877 = vst.msk [vmem:[#allocation2 + $0x450] sm:$0xff] %vm737, 0.0
      %878 = vst.msk [vmem:[#allocation2 + $0x458] sm:$0x3] %vm742, 0.0
      %879 = vst.msk [vmem:[#allocation2 + $0x460] sm:$0xff] %vm737, 0.0
      %880 = vst.msk [vmem:[#allocation2 + $0x468] sm:$0xff] %vm737, 0.0
      %881 = vst.msk [vmem:[#allocation2 + $0x470] sm:$0xff] %vm737, 0.0
      %882 = vst.msk [vmem:[#allocation2 + $0x478] sm:$0xff] %vm737, 0.0
      %883 = vst.msk [vmem:[#allocation2 + $0x480] sm:$0x3] %vm742, 0.0
      %884 = vst.msk [vmem:[#allocation2 + $0x488] sm:$0xff] %vm737, 0.0
      %885 = vst.msk [vmem:[#allocation2 + $0x490] sm:$0xff] %vm737, 0.0
      %886 = vst.msk [vmem:[#allocation2 + $0x498] sm:$0xff] %vm737, 0.0
      %887 = vst.msk [vmem:[#allocation2 + $0x4a0] sm:$0xff] %vm737, 0.0
      %888 = vst.msk [vmem:[#allocation2 + $0x4a8] sm:$0x3] %vm742, 0.0
      %889 = vst.msk [vmem:[#allocation2 + $0x4b0] sm:$0xff] %vm737, 0.0
      %890 = vst.msk [vmem:[#allocation2 + $0x4b8] sm:$0xff] %vm737, 0.0
      %891 = vst.msk [vmem:[#allocation2 + $0x4c0] sm:$0xff] %vm737, 0.0
      %892 = vst.msk [vmem:[#allocation2 + $0x4c8] sm:$0xff] %vm737, 0.0
      %893 = vst.msk [vmem:[#allocation2 + $0x4d0] sm:$0x3] %vm742, 0.0
      %894 = vst.msk [vmem:[#allocation2 + $0x4d8] sm:$0xff] %vm737, 0.0
      %895 = vst.msk [vmem:[#allocation2 + $0x4e0] sm:$0xff] %vm737, 0.0
      %896 = vst.msk [vmem:[#allocation2 + $0x4e8] sm:$0xff] %vm737, 0.0
      %897 = vst.msk [vmem:[#allocation2 + $0x4f0] sm:$0xff] %vm737, 0.0
      %898 = vst.msk [vmem:[#allocation2 + $0x4f8] sm:$0x3] %vm742, 0.0
      %899 = vst.msk [vmem:[#allocation2 + $0x500] sm:$0xff] %vm737, 0.0
      %900 = vst.msk [vmem:[#allocation2 + $0x508] sm:$0xff] %vm737, 0.0
      %901 = vst.msk [vmem:[#allocation2 + $0x510] sm:$0xff] %vm737, 0.0
      %902 = vst.msk [vmem:[#allocation2 + $0x518] sm:$0xff] %vm737, 0.0
      %903 = vst.msk [vmem:[#allocation2 + $0x520] sm:$0x3] %vm742, 0.0
      %904 = vst.msk [vmem:[#allocation2 + $0x528] sm:$0xff] %vm737, 0.0
      %905 = vst.msk [vmem:[#allocation2 + $0x530] sm:$0xff] %vm737, 0.0
      %906 = vst.msk [vmem:[#allocation2 + $0x538] sm:$0xff] %vm737, 0.0
      %907 = vst.msk [vmem:[#allocation2 + $0x540] sm:$0xff] %vm737, 0.0
      %908 = vst.msk [vmem:[#allocation2 + $0x548] sm:$0x3] %vm742, 0.0
      %s909 = scalar_lea.vmem [#allocation2], 40
      %910 = vst.msk [vmem:[%s909 + $0x1] sm:$0xff] %vm737, %v609
      %911 = vst.msk [vmem:[%s909 + $0x9] sm:$0xff] %vm737, %v610
      %912 = vst.msk [vmem:[%s909 + $0x11] sm:$0xff] %vm737, %v611
      %913 = vst.msk [vmem:[%s909 + $0x19] sm:$0xff] %vm737, %v612
      %914 = vst.msk [vmem:[%s909 + $0x29] sm:$0xff] %vm737, %v613
      %915 = vst.msk [vmem:[%s909 + $0x31] sm:$0xff] %vm737, %v614
      %916 = vst.msk [vmem:[%s909 + $0x39] sm:$0xff] %vm737, %v615
      %917 = vst.msk [vmem:[%s909 + $0x41] sm:$0xff] %vm737, %v616
      %918 = vst.msk [vmem:[%s909 + $0x51] sm:$0xff] %vm737, %v617
      %919 = vst.msk [vmem:[%s909 + $0x59] sm:$0xff] %vm737, %v618
      %920 = vst.msk [vmem:[%s909 + $0x61] sm:$0xff] %vm737, %v619
      %921 = vst.msk [vmem:[%s909 + $0x69] sm:$0xff] %vm737, %v620
      %922 = vst.msk [vmem:[%s909 + $0x79] sm:$0xff] %vm737, %v621
      %923 = vst.msk [vmem:[%s909 + $0x81] sm:$0xff] %vm737, %v622
      %924 = vst.msk [vmem:[%s909 + $0x89] sm:$0xff] %vm737, %v623
      %925 = vst.msk [vmem:[%s909 + $0x91] sm:$0xff] %vm737, %v624
      %926 = vst.msk [vmem:[%s909 + $0xa1] sm:$0xff] %vm737, %v625
      %927 = vst.msk [vmem:[%s909 + $0xa9] sm:$0xff] %vm737, %v626
      %928 = vst.msk [vmem:[%s909 + $0xb1] sm:$0xff] %vm737, %v627
      %929 = vst.msk [vmem:[%s909 + $0xb9] sm:$0xff] %vm737, %v628
      %930 = vst.msk [vmem:[%s909 + $0xc9] sm:$0xff] %vm737, %v629
      %931 = vst.msk [vmem:[%s909 + $0xd1] sm:$0xff] %vm737, %v630
      %932 = vst.msk [vmem:[%s909 + $0xd9] sm:$0xff] %vm737, %v631
      %933 = vst.msk [vmem:[%s909 + $0xe1] sm:$0xff] %vm737, %v632
      %934 = vst.msk [vmem:[%s909 + $0xf1] sm:$0xff] %vm737, %v633
      %935 = vst.msk [vmem:[%s909 + $0xf9] sm:$0xff] %vm737, %v634
      %936 = vst.msk [vmem:[%s909 + $0x101] sm:$0xff] %vm737, %v635
      %937 = vst.msk [vmem:[%s909 + $0x109] sm:$0xff] %vm737, %v636
      %938 = vst.msk [vmem:[%s909 + $0x119] sm:$0xff] %vm737, %v637
      %939 = vst.msk [vmem:[%s909 + $0x121] sm:$0xff] %vm737, %v638
      %940 = vst.msk [vmem:[%s909 + $0x129] sm:$0xff] %vm737, %v639
      %941 = vst.msk [vmem:[%s909 + $0x131] sm:$0xff] %vm737, %v640
      %942 = vst.msk [vmem:[%s909 + $0x141] sm:$0xff] %vm737, %v641
      %943 = vst.msk [vmem:[%s909 + $0x149] sm:$0xff] %vm737, %v642
      %944 = vst.msk [vmem:[%s909 + $0x151] sm:$0xff] %vm737, %v643
      %945 = vst.msk [vmem:[%s909 + $0x159] sm:$0xff] %vm737, %v644
      %946 = vst.msk [vmem:[%s909 + $0x169] sm:$0xff] %vm737, %v645
      %947 = vst.msk [vmem:[%s909 + $0x171] sm:$0xff] %vm737, %v646
      %948 = vst.msk [vmem:[%s909 + $0x179] sm:$0xff] %vm737, %v647
      %949 = vst.msk [vmem:[%s909 + $0x181] sm:$0xff] %vm737, %v648
      %950 = vst.msk [vmem:[%s909 + $0x191] sm:$0xff] %vm737, %v649
      %951 = vst.msk [vmem:[%s909 + $0x199] sm:$0xff] %vm737, %v650
      %952 = vst.msk [vmem:[%s909 + $0x1a1] sm:$0xff] %vm737, %v651
      %953 = vst.msk [vmem:[%s909 + $0x1a9] sm:$0xff] %vm737, %v652
      %954 = vst.msk [vmem:[%s909 + $0x1b9] sm:$0xff] %vm737, %v653
      %955 = vst.msk [vmem:[%s909 + $0x1c1] sm:$0xff] %vm737, %v654
      %956 = vst.msk [vmem:[%s909 + $0x1c9] sm:$0xff] %vm737, %v655
      %957 = vst.msk [vmem:[%s909 + $0x1d1] sm:$0xff] %vm737, %v656
      %958 = vst.msk [vmem:[%s909 + $0x1e1] sm:$0xff] %vm737, %v657
      %959 = vst.msk [vmem:[%s909 + $0x1e9] sm:$0xff] %vm737, %v658
      %960 = vst.msk [vmem:[%s909 + $0x1f1] sm:$0xff] %vm737, %v659
      %961 = vst.msk [vmem:[%s909 + $0x1f9] sm:$0xff] %vm737, %v660
      %962 = vst.msk [vmem:[%s909 + $0x209] sm:$0xff] %vm737, %v661
      %963 = vst.msk [vmem:[%s909 + $0x211] sm:$0xff] %vm737, %v662
      %964 = vst.msk [vmem:[%s909 + $0x219] sm:$0xff] %vm737, %v663
      %965 = vst.msk [vmem:[%s909 + $0x221] sm:$0xff] %vm737, %v664
      %966 = vst.msk [vmem:[%s909 + $0x231] sm:$0xff] %vm737, %v665
      %967 = vst.msk [vmem:[%s909 + $0x239] sm:$0xff] %vm737, %v666
      %968 = vst.msk [vmem:[%s909 + $0x241] sm:$0xff] %vm737, %v667
      %969 = vst.msk [vmem:[%s909 + $0x249] sm:$0xff] %vm737, %v668
      %970 = vst.msk [vmem:[%s909 + $0x259] sm:$0xff] %vm737, %v669
      %971 = vst.msk [vmem:[%s909 + $0x261] sm:$0xff] %vm737, %v670
      %972 = vst.msk [vmem:[%s909 + $0x269] sm:$0xff] %vm737, %v671
      %973 = vst.msk [vmem:[%s909 + $0x271] sm:$0xff] %vm737, %v672
      %974 = vst.msk [vmem:[%s909 + $0x281] sm:$0xff] %vm737, %v673
      %975 = vst.msk [vmem:[%s909 + $0x289] sm:$0xff] %vm737, %v674
      %976 = vst.msk [vmem:[%s909 + $0x291] sm:$0xff] %vm737, %v675
      %977 = vst.msk [vmem:[%s909 + $0x299] sm:$0xff] %vm737, %v676
      %978 = vst.msk [vmem:[%s909 + $0x2a9] sm:$0xff] %vm737, %v677
      %979 = vst.msk [vmem:[%s909 + $0x2b1] sm:$0xff] %vm737, %v678
      %980 = vst.msk [vmem:[%s909 + $0x2b9] sm:$0xff] %vm737, %v679
      %981 = vst.msk [vmem:[%s909 + $0x2c1] sm:$0xff] %vm737, %v680
      %982 = vst.msk [vmem:[%s909 + $0x2d1] sm:$0xff] %vm737, %v681
      %983 = vst.msk [vmem:[%s909 + $0x2d9] sm:$0xff] %vm737, %v682
      %984 = vst.msk [vmem:[%s909 + $0x2e1] sm:$0xff] %vm737, %v683
      %985 = vst.msk [vmem:[%s909 + $0x2e9] sm:$0xff] %vm737, %v684
      %986 = vst.msk [vmem:[%s909 + $0x2f9] sm:$0xff] %vm737, %v685
      %987 = vst.msk [vmem:[%s909 + $0x301] sm:$0xff] %vm737, %v686
      %988 = vst.msk [vmem:[%s909 + $0x309] sm:$0xff] %vm737, %v687
      %989 = vst.msk [vmem:[%s909 + $0x311] sm:$0xff] %vm737, %v688
      %990 = vst.msk [vmem:[%s909 + $0x321] sm:$0xff] %vm737, %v689
      %991 = vst.msk [vmem:[%s909 + $0x329] sm:$0xff] %vm737, %v690
      %992 = vst.msk [vmem:[%s909 + $0x331] sm:$0xff] %vm737, %v691
      %993 = vst.msk [vmem:[%s909 + $0x339] sm:$0xff] %vm737, %v692
      %994 = vst.msk [vmem:[%s909 + $0x349] sm:$0xff] %vm737, %v693
      %995 = vst.msk [vmem:[%s909 + $0x351] sm:$0xff] %vm737, %v694
      %996 = vst.msk [vmem:[%s909 + $0x359] sm:$0xff] %vm737, %v695
      %997 = vst.msk [vmem:[%s909 + $0x361] sm:$0xff] %vm737, %v696
      %998 = vst.msk [vmem:[%s909 + $0x371] sm:$0xff] %vm737, %v697
      %999 = vst.msk [vmem:[%s909 + $0x379] sm:$0xff] %vm737, %v698
      %1000 = vst.msk [vmem:[%s909 + $0x381] sm:$0xff] %vm737, %v699
      %1001 = vst.msk [vmem:[%s909 + $0x389] sm:$0xff] %vm737, %v700
      %1002 = vst.msk [vmem:[%s909 + $0x399] sm:$0xff] %vm737, %v701
      %1003 = vst.msk [vmem:[%s909 + $0x3a1] sm:$0xff] %vm737, %v702
      %1004 = vst.msk [vmem:[%s909 + $0x3a9] sm:$0xff] %vm737, %v703
      %1005 = vst.msk [vmem:[%s909 + $0x3b1] sm:$0xff] %vm737, %v704
      %1006 = vst.msk [vmem:[%s909 + $0x3c1] sm:$0xff] %vm737, %v705
      %1007 = vst.msk [vmem:[%s909 + $0x3c9] sm:$0xff] %vm737, %v706
      %1008 = vst.msk [vmem:[%s909 + $0x3d1] sm:$0xff] %vm737, %v707
      %1009 = vst.msk [vmem:[%s909 + $0x3d9] sm:$0xff] %vm737, %v708
      %1010 = vst.msk [vmem:[%s909 + $0x3e9] sm:$0xff] %vm737, %v709
      %1011 = vst.msk [vmem:[%s909 + $0x3f1] sm:$0xff] %vm737, %v710
      %1012 = vst.msk [vmem:[%s909 + $0x3f9] sm:$0xff] %vm737, %v711
      %1013 = vst.msk [vmem:[%s909 + $0x401] sm:$0xff] %vm737, %v712
      %1014 = vst.msk [vmem:[%s909 + $0x411] sm:$0xff] %vm737, %v713
      %1015 = vst.msk [vmem:[%s909 + $0x419] sm:$0xff] %vm737, %v714
      %1016 = vst.msk [vmem:[%s909 + $0x421] sm:$0xff] %vm737, %v715
      %1017 = vst.msk [vmem:[%s909 + $0x429] sm:$0xff] %vm737, %v716
      %1018 = vst.msk [vmem:[%s909 + $0x439] sm:$0xff] %vm737, %v717
      %1019 = vst.msk [vmem:[%s909 + $0x441] sm:$0xff] %vm737, %v718
      %1020 = vst.msk [vmem:[%s909 + $0x449] sm:$0xff] %vm737, %v719
      %1021 = vst.msk [vmem:[%s909 + $0x451] sm:$0xff] %vm737, %v720
      %1022 = vst.msk [vmem:[%s909 + $0x461] sm:$0xff] %vm737, %v721
      %1023 = vst.msk [vmem:[%s909 + $0x469] sm:$0xff] %vm737, %v722
      %1024 = vst.msk [vmem:[%s909 + $0x471] sm:$0xff] %vm737, %v723
      %1025 = vst.msk [vmem:[%s909 + $0x479] sm:$0xff] %vm737, %v724
      %1026 = vst.msk [vmem:[%s909 + $0x489] sm:$0xff] %vm737, %v725
      %1027 = vst.msk [vmem:[%s909 + $0x491] sm:$0xff] %vm737, %v726
      %1028 = vst.msk [vmem:[%s909 + $0x499] sm:$0xff] %vm737, %v727
      %1029 = vst.msk [vmem:[%s909 + $0x4a1] sm:$0xff] %vm737, %v728
      %1030 = vst.msk [vmem:[%s909 + $0x4b1] sm:$0xff] %vm737, %v729
      %1031 = vst.msk [vmem:[%s909 + $0x4b9] sm:$0xff] %vm737, %v730
      %1032 = vst.msk [vmem:[%s909 + $0x4c1] sm:$0xff] %vm737, %v731
      %1033 = vst.msk [vmem:[%s909 + $0x4c9] sm:$0xff] %vm737, %v732
      %1034 = vst.msk [vmem:[%s909 + $0x4d9] sm:$0xff] %vm737, %v733
      %1035 = vst.msk [vmem:[%s909 + $0x4e1] sm:$0xff] %vm737, %v734
      %1036 = vst.msk [vmem:[%s909 + $0x4e9] sm:$0xff] %vm737, %v735
      %1037 = vst.msk [vmem:[%s909 + $0x4f1] sm:$0xff] %vm737, %v736
      %v1038 = vld [vmem:[#allocation2] sm:$0xff]
      %v1039 = vld [vmem:[#allocation2 + $0x8] sm:$0xff]
      %v1040 = vld [vmem:[#allocation2 + $0x10] sm:$0xff]
      %v1041 = vld [vmem:[#allocation2 + $0x18] sm:$0xff]
      %v1042 = vld [vmem:[#allocation2 + $0x20] sm:$0x3]
      %v1043 = vld [vmem:[#allocation2 + $0x28] sm:$0xff]
      %v1044 = vld [vmem:[#allocation2 + $0x30] sm:$0xff]
      %v1045 = vld [vmem:[#allocation2 + $0x38] sm:$0xff]
      %v1046 = vld [vmem:[#allocation2 + $0x40] sm:$0xff]
      %v1047 = vld [vmem:[#allocation2 + $0x48] sm:$0x3]
      %v1048 = vld [vmem:[#allocation2 + $0x50] sm:$0xff]
      %v1049 = vld [vmem:[#allocation2 + $0x58] sm:$0xff]
      %v1050 = vld [vmem:[#allocation2 + $0x60] sm:$0xff]
      %v1051 = vld [vmem:[#allocation2 + $0x68] sm:$0xff]
      %v1052 = vld [vmem:[#allocation2 + $0x70] sm:$0x3]
      %v1053 = vld [vmem:[#allocation2 + $0x78] sm:$0xff]
      %v1054 = vld [vmem:[#allocation2 + $0x80] sm:$0xff]
      %v1055 = vld [vmem:[#allocation2 + $0x88] sm:$0xff]
      %v1056 = vld [vmem:[#allocation2 + $0x90] sm:$0xff]
      %v1057 = vld [vmem:[#allocation2 + $0x98] sm:$0x3]
      %v1058 = vld [vmem:[#allocation2 + $0xa0] sm:$0xff]
      %v1059 = vld [vmem:[#allocation2 + $0xa8] sm:$0xff]
      %v1060 = vld [vmem:[#allocation2 + $0xb0] sm:$0xff]
      %v1061 = vld [vmem:[#allocation2 + $0xb8] sm:$0xff]
      %v1062 = vld [vmem:[#allocation2 + $0xc0] sm:$0x3]
      %v1063 = vld [vmem:[#allocation2 + $0xc8] sm:$0xff]
      %v1064 = vld [vmem:[#allocation2 + $0xd0] sm:$0xff]
      %v1065 = vld [vmem:[#allocation2 + $0xd8] sm:$0xff]
      %v1066 = vld [vmem:[#allocation2 + $0xe0] sm:$0xff]
      %v1067 = vld [vmem:[#allocation2 + $0xe8] sm:$0x3]
      %v1068 = vld [vmem:[#allocation2 + $0xf0] sm:$0xff]
      %v1069 = vld [vmem:[#allocation2 + $0xf8] sm:$0xff]
      %v1070 = vld [vmem:[#allocation2 + $0x100] sm:$0xff]
      %v1071 = vld [vmem:[#allocation2 + $0x108] sm:$0xff]
      %v1072 = vld [vmem:[#allocation2 + $0x110] sm:$0x3]
      %v1073 = vld [vmem:[#allocation2 + $0x118] sm:$0xff]
      %v1074 = vld [vmem:[#allocation2 + $0x120] sm:$0xff]
      %v1075 = vld [vmem:[#allocation2 + $0x128] sm:$0xff]
      %v1076 = vld [vmem:[#allocation2 + $0x130] sm:$0xff]
      %v1077 = vld [vmem:[#allocation2 + $0x138] sm:$0x3]
      %v1078 = vld [vmem:[#allocation2 + $0x140] sm:$0xff]
      %v1079 = vld [vmem:[#allocation2 + $0x148] sm:$0xff]
      %v1080 = vld [vmem:[#allocation2 + $0x150] sm:$0xff]
      %v1081 = vld [vmem:[#allocation2 + $0x158] sm:$0xff]
      %v1082 = vld [vmem:[#allocation2 + $0x160] sm:$0x3]
      %v1083 = vld [vmem:[#allocation2 + $0x168] sm:$0xff]
      %v1084 = vld [vmem:[#allocation2 + $0x170] sm:$0xff]
      %v1085 = vld [vmem:[#allocation2 + $0x178] sm:$0xff]
      %v1086 = vld [vmem:[#allocation2 + $0x180] sm:$0xff]
      %v1087 = vld [vmem:[#allocation2 + $0x188] sm:$0x3]
      %v1088 = vld [vmem:[#allocation2 + $0x190] sm:$0xff]
      %v1089 = vld [vmem:[#allocation2 + $0x198] sm:$0xff]
      %v1090 = vld [vmem:[#allocation2 + $0x1a0] sm:$0xff]
      %v1091 = vld [vmem:[#allocation2 + $0x1a8] sm:$0xff]
      %v1092 = vld [vmem:[#allocation2 + $0x1b0] sm:$0x3]
      %v1093 = vld [vmem:[#allocation2 + $0x1b8] sm:$0xff]
      %v1094 = vld [vmem:[#allocation2 + $0x1c0] sm:$0xff]
      %v1095 = vld [vmem:[#allocation2 + $0x1c8] sm:$0xff]
      %v1096 = vld [vmem:[#allocation2 + $0x1d0] sm:$0xff]
      %v1097 = vld [vmem:[#allocation2 + $0x1d8] sm:$0x3]
      %v1098 = vld [vmem:[#allocation2 + $0x1e0] sm:$0xff]
      %v1099 = vld [vmem:[#allocation2 + $0x1e8] sm:$0xff]
      %v1100 = vld [vmem:[#allocation2 + $0x1f0] sm:$0xff]
      %v1101 = vld [vmem:[#allocation2 + $0x1f8] sm:$0xff]
      %v1102 = vld [vmem:[#allocation2 + $0x200] sm:$0x3]
      %v1103 = vld [vmem:[#allocation2 + $0x208] sm:$0xff]
      %v1104 = vld [vmem:[#allocation2 + $0x210] sm:$0xff]
      %v1105 = vld [vmem:[#allocation2 + $0x218] sm:$0xff]
      %v1106 = vld [vmem:[#allocation2 + $0x220] sm:$0xff]
      %v1107 = vld [vmem:[#allocation2 + $0x228] sm:$0x3]
      %v1108 = vld [vmem:[#allocation2 + $0x230] sm:$0xff]
      %v1109 = vld [vmem:[#allocation2 + $0x238] sm:$0xff]
      %v1110 = vld [vmem:[#allocation2 + $0x240] sm:$0xff]
      %v1111 = vld [vmem:[#allocation2 + $0x248] sm:$0xff]
      %v1112 = vld [vmem:[#allocation2 + $0x250] sm:$0x3]
      %v1113 = vld [vmem:[#allocation2 + $0x258] sm:$0xff]
      %v1114 = vld [vmem:[#allocation2 + $0x260] sm:$0xff]
      %v1115 = vld [vmem:[#allocation2 + $0x268] sm:$0xff]
      %v1116 = vld [vmem:[#allocation2 + $0x270] sm:$0xff]
      %v1117 = vld [vmem:[#allocation2 + $0x278] sm:$0x3]
      %v1118 = vld [vmem:[#allocation2 + $0x280] sm:$0xff]
      %v1119 = vld [vmem:[#allocation2 + $0x288] sm:$0xff]
      %v1120 = vld [vmem:[#allocation2 + $0x290] sm:$0xff]
      %v1121 = vld [vmem:[#allocation2 + $0x298] sm:$0xff]
      %v1122 = vld [vmem:[#allocation2 + $0x2a0] sm:$0x3]
      %v1123 = vld [vmem:[#allocation2 + $0x2a8] sm:$0xff]
      %v1124 = vld [vmem:[#allocation2 + $0x2b0] sm:$0xff]
      %v1125 = vld [vmem:[#allocation2 + $0x2b8] sm:$0xff]
      %v1126 = vld [vmem:[#allocation2 + $0x2c0] sm:$0xff]
      %v1127 = vld [vmem:[#allocation2 + $0x2c8] sm:$0x3]
      %v1128 = vld [vmem:[#allocation2 + $0x2d0] sm:$0xff]
      %v1129 = vld [vmem:[#allocation2 + $0x2d8] sm:$0xff]
      %v1130 = vld [vmem:[#allocation2 + $0x2e0] sm:$0xff]
      %v1131 = vld [vmem:[#allocation2 + $0x2e8] sm:$0xff]
      %v1132 = vld [vmem:[#allocation2 + $0x2f0] sm:$0x3]
      %v1133 = vld [vmem:[#allocation2 + $0x2f8] sm:$0xff]
      %v1134 = vld [vmem:[#allocation2 + $0x300] sm:$0xff]
      %v1135 = vld [vmem:[#allocation2 + $0x308] sm:$0xff]
      %v1136 = vld [vmem:[#allocation2 + $0x310] sm:$0xff]
      %v1137 = vld [vmem:[#allocation2 + $0x318] sm:$0x3]
      %v1138 = vld [vmem:[#allocation2 + $0x320] sm:$0xff]
      %v1139 = vld [vmem:[#allocation2 + $0x328] sm:$0xff]
      %v1140 = vld [vmem:[#allocation2 + $0x330] sm:$0xff]
      %v1141 = vld [vmem:[#allocation2 + $0x338] sm:$0xff]
      %v1142 = vld [vmem:[#allocation2 + $0x340] sm:$0x3]
      %v1143 = vld [vmem:[#allocation2 + $0x348] sm:$0xff]
      %v1144 = vld [vmem:[#allocation2 + $0x350] sm:$0xff]
      %v1145 = vld [vmem:[#allocation2 + $0x358] sm:$0xff]
      %v1146 = vld [vmem:[#allocation2 + $0x360] sm:$0xff]
      %v1147 = vld [vmem:[#allocation2 + $0x368] sm:$0x3]
      %v1148 = vld [vmem:[#allocation2 + $0x370] sm:$0xff]
      %v1149 = vld [vmem:[#allocation2 + $0x378] sm:$0xff]
      %v1150 = vld [vmem:[#allocation2 + $0x380] sm:$0xff]
      %v1151 = vld [vmem:[#allocation2 + $0x388] sm:$0xff]
      %v1152 = vld [vmem:[#allocation2 + $0x390] sm:$0x3]
      %v1153 = vld [vmem:[#allocation2 + $0x398] sm:$0xff]
      %v1154 = vld [vmem:[#allocation2 + $0x3a0] sm:$0xff]
      %v1155 = vld [vmem:[#allocation2 + $0x3a8] sm:$0xff]
      %v1156 = vld [vmem:[#allocation2 + $0x3b0] sm:$0xff]
      %v1157 = vld [vmem:[#allocation2 + $0x3b8] sm:$0x3]
      %v1158 = vld [vmem:[#allocation2 + $0x3c0] sm:$0xff]
      %v1159 = vld [vmem:[#allocation2 + $0x3c8] sm:$0xff]
      %v1160 = vld [vmem:[#allocation2 + $0x3d0] sm:$0xff]
      %v1161 = vld [vmem:[#allocation2 + $0x3d8] sm:$0xff]
      %v1162 = vld [vmem:[#allocation2 + $0x3e0] sm:$0x3]
      %v1163 = vld [vmem:[#allocation2 + $0x3e8] sm:$0xff]
      %v1164 = vld [vmem:[#allocation2 + $0x3f0] sm:$0xff]
      %v1165 = vld [vmem:[#allocation2 + $0x3f8] sm:$0xff]
      %v1166 = vld [vmem:[#allocation2 + $0x400] sm:$0xff]
      %v1167 = vld [vmem:[#allocation2 + $0x408] sm:$0x3]
      %v1168 = vld [vmem:[#allocation2 + $0x410] sm:$0xff]
      %v1169 = vld [vmem:[#allocation2 + $0x418] sm:$0xff]
      %v1170 = vld [vmem:[#allocation2 + $0x420] sm:$0xff]
      %v1171 = vld [vmem:[#allocation2 + $0x428] sm:$0xff]
      %v1172 = vld [vmem:[#allocation2 + $0x430] sm:$0x3]
      %v1173 = vld [vmem:[#allocation2 + $0x438] sm:$0xff]
      %v1174 = vld [vmem:[#allocation2 + $0x440] sm:$0xff]
      %v1175 = vld [vmem:[#allocation2 + $0x448] sm:$0xff]
      %v1176 = vld [vmem:[#allocation2 + $0x450] sm:$0xff]
      %v1177 = vld [vmem:[#allocation2 + $0x458] sm:$0x3]
      %v1178 = vld [vmem:[#allocation2 + $0x460] sm:$0xff]
      %v1179 = vld [vmem:[#allocation2 + $0x468] sm:$0xff]
      %v1180 = vld [vmem:[#allocation2 + $0x470] sm:$0xff]
      %v1181 = vld [vmem:[#allocation2 + $0x478] sm:$0xff]
      %v1182 = vld [vmem:[#allocation2 + $0x480] sm:$0x3]
      %v1183 = vld [vmem:[#allocation2 + $0x488] sm:$0xff]
      %v1184 = vld [vmem:[#allocation2 + $0x490] sm:$0xff]
      %v1185 = vld [vmem:[#allocation2 + $0x498] sm:$0xff]
      %v1186 = vld [vmem:[#allocation2 + $0x4a0] sm:$0xff]
      %v1187 = vld [vmem:[#allocation2 + $0x4a8] sm:$0x3]
      %v1188 = vld [vmem:[#allocation2 + $0x4b0] sm:$0xff]
      %v1189 = vld [vmem:[#allocation2 + $0x4b8] sm:$0xff]
      %v1190 = vld [vmem:[#allocation2 + $0x4c0] sm:$0xff]
      %v1191 = vld [vmem:[#allocation2 + $0x4c8] sm:$0xff]
      %v1192 = vld [vmem:[#allocation2 + $0x4d0] sm:$0x3]
      %v1193 = vld [vmem:[#allocation2 + $0x4d8] sm:$0xff]
      %v1194 = vld [vmem:[#allocation2 + $0x4e0] sm:$0xff]
      %v1195 = vld [vmem:[#allocation2 + $0x4e8] sm:$0xff]
      %v1196 = vld [vmem:[#allocation2 + $0x4f0] sm:$0xff]
      %v1197 = vld [vmem:[#allocation2 + $0x4f8] sm:$0x3]
      %v1198 = vld [vmem:[#allocation2 + $0x500] sm:$0xff]
      %v1199 = vld [vmem:[#allocation2 + $0x508] sm:$0xff]
      %v1200 = vld [vmem:[#allocation2 + $0x510] sm:$0xff]
      %v1201 = vld [vmem:[#allocation2 + $0x518] sm:$0xff]
      %v1202 = vld [vmem:[#allocation2 + $0x520] sm:$0x3]
      %v1203 = vld [vmem:[#allocation2 + $0x528] sm:$0xff]
      %v1204 = vld [vmem:[#allocation2 + $0x530] sm:$0xff]
      %v1205 = vld [vmem:[#allocation2 + $0x538] sm:$0xff]
      %v1206 = vld [vmem:[#allocation2 + $0x540] sm:$0xff]
      %v1207 = vld [vmem:[#allocation2 + $0x548] sm:$0x3]
      %vm1368 = vcmask 1046528
      %v1369 = vrot.slane %v1038, 1
      %v1370 = vrot.slane %v1039, 1
      %v1371 = vsel %vm1368, %v1369, %v1370
      %v1372 = vrot.slane %v1040, 1
      %v1373 = vsel %vm1368, %v1370, %v1372
      %v1374 = vrot.slane %v1041, 1
      %v1375 = vsel %vm1368, %v1372, %v1374
      %v1376 = vrot.slane %v1042, 1
      %v1377 = vsel %vm1368, %v1374, %v1376
      %v1378 = vrot.slane %v1043, 1
      %v1379 = vrot.slane %v1044, 1
      %v1380 = vsel %vm1368, %v1378, %v1379
      %v1381 = vrot.slane %v1045, 1
      %v1382 = vsel %vm1368, %v1379, %v1381
      %v1383 = vrot.slane %v1046, 1
      %v1384 = vsel %vm1368, %v1381, %v1383
      %v1385 = vrot.slane %v1047, 1
      %v1386 = vsel %vm1368, %v1383, %v1385
      %v1387 = vrot.slane %v1048, 1
      %v1388 = vrot.slane %v1049, 1
      %v1389 = vsel %vm1368, %v1387, %v1388
      %v1390 = vrot.slane %v1050, 1
      %v1391 = vsel %vm1368, %v1388, %v1390
      %v1392 = vrot.slane %v1051, 1
      %v1393 = vsel %vm1368, %v1390, %v1392
      %v1394 = vrot.slane %v1052, 1
      %v1395 = vsel %vm1368, %v1392, %v1394
      %v1396 = vrot.slane %v1053, 1
      %v1397 = vrot.slane %v1054, 1
      %v1398 = vsel %vm1368, %v1396, %v1397
      %v1399 = vrot.slane %v1055, 1
      %v1400 = vsel %vm1368, %v1397, %v1399
      %v1401 = vrot.slane %v1056, 1
      %v1402 = vsel %vm1368, %v1399, %v1401
      %v1403 = vrot.slane %v1057, 1
      %v1404 = vsel %vm1368, %v1401, %v1403
      %v1405 = vrot.slane %v1058, 1
      %v1406 = vrot.slane %v1059, 1
      %v1407 = vsel %vm1368, %v1405, %v1406
      %v1408 = vrot.slane %v1060, 1
      %v1409 = vsel %vm1368, %v1406, %v1408
      %v1410 = vrot.slane %v1061, 1
      %v1411 = vsel %vm1368, %v1408, %v1410
      %v1412 = vrot.slane %v1062, 1
      %v1413 = vsel %vm1368, %v1410, %v1412
      %v1414 = vrot.slane %v1063, 1
      %v1415 = vrot.slane %v1064, 1
      %v1416 = vsel %vm1368, %v1414, %v1415
      %v1417 = vrot.slane %v1065, 1
      %v1418 = vsel %vm1368, %v1415, %v1417
      %v1419 = vrot.slane %v1066, 1
      %v1420 = vsel %vm1368, %v1417, %v1419
      %v1421 = vrot.slane %v1067, 1
      %v1422 = vsel %vm1368, %v1419, %v1421
      %v1423 = vrot.slane %v1068, 1
      %v1424 = vrot.slane %v1069, 1
      %v1425 = vsel %vm1368, %v1423, %v1424
      %v1426 = vrot.slane %v1070, 1
      %v1427 = vsel %vm1368, %v1424, %v1426
      %v1428 = vrot.slane %v1071, 1
      %v1429 = vsel %vm1368, %v1426, %v1428
      %v1430 = vrot.slane %v1072, 1
      %v1431 = vsel %vm1368, %v1428, %v1430
      %v1432 = vrot.slane %v1073, 1
      %v1433 = vrot.slane %v1074, 1
      %v1434 = vsel %vm1368, %v1432, %v1433
      %v1435 = vrot.slane %v1075, 1
      %v1436 = vsel %vm1368, %v1433, %v1435
      %v1437 = vrot.slane %v1076, 1
      %v1438 = vsel %vm1368, %v1435, %v1437
      %v1439 = vrot.slane %v1077, 1
      %v1440 = vsel %vm1368, %v1437, %v1439
      %v1441 = vrot.slane %v1078, 1
      %v1442 = vrot.slane %v1079, 1
      %v1443 = vsel %vm1368, %v1441, %v1442
      %v1444 = vrot.slane %v1080, 1
      %v1445 = vsel %vm1368, %v1442, %v1444
      %v1446 = vrot.slane %v1081, 1
      %v1447 = vsel %vm1368, %v1444, %v1446
      %v1448 = vrot.slane %v1082, 1
      %v1449 = vsel %vm1368, %v1446, %v1448
      %v1450 = vrot.slane %v1083, 1
      %v1451 = vrot.slane %v1084, 1
      %v1452 = vsel %vm1368, %v1450, %v1451
      %v1453 = vrot.slane %v1085, 1
      %v1454 = vsel %vm1368, %v1451, %v1453
      %v1455 = vrot.slane %v1086, 1
      %v1456 = vsel %vm1368, %v1453, %v1455
      %v1457 = vrot.slane %v1087, 1
      %v1458 = vsel %vm1368, %v1455, %v1457
      %v1459 = vrot.slane %v1088, 1
      %v1460 = vrot.slane %v1089, 1
      %v1461 = vsel %vm1368, %v1459, %v1460
      %v1462 = vrot.slane %v1090, 1
      %v1463 = vsel %vm1368, %v1460, %v1462
      %v1464 = vrot.slane %v1091, 1
      %v1465 = vsel %vm1368, %v1462, %v1464
      %v1466 = vrot.slane %v1092, 1
      %v1467 = vsel %vm1368, %v1464, %v1466
      %v1468 = vrot.slane %v1093, 1
      %v1469 = vrot.slane %v1094, 1
      %v1470 = vsel %vm1368, %v1468, %v1469
      %v1471 = vrot.slane %v1095, 1
      %v1472 = vsel %vm1368, %v1469, %v1471
      %v1473 = vrot.slane %v1096, 1
      %v1474 = vsel %vm1368, %v1471, %v1473
      %v1475 = vrot.slane %v1097, 1
      %v1476 = vsel %vm1368, %v1473, %v1475
      %v1477 = vrot.slane %v1098, 1
      %v1478 = vrot.slane %v1099, 1
      %v1479 = vsel %vm1368, %v1477, %v1478
      %v1480 = vrot.slane %v1100, 1
      %v1481 = vsel %vm1368, %v1478, %v1480
      %v1482 = vrot.slane %v1101, 1
      %v1483 = vsel %vm1368, %v1480, %v1482
      %v1484 = vrot.slane %v1102, 1
      %v1485 = vsel %vm1368, %v1482, %v1484
      %v1486 = vrot.slane %v1103, 1
      %v1487 = vrot.slane %v1104, 1
      %v1488 = vsel %vm1368, %v1486, %v1487
      %v1489 = vrot.slane %v1105, 1
      %v1490 = vsel %vm1368, %v1487, %v1489
      %v1491 = vrot.slane %v1106, 1
      %v1492 = vsel %vm1368, %v1489, %v1491
      %v1493 = vrot.slane %v1107, 1
      %v1494 = vsel %vm1368, %v1491, %v1493
      %v1495 = vrot.slane %v1108, 1
      %v1496 = vrot.slane %v1109, 1
      %v1497 = vsel %vm1368, %v1495, %v1496
      %v1498 = vrot.slane %v1110, 1
      %v1499 = vsel %vm1368, %v1496, %v1498
      %v1500 = vrot.slane %v1111, 1
      %v1501 = vsel %vm1368, %v1498, %v1500
      %v1502 = vrot.slane %v1112, 1
      %v1503 = vsel %vm1368, %v1500, %v1502
      %v1504 = vrot.slane %v1113, 1
      %v1505 = vrot.slane %v1114, 1
      %v1506 = vsel %vm1368, %v1504, %v1505
      %v1507 = vrot.slane %v1115, 1
      %v1508 = vsel %vm1368, %v1505, %v1507
      %v1509 = vrot.slane %v1116, 1
      %v1510 = vsel %vm1368, %v1507, %v1509
      %v1511 = vrot.slane %v1117, 1
      %v1512 = vsel %vm1368, %v1509, %v1511
      %v1513 = vrot.slane %v1118, 1
      %v1514 = vrot.slane %v1119, 1
      %v1515 = vsel %vm1368, %v1513, %v1514
      %v1516 = vrot.slane %v1120, 1
      %v1517 = vsel %vm1368, %v1514, %v1516
      %v1518 = vrot.slane %v1121, 1
      %v1519 = vsel %vm1368, %v1516, %v1518
      %v1520 = vrot.slane %v1122, 1
      %v1521 = vsel %vm1368, %v1518, %v1520
      %v1522 = vrot.slane %v1123, 1
      %v1523 = vrot.slane %v1124, 1
      %v1524 = vsel %vm1368, %v1522, %v1523
      %v1525 = vrot.slane %v1125, 1
      %v1526 = vsel %vm1368, %v1523, %v1525
      %v1527 = vrot.slane %v1126, 1
      %v1528 = vsel %vm1368, %v1525, %v1527
      %v1529 = vrot.slane %v1127, 1
      %v1530 = vsel %vm1368, %v1527, %v1529
      %v1531 = vrot.slane %v1128, 1
      %v1532 = vrot.slane %v1129, 1
      %v1533 = vsel %vm1368, %v1531, %v1532
      %v1534 = vrot.slane %v1130, 1
      %v1535 = vsel %vm1368, %v1532, %v1534
      %v1536 = vrot.slane %v1131, 1
      %v1537 = vsel %vm1368, %v1534, %v1536
      %v1538 = vrot.slane %v1132, 1
      %v1539 = vsel %vm1368, %v1536, %v1538
      %v1540 = vrot.slane %v1133, 1
      %v1541 = vrot.slane %v1134, 1
      %v1542 = vsel %vm1368, %v1540, %v1541
      %v1543 = vrot.slane %v1135, 1
      %v1544 = vsel %vm1368, %v1541, %v1543
      %v1545 = vrot.slane %v1136, 1
      %v1546 = vsel %vm1368, %v1543, %v1545
      %v1547 = vrot.slane %v1137, 1
      %v1548 = vsel %vm1368, %v1545, %v1547
      %v1549 = vrot.slane %v1138, 1
      %v1550 = vrot.slane %v1139, 1
      %v1551 = vsel %vm1368, %v1549, %v1550
      %v1552 = vrot.slane %v1140, 1
      %v1553 = vsel %vm1368, %v1550, %v1552
      %v1554 = vrot.slane %v1141, 1
      %v1555 = vsel %vm1368, %v1552, %v1554
      %v1556 = vrot.slane %v1142, 1
      %v1557 = vsel %vm1368, %v1554, %v1556
      %v1558 = vrot.slane %v1143, 1
      %v1559 = vrot.slane %v1144, 1
      %v1560 = vsel %vm1368, %v1558, %v1559
      %v1561 = vrot.slane %v1145, 1
      %v1562 = vsel %vm1368, %v1559, %v1561
      %v1563 = vrot.slane %v1146, 1
      %v1564 = vsel %vm1368, %v1561, %v1563
      %v1565 = vrot.slane %v1147, 1
      %v1566 = vsel %vm1368, %v1563, %v1565
      %v1567 = vrot.slane %v1148, 1
      %v1568 = vrot.slane %v1149, 1
      %v1569 = vsel %vm1368, %v1567, %v1568
      %v1570 = vrot.slane %v1150, 1
      %v1571 = vsel %vm1368, %v1568, %v1570
      %v1572 = vrot.slane %v1151, 1
      %v1573 = vsel %vm1368, %v1570, %v1572
      %v1574 = vrot.slane %v1152, 1
      %v1575 = vsel %vm1368, %v1572, %v1574
      %v1576 = vrot.slane %v1153, 1
      %v1577 = vrot.slane %v1154, 1
      %v1578 = vsel %vm1368, %v1576, %v1577
      %v1579 = vrot.slane %v1155, 1
      %v1580 = vsel %vm1368, %v1577, %v1579
      %v1581 = vrot.slane %v1156, 1
      %v1582 = vsel %vm1368, %v1579, %v1581
      %v1583 = vrot.slane %v1157, 1
      %v1584 = vsel %vm1368, %v1581, %v1583
      %v1585 = vrot.slane %v1158, 1
      %v1586 = vrot.slane %v1159, 1
      %v1587 = vsel %vm1368, %v1585, %v1586
      %v1588 = vrot.slane %v1160, 1
      %v1589 = vsel %vm1368, %v1586, %v1588
      %v1590 = vrot.slane %v1161, 1
      %v1591 = vsel %vm1368, %v1588, %v1590
      %v1592 = vrot.slane %v1162, 1
      %v1593 = vsel %vm1368, %v1590, %v1592
      %v1594 = vrot.slane %v1163, 1
      %v1595 = vrot.slane %v1164, 1
      %v1596 = vsel %vm1368, %v1594, %v1595
      %v1597 = vrot.slane %v1165, 1
      %v1598 = vsel %vm1368, %v1595, %v1597
      %v1599 = vrot.slane %v1166, 1
      %v1600 = vsel %vm1368, %v1597, %v1599
      %v1601 = vrot.slane %v1167, 1
      %v1602 = vsel %vm1368, %v1599, %v1601
      %v1603 = vrot.slane %v1168, 1
      %v1604 = vrot.slane %v1169, 1
      %v1605 = vsel %vm1368, %v1603, %v1604
      %v1606 = vrot.slane %v1170, 1
      %v1607 = vsel %vm1368, %v1604, %v1606
      %v1608 = vrot.slane %v1171, 1
      %v1609 = vsel %vm1368, %v1606, %v1608
      %v1610 = vrot.slane %v1172, 1
      %v1611 = vsel %vm1368, %v1608, %v1610
      %v1612 = vrot.slane %v1173, 1
      %v1613 = vrot.slane %v1174, 1
      %v1614 = vsel %vm1368, %v1612, %v1613
      %v1615 = vrot.slane %v1175, 1
      %v1616 = vsel %vm1368, %v1613, %v1615
      %v1617 = vrot.slane %v1176, 1
      %v1618 = vsel %vm1368, %v1615, %v1617
      %v1619 = vrot.slane %v1177, 1
      %v1620 = vsel %vm1368, %v1617, %v1619
      %v1621 = vrot.slane %v1178, 1
      %v1622 = vrot.slane %v1179, 1
      %v1623 = vsel %vm1368, %v1621, %v1622
      %v1624 = vrot.slane %v1180, 1
      %v1625 = vsel %vm1368, %v1622, %v1624
      %v1626 = vrot.slane %v1181, 1
      %v1627 = vsel %vm1368, %v1624, %v1626
      %v1628 = vrot.slane %v1182, 1
      %v1629 = vsel %vm1368, %v1626, %v1628
      %v1630 = vrot.slane %v1183, 1
      %v1631 = vrot.slane %v1184, 1
      %v1632 = vsel %vm1368, %v1630, %v1631
      %v1633 = vrot.slane %v1185, 1
      %v1634 = vsel %vm1368, %v1631, %v1633
      %v1635 = vrot.slane %v1186, 1
      %v1636 = vsel %vm1368, %v1633, %v1635
      %v1637 = vrot.slane %v1187, 1
      %v1638 = vsel %vm1368, %v1635, %v1637
      %v1639 = vrot.slane %v1188, 1
      %v1640 = vrot.slane %v1189, 1
      %v1641 = vsel %vm1368, %v1639, %v1640
      %v1642 = vrot.slane %v1190, 1
      %v1643 = vsel %vm1368, %v1640, %v1642
      %v1644 = vrot.slane %v1191, 1
      %v1645 = vsel %vm1368, %v1642, %v1644
      %v1646 = vrot.slane %v1192, 1
      %v1647 = vsel %vm1368, %v1644, %v1646
      %v1648 = vrot.slane %v1193, 1
      %v1649 = vrot.slane %v1194, 1
      %v1650 = vsel %vm1368, %v1648, %v1649
      %v1651 = vrot.slane %v1195, 1
      %v1652 = vsel %vm1368, %v1649, %v1651
      %v1653 = vrot.slane %v1196, 1
      %v1654 = vsel %vm1368, %v1651, %v1653
      %v1655 = vrot.slane %v1197, 1
      %v1656 = vsel %vm1368, %v1653, %v1655
      %vm1657 = vcmask 1045504
      %v1658 = vrot.slane %v1038, 2
      %v1659 = vrot.slane %v1039, 2
      %v1660 = vsel %vm1657, %v1658, %v1659
      %v1661 = vrot.slane %v1040, 2
      %v1662 = vsel %vm1657, %v1659, %v1661
      %v1663 = vrot.slane %v1041, 2
      %v1664 = vsel %vm1657, %v1661, %v1663
      %v1665 = vrot.slane %v1042, 2
      %v1666 = vsel %vm1657, %v1663, %v1665
      %v1667 = vrot.slane %v1043, 2
      %v1668 = vrot.slane %v1044, 2
      %v1669 = vsel %vm1657, %v1667, %v1668
      %v1670 = vrot.slane %v1045, 2
      %v1671 = vsel %vm1657, %v1668, %v1670
      %v1672 = vrot.slane %v1046, 2
      %v1673 = vsel %vm1657, %v1670, %v1672
      %v1674 = vrot.slane %v1047, 2
      %v1675 = vsel %vm1657, %v1672, %v1674
      %v1676 = vrot.slane %v1048, 2
      %v1677 = vrot.slane %v1049, 2
      %v1678 = vsel %vm1657, %v1676, %v1677
      %v1679 = vrot.slane %v1050, 2
      %v1680 = vsel %vm1657, %v1677, %v1679
      %v1681 = vrot.slane %v1051, 2
      %v1682 = vsel %vm1657, %v1679, %v1681
      %v1683 = vrot.slane %v1052, 2
      %v1684 = vsel %vm1657, %v1681, %v1683
      %v1685 = vrot.slane %v1053, 2
      %v1686 = vrot.slane %v1054, 2
      %v1687 = vsel %vm1657, %v1685, %v1686
      %v1688 = vrot.slane %v1055, 2
      %v1689 = vsel %vm1657, %v1686, %v1688
      %v1690 = vrot.slane %v1056, 2
      %v1691 = vsel %vm1657, %v1688, %v1690
      %v1692 = vrot.slane %v1057, 2
      %v1693 = vsel %vm1657, %v1690, %v1692
      %v1694 = vrot.slane %v1058, 2
      %v1695 = vrot.slane %v1059, 2
      %v1696 = vsel %vm1657, %v1694, %v1695
      %v1697 = vrot.slane %v1060, 2
      %v1698 = vsel %vm1657, %v1695, %v1697
      %v1699 = vrot.slane %v1061, 2
      %v1700 = vsel %vm1657, %v1697, %v1699
      %v1701 = vrot.slane %v1062, 2
      %v1702 = vsel %vm1657, %v1699, %v1701
      %v1703 = vrot.slane %v1063, 2
      %v1704 = vrot.slane %v1064, 2
      %v1705 = vsel %vm1657, %v1703, %v1704
      %v1706 = vrot.slane %v1065, 2
      %v1707 = vsel %vm1657, %v1704, %v1706
      %v1708 = vrot.slane %v1066, 2
      %v1709 = vsel %vm1657, %v1706, %v1708
      %v1710 = vrot.slane %v1067, 2
      %v1711 = vsel %vm1657, %v1708, %v1710
      %v1712 = vrot.slane %v1068, 2
      %v1713 = vrot.slane %v1069, 2
      %v1714 = vsel %vm1657, %v1712, %v1713
      %v1715 = vrot.slane %v1070, 2
      %v1716 = vsel %vm1657, %v1713, %v1715
      %v1717 = vrot.slane %v1071, 2
      %v1718 = vsel %vm1657, %v1715, %v1717
      %v1719 = vrot.slane %v1072, 2
      %v1720 = vsel %vm1657, %v1717, %v1719
      %v1721 = vrot.slane %v1073, 2
      %v1722 = vrot.slane %v1074, 2
      %v1723 = vsel %vm1657, %v1721, %v1722
      %v1724 = vrot.slane %v1075, 2
      %v1725 = vsel %vm1657, %v1722, %v1724
      %v1726 = vrot.slane %v1076, 2
      %v1727 = vsel %vm1657, %v1724, %v1726
      %v1728 = vrot.slane %v1077, 2
      %v1729 = vsel %vm1657, %v1726, %v1728
      %v1730 = vrot.slane %v1078, 2
      %v1731 = vrot.slane %v1079, 2
      %v1732 = vsel %vm1657, %v1730, %v1731
      %v1733 = vrot.slane %v1080, 2
      %v1734 = vsel %vm1657, %v1731, %v1733
      %v1735 = vrot.slane %v1081, 2
      %v1736 = vsel %vm1657, %v1733, %v1735
      %v1737 = vrot.slane %v1082, 2
      %v1738 = vsel %vm1657, %v1735, %v1737
      %v1739 = vrot.slane %v1083, 2
      %v1740 = vrot.slane %v1084, 2
      %v1741 = vsel %vm1657, %v1739, %v1740
      %v1742 = vrot.slane %v1085, 2
      %v1743 = vsel %vm1657, %v1740, %v1742
      %v1744 = vrot.slane %v1086, 2
      %v1745 = vsel %vm1657, %v1742, %v1744
      %v1746 = vrot.slane %v1087, 2
      %v1747 = vsel %vm1657, %v1744, %v1746
      %v1748 = vrot.slane %v1088, 2
      %v1749 = vrot.slane %v1089, 2
      %v1750 = vsel %vm1657, %v1748, %v1749
      %v1751 = vrot.slane %v1090, 2
      %v1752 = vsel %vm1657, %v1749, %v1751
      %v1753 = vrot.slane %v1091, 2
      %v1754 = vsel %vm1657, %v1751, %v1753
      %v1755 = vrot.slane %v1092, 2
      %v1756 = vsel %vm1657, %v1753, %v1755
      %v1757 = vrot.slane %v1093, 2
      %v1758 = vrot.slane %v1094, 2
      %v1759 = vsel %vm1657, %v1757, %v1758
      %v1760 = vrot.slane %v1095, 2
      %v1761 = vsel %vm1657, %v1758, %v1760
      %v1762 = vrot.slane %v1096, 2
      %v1763 = vsel %vm1657, %v1760, %v1762
      %v1764 = vrot.slane %v1097, 2
      %v1765 = vsel %vm1657, %v1762, %v1764
      %v1766 = vrot.slane %v1098, 2
      %v1767 = vrot.slane %v1099, 2
      %v1768 = vsel %vm1657, %v1766, %v1767
      %v1769 = vrot.slane %v1100, 2
      %v1770 = vsel %vm1657, %v1767, %v1769
      %v1771 = vrot.slane %v1101, 2
      %v1772 = vsel %vm1657, %v1769, %v1771
      %v1773 = vrot.slane %v1102, 2
      %v1774 = vsel %vm1657, %v1771, %v1773
      %v1775 = vrot.slane %v1103, 2
      %v1776 = vrot.slane %v1104, 2
      %v1777 = vsel %vm1657, %v1775, %v1776
      %v1778 = vrot.slane %v1105, 2
      %v1779 = vsel %vm1657, %v1776, %v1778
      %v1780 = vrot.slane %v1106, 2
      %v1781 = vsel %vm1657, %v1778, %v1780
      %v1782 = vrot.slane %v1107, 2
      %v1783 = vsel %vm1657, %v1780, %v1782
      %v1784 = vrot.slane %v1108, 2
      %v1785 = vrot.slane %v1109, 2
      %v1786 = vsel %vm1657, %v1784, %v1785
      %v1787 = vrot.slane %v1110, 2
      %v1788 = vsel %vm1657, %v1785, %v1787
      %v1789 = vrot.slane %v1111, 2
      %v1790 = vsel %vm1657, %v1787, %v1789
      %v1791 = vrot.slane %v1112, 2
      %v1792 = vsel %vm1657, %v1789, %v1791
      %v1793 = vrot.slane %v1113, 2
      %v1794 = vrot.slane %v1114, 2
      %v1795 = vsel %vm1657, %v1793, %v1794
      %v1796 = vrot.slane %v1115, 2
      %v1797 = vsel %vm1657, %v1794, %v1796
      %v1798 = vrot.slane %v1116, 2
      %v1799 = vsel %vm1657, %v1796, %v1798
      %v1800 = vrot.slane %v1117, 2
      %v1801 = vsel %vm1657, %v1798, %v1800
      %v1802 = vrot.slane %v1118, 2
      %v1803 = vrot.slane %v1119, 2
      %v1804 = vsel %vm1657, %v1802, %v1803
      %v1805 = vrot.slane %v1120, 2
      %v1806 = vsel %vm1657, %v1803, %v1805
      %v1807 = vrot.slane %v1121, 2
      %v1808 = vsel %vm1657, %v1805, %v1807
      %v1809 = vrot.slane %v1122, 2
      %v1810 = vsel %vm1657, %v1807, %v1809
      %v1811 = vrot.slane %v1123, 2
      %v1812 = vrot.slane %v1124, 2
      %v1813 = vsel %vm1657, %v1811, %v1812
      %v1814 = vrot.slane %v1125, 2
      %v1815 = vsel %vm1657, %v1812, %v1814
      %v1816 = vrot.slane %v1126, 2
      %v1817 = vsel %vm1657, %v1814, %v1816
      %v1818 = vrot.slane %v1127, 2
      %v1819 = vsel %vm1657, %v1816, %v1818
      %v1820 = vrot.slane %v1128, 2
      %v1821 = vrot.slane %v1129, 2
      %v1822 = vsel %vm1657, %v1820, %v1821
      %v1823 = vrot.slane %v1130, 2
      %v1824 = vsel %vm1657, %v1821, %v1823
      %v1825 = vrot.slane %v1131, 2
      %v1826 = vsel %vm1657, %v1823, %v1825
      %v1827 = vrot.slane %v1132, 2
      %v1828 = vsel %vm1657, %v1825, %v1827
      %v1829 = vrot.slane %v1133, 2
      %v1830 = vrot.slane %v1134, 2
      %v1831 = vsel %vm1657, %v1829, %v1830
      %v1832 = vrot.slane %v1135, 2
      %v1833 = vsel %vm1657, %v1830, %v1832
      %v1834 = vrot.slane %v1136, 2
      %v1835 = vsel %vm1657, %v1832, %v1834
      %v1836 = vrot.slane %v1137, 2
      %v1837 = vsel %vm1657, %v1834, %v1836
      %v1838 = vrot.slane %v1138, 2
      %v1839 = vrot.slane %v1139, 2
      %v1840 = vsel %vm1657, %v1838, %v1839
      %v1841 = vrot.slane %v1140, 2
      %v1842 = vsel %vm1657, %v1839, %v1841
      %v1843 = vrot.slane %v1141, 2
      %v1844 = vsel %vm1657, %v1841, %v1843
      %v1845 = vrot.slane %v1142, 2
      %v1846 = vsel %vm1657, %v1843, %v1845
      %v1847 = vrot.slane %v1143, 2
      %v1848 = vrot.slane %v1144, 2
      %v1849 = vsel %vm1657, %v1847, %v1848
      %v1850 = vrot.slane %v1145, 2
      %v1851 = vsel %vm1657, %v1848, %v1850
      %v1852 = vrot.slane %v1146, 2
      %v1853 = vsel %vm1657, %v1850, %v1852
      %v1854 = vrot.slane %v1147, 2
      %v1855 = vsel %vm1657, %v1852, %v1854
      %v1856 = vrot.slane %v1148, 2
      %v1857 = vrot.slane %v1149, 2
      %v1858 = vsel %vm1657, %v1856, %v1857
      %v1859 = vrot.slane %v1150, 2
      %v1860 = vsel %vm1657, %v1857, %v1859
      %v1861 = vrot.slane %v1151, 2
      %v1862 = vsel %vm1657, %v1859, %v1861
      %v1863 = vrot.slane %v1152, 2
      %v1864 = vsel %vm1657, %v1861, %v1863
      %v1865 = vrot.slane %v1153, 2
      %v1866 = vrot.slane %v1154, 2
      %v1867 = vsel %vm1657, %v1865, %v1866
      %v1868 = vrot.slane %v1155, 2
      %v1869 = vsel %vm1657, %v1866, %v1868
      %v1870 = vrot.slane %v1156, 2
      %v1871 = vsel %vm1657, %v1868, %v1870
      %v1872 = vrot.slane %v1157, 2
      %v1873 = vsel %vm1657, %v1870, %v1872
      %v1874 = vrot.slane %v1158, 2
      %v1875 = vrot.slane %v1159, 2
      %v1876 = vsel %vm1657, %v1874, %v1875
      %v1877 = vrot.slane %v1160, 2
      %v1878 = vsel %vm1657, %v1875, %v1877
      %v1879 = vrot.slane %v1161, 2
      %v1880 = vsel %vm1657, %v1877, %v1879
      %v1881 = vrot.slane %v1162, 2
      %v1882 = vsel %vm1657, %v1879, %v1881
      %v1883 = vrot.slane %v1163, 2
      %v1884 = vrot.slane %v1164, 2
      %v1885 = vsel %vm1657, %v1883, %v1884
      %v1886 = vrot.slane %v1165, 2
      %v1887 = vsel %vm1657, %v1884, %v1886
      %v1888 = vrot.slane %v1166, 2
      %v1889 = vsel %vm1657, %v1886, %v1888
      %v1890 = vrot.slane %v1167, 2
      %v1891 = vsel %vm1657, %v1888, %v1890
      %v1892 = vrot.slane %v1168, 2
      %v1893 = vrot.slane %v1169, 2
      %v1894 = vsel %vm1657, %v1892, %v1893
      %v1895 = vrot.slane %v1170, 2
      %v1896 = vsel %vm1657, %v1893, %v1895
      %v1897 = vrot.slane %v1171, 2
      %v1898 = vsel %vm1657, %v1895, %v1897
      %v1899 = vrot.slane %v1172, 2
      %v1900 = vsel %vm1657, %v1897, %v1899
      %v1901 = vrot.slane %v1173, 2
      %v1902 = vrot.slane %v1174, 2
      %v1903 = vsel %vm1657, %v1901, %v1902
      %v1904 = vrot.slane %v1175, 2
      %v1905 = vsel %vm1657, %v1902, %v1904
      %v1906 = vrot.slane %v1176, 2
      %v1907 = vsel %vm1657, %v1904, %v1906
      %v1908 = vrot.slane %v1177, 2
      %v1909 = vsel %vm1657, %v1906, %v1908
      %v1910 = vrot.slane %v1178, 2
      %v1911 = vrot.slane %v1179, 2
      %v1912 = vsel %vm1657, %v1910, %v1911
      %v1913 = vrot.slane %v1180, 2
      %v1914 = vsel %vm1657, %v1911, %v1913
      %v1915 = vrot.slane %v1181, 2
      %v1916 = vsel %vm1657, %v1913, %v1915
      %v1917 = vrot.slane %v1182, 2
      %v1918 = vsel %vm1657, %v1915, %v1917
      %v1919 = vrot.slane %v1183, 2
      %v1920 = vrot.slane %v1184, 2
      %v1921 = vsel %vm1657, %v1919, %v1920
      %v1922 = vrot.slane %v1185, 2
      %v1923 = vsel %vm1657, %v1920, %v1922
      %v1924 = vrot.slane %v1186, 2
      %v1925 = vsel %vm1657, %v1922, %v1924
      %v1926 = vrot.slane %v1187, 2
      %v1927 = vsel %vm1657, %v1924, %v1926
      %v1928 = vrot.slane %v1188, 2
      %v1929 = vrot.slane %v1189, 2
      %v1930 = vsel %vm1657, %v1928, %v1929
      %v1931 = vrot.slane %v1190, 2
      %v1932 = vsel %vm1657, %v1929, %v1931
      %v1933 = vrot.slane %v1191, 2
      %v1934 = vsel %vm1657, %v1931, %v1933
      %v1935 = vrot.slane %v1192, 2
      %v1936 = vsel %vm1657, %v1933, %v1935
      %v1937 = vrot.slane %v1193, 2
      %v1938 = vrot.slane %v1194, 2
      %v1939 = vsel %vm1657, %v1937, %v1938
      %v1940 = vrot.slane %v1195, 2
      %v1941 = vsel %vm1657, %v1938, %v1940
      %v1942 = vrot.slane %v1196, 2
      %v1943 = vsel %vm1657, %v1940, %v1942
      %v1944 = vrot.slane %v1197, 2
      %v1945 = vsel %vm1657, %v1942, %v1944
      %v1951 = vrot.slane %v1198, 1
      %v1952 = vrot.slane %v1199, 1
      %v1953 = vsel %vm1368, %v1951, %v1952
      %v1954 = vrot.slane %v1200, 1
      %v1955 = vsel %vm1368, %v1952, %v1954
      %v1956 = vrot.slane %v1201, 1
      %v1957 = vsel %vm1368, %v1954, %v1956
      %v1958 = vrot.slane %v1202, 1
      %v1959 = vsel %vm1368, %v1956, %v1958
      %v1960 = vrot.slane %v1198, 2
      %v1961 = vrot.slane %v1199, 2
      %v1962 = vsel %vm1657, %v1960, %v1961
      %v1963 = vrot.slane %v1200, 2
      %v1964 = vsel %vm1657, %v1961, %v1963
      %v1965 = vrot.slane %v1201, 2
      %v1966 = vsel %vm1657, %v1963, %v1965
      %v1967 = vrot.slane %v1202, 2
      %v1968 = vsel %vm1657, %v1965, %v1967
      %v1974 = vrot.slane %v1203, 1
      %v1975 = vrot.slane %v1204, 1
      %v1976 = vsel %vm1368, %v1974, %v1975
      %v1977 = vrot.slane %v1205, 1
      %v1978 = vsel %vm1368, %v1975, %v1977
      %v1979 = vrot.slane %v1206, 1
      %v1980 = vsel %vm1368, %v1977, %v1979
      %v1981 = vrot.slane %v1207, 1
      %v1982 = vsel %vm1368, %v1979, %v1981
      %v1983 = vrot.slane %v1203, 2
      %v1984 = vrot.slane %v1204, 2
      %v1985 = vsel %vm1657, %v1983, %v1984
      %v1986 = vrot.slane %v1205, 2
      %v1987 = vsel %vm1657, %v1984, %v1986
      %v1988 = vrot.slane %v1206, 2
      %v1989 = vsel %vm1657, %v1986, %v1988
      %v1990 = vrot.slane %v1207, 2
      %v1991 = vsel %vm1657, %v1988, %v1990
      %1992 = vrot.lane.b32.xlu0 %v1371, 4
      %v1993 = vpop.permute.xlu0 %1992
      %1994 = vrot.lane.b32.xlu0 %v1373, 4
      %v1995 = vpop.permute.xlu0 %1994
      %1996 = vrot.lane.b32.xlu0 %v1375, 4
      %v1997 = vpop.permute.xlu0 %1996
      %1998 = vrot.lane.b32.xlu0 %v1377, 4
      %v1999 = vpop.permute.xlu0 %1998
      %2000 = vrot.lane.b32.xlu0 %v1380, 4
      %v2001 = vpop.permute.xlu0 %2000
      %2002 = vrot.lane.b32.xlu0 %v1382, 4
      %v2003 = vpop.permute.xlu0 %2002
      %2004 = vrot.lane.b32.xlu0 %v1384, 4
      %v2005 = vpop.permute.xlu0 %2004
      %2006 = vrot.lane.b32.xlu0 %v1386, 4
      %v2007 = vpop.permute.xlu0 %2006
      %2008 = vrot.lane.b32.xlu0 %v1389, 4
      %v2009 = vpop.permute.xlu0 %2008
      %2010 = vrot.lane.b32.xlu0 %v1391, 4
      %v2011 = vpop.permute.xlu0 %2010
      %2012 = vrot.lane.b32.xlu0 %v1393, 4
      %v2013 = vpop.permute.xlu0 %2012
      %2014 = vrot.lane.b32.xlu0 %v1395, 4
      %v2015 = vpop.permute.xlu0 %2014
      %2016 = vrot.lane.b32.xlu0 %v1398, 4
      %v2017 = vpop.permute.xlu0 %2016
      %2018 = vrot.lane.b32.xlu0 %v1400, 4
      %v2019 = vpop.permute.xlu0 %2018
      %2020 = vrot.lane.b32.xlu0 %v1402, 4
      %v2021 = vpop.permute.xlu0 %2020
      %2022 = vrot.lane.b32.xlu0 %v1404, 4
      %v2023 = vpop.permute.xlu0 %2022
      %2024 = vrot.lane.b32.xlu0 %v1407, 4
      %v2025 = vpop.permute.xlu0 %2024
      %2026 = vrot.lane.b32.xlu0 %v1409, 4
      %v2027 = vpop.permute.xlu0 %2026
      %2028 = vrot.lane.b32.xlu0 %v1411, 4
      %v2029 = vpop.permute.xlu0 %2028
      %2030 = vrot.lane.b32.xlu0 %v1413, 4
      %v2031 = vpop.permute.xlu0 %2030
      %2032 = vrot.lane.b32.xlu0 %v1416, 4
      %v2033 = vpop.permute.xlu0 %2032
      %2034 = vrot.lane.b32.xlu0 %v1418, 4
      %v2035 = vpop.permute.xlu0 %2034
      %2036 = vrot.lane.b32.xlu0 %v1420, 4
      %v2037 = vpop.permute.xlu0 %2036
      %2038 = vrot.lane.b32.xlu0 %v1422, 4
      %v2039 = vpop.permute.xlu0 %2038
      %2040 = vrot.lane.b32.xlu0 %v1425, 4
      %v2041 = vpop.permute.xlu0 %2040
      %2042 = vrot.lane.b32.xlu0 %v1427, 4
      %v2043 = vpop.permute.xlu0 %2042
      %2044 = vrot.lane.b32.xlu0 %v1429, 4
      %v2045 = vpop.permute.xlu0 %2044
      %2046 = vrot.lane.b32.xlu0 %v1431, 4
      %v2047 = vpop.permute.xlu0 %2046
      %2048 = vrot.lane.b32.xlu0 %v1434, 4
      %v2049 = vpop.permute.xlu0 %2048
      %2050 = vrot.lane.b32.xlu0 %v1436, 4
      %v2051 = vpop.permute.xlu0 %2050
      %2052 = vrot.lane.b32.xlu0 %v1438, 4
      %v2053 = vpop.permute.xlu0 %2052
      %2054 = vrot.lane.b32.xlu0 %v1440, 4
      %v2055 = vpop.permute.xlu0 %2054
      %2056 = vrot.lane.b32.xlu0 %v1443, 4
      %v2057 = vpop.permute.xlu0 %2056
      %2058 = vrot.lane.b32.xlu0 %v1445, 4
      %v2059 = vpop.permute.xlu0 %2058
      %2060 = vrot.lane.b32.xlu0 %v1447, 4
      %v2061 = vpop.permute.xlu0 %2060
      %2062 = vrot.lane.b32.xlu0 %v1449, 4
      %v2063 = vpop.permute.xlu0 %2062
      %2064 = vrot.lane.b32.xlu0 %v1452, 4
      %v2065 = vpop.permute.xlu0 %2064
      %2066 = vrot.lane.b32.xlu0 %v1454, 4
      %v2067 = vpop.permute.xlu0 %2066
      %2068 = vrot.lane.b32.xlu0 %v1456, 4
      %v2069 = vpop.permute.xlu0 %2068
      %2070 = vrot.lane.b32.xlu0 %v1458, 4
      %v2071 = vpop.permute.xlu0 %2070
      %2072 = vrot.lane.b32.xlu0 %v1461, 4
      %v2073 = vpop.permute.xlu0 %2072
      %2074 = vrot.lane.b32.xlu0 %v1463, 4
      %v2075 = vpop.permute.xlu0 %2074
      %2076 = vrot.lane.b32.xlu0 %v1465, 4
      %v2077 = vpop.permute.xlu0 %2076
      %2078 = vrot.lane.b32.xlu0 %v1467, 4
      %v2079 = vpop.permute.xlu0 %2078
      %2080 = vrot.lane.b32.xlu0 %v1470, 4
      %v2081 = vpop.permute.xlu0 %2080
      %2082 = vrot.lane.b32.xlu0 %v1472, 4
      %v2083 = vpop.permute.xlu0 %2082
      %2084 = vrot.lane.b32.xlu0 %v1474, 4
      %v2085 = vpop.permute.xlu0 %2084
      %2086 = vrot.lane.b32.xlu0 %v1476, 4
      %v2087 = vpop.permute.xlu0 %2086
      %2088 = vrot.lane.b32.xlu0 %v1479, 4
      %v2089 = vpop.permute.xlu0 %2088
      %2090 = vrot.lane.b32.xlu0 %v1481, 4
      %v2091 = vpop.permute.xlu0 %2090
      %2092 = vrot.lane.b32.xlu0 %v1483, 4
      %v2093 = vpop.permute.xlu0 %2092
      %2094 = vrot.lane.b32.xlu0 %v1485, 4
      %v2095 = vpop.permute.xlu0 %2094
      %2096 = vrot.lane.b32.xlu0 %v1488, 4
      %v2097 = vpop.permute.xlu0 %2096
      %2098 = vrot.lane.b32.xlu0 %v1490, 4
      %v2099 = vpop.permute.xlu0 %2098
      %2100 = vrot.lane.b32.xlu0 %v1492, 4
      %v2101 = vpop.permute.xlu0 %2100
      %2102 = vrot.lane.b32.xlu0 %v1494, 4
      %v2103 = vpop.permute.xlu0 %2102
      %2104 = vrot.lane.b32.xlu0 %v1497, 4
      %v2105 = vpop.permute.xlu0 %2104
      %2106 = vrot.lane.b32.xlu0 %v1499, 4
      %v2107 = vpop.permute.xlu0 %2106
      %2108 = vrot.lane.b32.xlu0 %v1501, 4
      %v2109 = vpop.permute.xlu0 %2108
      %2110 = vrot.lane.b32.xlu0 %v1503, 4
      %v2111 = vpop.permute.xlu0 %2110
      %2112 = vrot.lane.b32.xlu0 %v1506, 4
      %v2113 = vpop.permute.xlu0 %2112
      %2114 = vrot.lane.b32.xlu0 %v1508, 4
      %v2115 = vpop.permute.xlu0 %2114
      %2116 = vrot.lane.b32.xlu0 %v1510, 4
      %v2117 = vpop.permute.xlu0 %2116
      %2118 = vrot.lane.b32.xlu0 %v1512, 4
      %v2119 = vpop.permute.xlu0 %2118
      %2120 = vrot.lane.b32.xlu0 %v1515, 4
      %v2121 = vpop.permute.xlu0 %2120
      %2122 = vrot.lane.b32.xlu0 %v1517, 4
      %v2123 = vpop.permute.xlu0 %2122
      %2124 = vrot.lane.b32.xlu0 %v1519, 4
      %v2125 = vpop.permute.xlu0 %2124
      %2126 = vrot.lane.b32.xlu0 %v1521, 4
      %v2127 = vpop.permute.xlu0 %2126
      %2128 = vrot.lane.b32.xlu0 %v1524, 4
      %v2129 = vpop.permute.xlu0 %2128
      %2130 = vrot.lane.b32.xlu0 %v1526, 4
      %v2131 = vpop.permute.xlu0 %2130
      %2132 = vrot.lane.b32.xlu0 %v1528, 4
      %v2133 = vpop.permute.xlu0 %2132
      %2134 = vrot.lane.b32.xlu0 %v1530, 4
      %v2135 = vpop.permute.xlu0 %2134
      %2136 = vrot.lane.b32.xlu0 %v1533, 4
      %v2137 = vpop.permute.xlu0 %2136
      %2138 = vrot.lane.b32.xlu0 %v1535, 4
      %v2139 = vpop.permute.xlu0 %2138
      %2140 = vrot.lane.b32.xlu0 %v1537, 4
      %v2141 = vpop.permute.xlu0 %2140
      %2142 = vrot.lane.b32.xlu0 %v1539, 4
      %v2143 = vpop.permute.xlu0 %2142
      %2144 = vrot.lane.b32.xlu0 %v1542, 4
      %v2145 = vpop.permute.xlu0 %2144
      %2146 = vrot.lane.b32.xlu0 %v1544, 4
      %v2147 = vpop.permute.xlu0 %2146
      %2148 = vrot.lane.b32.xlu0 %v1546, 4
      %v2149 = vpop.permute.xlu0 %2148
      %2150 = vrot.lane.b32.xlu0 %v1548, 4
      %v2151 = vpop.permute.xlu0 %2150
      %2152 = vrot.lane.b32.xlu0 %v1551, 4
      %v2153 = vpop.permute.xlu0 %2152
      %2154 = vrot.lane.b32.xlu0 %v1553, 4
      %v2155 = vpop.permute.xlu0 %2154
      %2156 = vrot.lane.b32.xlu0 %v1555, 4
      %v2157 = vpop.permute.xlu0 %2156
      %2158 = vrot.lane.b32.xlu0 %v1557, 4
      %v2159 = vpop.permute.xlu0 %2158
      %2160 = vrot.lane.b32.xlu0 %v1560, 4
      %v2161 = vpop.permute.xlu0 %2160
      %2162 = vrot.lane.b32.xlu0 %v1562, 4
      %v2163 = vpop.permute.xlu0 %2162
      %2164 = vrot.lane.b32.xlu0 %v1564, 4
      %v2165 = vpop.permute.xlu0 %2164
      %2166 = vrot.lane.b32.xlu0 %v1566, 4
      %v2167 = vpop.permute.xlu0 %2166
      %2168 = vrot.lane.b32.xlu0 %v1569, 4
      %v2169 = vpop.permute.xlu0 %2168
      %2170 = vrot.lane.b32.xlu0 %v1571, 4
      %v2171 = vpop.permute.xlu0 %2170
      %2172 = vrot.lane.b32.xlu0 %v1573, 4
      %v2173 = vpop.permute.xlu0 %2172
      %2174 = vrot.lane.b32.xlu0 %v1575, 4
      %v2175 = vpop.permute.xlu0 %2174
      %2176 = vrot.lane.b32.xlu0 %v1578, 4
      %v2177 = vpop.permute.xlu0 %2176
      %2178 = vrot.lane.b32.xlu0 %v1580, 4
      %v2179 = vpop.permute.xlu0 %2178
      %2180 = vrot.lane.b32.xlu0 %v1582, 4
      %v2181 = vpop.permute.xlu0 %2180
      %2182 = vrot.lane.b32.xlu0 %v1584, 4
      %v2183 = vpop.permute.xlu0 %2182
      %2184 = vrot.lane.b32.xlu0 %v1587, 4
      %v2185 = vpop.permute.xlu0 %2184
      %2186 = vrot.lane.b32.xlu0 %v1589, 4
      %v2187 = vpop.permute.xlu0 %2186
      %2188 = vrot.lane.b32.xlu0 %v1591, 4
      %v2189 = vpop.permute.xlu0 %2188
      %2190 = vrot.lane.b32.xlu0 %v1593, 4
      %v2191 = vpop.permute.xlu0 %2190
      %2192 = vrot.lane.b32.xlu0 %v1596, 4
      %v2193 = vpop.permute.xlu0 %2192
      %2194 = vrot.lane.b32.xlu0 %v1598, 4
      %v2195 = vpop.permute.xlu0 %2194
      %2196 = vrot.lane.b32.xlu0 %v1600, 4
      %v2197 = vpop.permute.xlu0 %2196
      %2198 = vrot.lane.b32.xlu0 %v1602, 4
      %v2199 = vpop.permute.xlu0 %2198
      %2200 = vrot.lane.b32.xlu0 %v1605, 4
      %v2201 = vpop.permute.xlu0 %2200
      %2202 = vrot.lane.b32.xlu0 %v1607, 4
      %v2203 = vpop.permute.xlu0 %2202
      %2204 = vrot.lane.b32.xlu0 %v1609, 4
      %v2205 = vpop.permute.xlu0 %2204
      %2206 = vrot.lane.b32.xlu0 %v1611, 4
      %v2207 = vpop.permute.xlu0 %2206
      %2208 = vrot.lane.b32.xlu0 %v1614, 4
      %v2209 = vpop.permute.xlu0 %2208
      %2210 = vrot.lane.b32.xlu0 %v1616, 4
      %v2211 = vpop.permute.xlu0 %2210
      %2212 = vrot.lane.b32.xlu0 %v1618, 4
      %v2213 = vpop.permute.xlu0 %2212
      %2214 = vrot.lane.b32.xlu0 %v1620, 4
      %v2215 = vpop.permute.xlu0 %2214
      %2216 = vrot.lane.b32.xlu0 %v1623, 4
      %v2217 = vpop.permute.xlu0 %2216
      %2218 = vrot.lane.b32.xlu0 %v1625, 4
      %v2219 = vpop.permute.xlu0 %2218
      %2220 = vrot.lane.b32.xlu0 %v1627, 4
      %v2221 = vpop.permute.xlu0 %2220
      %2222 = vrot.lane.b32.xlu0 %v1629, 4
      %v2223 = vpop.permute.xlu0 %2222
      %2224 = vrot.lane.b32.xlu0 %v1632, 4
      %v2225 = vpop.permute.xlu0 %2224
      %2226 = vrot.lane.b32.xlu0 %v1634, 4
      %v2227 = vpop.permute.xlu0 %2226
      %2228 = vrot.lane.b32.xlu0 %v1636, 4
      %v2229 = vpop.permute.xlu0 %2228
      %2230 = vrot.lane.b32.xlu0 %v1638, 4
      %v2231 = vpop.permute.xlu0 %2230
      %2232 = vrot.lane.b32.xlu0 %v1641, 4
      %v2233 = vpop.permute.xlu0 %2232
      %2234 = vrot.lane.b32.xlu0 %v1643, 4
      %v2235 = vpop.permute.xlu0 %2234
      %2236 = vrot.lane.b32.xlu0 %v1645, 4
      %v2237 = vpop.permute.xlu0 %2236
      %2238 = vrot.lane.b32.xlu0 %v1647, 4
      %v2239 = vpop.permute.xlu0 %2238
      %2240 = vrot.lane.b32.xlu0 %v1650, 4
      %v2241 = vpop.permute.xlu0 %2240
      %2242 = vrot.lane.b32.xlu0 %v1652, 4
      %v2243 = vpop.permute.xlu0 %2242
      %2244 = vrot.lane.b32.xlu0 %v1654, 4
      %v2245 = vpop.permute.xlu0 %2244
      %2246 = vrot.lane.b32.xlu0 %v1656, 4
      %v2247 = vpop.permute.xlu0 %2246
      %2376 = vrot.lane.b32.xlu0 %v1660, 8
      %v2377 = vpop.permute.xlu0 %2376
      %2378 = vrot.lane.b32.xlu0 %v1662, 8
      %v2379 = vpop.permute.xlu0 %2378
      %2380 = vrot.lane.b32.xlu0 %v1664, 8
      %v2381 = vpop.permute.xlu0 %2380
      %2382 = vrot.lane.b32.xlu0 %v1666, 8
      %v2383 = vpop.permute.xlu0 %2382
      %2384 = vrot.lane.b32.xlu0 %v1669, 8
      %v2385 = vpop.permute.xlu0 %2384
      %2386 = vrot.lane.b32.xlu0 %v1671, 8
      %v2387 = vpop.permute.xlu0 %2386
      %2388 = vrot.lane.b32.xlu0 %v1673, 8
      %v2389 = vpop.permute.xlu0 %2388
      %2390 = vrot.lane.b32.xlu0 %v1675, 8
      %v2391 = vpop.permute.xlu0 %2390
      %2392 = vrot.lane.b32.xlu0 %v1678, 8
      %v2393 = vpop.permute.xlu0 %2392
      %2394 = vrot.lane.b32.xlu0 %v1680, 8
      %v2395 = vpop.permute.xlu0 %2394
      %2396 = vrot.lane.b32.xlu0 %v1682, 8
      %v2397 = vpop.permute.xlu0 %2396
      %2398 = vrot.lane.b32.xlu0 %v1684, 8
      %v2399 = vpop.permute.xlu0 %2398
      %2400 = vrot.lane.b32.xlu0 %v1687, 8
      %v2401 = vpop.permute.xlu0 %2400
      %2402 = vrot.lane.b32.xlu0 %v1689, 8
      %v2403 = vpop.permute.xlu0 %2402
      %2404 = vrot.lane.b32.xlu0 %v1691, 8
      %v2405 = vpop.permute.xlu0 %2404
      %2406 = vrot.lane.b32.xlu0 %v1693, 8
      %v2407 = vpop.permute.xlu0 %2406
      %2408 = vrot.lane.b32.xlu0 %v1696, 8
      %v2409 = vpop.permute.xlu0 %2408
      %2410 = vrot.lane.b32.xlu0 %v1698, 8
      %v2411 = vpop.permute.xlu0 %2410
      %2412 = vrot.lane.b32.xlu0 %v1700, 8
      %v2413 = vpop.permute.xlu0 %2412
      %2414 = vrot.lane.b32.xlu0 %v1702, 8
      %v2415 = vpop.permute.xlu0 %2414
      %2416 = vrot.lane.b32.xlu0 %v1705, 8
      %v2417 = vpop.permute.xlu0 %2416
      %2418 = vrot.lane.b32.xlu0 %v1707, 8
      %v2419 = vpop.permute.xlu0 %2418
      %2420 = vrot.lane.b32.xlu0 %v1709, 8
      %v2421 = vpop.permute.xlu0 %2420
      %2422 = vrot.lane.b32.xlu0 %v1711, 8
      %v2423 = vpop.permute.xlu0 %2422
      %2424 = vrot.lane.b32.xlu0 %v1714, 8
      %v2425 = vpop.permute.xlu0 %2424
      %2426 = vrot.lane.b32.xlu0 %v1716, 8
      %v2427 = vpop.permute.xlu0 %2426
      %2428 = vrot.lane.b32.xlu0 %v1718, 8
      %v2429 = vpop.permute.xlu0 %2428
      %2430 = vrot.lane.b32.xlu0 %v1720, 8
      %v2431 = vpop.permute.xlu0 %2430
      %2432 = vrot.lane.b32.xlu0 %v1723, 8
      %v2433 = vpop.permute.xlu0 %2432
      %2434 = vrot.lane.b32.xlu0 %v1725, 8
      %v2435 = vpop.permute.xlu0 %2434
      %2436 = vrot.lane.b32.xlu0 %v1727, 8
      %v2437 = vpop.permute.xlu0 %2436
      %2438 = vrot.lane.b32.xlu0 %v1729, 8
      %v2439 = vpop.permute.xlu0 %2438
      %2440 = vrot.lane.b32.xlu0 %v1732, 8
      %v2441 = vpop.permute.xlu0 %2440
      %2442 = vrot.lane.b32.xlu0 %v1734, 8
      %v2443 = vpop.permute.xlu0 %2442
      %2444 = vrot.lane.b32.xlu0 %v1736, 8
      %v2445 = vpop.permute.xlu0 %2444
      %2446 = vrot.lane.b32.xlu0 %v1738, 8
      %v2447 = vpop.permute.xlu0 %2446
      %2448 = vrot.lane.b32.xlu0 %v1741, 8
      %v2449 = vpop.permute.xlu0 %2448
      %2450 = vrot.lane.b32.xlu0 %v1743, 8
      %v2451 = vpop.permute.xlu0 %2450
      %2452 = vrot.lane.b32.xlu0 %v1745, 8
      %v2453 = vpop.permute.xlu0 %2452
      %2454 = vrot.lane.b32.xlu0 %v1747, 8
      %v2455 = vpop.permute.xlu0 %2454
      %2456 = vrot.lane.b32.xlu0 %v1750, 8
      %v2457 = vpop.permute.xlu0 %2456
      %2458 = vrot.lane.b32.xlu0 %v1752, 8
      %v2459 = vpop.permute.xlu0 %2458
      %2460 = vrot.lane.b32.xlu0 %v1754, 8
      %v2461 = vpop.permute.xlu0 %2460
      %2462 = vrot.lane.b32.xlu0 %v1756, 8
      %v2463 = vpop.permute.xlu0 %2462
      %2464 = vrot.lane.b32.xlu0 %v1759, 8
      %v2465 = vpop.permute.xlu0 %2464
      %2466 = vrot.lane.b32.xlu0 %v1761, 8
      %v2467 = vpop.permute.xlu0 %2466
      %2468 = vrot.lane.b32.xlu0 %v1763, 8
      %v2469 = vpop.permute.xlu0 %2468
      %2470 = vrot.lane.b32.xlu0 %v1765, 8
      %v2471 = vpop.permute.xlu0 %2470
      %2472 = vrot.lane.b32.xlu0 %v1768, 8
      %v2473 = vpop.permute.xlu0 %2472
      %2474 = vrot.lane.b32.xlu0 %v1770, 8
      %v2475 = vpop.permute.xlu0 %2474
      %2476 = vrot.lane.b32.xlu0 %v1772, 8
      %v2477 = vpop.permute.xlu0 %2476
      %2478 = vrot.lane.b32.xlu0 %v1774, 8
      %v2479 = vpop.permute.xlu0 %2478
      %2480 = vrot.lane.b32.xlu0 %v1777, 8
      %v2481 = vpop.permute.xlu0 %2480
      %2482 = vrot.lane.b32.xlu0 %v1779, 8
      %v2483 = vpop.permute.xlu0 %2482
      %2484 = vrot.lane.b32.xlu0 %v1781, 8
      %v2485 = vpop.permute.xlu0 %2484
      %2486 = vrot.lane.b32.xlu0 %v1783, 8
      %v2487 = vpop.permute.xlu0 %2486
      %2488 = vrot.lane.b32.xlu0 %v1786, 8
      %v2489 = vpop.permute.xlu0 %2488
      %2490 = vrot.lane.b32.xlu0 %v1788, 8
      %v2491 = vpop.permute.xlu0 %2490
      %2492 = vrot.lane.b32.xlu0 %v1790, 8
      %v2493 = vpop.permute.xlu0 %2492
      %2494 = vrot.lane.b32.xlu0 %v1792, 8
      %v2495 = vpop.permute.xlu0 %2494
      %2496 = vrot.lane.b32.xlu0 %v1795, 8
      %v2497 = vpop.permute.xlu0 %2496
      %2498 = vrot.lane.b32.xlu0 %v1797, 8
      %v2499 = vpop.permute.xlu0 %2498
      %2500 = vrot.lane.b32.xlu0 %v1799, 8
      %v2501 = vpop.permute.xlu0 %2500
      %2502 = vrot.lane.b32.xlu0 %v1801, 8
      %v2503 = vpop.permute.xlu0 %2502
      %2504 = vrot.lane.b32.xlu0 %v1804, 8
      %v2505 = vpop.permute.xlu0 %2504
      %2506 = vrot.lane.b32.xlu0 %v1806, 8
      %v2507 = vpop.permute.xlu0 %2506
      %2508 = vrot.lane.b32.xlu0 %v1808, 8
      %v2509 = vpop.permute.xlu0 %2508
      %2510 = vrot.lane.b32.xlu0 %v1810, 8
      %v2511 = vpop.permute.xlu0 %2510
      %2512 = vrot.lane.b32.xlu0 %v1813, 8
      %v2513 = vpop.permute.xlu0 %2512
      %2514 = vrot.lane.b32.xlu0 %v1815, 8
      %v2515 = vpop.permute.xlu0 %2514
      %2516 = vrot.lane.b32.xlu0 %v1817, 8
      %v2517 = vpop.permute.xlu0 %2516
      %2518 = vrot.lane.b32.xlu0 %v1819, 8
      %v2519 = vpop.permute.xlu0 %2518
      %2520 = vrot.lane.b32.xlu0 %v1822, 8
      %v2521 = vpop.permute.xlu0 %2520
      %2522 = vrot.lane.b32.xlu0 %v1824, 8
      %v2523 = vpop.permute.xlu0 %2522
      %2524 = vrot.lane.b32.xlu0 %v1826, 8
      %v2525 = vpop.permute.xlu0 %2524
      %2526 = vrot.lane.b32.xlu0 %v1828, 8
      %v2527 = vpop.permute.xlu0 %2526
      %2528 = vrot.lane.b32.xlu0 %v1831, 8
      %v2529 = vpop.permute.xlu0 %2528
      %2530 = vrot.lane.b32.xlu0 %v1833, 8
      %v2531 = vpop.permute.xlu0 %2530
      %2532 = vrot.lane.b32.xlu0 %v1835, 8
      %v2533 = vpop.permute.xlu0 %2532
      %2534 = vrot.lane.b32.xlu0 %v1837, 8
      %v2535 = vpop.permute.xlu0 %2534
      %2536 = vrot.lane.b32.xlu0 %v1840, 8
      %v2537 = vpop.permute.xlu0 %2536
      %2538 = vrot.lane.b32.xlu0 %v1842, 8
      %v2539 = vpop.permute.xlu0 %2538
      %2540 = vrot.lane.b32.xlu0 %v1844, 8
      %v2541 = vpop.permute.xlu0 %2540
      %2542 = vrot.lane.b32.xlu0 %v1846, 8
      %v2543 = vpop.permute.xlu0 %2542
      %2544 = vrot.lane.b32.xlu0 %v1849, 8
      %v2545 = vpop.permute.xlu0 %2544
      %2546 = vrot.lane.b32.xlu0 %v1851, 8
      %v2547 = vpop.permute.xlu0 %2546
      %2548 = vrot.lane.b32.xlu0 %v1853, 8
      %v2549 = vpop.permute.xlu0 %2548
      %2550 = vrot.lane.b32.xlu0 %v1855, 8
      %v2551 = vpop.permute.xlu0 %2550
      %2552 = vrot.lane.b32.xlu0 %v1858, 8
      %v2553 = vpop.permute.xlu0 %2552
      %2554 = vrot.lane.b32.xlu0 %v1860, 8
      %v2555 = vpop.permute.xlu0 %2554
      %2556 = vrot.lane.b32.xlu0 %v1862, 8
      %v2557 = vpop.permute.xlu0 %2556
      %2558 = vrot.lane.b32.xlu0 %v1864, 8
      %v2559 = vpop.permute.xlu0 %2558
      %2560 = vrot.lane.b32.xlu0 %v1867, 8
      %v2561 = vpop.permute.xlu0 %2560
      %2562 = vrot.lane.b32.xlu0 %v1869, 8
      %v2563 = vpop.permute.xlu0 %2562
      %2564 = vrot.lane.b32.xlu0 %v1871, 8
      %v2565 = vpop.permute.xlu0 %2564
      %2566 = vrot.lane.b32.xlu0 %v1873, 8
      %v2567 = vpop.permute.xlu0 %2566
      %2568 = vrot.lane.b32.xlu0 %v1876, 8
      %v2569 = vpop.permute.xlu0 %2568
      %2570 = vrot.lane.b32.xlu0 %v1878, 8
      %v2571 = vpop.permute.xlu0 %2570
      %2572 = vrot.lane.b32.xlu0 %v1880, 8
      %v2573 = vpop.permute.xlu0 %2572
      %2574 = vrot.lane.b32.xlu0 %v1882, 8
      %v2575 = vpop.permute.xlu0 %2574
      %2576 = vrot.lane.b32.xlu0 %v1885, 8
      %v2577 = vpop.permute.xlu0 %2576
      %2578 = vrot.lane.b32.xlu0 %v1887, 8
      %v2579 = vpop.permute.xlu0 %2578
      %2580 = vrot.lane.b32.xlu0 %v1889, 8
      %v2581 = vpop.permute.xlu0 %2580
      %2582 = vrot.lane.b32.xlu0 %v1891, 8
      %v2583 = vpop.permute.xlu0 %2582
      %2584 = vrot.lane.b32.xlu0 %v1894, 8
      %v2585 = vpop.permute.xlu0 %2584
      %2586 = vrot.lane.b32.xlu0 %v1896, 8
      %v2587 = vpop.permute.xlu0 %2586
      %2588 = vrot.lane.b32.xlu0 %v1898, 8
      %v2589 = vpop.permute.xlu0 %2588
      %2590 = vrot.lane.b32.xlu0 %v1900, 8
      %v2591 = vpop.permute.xlu0 %2590
      %2592 = vrot.lane.b32.xlu0 %v1903, 8
      %v2593 = vpop.permute.xlu0 %2592
      %2594 = vrot.lane.b32.xlu0 %v1905, 8
      %v2595 = vpop.permute.xlu0 %2594
      %2596 = vrot.lane.b32.xlu0 %v1907, 8
      %v2597 = vpop.permute.xlu0 %2596
      %2598 = vrot.lane.b32.xlu0 %v1909, 8
      %v2599 = vpop.permute.xlu0 %2598
      %2600 = vrot.lane.b32.xlu0 %v1912, 8
      %v2601 = vpop.permute.xlu0 %2600
      %2602 = vrot.lane.b32.xlu0 %v1914, 8
      %v2603 = vpop.permute.xlu0 %2602
      %2604 = vrot.lane.b32.xlu0 %v1916, 8
      %v2605 = vpop.permute.xlu0 %2604
      %2606 = vrot.lane.b32.xlu0 %v1918, 8
      %v2607 = vpop.permute.xlu0 %2606
      %2608 = vrot.lane.b32.xlu0 %v1921, 8
      %v2609 = vpop.permute.xlu0 %2608
      %2610 = vrot.lane.b32.xlu0 %v1923, 8
      %v2611 = vpop.permute.xlu0 %2610
      %2612 = vrot.lane.b32.xlu0 %v1925, 8
      %v2613 = vpop.permute.xlu0 %2612
      %2614 = vrot.lane.b32.xlu0 %v1927, 8
      %v2615 = vpop.permute.xlu0 %2614
      %2616 = vrot.lane.b32.xlu0 %v1930, 8
      %v2617 = vpop.permute.xlu0 %2616
      %2618 = vrot.lane.b32.xlu0 %v1932, 8
      %v2619 = vpop.permute.xlu0 %2618
      %2620 = vrot.lane.b32.xlu0 %v1934, 8
      %v2621 = vpop.permute.xlu0 %2620
      %2622 = vrot.lane.b32.xlu0 %v1936, 8
      %v2623 = vpop.permute.xlu0 %2622
      %2624 = vrot.lane.b32.xlu0 %v1939, 8
      %v2625 = vpop.permute.xlu0 %2624
      %2626 = vrot.lane.b32.xlu0 %v1941, 8
      %v2627 = vpop.permute.xlu0 %2626
      %2628 = vrot.lane.b32.xlu0 %v1943, 8
      %v2629 = vpop.permute.xlu0 %2628
      %2630 = vrot.lane.b32.xlu0 %v1945, 8
      %v2631 = vpop.permute.xlu0 %2630
      %2760 = vrot.lane.b32.xlu0 %v1043, 12
      %v2761 = vpop.permute.xlu0 %2760
      %2762 = vrot.lane.b32.xlu0 %v1044, 12
      %v2763 = vpop.permute.xlu0 %2762
      %2764 = vrot.lane.b32.xlu0 %v1045, 12
      %v2765 = vpop.permute.xlu0 %2764
      %2766 = vrot.lane.b32.xlu0 %v1046, 12
      %v2767 = vpop.permute.xlu0 %2766
      %2768 = vrot.lane.b32.xlu0 %v1048, 12
      %v2769 = vpop.permute.xlu0 %2768
      %2770 = vrot.lane.b32.xlu0 %v1049, 12
      %v2771 = vpop.permute.xlu0 %2770
      %2772 = vrot.lane.b32.xlu0 %v1050, 12
      %v2773 = vpop.permute.xlu0 %2772
      %2774 = vrot.lane.b32.xlu0 %v1051, 12
      %v2775 = vpop.permute.xlu0 %2774
      %2776 = vrot.lane.b32.xlu0 %v1053, 12
      %v2777 = vpop.permute.xlu0 %2776
      %2778 = vrot.lane.b32.xlu0 %v1054, 12
      %v2779 = vpop.permute.xlu0 %2778
      %2780 = vrot.lane.b32.xlu0 %v1055, 12
      %v2781 = vpop.permute.xlu0 %2780
      %2782 = vrot.lane.b32.xlu0 %v1056, 12
      %v2783 = vpop.permute.xlu0 %2782
      %2784 = vrot.lane.b32.xlu0 %v1058, 12
      %v2785 = vpop.permute.xlu0 %2784
      %2786 = vrot.lane.b32.xlu0 %v1059, 12
      %v2787 = vpop.permute.xlu0 %2786
      %2788 = vrot.lane.b32.xlu0 %v1060, 12
      %v2789 = vpop.permute.xlu0 %2788
      %2790 = vrot.lane.b32.xlu0 %v1061, 12
      %v2791 = vpop.permute.xlu0 %2790
      %2792 = vrot.lane.b32.xlu0 %v1063, 12
      %v2793 = vpop.permute.xlu0 %2792
      %2794 = vrot.lane.b32.xlu0 %v1064, 12
      %v2795 = vpop.permute.xlu0 %2794
      %2796 = vrot.lane.b32.xlu0 %v1065, 12
      %v2797 = vpop.permute.xlu0 %2796
      %2798 = vrot.lane.b32.xlu0 %v1066, 12
      %v2799 = vpop.permute.xlu0 %2798
      %2800 = vrot.lane.b32.xlu0 %v1068, 12
      %v2801 = vpop.permute.xlu0 %2800
      %2802 = vrot.lane.b32.xlu0 %v1069, 12
      %v2803 = vpop.permute.xlu0 %2802
      %2804 = vrot.lane.b32.xlu0 %v1070, 12
      %v2805 = vpop.permute.xlu0 %2804
      %2806 = vrot.lane.b32.xlu0 %v1071, 12
      %v2807 = vpop.permute.xlu0 %2806
      %2808 = vrot.lane.b32.xlu0 %v1073, 12
      %v2809 = vpop.permute.xlu0 %2808
      %2810 = vrot.lane.b32.xlu0 %v1074, 12
      %v2811 = vpop.permute.xlu0 %2810
      %2812 = vrot.lane.b32.xlu0 %v1075, 12
      %v2813 = vpop.permute.xlu0 %2812
      %2814 = vrot.lane.b32.xlu0 %v1076, 12
      %v2815 = vpop.permute.xlu0 %2814
      %2816 = vrot.lane.b32.xlu0 %v1078, 12
      %v2817 = vpop.permute.xlu0 %2816
      %2818 = vrot.lane.b32.xlu0 %v1079, 12
      %v2819 = vpop.permute.xlu0 %2818
      %2820 = vrot.lane.b32.xlu0 %v1080, 12
      %v2821 = vpop.permute.xlu0 %2820
      %2822 = vrot.lane.b32.xlu0 %v1081, 12
      %v2823 = vpop.permute.xlu0 %2822
      %2824 = vrot.lane.b32.xlu0 %v1083, 12
      %v2825 = vpop.permute.xlu0 %2824
      %2826 = vrot.lane.b32.xlu0 %v1084, 12
      %v2827 = vpop.permute.xlu0 %2826
      %2828 = vrot.lane.b32.xlu0 %v1085, 12
      %v2829 = vpop.permute.xlu0 %2828
      %2830 = vrot.lane.b32.xlu0 %v1086, 12
      %v2831 = vpop.permute.xlu0 %2830
      %2832 = vrot.lane.b32.xlu0 %v1088, 12
      %v2833 = vpop.permute.xlu0 %2832
      %2834 = vrot.lane.b32.xlu0 %v1089, 12
      %v2835 = vpop.permute.xlu0 %2834
      %2836 = vrot.lane.b32.xlu0 %v1090, 12
      %v2837 = vpop.permute.xlu0 %2836
      %2838 = vrot.lane.b32.xlu0 %v1091, 12
      %v2839 = vpop.permute.xlu0 %2838
      %2840 = vrot.lane.b32.xlu0 %v1093, 12
      %v2841 = vpop.permute.xlu0 %2840
      %2842 = vrot.lane.b32.xlu0 %v1094, 12
      %v2843 = vpop.permute.xlu0 %2842
      %2844 = vrot.lane.b32.xlu0 %v1095, 12
      %v2845 = vpop.permute.xlu0 %2844
      %2846 = vrot.lane.b32.xlu0 %v1096, 12
      %v2847 = vpop.permute.xlu0 %2846
      %2848 = vrot.lane.b32.xlu0 %v1098, 12
      %v2849 = vpop.permute.xlu0 %2848
      %2850 = vrot.lane.b32.xlu0 %v1099, 12
      %v2851 = vpop.permute.xlu0 %2850
      %2852 = vrot.lane.b32.xlu0 %v1100, 12
      %v2853 = vpop.permute.xlu0 %2852
      %2854 = vrot.lane.b32.xlu0 %v1101, 12
      %v2855 = vpop.permute.xlu0 %2854
      %2856 = vrot.lane.b32.xlu0 %v1103, 12
      %v2857 = vpop.permute.xlu0 %2856
      %2858 = vrot.lane.b32.xlu0 %v1104, 12
      %v2859 = vpop.permute.xlu0 %2858
      %2860 = vrot.lane.b32.xlu0 %v1105, 12
      %v2861 = vpop.permute.xlu0 %2860
      %2862 = vrot.lane.b32.xlu0 %v1106, 12
      %v2863 = vpop.permute.xlu0 %2862
      %2864 = vrot.lane.b32.xlu0 %v1108, 12
      %v2865 = vpop.permute.xlu0 %2864
      %2866 = vrot.lane.b32.xlu0 %v1109, 12
      %v2867 = vpop.permute.xlu0 %2866
      %2868 = vrot.lane.b32.xlu0 %v1110, 12
      %v2869 = vpop.permute.xlu0 %2868
      %2870 = vrot.lane.b32.xlu0 %v1111, 12
      %v2871 = vpop.permute.xlu0 %2870
      %2872 = vrot.lane.b32.xlu0 %v1113, 12
      %v2873 = vpop.permute.xlu0 %2872
      %2874 = vrot.lane.b32.xlu0 %v1114, 12
      %v2875 = vpop.permute.xlu0 %2874
      %2876 = vrot.lane.b32.xlu0 %v1115, 12
      %v2877 = vpop.permute.xlu0 %2876
      %2878 = vrot.lane.b32.xlu0 %v1116, 12
      %v2879 = vpop.permute.xlu0 %2878
      %2880 = vrot.lane.b32.xlu0 %v1118, 12
      %v2881 = vpop.permute.xlu0 %2880
      %2882 = vrot.lane.b32.xlu0 %v1119, 12
      %v2883 = vpop.permute.xlu0 %2882
      %2884 = vrot.lane.b32.xlu0 %v1120, 12
      %v2885 = vpop.permute.xlu0 %2884
      %2886 = vrot.lane.b32.xlu0 %v1121, 12
      %v2887 = vpop.permute.xlu0 %2886
      %2888 = vrot.lane.b32.xlu0 %v1123, 12
      %v2889 = vpop.permute.xlu0 %2888
      %2890 = vrot.lane.b32.xlu0 %v1124, 12
      %v2891 = vpop.permute.xlu0 %2890
      %2892 = vrot.lane.b32.xlu0 %v1125, 12
      %v2893 = vpop.permute.xlu0 %2892
      %2894 = vrot.lane.b32.xlu0 %v1126, 12
      %v2895 = vpop.permute.xlu0 %2894
      %2896 = vrot.lane.b32.xlu0 %v1128, 12
      %v2897 = vpop.permute.xlu0 %2896
      %2898 = vrot.lane.b32.xlu0 %v1129, 12
      %v2899 = vpop.permute.xlu0 %2898
      %2900 = vrot.lane.b32.xlu0 %v1130, 12
      %v2901 = vpop.permute.xlu0 %2900
      %2902 = vrot.lane.b32.xlu0 %v1131, 12
      %v2903 = vpop.permute.xlu0 %2902
      %2904 = vrot.lane.b32.xlu0 %v1133, 12
      %v2905 = vpop.permute.xlu0 %2904
      %2906 = vrot.lane.b32.xlu0 %v1134, 12
      %v2907 = vpop.permute.xlu0 %2906
      %2908 = vrot.lane.b32.xlu0 %v1135, 12
      %v2909 = vpop.permute.xlu0 %2908
      %2910 = vrot.lane.b32.xlu0 %v1136, 12
      %v2911 = vpop.permute.xlu0 %2910
      %2912 = vrot.lane.b32.xlu0 %v1138, 12
      %v2913 = vpop.permute.xlu0 %2912
      %2914 = vrot.lane.b32.xlu0 %v1139, 12
      %v2915 = vpop.permute.xlu0 %2914
      %2916 = vrot.lane.b32.xlu0 %v1140, 12
      %v2917 = vpop.permute.xlu0 %2916
      %2918 = vrot.lane.b32.xlu0 %v1141, 12
      %v2919 = vpop.permute.xlu0 %2918
      %2920 = vrot.lane.b32.xlu0 %v1143, 12
      %v2921 = vpop.permute.xlu0 %2920
      %2922 = vrot.lane.b32.xlu0 %v1144, 12
      %v2923 = vpop.permute.xlu0 %2922
      %2924 = vrot.lane.b32.xlu0 %v1145, 12
      %v2925 = vpop.permute.xlu0 %2924
      %2926 = vrot.lane.b32.xlu0 %v1146, 12
      %v2927 = vpop.permute.xlu0 %2926
      %2928 = vrot.lane.b32.xlu0 %v1148, 12
      %v2929 = vpop.permute.xlu0 %2928
      %2930 = vrot.lane.b32.xlu0 %v1149, 12
      %v2931 = vpop.permute.xlu0 %2930
      %2932 = vrot.lane.b32.xlu0 %v1150, 12
      %v2933 = vpop.permute.xlu0 %2932
      %2934 = vrot.lane.b32.xlu0 %v1151, 12
      %v2935 = vpop.permute.xlu0 %2934
      %2936 = vrot.lane.b32.xlu0 %v1153, 12
      %v2937 = vpop.permute.xlu0 %2936
      %2938 = vrot.lane.b32.xlu0 %v1154, 12
      %v2939 = vpop.permute.xlu0 %2938
      %2940 = vrot.lane.b32.xlu0 %v1155, 12
      %v2941 = vpop.permute.xlu0 %2940
      %2942 = vrot.lane.b32.xlu0 %v1156, 12
      %v2943 = vpop.permute.xlu0 %2942
      %2944 = vrot.lane.b32.xlu0 %v1158, 12
      %v2945 = vpop.permute.xlu0 %2944
      %2946 = vrot.lane.b32.xlu0 %v1159, 12
      %v2947 = vpop.permute.xlu0 %2946
      %2948 = vrot.lane.b32.xlu0 %v1160, 12
      %v2949 = vpop.permute.xlu0 %2948
      %2950 = vrot.lane.b32.xlu0 %v1161, 12
      %v2951 = vpop.permute.xlu0 %2950
      %2952 = vrot.lane.b32.xlu0 %v1163, 12
      %v2953 = vpop.permute.xlu0 %2952
      %2954 = vrot.lane.b32.xlu0 %v1164, 12
      %v2955 = vpop.permute.xlu0 %2954
      %2956 = vrot.lane.b32.xlu0 %v1165, 12
      %v2957 = vpop.permute.xlu0 %2956
      %2958 = vrot.lane.b32.xlu0 %v1166, 12
      %v2959 = vpop.permute.xlu0 %2958
      %2960 = vrot.lane.b32.xlu0 %v1168, 12
      %v2961 = vpop.permute.xlu0 %2960
      %2962 = vrot.lane.b32.xlu0 %v1169, 12
      %v2963 = vpop.permute.xlu0 %2962
      %2964 = vrot.lane.b32.xlu0 %v1170, 12
      %v2965 = vpop.permute.xlu0 %2964
      %2966 = vrot.lane.b32.xlu0 %v1171, 12
      %v2967 = vpop.permute.xlu0 %2966
      %2968 = vrot.lane.b32.xlu0 %v1173, 12
      %v2969 = vpop.permute.xlu0 %2968
      %2970 = vrot.lane.b32.xlu0 %v1174, 12
      %v2971 = vpop.permute.xlu0 %2970
      %2972 = vrot.lane.b32.xlu0 %v1175, 12
      %v2973 = vpop.permute.xlu0 %2972
      %2974 = vrot.lane.b32.xlu0 %v1176, 12
      %v2975 = vpop.permute.xlu0 %2974
      %2976 = vrot.lane.b32.xlu0 %v1178, 12
      %v2977 = vpop.permute.xlu0 %2976
      %2978 = vrot.lane.b32.xlu0 %v1179, 12
      %v2979 = vpop.permute.xlu0 %2978
      %2980 = vrot.lane.b32.xlu0 %v1180, 12
      %v2981 = vpop.permute.xlu0 %2980
      %2982 = vrot.lane.b32.xlu0 %v1181, 12
      %v2983 = vpop.permute.xlu0 %2982
      %2984 = vrot.lane.b32.xlu0 %v1183, 12
      %v2985 = vpop.permute.xlu0 %2984
      %2986 = vrot.lane.b32.xlu0 %v1184, 12
      %v2987 = vpop.permute.xlu0 %2986
      %2988 = vrot.lane.b32.xlu0 %v1185, 12
      %v2989 = vpop.permute.xlu0 %2988
      %2990 = vrot.lane.b32.xlu0 %v1186, 12
      %v2991 = vpop.permute.xlu0 %2990
      %2992 = vrot.lane.b32.xlu0 %v1188, 12
      %v2993 = vpop.permute.xlu0 %2992
      %2994 = vrot.lane.b32.xlu0 %v1189, 12
      %v2995 = vpop.permute.xlu0 %2994
      %2996 = vrot.lane.b32.xlu0 %v1190, 12
      %v2997 = vpop.permute.xlu0 %2996
      %2998 = vrot.lane.b32.xlu0 %v1191, 12
      %v2999 = vpop.permute.xlu0 %2998
      %3000 = vrot.lane.b32.xlu0 %v1193, 12
      %v3001 = vpop.permute.xlu0 %3000
      %3002 = vrot.lane.b32.xlu0 %v1194, 12
      %v3003 = vpop.permute.xlu0 %3002
      %3004 = vrot.lane.b32.xlu0 %v1195, 12
      %v3005 = vpop.permute.xlu0 %3004
      %3006 = vrot.lane.b32.xlu0 %v1196, 12
      %v3007 = vpop.permute.xlu0 %3006
      %3008 = vrot.lane.b32.xlu0 %v1198, 12
      %v3009 = vpop.permute.xlu0 %3008
      %3010 = vrot.lane.b32.xlu0 %v1199, 12
      %v3011 = vpop.permute.xlu0 %3010
      %3012 = vrot.lane.b32.xlu0 %v1200, 12
      %v3013 = vpop.permute.xlu0 %3012
      %3014 = vrot.lane.b32.xlu0 %v1201, 12
      %v3015 = vpop.permute.xlu0 %3014
      %3144 = vrot.lane.b32.xlu0 %v1380, 16
      %v3145 = vpop.permute.xlu0 %3144
      %3146 = vrot.lane.b32.xlu0 %v1382, 16
      %v3147 = vpop.permute.xlu0 %3146
      %3148 = vrot.lane.b32.xlu0 %v1384, 16
      %v3149 = vpop.permute.xlu0 %3148
      %3150 = vrot.lane.b32.xlu0 %v1386, 16
      %v3151 = vpop.permute.xlu0 %3150
      %3152 = vrot.lane.b32.xlu0 %v1389, 16
      %v3153 = vpop.permute.xlu0 %3152
      %3154 = vrot.lane.b32.xlu0 %v1391, 16
      %v3155 = vpop.permute.xlu0 %3154
      %3156 = vrot.lane.b32.xlu0 %v1393, 16
      %v3157 = vpop.permute.xlu0 %3156
      %3158 = vrot.lane.b32.xlu0 %v1395, 16
      %v3159 = vpop.permute.xlu0 %3158
      %3160 = vrot.lane.b32.xlu0 %v1398, 16
      %v3161 = vpop.permute.xlu0 %3160
      %3162 = vrot.lane.b32.xlu0 %v1400, 16
      %v3163 = vpop.permute.xlu0 %3162
      %3164 = vrot.lane.b32.xlu0 %v1402, 16
      %v3165 = vpop.permute.xlu0 %3164
      %3166 = vrot.lane.b32.xlu0 %v1404, 16
      %v3167 = vpop.permute.xlu0 %3166
      %3168 = vrot.lane.b32.xlu0 %v1407, 16
      %v3169 = vpop.permute.xlu0 %3168
      %3170 = vrot.lane.b32.xlu0 %v1409, 16
      %v3171 = vpop.permute.xlu0 %3170
      %3172 = vrot.lane.b32.xlu0 %v1411, 16
      %v3173 = vpop.permute.xlu0 %3172
      %3174 = vrot.lane.b32.xlu0 %v1413, 16
      %v3175 = vpop.permute.xlu0 %3174
      %3176 = vrot.lane.b32.xlu0 %v1416, 16
      %v3177 = vpop.permute.xlu0 %3176
      %3178 = vrot.lane.b32.xlu0 %v1418, 16
      %v3179 = vpop.permute.xlu0 %3178
      %3180 = vrot.lane.b32.xlu0 %v1420, 16
      %v3181 = vpop.permute.xlu0 %3180
      %3182 = vrot.lane.b32.xlu0 %v1422, 16
      %v3183 = vpop.permute.xlu0 %3182
      %3184 = vrot.lane.b32.xlu0 %v1425, 16
      %v3185 = vpop.permute.xlu0 %3184
      %3186 = vrot.lane.b32.xlu0 %v1427, 16
      %v3187 = vpop.permute.xlu0 %3186
      %3188 = vrot.lane.b32.xlu0 %v1429, 16
      %v3189 = vpop.permute.xlu0 %3188
      %3190 = vrot.lane.b32.xlu0 %v1431, 16
      %v3191 = vpop.permute.xlu0 %3190
      %3192 = vrot.lane.b32.xlu0 %v1434, 16
      %v3193 = vpop.permute.xlu0 %3192
      %3194 = vrot.lane.b32.xlu0 %v1436, 16
      %v3195 = vpop.permute.xlu0 %3194
      %3196 = vrot.lane.b32.xlu0 %v1438, 16
      %v3197 = vpop.permute.xlu0 %3196
      %3198 = vrot.lane.b32.xlu0 %v1440, 16
      %v3199 = vpop.permute.xlu0 %3198
      %3200 = vrot.lane.b32.xlu0 %v1443, 16
      %v3201 = vpop.permute.xlu0 %3200
      %3202 = vrot.lane.b32.xlu0 %v1445, 16
      %v3203 = vpop.permute.xlu0 %3202
      %3204 = vrot.lane.b32.xlu0 %v1447, 16
      %v3205 = vpop.permute.xlu0 %3204
      %3206 = vrot.lane.b32.xlu0 %v1449, 16
      %v3207 = vpop.permute.xlu0 %3206
      %3208 = vrot.lane.b32.xlu0 %v1452, 16
      %v3209 = vpop.permute.xlu0 %3208
      %3210 = vrot.lane.b32.xlu0 %v1454, 16
      %v3211 = vpop.permute.xlu0 %3210
      %3212 = vrot.lane.b32.xlu0 %v1456, 16
      %v3213 = vpop.permute.xlu0 %3212
      %3214 = vrot.lane.b32.xlu0 %v1458, 16
      %v3215 = vpop.permute.xlu0 %3214
      %3216 = vrot.lane.b32.xlu0 %v1461, 16
      %v3217 = vpop.permute.xlu0 %3216
      %3218 = vrot.lane.b32.xlu0 %v1463, 16
      %v3219 = vpop.permute.xlu0 %3218
      %3220 = vrot.lane.b32.xlu0 %v1465, 16
      %v3221 = vpop.permute.xlu0 %3220
      %3222 = vrot.lane.b32.xlu0 %v1467, 16
      %v3223 = vpop.permute.xlu0 %3222
      %3224 = vrot.lane.b32.xlu0 %v1470, 16
      %v3225 = vpop.permute.xlu0 %3224
      %3226 = vrot.lane.b32.xlu0 %v1472, 16
      %v3227 = vpop.permute.xlu0 %3226
      %3228 = vrot.lane.b32.xlu0 %v1474, 16
      %v3229 = vpop.permute.xlu0 %3228
      %3230 = vrot.lane.b32.xlu0 %v1476, 16
      %v3231 = vpop.permute.xlu0 %3230
      %3232 = vrot.lane.b32.xlu0 %v1479, 16
      %v3233 = vpop.permute.xlu0 %3232
      %3234 = vrot.lane.b32.xlu0 %v1481, 16
      %v3235 = vpop.permute.xlu0 %3234
      %3236 = vrot.lane.b32.xlu0 %v1483, 16
      %v3237 = vpop.permute.xlu0 %3236
      %3238 = vrot.lane.b32.xlu0 %v1485, 16
      %v3239 = vpop.permute.xlu0 %3238
      %3240 = vrot.lane.b32.xlu0 %v1488, 16
      %v3241 = vpop.permute.xlu0 %3240
      %3242 = vrot.lane.b32.xlu0 %v1490, 16
      %v3243 = vpop.permute.xlu0 %3242
      %3244 = vrot.lane.b32.xlu0 %v1492, 16
      %v3245 = vpop.permute.xlu0 %3244
      %3246 = vrot.lane.b32.xlu0 %v1494, 16
      %v3247 = vpop.permute.xlu0 %3246
      %3248 = vrot.lane.b32.xlu0 %v1497, 16
      %v3249 = vpop.permute.xlu0 %3248
      %3250 = vrot.lane.b32.xlu0 %v1499, 16
      %v3251 = vpop.permute.xlu0 %3250
      %3252 = vrot.lane.b32.xlu0 %v1501, 16
      %v3253 = vpop.permute.xlu0 %3252
      %3254 = vrot.lane.b32.xlu0 %v1503, 16
      %v3255 = vpop.permute.xlu0 %3254
      %3256 = vrot.lane.b32.xlu0 %v1506, 16
      %v3257 = vpop.permute.xlu0 %3256
      %3258 = vrot.lane.b32.xlu0 %v1508, 16
      %v3259 = vpop.permute.xlu0 %3258
      %3260 = vrot.lane.b32.xlu0 %v1510, 16
      %v3261 = vpop.permute.xlu0 %3260
      %3262 = vrot.lane.b32.xlu0 %v1512, 16
      %v3263 = vpop.permute.xlu0 %3262
      %3264 = vrot.lane.b32.xlu0 %v1515, 16
      %v3265 = vpop.permute.xlu0 %3264
      %3266 = vrot.lane.b32.xlu0 %v1517, 16
      %v3267 = vpop.permute.xlu0 %3266
      %3268 = vrot.lane.b32.xlu0 %v1519, 16
      %v3269 = vpop.permute.xlu0 %3268
      %3270 = vrot.lane.b32.xlu0 %v1521, 16
      %v3271 = vpop.permute.xlu0 %3270
      %3272 = vrot.lane.b32.xlu0 %v1524, 16
      %v3273 = vpop.permute.xlu0 %3272
      %3274 = vrot.lane.b32.xlu0 %v1526, 16
      %v3275 = vpop.permute.xlu0 %3274
      %3276 = vrot.lane.b32.xlu0 %v1528, 16
      %v3277 = vpop.permute.xlu0 %3276
      %3278 = vrot.lane.b32.xlu0 %v1530, 16
      %v3279 = vpop.permute.xlu0 %3278
      %3280 = vrot.lane.b32.xlu0 %v1533, 16
      %v3281 = vpop.permute.xlu0 %3280
      %3282 = vrot.lane.b32.xlu0 %v1535, 16
      %v3283 = vpop.permute.xlu0 %3282
      %3284 = vrot.lane.b32.xlu0 %v1537, 16
      %v3285 = vpop.permute.xlu0 %3284
      %3286 = vrot.lane.b32.xlu0 %v1539, 16
      %v3287 = vpop.permute.xlu0 %3286
      %3288 = vrot.lane.b32.xlu0 %v1542, 16
      %v3289 = vpop.permute.xlu0 %3288
      %3290 = vrot.lane.b32.xlu0 %v1544, 16
      %v3291 = vpop.permute.xlu0 %3290
      %3292 = vrot.lane.b32.xlu0 %v1546, 16
      %v3293 = vpop.permute.xlu0 %3292
      %3294 = vrot.lane.b32.xlu0 %v1548, 16
      %v3295 = vpop.permute.xlu0 %3294
      %3296 = vrot.lane.b32.xlu0 %v1551, 16
      %v3297 = vpop.permute.xlu0 %3296
      %3298 = vrot.lane.b32.xlu0 %v1553, 16
      %v3299 = vpop.permute.xlu0 %3298
      %3300 = vrot.lane.b32.xlu0 %v1555, 16
      %v3301 = vpop.permute.xlu0 %3300
      %3302 = vrot.lane.b32.xlu0 %v1557, 16
      %v3303 = vpop.permute.xlu0 %3302
      %3304 = vrot.lane.b32.xlu0 %v1560, 16
      %v3305 = vpop.permute.xlu0 %3304
      %3306 = vrot.lane.b32.xlu0 %v1562, 16
      %v3307 = vpop.permute.xlu0 %3306
      %3308 = vrot.lane.b32.xlu0 %v1564, 16
      %v3309 = vpop.permute.xlu0 %3308
      %3310 = vrot.lane.b32.xlu0 %v1566, 16
      %v3311 = vpop.permute.xlu0 %3310
      %3312 = vrot.lane.b32.xlu0 %v1569, 16
      %v3313 = vpop.permute.xlu0 %3312
      %3314 = vrot.lane.b32.xlu0 %v1571, 16
      %v3315 = vpop.permute.xlu0 %3314
      %3316 = vrot.lane.b32.xlu0 %v1573, 16
      %v3317 = vpop.permute.xlu0 %3316
      %3318 = vrot.lane.b32.xlu0 %v1575, 16
      %v3319 = vpop.permute.xlu0 %3318
      %3320 = vrot.lane.b32.xlu0 %v1578, 16
      %v3321 = vpop.permute.xlu0 %3320
      %3322 = vrot.lane.b32.xlu0 %v1580, 16
      %v3323 = vpop.permute.xlu0 %3322
      %3324 = vrot.lane.b32.xlu0 %v1582, 16
      %v3325 = vpop.permute.xlu0 %3324
      %3326 = vrot.lane.b32.xlu0 %v1584, 16
      %v3327 = vpop.permute.xlu0 %3326
      %3328 = vrot.lane.b32.xlu0 %v1587, 16
      %v3329 = vpop.permute.xlu0 %3328
      %3330 = vrot.lane.b32.xlu0 %v1589, 16
      %v3331 = vpop.permute.xlu0 %3330
      %3332 = vrot.lane.b32.xlu0 %v1591, 16
      %v3333 = vpop.permute.xlu0 %3332
      %3334 = vrot.lane.b32.xlu0 %v1593, 16
      %v3335 = vpop.permute.xlu0 %3334
      %3336 = vrot.lane.b32.xlu0 %v1596, 16
      %v3337 = vpop.permute.xlu0 %3336
      %3338 = vrot.lane.b32.xlu0 %v1598, 16
      %v3339 = vpop.permute.xlu0 %3338
      %3340 = vrot.lane.b32.xlu0 %v1600, 16
      %v3341 = vpop.permute.xlu0 %3340
      %3342 = vrot.lane.b32.xlu0 %v1602, 16
      %v3343 = vpop.permute.xlu0 %3342
      %3344 = vrot.lane.b32.xlu0 %v1605, 16
      %v3345 = vpop.permute.xlu0 %3344
      %3346 = vrot.lane.b32.xlu0 %v1607, 16
      %v3347 = vpop.permute.xlu0 %3346
      %3348 = vrot.lane.b32.xlu0 %v1609, 16
      %v3349 = vpop.permute.xlu0 %3348
      %3350 = vrot.lane.b32.xlu0 %v1611, 16
      %v3351 = vpop.permute.xlu0 %3350
      %3352 = vrot.lane.b32.xlu0 %v1614, 16
      %v3353 = vpop.permute.xlu0 %3352
      %3354 = vrot.lane.b32.xlu0 %v1616, 16
      %v3355 = vpop.permute.xlu0 %3354
      %3356 = vrot.lane.b32.xlu0 %v1618, 16
      %v3357 = vpop.permute.xlu0 %3356
      %3358 = vrot.lane.b32.xlu0 %v1620, 16
      %v3359 = vpop.permute.xlu0 %3358
      %3360 = vrot.lane.b32.xlu0 %v1623, 16
      %v3361 = vpop.permute.xlu0 %3360
      %3362 = vrot.lane.b32.xlu0 %v1625, 16
      %v3363 = vpop.permute.xlu0 %3362
      %3364 = vrot.lane.b32.xlu0 %v1627, 16
      %v3365 = vpop.permute.xlu0 %3364
      %3366 = vrot.lane.b32.xlu0 %v1629, 16
      %v3367 = vpop.permute.xlu0 %3366
      %3368 = vrot.lane.b32.xlu0 %v1632, 16
      %v3369 = vpop.permute.xlu0 %3368
      %3370 = vrot.lane.b32.xlu0 %v1634, 16
      %v3371 = vpop.permute.xlu0 %3370
      %3372 = vrot.lane.b32.xlu0 %v1636, 16
      %v3373 = vpop.permute.xlu0 %3372
      %3374 = vrot.lane.b32.xlu0 %v1638, 16
      %v3375 = vpop.permute.xlu0 %3374
      %3376 = vrot.lane.b32.xlu0 %v1641, 16
      %v3377 = vpop.permute.xlu0 %3376
      %3378 = vrot.lane.b32.xlu0 %v1643, 16
      %v3379 = vpop.permute.xlu0 %3378
      %3380 = vrot.lane.b32.xlu0 %v1645, 16
      %v3381 = vpop.permute.xlu0 %3380
      %3382 = vrot.lane.b32.xlu0 %v1647, 16
      %v3383 = vpop.permute.xlu0 %3382
      %3384 = vrot.lane.b32.xlu0 %v1650, 16
      %v3385 = vpop.permute.xlu0 %3384
      %3386 = vrot.lane.b32.xlu0 %v1652, 16
      %v3387 = vpop.permute.xlu0 %3386
      %3388 = vrot.lane.b32.xlu0 %v1654, 16
      %v3389 = vpop.permute.xlu0 %3388
      %3390 = vrot.lane.b32.xlu0 %v1656, 16
      %v3391 = vpop.permute.xlu0 %3390
      %3392 = vrot.lane.b32.xlu0 %v1953, 16
      %v3393 = vpop.permute.xlu0 %3392
      %3394 = vrot.lane.b32.xlu0 %v1955, 16
      %v3395 = vpop.permute.xlu0 %3394
      %3396 = vrot.lane.b32.xlu0 %v1957, 16
      %v3397 = vpop.permute.xlu0 %3396
      %3398 = vrot.lane.b32.xlu0 %v1959, 16
      %v3399 = vpop.permute.xlu0 %3398
      %3528 = vrot.lane.b32.xlu0 %v1669, 20
      %v3529 = vpop.permute.xlu0 %3528
      %3530 = vrot.lane.b32.xlu0 %v1671, 20
      %v3531 = vpop.permute.xlu0 %3530
      %3532 = vrot.lane.b32.xlu0 %v1673, 20
      %v3533 = vpop.permute.xlu0 %3532
      %3534 = vrot.lane.b32.xlu0 %v1675, 20
      %v3535 = vpop.permute.xlu0 %3534
      %3536 = vrot.lane.b32.xlu0 %v1678, 20
      %v3537 = vpop.permute.xlu0 %3536
      %3538 = vrot.lane.b32.xlu0 %v1680, 20
      %v3539 = vpop.permute.xlu0 %3538
      %3540 = vrot.lane.b32.xlu0 %v1682, 20
      %v3541 = vpop.permute.xlu0 %3540
      %3542 = vrot.lane.b32.xlu0 %v1684, 20
      %v3543 = vpop.permute.xlu0 %3542
      %3544 = vrot.lane.b32.xlu0 %v1687, 20
      %v3545 = vpop.permute.xlu0 %3544
      %3546 = vrot.lane.b32.xlu0 %v1689, 20
      %v3547 = vpop.permute.xlu0 %3546
      %3548 = vrot.lane.b32.xlu0 %v1691, 20
      %v3549 = vpop.permute.xlu0 %3548
      %3550 = vrot.lane.b32.xlu0 %v1693, 20
      %v3551 = vpop.permute.xlu0 %3550
      %3552 = vrot.lane.b32.xlu0 %v1696, 20
      %v3553 = vpop.permute.xlu0 %3552
      %3554 = vrot.lane.b32.xlu0 %v1698, 20
      %v3555 = vpop.permute.xlu0 %3554
      %3556 = vrot.lane.b32.xlu0 %v1700, 20
      %v3557 = vpop.permute.xlu0 %3556
      %3558 = vrot.lane.b32.xlu0 %v1702, 20
      %v3559 = vpop.permute.xlu0 %3558
      %3560 = vrot.lane.b32.xlu0 %v1705, 20
      %v3561 = vpop.permute.xlu0 %3560
      %3562 = vrot.lane.b32.xlu0 %v1707, 20
      %v3563 = vpop.permute.xlu0 %3562
      %3564 = vrot.lane.b32.xlu0 %v1709, 20
      %v3565 = vpop.permute.xlu0 %3564
      %3566 = vrot.lane.b32.xlu0 %v1711, 20
      %v3567 = vpop.permute.xlu0 %3566
      %3568 = vrot.lane.b32.xlu0 %v1714, 20
      %v3569 = vpop.permute.xlu0 %3568
      %3570 = vrot.lane.b32.xlu0 %v1716, 20
      %v3571 = vpop.permute.xlu0 %3570
      %3572 = vrot.lane.b32.xlu0 %v1718, 20
      %v3573 = vpop.permute.xlu0 %3572
      %3574 = vrot.lane.b32.xlu0 %v1720, 20
      %v3575 = vpop.permute.xlu0 %3574
      %3576 = vrot.lane.b32.xlu0 %v1723, 20
      %v3577 = vpop.permute.xlu0 %3576
      %3578 = vrot.lane.b32.xlu0 %v1725, 20
      %v3579 = vpop.permute.xlu0 %3578
      %3580 = vrot.lane.b32.xlu0 %v1727, 20
      %v3581 = vpop.permute.xlu0 %3580
      %3582 = vrot.lane.b32.xlu0 %v1729, 20
      %v3583 = vpop.permute.xlu0 %3582
      %3584 = vrot.lane.b32.xlu0 %v1732, 20
      %v3585 = vpop.permute.xlu0 %3584
      %3586 = vrot.lane.b32.xlu0 %v1734, 20
      %v3587 = vpop.permute.xlu0 %3586
      %3588 = vrot.lane.b32.xlu0 %v1736, 20
      %v3589 = vpop.permute.xlu0 %3588
      %3590 = vrot.lane.b32.xlu0 %v1738, 20
      %v3591 = vpop.permute.xlu0 %3590
      %3592 = vrot.lane.b32.xlu0 %v1741, 20
      %v3593 = vpop.permute.xlu0 %3592
      %3594 = vrot.lane.b32.xlu0 %v1743, 20
      %v3595 = vpop.permute.xlu0 %3594
      %3596 = vrot.lane.b32.xlu0 %v1745, 20
      %v3597 = vpop.permute.xlu0 %3596
      %3598 = vrot.lane.b32.xlu0 %v1747, 20
      %v3599 = vpop.permute.xlu0 %3598
      %3600 = vrot.lane.b32.xlu0 %v1750, 20
      %v3601 = vpop.permute.xlu0 %3600
      %3602 = vrot.lane.b32.xlu0 %v1752, 20
      %v3603 = vpop.permute.xlu0 %3602
      %3604 = vrot.lane.b32.xlu0 %v1754, 20
      %v3605 = vpop.permute.xlu0 %3604
      %3606 = vrot.lane.b32.xlu0 %v1756, 20
      %v3607 = vpop.permute.xlu0 %3606
      %3608 = vrot.lane.b32.xlu0 %v1759, 20
      %v3609 = vpop.permute.xlu0 %3608
      %3610 = vrot.lane.b32.xlu0 %v1761, 20
      %v3611 = vpop.permute.xlu0 %3610
      %3612 = vrot.lane.b32.xlu0 %v1763, 20
      %v3613 = vpop.permute.xlu0 %3612
      %3614 = vrot.lane.b32.xlu0 %v1765, 20
      %v3615 = vpop.permute.xlu0 %3614
      %3616 = vrot.lane.b32.xlu0 %v1768, 20
      %v3617 = vpop.permute.xlu0 %3616
      %3618 = vrot.lane.b32.xlu0 %v1770, 20
      %v3619 = vpop.permute.xlu0 %3618
      %3620 = vrot.lane.b32.xlu0 %v1772, 20
      %v3621 = vpop.permute.xlu0 %3620
      %3622 = vrot.lane.b32.xlu0 %v1774, 20
      %v3623 = vpop.permute.xlu0 %3622
      %3624 = vrot.lane.b32.xlu0 %v1777, 20
      %v3625 = vpop.permute.xlu0 %3624
      %3626 = vrot.lane.b32.xlu0 %v1779, 20
      %v3627 = vpop.permute.xlu0 %3626
      %3628 = vrot.lane.b32.xlu0 %v1781, 20
      %v3629 = vpop.permute.xlu0 %3628
      %3630 = vrot.lane.b32.xlu0 %v1783, 20
      %v3631 = vpop.permute.xlu0 %3630
      %3632 = vrot.lane.b32.xlu0 %v1786, 20
      %v3633 = vpop.permute.xlu0 %3632
      %3634 = vrot.lane.b32.xlu0 %v1788, 20
      %v3635 = vpop.permute.xlu0 %3634
      %3636 = vrot.lane.b32.xlu0 %v1790, 20
      %v3637 = vpop.permute.xlu0 %3636
      %3638 = vrot.lane.b32.xlu0 %v1792, 20
      %v3639 = vpop.permute.xlu0 %3638
      %3640 = vrot.lane.b32.xlu0 %v1795, 20
      %v3641 = vpop.permute.xlu0 %3640
      %3642 = vrot.lane.b32.xlu0 %v1797, 20
      %v3643 = vpop.permute.xlu0 %3642
      %3644 = vrot.lane.b32.xlu0 %v1799, 20
      %v3645 = vpop.permute.xlu0 %3644
      %3646 = vrot.lane.b32.xlu0 %v1801, 20
      %v3647 = vpop.permute.xlu0 %3646
      %3648 = vrot.lane.b32.xlu0 %v1804, 20
      %v3649 = vpop.permute.xlu0 %3648
      %3650 = vrot.lane.b32.xlu0 %v1806, 20
      %v3651 = vpop.permute.xlu0 %3650
      %3652 = vrot.lane.b32.xlu0 %v1808, 20
      %v3653 = vpop.permute.xlu0 %3652
      %3654 = vrot.lane.b32.xlu0 %v1810, 20
      %v3655 = vpop.permute.xlu0 %3654
      %3656 = vrot.lane.b32.xlu0 %v1813, 20
      %v3657 = vpop.permute.xlu0 %3656
      %3658 = vrot.lane.b32.xlu0 %v1815, 20
      %v3659 = vpop.permute.xlu0 %3658
      %3660 = vrot.lane.b32.xlu0 %v1817, 20
      %v3661 = vpop.permute.xlu0 %3660
      %3662 = vrot.lane.b32.xlu0 %v1819, 20
      %v3663 = vpop.permute.xlu0 %3662
      %3664 = vrot.lane.b32.xlu0 %v1822, 20
      %v3665 = vpop.permute.xlu0 %3664
      %3666 = vrot.lane.b32.xlu0 %v1824, 20
      %v3667 = vpop.permute.xlu0 %3666
      %3668 = vrot.lane.b32.xlu0 %v1826, 20
      %v3669 = vpop.permute.xlu0 %3668
      %3670 = vrot.lane.b32.xlu0 %v1828, 20
      %v3671 = vpop.permute.xlu0 %3670
      %3672 = vrot.lane.b32.xlu0 %v1831, 20
      %v3673 = vpop.permute.xlu0 %3672
      %3674 = vrot.lane.b32.xlu0 %v1833, 20
      %v3675 = vpop.permute.xlu0 %3674
      %3676 = vrot.lane.b32.xlu0 %v1835, 20
      %v3677 = vpop.permute.xlu0 %3676
      %3678 = vrot.lane.b32.xlu0 %v1837, 20
      %v3679 = vpop.permute.xlu0 %3678
      %3680 = vrot.lane.b32.xlu0 %v1840, 20
      %v3681 = vpop.permute.xlu0 %3680
      %3682 = vrot.lane.b32.xlu0 %v1842, 20
      %v3683 = vpop.permute.xlu0 %3682
      %3684 = vrot.lane.b32.xlu0 %v1844, 20
      %v3685 = vpop.permute.xlu0 %3684
      %3686 = vrot.lane.b32.xlu0 %v1846, 20
      %v3687 = vpop.permute.xlu0 %3686
      %3688 = vrot.lane.b32.xlu0 %v1849, 20
      %v3689 = vpop.permute.xlu0 %3688
      %3690 = vrot.lane.b32.xlu0 %v1851, 20
      %v3691 = vpop.permute.xlu0 %3690
      %3692 = vrot.lane.b32.xlu0 %v1853, 20
      %v3693 = vpop.permute.xlu0 %3692
      %3694 = vrot.lane.b32.xlu0 %v1855, 20
      %v3695 = vpop.permute.xlu0 %3694
      %3696 = vrot.lane.b32.xlu0 %v1858, 20
      %v3697 = vpop.permute.xlu0 %3696
      %3698 = vrot.lane.b32.xlu0 %v1860, 20
      %v3699 = vpop.permute.xlu0 %3698
      %3700 = vrot.lane.b32.xlu0 %v1862, 20
      %v3701 = vpop.permute.xlu0 %3700
      %3702 = vrot.lane.b32.xlu0 %v1864, 20
      %v3703 = vpop.permute.xlu0 %3702
      %3704 = vrot.lane.b32.xlu0 %v1867, 20
      %v3705 = vpop.permute.xlu0 %3704
      %3706 = vrot.lane.b32.xlu0 %v1869, 20
      %v3707 = vpop.permute.xlu0 %3706
      %3708 = vrot.lane.b32.xlu0 %v1871, 20
      %v3709 = vpop.permute.xlu0 %3708
      %3710 = vrot.lane.b32.xlu0 %v1873, 20
      %v3711 = vpop.permute.xlu0 %3710
      %3712 = vrot.lane.b32.xlu0 %v1876, 20
      %v3713 = vpop.permute.xlu0 %3712
      %3714 = vrot.lane.b32.xlu0 %v1878, 20
      %v3715 = vpop.permute.xlu0 %3714
      %3716 = vrot.lane.b32.xlu0 %v1880, 20
      %v3717 = vpop.permute.xlu0 %3716
      %3718 = vrot.lane.b32.xlu0 %v1882, 20
      %v3719 = vpop.permute.xlu0 %3718
      %3720 = vrot.lane.b32.xlu0 %v1885, 20
      %v3721 = vpop.permute.xlu0 %3720
      %3722 = vrot.lane.b32.xlu0 %v1887, 20
      %v3723 = vpop.permute.xlu0 %3722
      %3724 = vrot.lane.b32.xlu0 %v1889, 20
      %v3725 = vpop.permute.xlu0 %3724
      %3726 = vrot.lane.b32.xlu0 %v1891, 20
      %v3727 = vpop.permute.xlu0 %3726
      %3728 = vrot.lane.b32.xlu0 %v1894, 20
      %v3729 = vpop.permute.xlu0 %3728
      %3730 = vrot.lane.b32.xlu0 %v1896, 20
      %v3731 = vpop.permute.xlu0 %3730
      %3732 = vrot.lane.b32.xlu0 %v1898, 20
      %v3733 = vpop.permute.xlu0 %3732
      %3734 = vrot.lane.b32.xlu0 %v1900, 20
      %v3735 = vpop.permute.xlu0 %3734
      %3736 = vrot.lane.b32.xlu0 %v1903, 20
      %v3737 = vpop.permute.xlu0 %3736
      %3738 = vrot.lane.b32.xlu0 %v1905, 20
      %v3739 = vpop.permute.xlu0 %3738
      %3740 = vrot.lane.b32.xlu0 %v1907, 20
      %v3741 = vpop.permute.xlu0 %3740
      %3742 = vrot.lane.b32.xlu0 %v1909, 20
      %v3743 = vpop.permute.xlu0 %3742
      %3744 = vrot.lane.b32.xlu0 %v1912, 20
      %v3745 = vpop.permute.xlu0 %3744
      %3746 = vrot.lane.b32.xlu0 %v1914, 20
      %v3747 = vpop.permute.xlu0 %3746
      %3748 = vrot.lane.b32.xlu0 %v1916, 20
      %v3749 = vpop.permute.xlu0 %3748
      %3750 = vrot.lane.b32.xlu0 %v1918, 20
      %v3751 = vpop.permute.xlu0 %3750
      %3752 = vrot.lane.b32.xlu0 %v1921, 20
      %v3753 = vpop.permute.xlu0 %3752
      %3754 = vrot.lane.b32.xlu0 %v1923, 20
      %v3755 = vpop.permute.xlu0 %3754
      %3756 = vrot.lane.b32.xlu0 %v1925, 20
      %v3757 = vpop.permute.xlu0 %3756
      %3758 = vrot.lane.b32.xlu0 %v1927, 20
      %v3759 = vpop.permute.xlu0 %3758
      %3760 = vrot.lane.b32.xlu0 %v1930, 20
      %v3761 = vpop.permute.xlu0 %3760
      %3762 = vrot.lane.b32.xlu0 %v1932, 20
      %v3763 = vpop.permute.xlu0 %3762
      %3764 = vrot.lane.b32.xlu0 %v1934, 20
      %v3765 = vpop.permute.xlu0 %3764
      %3766 = vrot.lane.b32.xlu0 %v1936, 20
      %v3767 = vpop.permute.xlu0 %3766
      %3768 = vrot.lane.b32.xlu0 %v1939, 20
      %v3769 = vpop.permute.xlu0 %3768
      %3770 = vrot.lane.b32.xlu0 %v1941, 20
      %v3771 = vpop.permute.xlu0 %3770
      %3772 = vrot.lane.b32.xlu0 %v1943, 20
      %v3773 = vpop.permute.xlu0 %3772
      %3774 = vrot.lane.b32.xlu0 %v1945, 20
      %v3775 = vpop.permute.xlu0 %3774
      %3776 = vrot.lane.b32.xlu0 %v1962, 20
      %v3777 = vpop.permute.xlu0 %3776
      %3778 = vrot.lane.b32.xlu0 %v1964, 20
      %v3779 = vpop.permute.xlu0 %3778
      %3780 = vrot.lane.b32.xlu0 %v1966, 20
      %v3781 = vpop.permute.xlu0 %3780
      %3782 = vrot.lane.b32.xlu0 %v1968, 20
      %v3783 = vpop.permute.xlu0 %3782
      %3912 = vrot.lane.b32.xlu0 %v1048, 24
      %v3913 = vpop.permute.xlu0 %3912
      %3914 = vrot.lane.b32.xlu0 %v1049, 24
      %v3915 = vpop.permute.xlu0 %3914
      %3916 = vrot.lane.b32.xlu0 %v1050, 24
      %v3917 = vpop.permute.xlu0 %3916
      %3918 = vrot.lane.b32.xlu0 %v1051, 24
      %v3919 = vpop.permute.xlu0 %3918
      %3920 = vrot.lane.b32.xlu0 %v1053, 24
      %v3921 = vpop.permute.xlu0 %3920
      %3922 = vrot.lane.b32.xlu0 %v1054, 24
      %v3923 = vpop.permute.xlu0 %3922
      %3924 = vrot.lane.b32.xlu0 %v1055, 24
      %v3925 = vpop.permute.xlu0 %3924
      %3926 = vrot.lane.b32.xlu0 %v1056, 24
      %v3927 = vpop.permute.xlu0 %3926
      %3928 = vrot.lane.b32.xlu0 %v1058, 24
      %v3929 = vpop.permute.xlu0 %3928
      %3930 = vrot.lane.b32.xlu0 %v1059, 24
      %v3931 = vpop.permute.xlu0 %3930
      %3932 = vrot.lane.b32.xlu0 %v1060, 24
      %v3933 = vpop.permute.xlu0 %3932
      %3934 = vrot.lane.b32.xlu0 %v1061, 24
      %v3935 = vpop.permute.xlu0 %3934
      %3936 = vrot.lane.b32.xlu0 %v1063, 24
      %v3937 = vpop.permute.xlu0 %3936
      %3938 = vrot.lane.b32.xlu0 %v1064, 24
      %v3939 = vpop.permute.xlu0 %3938
      %3940 = vrot.lane.b32.xlu0 %v1065, 24
      %v3941 = vpop.permute.xlu0 %3940
      %3942 = vrot.lane.b32.xlu0 %v1066, 24
      %v3943 = vpop.permute.xlu0 %3942
      %3944 = vrot.lane.b32.xlu0 %v1068, 24
      %v3945 = vpop.permute.xlu0 %3944
      %3946 = vrot.lane.b32.xlu0 %v1069, 24
      %v3947 = vpop.permute.xlu0 %3946
      %3948 = vrot.lane.b32.xlu0 %v1070, 24
      %v3949 = vpop.permute.xlu0 %3948
      %3950 = vrot.lane.b32.xlu0 %v1071, 24
      %v3951 = vpop.permute.xlu0 %3950
      %3952 = vrot.lane.b32.xlu0 %v1073, 24
      %v3953 = vpop.permute.xlu0 %3952
      %3954 = vrot.lane.b32.xlu0 %v1074, 24
      %v3955 = vpop.permute.xlu0 %3954
      %3956 = vrot.lane.b32.xlu0 %v1075, 24
      %v3957 = vpop.permute.xlu0 %3956
      %3958 = vrot.lane.b32.xlu0 %v1076, 24
      %v3959 = vpop.permute.xlu0 %3958
      %3960 = vrot.lane.b32.xlu0 %v1078, 24
      %v3961 = vpop.permute.xlu0 %3960
      %3962 = vrot.lane.b32.xlu0 %v1079, 24
      %v3963 = vpop.permute.xlu0 %3962
      %3964 = vrot.lane.b32.xlu0 %v1080, 24
      %v3965 = vpop.permute.xlu0 %3964
      %3966 = vrot.lane.b32.xlu0 %v1081, 24
      %v3967 = vpop.permute.xlu0 %3966
      %3968 = vrot.lane.b32.xlu0 %v1083, 24
      %v3969 = vpop.permute.xlu0 %3968
      %3970 = vrot.lane.b32.xlu0 %v1084, 24
      %v3971 = vpop.permute.xlu0 %3970
      %3972 = vrot.lane.b32.xlu0 %v1085, 24
      %v3973 = vpop.permute.xlu0 %3972
      %3974 = vrot.lane.b32.xlu0 %v1086, 24
      %v3975 = vpop.permute.xlu0 %3974
      %3976 = vrot.lane.b32.xlu0 %v1088, 24
      %v3977 = vpop.permute.xlu0 %3976
      %3978 = vrot.lane.b32.xlu0 %v1089, 24
      %v3979 = vpop.permute.xlu0 %3978
      %3980 = vrot.lane.b32.xlu0 %v1090, 24
      %v3981 = vpop.permute.xlu0 %3980
      %3982 = vrot.lane.b32.xlu0 %v1091, 24
      %v3983 = vpop.permute.xlu0 %3982
      %3984 = vrot.lane.b32.xlu0 %v1093, 24
      %v3985 = vpop.permute.xlu0 %3984
      %3986 = vrot.lane.b32.xlu0 %v1094, 24
      %v3987 = vpop.permute.xlu0 %3986
      %3988 = vrot.lane.b32.xlu0 %v1095, 24
      %v3989 = vpop.permute.xlu0 %3988
      %3990 = vrot.lane.b32.xlu0 %v1096, 24
      %v3991 = vpop.permute.xlu0 %3990
      %3992 = vrot.lane.b32.xlu0 %v1098, 24
      %v3993 = vpop.permute.xlu0 %3992
      %3994 = vrot.lane.b32.xlu0 %v1099, 24
      %v3995 = vpop.permute.xlu0 %3994
      %3996 = vrot.lane.b32.xlu0 %v1100, 24
      %v3997 = vpop.permute.xlu0 %3996
      %3998 = vrot.lane.b32.xlu0 %v1101, 24
      %v3999 = vpop.permute.xlu0 %3998
      %4000 = vrot.lane.b32.xlu0 %v1103, 24
      %v4001 = vpop.permute.xlu0 %4000
      %4002 = vrot.lane.b32.xlu0 %v1104, 24
      %v4003 = vpop.permute.xlu0 %4002
      %4004 = vrot.lane.b32.xlu0 %v1105, 24
      %v4005 = vpop.permute.xlu0 %4004
      %4006 = vrot.lane.b32.xlu0 %v1106, 24
      %v4007 = vpop.permute.xlu0 %4006
      %4008 = vrot.lane.b32.xlu0 %v1108, 24
      %v4009 = vpop.permute.xlu0 %4008
      %4010 = vrot.lane.b32.xlu0 %v1109, 24
      %v4011 = vpop.permute.xlu0 %4010
      %4012 = vrot.lane.b32.xlu0 %v1110, 24
      %v4013 = vpop.permute.xlu0 %4012
      %4014 = vrot.lane.b32.xlu0 %v1111, 24
      %v4015 = vpop.permute.xlu0 %4014
      %4016 = vrot.lane.b32.xlu0 %v1113, 24
      %v4017 = vpop.permute.xlu0 %4016
      %4018 = vrot.lane.b32.xlu0 %v1114, 24
      %v4019 = vpop.permute.xlu0 %4018
      %4020 = vrot.lane.b32.xlu0 %v1115, 24
      %v4021 = vpop.permute.xlu0 %4020
      %4022 = vrot.lane.b32.xlu0 %v1116, 24
      %v4023 = vpop.permute.xlu0 %4022
      %4024 = vrot.lane.b32.xlu0 %v1118, 24
      %v4025 = vpop.permute.xlu0 %4024
      %4026 = vrot.lane.b32.xlu0 %v1119, 24
      %v4027 = vpop.permute.xlu0 %4026
      %4028 = vrot.lane.b32.xlu0 %v1120, 24
      %v4029 = vpop.permute.xlu0 %4028
      %4030 = vrot.lane.b32.xlu0 %v1121, 24
      %v4031 = vpop.permute.xlu0 %4030
      %4032 = vrot.lane.b32.xlu0 %v1123, 24
      %v4033 = vpop.permute.xlu0 %4032
      %4034 = vrot.lane.b32.xlu0 %v1124, 24
      %v4035 = vpop.permute.xlu0 %4034
      %4036 = vrot.lane.b32.xlu0 %v1125, 24
      %v4037 = vpop.permute.xlu0 %4036
      %4038 = vrot.lane.b32.xlu0 %v1126, 24
      %v4039 = vpop.permute.xlu0 %4038
      %4040 = vrot.lane.b32.xlu0 %v1128, 24
      %v4041 = vpop.permute.xlu0 %4040
      %4042 = vrot.lane.b32.xlu0 %v1129, 24
      %v4043 = vpop.permute.xlu0 %4042
      %4044 = vrot.lane.b32.xlu0 %v1130, 24
      %v4045 = vpop.permute.xlu0 %4044
      %4046 = vrot.lane.b32.xlu0 %v1131, 24
      %v4047 = vpop.permute.xlu0 %4046
      %4048 = vrot.lane.b32.xlu0 %v1133, 24
      %v4049 = vpop.permute.xlu0 %4048
      %4050 = vrot.lane.b32.xlu0 %v1134, 24
      %v4051 = vpop.permute.xlu0 %4050
      %4052 = vrot.lane.b32.xlu0 %v1135, 24
      %v4053 = vpop.permute.xlu0 %4052
      %4054 = vrot.lane.b32.xlu0 %v1136, 24
      %v4055 = vpop.permute.xlu0 %4054
      %4056 = vrot.lane.b32.xlu0 %v1138, 24
      %v4057 = vpop.permute.xlu0 %4056
      %4058 = vrot.lane.b32.xlu0 %v1139, 24
      %v4059 = vpop.permute.xlu0 %4058
      %4060 = vrot.lane.b32.xlu0 %v1140, 24
      %v4061 = vpop.permute.xlu0 %4060
      %4062 = vrot.lane.b32.xlu0 %v1141, 24
      %v4063 = vpop.permute.xlu0 %4062
      %4064 = vrot.lane.b32.xlu0 %v1143, 24
      %v4065 = vpop.permute.xlu0 %4064
      %4066 = vrot.lane.b32.xlu0 %v1144, 24
      %v4067 = vpop.permute.xlu0 %4066
      %4068 = vrot.lane.b32.xlu0 %v1145, 24
      %v4069 = vpop.permute.xlu0 %4068
      %4070 = vrot.lane.b32.xlu0 %v1146, 24
      %v4071 = vpop.permute.xlu0 %4070
      %4072 = vrot.lane.b32.xlu0 %v1148, 24
      %v4073 = vpop.permute.xlu0 %4072
      %4074 = vrot.lane.b32.xlu0 %v1149, 24
      %v4075 = vpop.permute.xlu0 %4074
      %4076 = vrot.lane.b32.xlu0 %v1150, 24
      %v4077 = vpop.permute.xlu0 %4076
      %4078 = vrot.lane.b32.xlu0 %v1151, 24
      %v4079 = vpop.permute.xlu0 %4078
      %4080 = vrot.lane.b32.xlu0 %v1153, 24
      %v4081 = vpop.permute.xlu0 %4080
      %4082 = vrot.lane.b32.xlu0 %v1154, 24
      %v4083 = vpop.permute.xlu0 %4082
      %4084 = vrot.lane.b32.xlu0 %v1155, 24
      %v4085 = vpop.permute.xlu0 %4084
      %4086 = vrot.lane.b32.xlu0 %v1156, 24
      %v4087 = vpop.permute.xlu0 %4086
      %4088 = vrot.lane.b32.xlu0 %v1158, 24
      %v4089 = vpop.permute.xlu0 %4088
      %4090 = vrot.lane.b32.xlu0 %v1159, 24
      %v4091 = vpop.permute.xlu0 %4090
      %4092 = vrot.lane.b32.xlu0 %v1160, 24
      %v4093 = vpop.permute.xlu0 %4092
      %4094 = vrot.lane.b32.xlu0 %v1161, 24
      %v4095 = vpop.permute.xlu0 %4094
      %4096 = vrot.lane.b32.xlu0 %v1163, 24
      %v4097 = vpop.permute.xlu0 %4096
      %4098 = vrot.lane.b32.xlu0 %v1164, 24
      %v4099 = vpop.permute.xlu0 %4098
      %4100 = vrot.lane.b32.xlu0 %v1165, 24
      %v4101 = vpop.permute.xlu0 %4100
      %4102 = vrot.lane.b32.xlu0 %v1166, 24
      %v4103 = vpop.permute.xlu0 %4102
      %4104 = vrot.lane.b32.xlu0 %v1168, 24
      %v4105 = vpop.permute.xlu0 %4104
      %4106 = vrot.lane.b32.xlu0 %v1169, 24
      %v4107 = vpop.permute.xlu0 %4106
      %4108 = vrot.lane.b32.xlu0 %v1170, 24
      %v4109 = vpop.permute.xlu0 %4108
      %4110 = vrot.lane.b32.xlu0 %v1171, 24
      %v4111 = vpop.permute.xlu0 %4110
      %4112 = vrot.lane.b32.xlu0 %v1173, 24
      %v4113 = vpop.permute.xlu0 %4112
      %4114 = vrot.lane.b32.xlu0 %v1174, 24
      %v4115 = vpop.permute.xlu0 %4114
      %4116 = vrot.lane.b32.xlu0 %v1175, 24
      %v4117 = vpop.permute.xlu0 %4116
      %4118 = vrot.lane.b32.xlu0 %v1176, 24
      %v4119 = vpop.permute.xlu0 %4118
      %4120 = vrot.lane.b32.xlu0 %v1178, 24
      %v4121 = vpop.permute.xlu0 %4120
      %4122 = vrot.lane.b32.xlu0 %v1179, 24
      %v4123 = vpop.permute.xlu0 %4122
      %4124 = vrot.lane.b32.xlu0 %v1180, 24
      %v4125 = vpop.permute.xlu0 %4124
      %4126 = vrot.lane.b32.xlu0 %v1181, 24
      %v4127 = vpop.permute.xlu0 %4126
      %4128 = vrot.lane.b32.xlu0 %v1183, 24
      %v4129 = vpop.permute.xlu0 %4128
      %4130 = vrot.lane.b32.xlu0 %v1184, 24
      %v4131 = vpop.permute.xlu0 %4130
      %4132 = vrot.lane.b32.xlu0 %v1185, 24
      %v4133 = vpop.permute.xlu0 %4132
      %4134 = vrot.lane.b32.xlu0 %v1186, 24
      %v4135 = vpop.permute.xlu0 %4134
      %4136 = vrot.lane.b32.xlu0 %v1188, 24
      %v4137 = vpop.permute.xlu0 %4136
      %4138 = vrot.lane.b32.xlu0 %v1189, 24
      %v4139 = vpop.permute.xlu0 %4138
      %4140 = vrot.lane.b32.xlu0 %v1190, 24
      %v4141 = vpop.permute.xlu0 %4140
      %4142 = vrot.lane.b32.xlu0 %v1191, 24
      %v4143 = vpop.permute.xlu0 %4142
      %4144 = vrot.lane.b32.xlu0 %v1193, 24
      %v4145 = vpop.permute.xlu0 %4144
      %4146 = vrot.lane.b32.xlu0 %v1194, 24
      %v4147 = vpop.permute.xlu0 %4146
      %4148 = vrot.lane.b32.xlu0 %v1195, 24
      %v4149 = vpop.permute.xlu0 %4148
      %4150 = vrot.lane.b32.xlu0 %v1196, 24
      %v4151 = vpop.permute.xlu0 %4150
      %4152 = vrot.lane.b32.xlu0 %v1198, 24
      %v4153 = vpop.permute.xlu0 %4152
      %4154 = vrot.lane.b32.xlu0 %v1199, 24
      %v4155 = vpop.permute.xlu0 %4154
      %4156 = vrot.lane.b32.xlu0 %v1200, 24
      %v4157 = vpop.permute.xlu0 %4156
      %4158 = vrot.lane.b32.xlu0 %v1201, 24
      %v4159 = vpop.permute.xlu0 %4158
      %4160 = vrot.lane.b32.xlu0 %v1203, 24
      %v4161 = vpop.permute.xlu0 %4160
      %4162 = vrot.lane.b32.xlu0 %v1204, 24
      %v4163 = vpop.permute.xlu0 %4162
      %4164 = vrot.lane.b32.xlu0 %v1205, 24
      %v4165 = vpop.permute.xlu0 %4164
      %4166 = vrot.lane.b32.xlu0 %v1206, 24
      %v4167 = vpop.permute.xlu0 %4166
      %4296 = vrot.lane.b32.xlu0 %v1389, 28
      %v4297 = vpop.permute.xlu0 %4296
      %4298 = vrot.lane.b32.xlu0 %v1391, 28
      %v4299 = vpop.permute.xlu0 %4298
      %4300 = vrot.lane.b32.xlu0 %v1393, 28
      %v4301 = vpop.permute.xlu0 %4300
      %4302 = vrot.lane.b32.xlu0 %v1395, 28
      %v4303 = vpop.permute.xlu0 %4302
      %4304 = vrot.lane.b32.xlu0 %v1398, 28
      %v4305 = vpop.permute.xlu0 %4304
      %4306 = vrot.lane.b32.xlu0 %v1400, 28
      %v4307 = vpop.permute.xlu0 %4306
      %4308 = vrot.lane.b32.xlu0 %v1402, 28
      %v4309 = vpop.permute.xlu0 %4308
      %4310 = vrot.lane.b32.xlu0 %v1404, 28
      %v4311 = vpop.permute.xlu0 %4310
      %4312 = vrot.lane.b32.xlu0 %v1407, 28
      %v4313 = vpop.permute.xlu0 %4312
      %4314 = vrot.lane.b32.xlu0 %v1409, 28
      %v4315 = vpop.permute.xlu0 %4314
      %4316 = vrot.lane.b32.xlu0 %v1411, 28
      %v4317 = vpop.permute.xlu0 %4316
      %4318 = vrot.lane.b32.xlu0 %v1413, 28
      %v4319 = vpop.permute.xlu0 %4318
      %4320 = vrot.lane.b32.xlu0 %v1416, 28
      %v4321 = vpop.permute.xlu0 %4320
      %4322 = vrot.lane.b32.xlu0 %v1418, 28
      %v4323 = vpop.permute.xlu0 %4322
      %4324 = vrot.lane.b32.xlu0 %v1420, 28
      %v4325 = vpop.permute.xlu0 %4324
      %4326 = vrot.lane.b32.xlu0 %v1422, 28
      %v4327 = vpop.permute.xlu0 %4326
      %4328 = vrot.lane.b32.xlu0 %v1425, 28
      %v4329 = vpop.permute.xlu0 %4328
      %4330 = vrot.lane.b32.xlu0 %v1427, 28
      %v4331 = vpop.permute.xlu0 %4330
      %4332 = vrot.lane.b32.xlu0 %v1429, 28
      %v4333 = vpop.permute.xlu0 %4332
      %4334 = vrot.lane.b32.xlu0 %v1431, 28
      %v4335 = vpop.permute.xlu0 %4334
      %4336 = vrot.lane.b32.xlu0 %v1434, 28
      %v4337 = vpop.permute.xlu0 %4336
      %4338 = vrot.lane.b32.xlu0 %v1436, 28
      %v4339 = vpop.permute.xlu0 %4338
      %4340 = vrot.lane.b32.xlu0 %v1438, 28
      %v4341 = vpop.permute.xlu0 %4340
      %4342 = vrot.lane.b32.xlu0 %v1440, 28
      %v4343 = vpop.permute.xlu0 %4342
      %4344 = vrot.lane.b32.xlu0 %v1443, 28
      %v4345 = vpop.permute.xlu0 %4344
      %4346 = vrot.lane.b32.xlu0 %v1445, 28
      %v4347 = vpop.permute.xlu0 %4346
      %4348 = vrot.lane.b32.xlu0 %v1447, 28
      %v4349 = vpop.permute.xlu0 %4348
      %4350 = vrot.lane.b32.xlu0 %v1449, 28
      %v4351 = vpop.permute.xlu0 %4350
      %4352 = vrot.lane.b32.xlu0 %v1452, 28
      %v4353 = vpop.permute.xlu0 %4352
      %4354 = vrot.lane.b32.xlu0 %v1454, 28
      %v4355 = vpop.permute.xlu0 %4354
      %4356 = vrot.lane.b32.xlu0 %v1456, 28
      %v4357 = vpop.permute.xlu0 %4356
      %4358 = vrot.lane.b32.xlu0 %v1458, 28
      %v4359 = vpop.permute.xlu0 %4358
      %4360 = vrot.lane.b32.xlu0 %v1461, 28
      %v4361 = vpop.permute.xlu0 %4360
      %4362 = vrot.lane.b32.xlu0 %v1463, 28
      %v4363 = vpop.permute.xlu0 %4362
      %4364 = vrot.lane.b32.xlu0 %v1465, 28
      %v4365 = vpop.permute.xlu0 %4364
      %4366 = vrot.lane.b32.xlu0 %v1467, 28
      %v4367 = vpop.permute.xlu0 %4366
      %4368 = vrot.lane.b32.xlu0 %v1470, 28
      %v4369 = vpop.permute.xlu0 %4368
      %4370 = vrot.lane.b32.xlu0 %v1472, 28
      %v4371 = vpop.permute.xlu0 %4370
      %4372 = vrot.lane.b32.xlu0 %v1474, 28
      %v4373 = vpop.permute.xlu0 %4372
      %4374 = vrot.lane.b32.xlu0 %v1476, 28
      %v4375 = vpop.permute.xlu0 %4374
      %4376 = vrot.lane.b32.xlu0 %v1479, 28
      %v4377 = vpop.permute.xlu0 %4376
      %4378 = vrot.lane.b32.xlu0 %v1481, 28
      %v4379 = vpop.permute.xlu0 %4378
      %4380 = vrot.lane.b32.xlu0 %v1483, 28
      %v4381 = vpop.permute.xlu0 %4380
      %4382 = vrot.lane.b32.xlu0 %v1485, 28
      %v4383 = vpop.permute.xlu0 %4382
      %4384 = vrot.lane.b32.xlu0 %v1488, 28
      %v4385 = vpop.permute.xlu0 %4384
      %4386 = vrot.lane.b32.xlu0 %v1490, 28
      %v4387 = vpop.permute.xlu0 %4386
      %4388 = vrot.lane.b32.xlu0 %v1492, 28
      %v4389 = vpop.permute.xlu0 %4388
      %4390 = vrot.lane.b32.xlu0 %v1494, 28
      %v4391 = vpop.permute.xlu0 %4390
      %4392 = vrot.lane.b32.xlu0 %v1497, 28
      %v4393 = vpop.permute.xlu0 %4392
      %4394 = vrot.lane.b32.xlu0 %v1499, 28
      %v4395 = vpop.permute.xlu0 %4394
      %4396 = vrot.lane.b32.xlu0 %v1501, 28
      %v4397 = vpop.permute.xlu0 %4396
      %4398 = vrot.lane.b32.xlu0 %v1503, 28
      %v4399 = vpop.permute.xlu0 %4398
      %4400 = vrot.lane.b32.xlu0 %v1506, 28
      %v4401 = vpop.permute.xlu0 %4400
      %4402 = vrot.lane.b32.xlu0 %v1508, 28
      %v4403 = vpop.permute.xlu0 %4402
      %4404 = vrot.lane.b32.xlu0 %v1510, 28
      %v4405 = vpop.permute.xlu0 %4404
      %4406 = vrot.lane.b32.xlu0 %v1512, 28
      %v4407 = vpop.permute.xlu0 %4406
      %4408 = vrot.lane.b32.xlu0 %v1515, 28
      %v4409 = vpop.permute.xlu0 %4408
      %4410 = vrot.lane.b32.xlu0 %v1517, 28
      %v4411 = vpop.permute.xlu0 %4410
      %4412 = vrot.lane.b32.xlu0 %v1519, 28
      %v4413 = vpop.permute.xlu0 %4412
      %4414 = vrot.lane.b32.xlu0 %v1521, 28
      %v4415 = vpop.permute.xlu0 %4414
      %4416 = vrot.lane.b32.xlu0 %v1524, 28
      %v4417 = vpop.permute.xlu0 %4416
      %4418 = vrot.lane.b32.xlu0 %v1526, 28
      %v4419 = vpop.permute.xlu0 %4418
      %4420 = vrot.lane.b32.xlu0 %v1528, 28
      %v4421 = vpop.permute.xlu0 %4420
      %4422 = vrot.lane.b32.xlu0 %v1530, 28
      %v4423 = vpop.permute.xlu0 %4422
      %4424 = vrot.lane.b32.xlu0 %v1533, 28
      %v4425 = vpop.permute.xlu0 %4424
      %4426 = vrot.lane.b32.xlu0 %v1535, 28
      %v4427 = vpop.permute.xlu0 %4426
      %4428 = vrot.lane.b32.xlu0 %v1537, 28
      %v4429 = vpop.permute.xlu0 %4428
      %4430 = vrot.lane.b32.xlu0 %v1539, 28
      %v4431 = vpop.permute.xlu0 %4430
      %4432 = vrot.lane.b32.xlu0 %v1542, 28
      %v4433 = vpop.permute.xlu0 %4432
      %4434 = vrot.lane.b32.xlu0 %v1544, 28
      %v4435 = vpop.permute.xlu0 %4434
      %4436 = vrot.lane.b32.xlu0 %v1546, 28
      %v4437 = vpop.permute.xlu0 %4436
      %4438 = vrot.lane.b32.xlu0 %v1548, 28
      %v4439 = vpop.permute.xlu0 %4438
      %4440 = vrot.lane.b32.xlu0 %v1551, 28
      %v4441 = vpop.permute.xlu0 %4440
      %4442 = vrot.lane.b32.xlu0 %v1553, 28
      %v4443 = vpop.permute.xlu0 %4442
      %4444 = vrot.lane.b32.xlu0 %v1555, 28
      %v4445 = vpop.permute.xlu0 %4444
      %4446 = vrot.lane.b32.xlu0 %v1557, 28
      %v4447 = vpop.permute.xlu0 %4446
      %4448 = vrot.lane.b32.xlu0 %v1560, 28
      %v4449 = vpop.permute.xlu0 %4448
      %4450 = vrot.lane.b32.xlu0 %v1562, 28
      %v4451 = vpop.permute.xlu0 %4450
      %4452 = vrot.lane.b32.xlu0 %v1564, 28
      %v4453 = vpop.permute.xlu0 %4452
      %4454 = vrot.lane.b32.xlu0 %v1566, 28
      %v4455 = vpop.permute.xlu0 %4454
      %4456 = vrot.lane.b32.xlu0 %v1569, 28
      %v4457 = vpop.permute.xlu0 %4456
      %4458 = vrot.lane.b32.xlu0 %v1571, 28
      %v4459 = vpop.permute.xlu0 %4458
      %4460 = vrot.lane.b32.xlu0 %v1573, 28
      %v4461 = vpop.permute.xlu0 %4460
      %4462 = vrot.lane.b32.xlu0 %v1575, 28
      %v4463 = vpop.permute.xlu0 %4462
      %4464 = vrot.lane.b32.xlu0 %v1578, 28
      %v4465 = vpop.permute.xlu0 %4464
      %4466 = vrot.lane.b32.xlu0 %v1580, 28
      %v4467 = vpop.permute.xlu0 %4466
      %4468 = vrot.lane.b32.xlu0 %v1582, 28
      %v4469 = vpop.permute.xlu0 %4468
      %4470 = vrot.lane.b32.xlu0 %v1584, 28
      %v4471 = vpop.permute.xlu0 %4470
      %4472 = vrot.lane.b32.xlu0 %v1587, 28
      %v4473 = vpop.permute.xlu0 %4472
      %4474 = vrot.lane.b32.xlu0 %v1589, 28
      %v4475 = vpop.permute.xlu0 %4474
      %4476 = vrot.lane.b32.xlu0 %v1591, 28
      %v4477 = vpop.permute.xlu0 %4476
      %4478 = vrot.lane.b32.xlu0 %v1593, 28
      %v4479 = vpop.permute.xlu0 %4478
      %4480 = vrot.lane.b32.xlu0 %v1596, 28
      %v4481 = vpop.permute.xlu0 %4480
      %4482 = vrot.lane.b32.xlu0 %v1598, 28
      %v4483 = vpop.permute.xlu0 %4482
      %4484 = vrot.lane.b32.xlu0 %v1600, 28
      %v4485 = vpop.permute.xlu0 %4484
      %4486 = vrot.lane.b32.xlu0 %v1602, 28
      %v4487 = vpop.permute.xlu0 %4486
      %4488 = vrot.lane.b32.xlu0 %v1605, 28
      %v4489 = vpop.permute.xlu0 %4488
      %4490 = vrot.lane.b32.xlu0 %v1607, 28
      %v4491 = vpop.permute.xlu0 %4490
      %4492 = vrot.lane.b32.xlu0 %v1609, 28
      %v4493 = vpop.permute.xlu0 %4492
      %4494 = vrot.lane.b32.xlu0 %v1611, 28
      %v4495 = vpop.permute.xlu0 %4494
      %4496 = vrot.lane.b32.xlu0 %v1614, 28
      %v4497 = vpop.permute.xlu0 %4496
      %4498 = vrot.lane.b32.xlu0 %v1616, 28
      %v4499 = vpop.permute.xlu0 %4498
      %4500 = vrot.lane.b32.xlu0 %v1618, 28
      %v4501 = vpop.permute.xlu0 %4500
      %4502 = vrot.lane.b32.xlu0 %v1620, 28
      %v4503 = vpop.permute.xlu0 %4502
      %4504 = vrot.lane.b32.xlu0 %v1623, 28
      %v4505 = vpop.permute.xlu0 %4504
      %4506 = vrot.lane.b32.xlu0 %v1625, 28
      %v4507 = vpop.permute.xlu0 %4506
      %4508 = vrot.lane.b32.xlu0 %v1627, 28
      %v4509 = vpop.permute.xlu0 %4508
      %4510 = vrot.lane.b32.xlu0 %v1629, 28
      %v4511 = vpop.permute.xlu0 %4510
      %4512 = vrot.lane.b32.xlu0 %v1632, 28
      %v4513 = vpop.permute.xlu0 %4512
      %4514 = vrot.lane.b32.xlu0 %v1634, 28
      %v4515 = vpop.permute.xlu0 %4514
      %4516 = vrot.lane.b32.xlu0 %v1636, 28
      %v4517 = vpop.permute.xlu0 %4516
      %4518 = vrot.lane.b32.xlu0 %v1638, 28
      %v4519 = vpop.permute.xlu0 %4518
      %4520 = vrot.lane.b32.xlu0 %v1641, 28
      %v4521 = vpop.permute.xlu0 %4520
      %4522 = vrot.lane.b32.xlu0 %v1643, 28
      %v4523 = vpop.permute.xlu0 %4522
      %4524 = vrot.lane.b32.xlu0 %v1645, 28
      %v4525 = vpop.permute.xlu0 %4524
      %4526 = vrot.lane.b32.xlu0 %v1647, 28
      %v4527 = vpop.permute.xlu0 %4526
      %4528 = vrot.lane.b32.xlu0 %v1650, 28
      %v4529 = vpop.permute.xlu0 %4528
      %4530 = vrot.lane.b32.xlu0 %v1652, 28
      %v4531 = vpop.permute.xlu0 %4530
      %4532 = vrot.lane.b32.xlu0 %v1654, 28
      %v4533 = vpop.permute.xlu0 %4532
      %4534 = vrot.lane.b32.xlu0 %v1656, 28
      %v4535 = vpop.permute.xlu0 %4534
      %4536 = vrot.lane.b32.xlu0 %v1953, 28
      %v4537 = vpop.permute.xlu0 %4536
      %4538 = vrot.lane.b32.xlu0 %v1955, 28
      %v4539 = vpop.permute.xlu0 %4538
      %4540 = vrot.lane.b32.xlu0 %v1957, 28
      %v4541 = vpop.permute.xlu0 %4540
      %4542 = vrot.lane.b32.xlu0 %v1959, 28
      %v4543 = vpop.permute.xlu0 %4542
      %4544 = vrot.lane.b32.xlu0 %v1976, 28
      %v4545 = vpop.permute.xlu0 %4544
      %4546 = vrot.lane.b32.xlu0 %v1978, 28
      %v4547 = vpop.permute.xlu0 %4546
      %4548 = vrot.lane.b32.xlu0 %v1980, 28
      %v4549 = vpop.permute.xlu0 %4548
      %4550 = vrot.lane.b32.xlu0 %v1982, 28
      %v4551 = vpop.permute.xlu0 %4550
      %4680 = vrot.lane.b32.xlu0 %v1678, 32
      %v4681 = vpop.permute.xlu0 %4680
      %4682 = vrot.lane.b32.xlu0 %v1680, 32
      %v4683 = vpop.permute.xlu0 %4682
      %4684 = vrot.lane.b32.xlu0 %v1682, 32
      %v4685 = vpop.permute.xlu0 %4684
      %4686 = vrot.lane.b32.xlu0 %v1684, 32
      %v4687 = vpop.permute.xlu0 %4686
      %4688 = vrot.lane.b32.xlu0 %v1687, 32
      %v4689 = vpop.permute.xlu0 %4688
      %4690 = vrot.lane.b32.xlu0 %v1689, 32
      %v4691 = vpop.permute.xlu0 %4690
      %4692 = vrot.lane.b32.xlu0 %v1691, 32
      %v4693 = vpop.permute.xlu0 %4692
      %4694 = vrot.lane.b32.xlu0 %v1693, 32
      %v4695 = vpop.permute.xlu0 %4694
      %4696 = vrot.lane.b32.xlu0 %v1696, 32
      %v4697 = vpop.permute.xlu0 %4696
      %4698 = vrot.lane.b32.xlu0 %v1698, 32
      %v4699 = vpop.permute.xlu0 %4698
      %4700 = vrot.lane.b32.xlu0 %v1700, 32
      %v4701 = vpop.permute.xlu0 %4700
      %4702 = vrot.lane.b32.xlu0 %v1702, 32
      %v4703 = vpop.permute.xlu0 %4702
      %4704 = vrot.lane.b32.xlu0 %v1705, 32
      %v4705 = vpop.permute.xlu0 %4704
      %4706 = vrot.lane.b32.xlu0 %v1707, 32
      %v4707 = vpop.permute.xlu0 %4706
      %4708 = vrot.lane.b32.xlu0 %v1709, 32
      %v4709 = vpop.permute.xlu0 %4708
      %4710 = vrot.lane.b32.xlu0 %v1711, 32
      %v4711 = vpop.permute.xlu0 %4710
      %4712 = vrot.lane.b32.xlu0 %v1714, 32
      %v4713 = vpop.permute.xlu0 %4712
      %4714 = vrot.lane.b32.xlu0 %v1716, 32
      %v4715 = vpop.permute.xlu0 %4714
      %4716 = vrot.lane.b32.xlu0 %v1718, 32
      %v4717 = vpop.permute.xlu0 %4716
      %4718 = vrot.lane.b32.xlu0 %v1720, 32
      %v4719 = vpop.permute.xlu0 %4718
      %4720 = vrot.lane.b32.xlu0 %v1723, 32
      %v4721 = vpop.permute.xlu0 %4720
      %4722 = vrot.lane.b32.xlu0 %v1725, 32
      %v4723 = vpop.permute.xlu0 %4722
      %4724 = vrot.lane.b32.xlu0 %v1727, 32
      %v4725 = vpop.permute.xlu0 %4724
      %4726 = vrot.lane.b32.xlu0 %v1729, 32
      %v4727 = vpop.permute.xlu0 %4726
      %4728 = vrot.lane.b32.xlu0 %v1732, 32
      %v4729 = vpop.permute.xlu0 %4728
      %4730 = vrot.lane.b32.xlu0 %v1734, 32
      %v4731 = vpop.permute.xlu0 %4730
      %4732 = vrot.lane.b32.xlu0 %v1736, 32
      %v4733 = vpop.permute.xlu0 %4732
      %4734 = vrot.lane.b32.xlu0 %v1738, 32
      %v4735 = vpop.permute.xlu0 %4734
      %4736 = vrot.lane.b32.xlu0 %v1741, 32
      %v4737 = vpop.permute.xlu0 %4736
      %4738 = vrot.lane.b32.xlu0 %v1743, 32
      %v4739 = vpop.permute.xlu0 %4738
      %4740 = vrot.lane.b32.xlu0 %v1745, 32
      %v4741 = vpop.permute.xlu0 %4740
      %4742 = vrot.lane.b32.xlu0 %v1747, 32
      %v4743 = vpop.permute.xlu0 %4742
      %4744 = vrot.lane.b32.xlu0 %v1750, 32
      %v4745 = vpop.permute.xlu0 %4744
      %4746 = vrot.lane.b32.xlu0 %v1752, 32
      %v4747 = vpop.permute.xlu0 %4746
      %4748 = vrot.lane.b32.xlu0 %v1754, 32
      %v4749 = vpop.permute.xlu0 %4748
      %4750 = vrot.lane.b32.xlu0 %v1756, 32
      %v4751 = vpop.permute.xlu0 %4750
      %4752 = vrot.lane.b32.xlu0 %v1759, 32
      %v4753 = vpop.permute.xlu0 %4752
      %4754 = vrot.lane.b32.xlu0 %v1761, 32
      %v4755 = vpop.permute.xlu0 %4754
      %4756 = vrot.lane.b32.xlu0 %v1763, 32
      %v4757 = vpop.permute.xlu0 %4756
      %4758 = vrot.lane.b32.xlu0 %v1765, 32
      %v4759 = vpop.permute.xlu0 %4758
      %4760 = vrot.lane.b32.xlu0 %v1768, 32
      %v4761 = vpop.permute.xlu0 %4760
      %4762 = vrot.lane.b32.xlu0 %v1770, 32
      %v4763 = vpop.permute.xlu0 %4762
      %4764 = vrot.lane.b32.xlu0 %v1772, 32
      %v4765 = vpop.permute.xlu0 %4764
      %4766 = vrot.lane.b32.xlu0 %v1774, 32
      %v4767 = vpop.permute.xlu0 %4766
      %4768 = vrot.lane.b32.xlu0 %v1777, 32
      %v4769 = vpop.permute.xlu0 %4768
      %4770 = vrot.lane.b32.xlu0 %v1779, 32
      %v4771 = vpop.permute.xlu0 %4770
      %4772 = vrot.lane.b32.xlu0 %v1781, 32
      %v4773 = vpop.permute.xlu0 %4772
      %4774 = vrot.lane.b32.xlu0 %v1783, 32
      %v4775 = vpop.permute.xlu0 %4774
      %4776 = vrot.lane.b32.xlu0 %v1786, 32
      %v4777 = vpop.permute.xlu0 %4776
      %4778 = vrot.lane.b32.xlu0 %v1788, 32
      %v4779 = vpop.permute.xlu0 %4778
      %4780 = vrot.lane.b32.xlu0 %v1790, 32
      %v4781 = vpop.permute.xlu0 %4780
      %4782 = vrot.lane.b32.xlu0 %v1792, 32
      %v4783 = vpop.permute.xlu0 %4782
      %4784 = vrot.lane.b32.xlu0 %v1795, 32
      %v4785 = vpop.permute.xlu0 %4784
      %4786 = vrot.lane.b32.xlu0 %v1797, 32
      %v4787 = vpop.permute.xlu0 %4786
      %4788 = vrot.lane.b32.xlu0 %v1799, 32
      %v4789 = vpop.permute.xlu0 %4788
      %4790 = vrot.lane.b32.xlu0 %v1801, 32
      %v4791 = vpop.permute.xlu0 %4790
      %4792 = vrot.lane.b32.xlu0 %v1804, 32
      %v4793 = vpop.permute.xlu0 %4792
      %4794 = vrot.lane.b32.xlu0 %v1806, 32
      %v4795 = vpop.permute.xlu0 %4794
      %4796 = vrot.lane.b32.xlu0 %v1808, 32
      %v4797 = vpop.permute.xlu0 %4796
      %4798 = vrot.lane.b32.xlu0 %v1810, 32
      %v4799 = vpop.permute.xlu0 %4798
      %4800 = vrot.lane.b32.xlu0 %v1813, 32
      %v4801 = vpop.permute.xlu0 %4800
      %4802 = vrot.lane.b32.xlu0 %v1815, 32
      %v4803 = vpop.permute.xlu0 %4802
      %4804 = vrot.lane.b32.xlu0 %v1817, 32
      %v4805 = vpop.permute.xlu0 %4804
      %4806 = vrot.lane.b32.xlu0 %v1819, 32
      %v4807 = vpop.permute.xlu0 %4806
      %4808 = vrot.lane.b32.xlu0 %v1822, 32
      %v4809 = vpop.permute.xlu0 %4808
      %4810 = vrot.lane.b32.xlu0 %v1824, 32
      %v4811 = vpop.permute.xlu0 %4810
      %4812 = vrot.lane.b32.xlu0 %v1826, 32
      %v4813 = vpop.permute.xlu0 %4812
      %4814 = vrot.lane.b32.xlu0 %v1828, 32
      %v4815 = vpop.permute.xlu0 %4814
      %4816 = vrot.lane.b32.xlu0 %v1831, 32
      %v4817 = vpop.permute.xlu0 %4816
      %4818 = vrot.lane.b32.xlu0 %v1833, 32
      %v4819 = vpop.permute.xlu0 %4818
      %4820 = vrot.lane.b32.xlu0 %v1835, 32
      %v4821 = vpop.permute.xlu0 %4820
      %4822 = vrot.lane.b32.xlu0 %v1837, 32
      %v4823 = vpop.permute.xlu0 %4822
      %4824 = vrot.lane.b32.xlu0 %v1840, 32
      %v4825 = vpop.permute.xlu0 %4824
      %4826 = vrot.lane.b32.xlu0 %v1842, 32
      %v4827 = vpop.permute.xlu0 %4826
      %4828 = vrot.lane.b32.xlu0 %v1844, 32
      %v4829 = vpop.permute.xlu0 %4828
      %4830 = vrot.lane.b32.xlu0 %v1846, 32
      %v4831 = vpop.permute.xlu0 %4830
      %4832 = vrot.lane.b32.xlu0 %v1849, 32
      %v4833 = vpop.permute.xlu0 %4832
      %4834 = vrot.lane.b32.xlu0 %v1851, 32
      %v4835 = vpop.permute.xlu0 %4834
      %4836 = vrot.lane.b32.xlu0 %v1853, 32
      %v4837 = vpop.permute.xlu0 %4836
      %4838 = vrot.lane.b32.xlu0 %v1855, 32
      %v4839 = vpop.permute.xlu0 %4838
      %4840 = vrot.lane.b32.xlu0 %v1858, 32
      %v4841 = vpop.permute.xlu0 %4840
      %4842 = vrot.lane.b32.xlu0 %v1860, 32
      %v4843 = vpop.permute.xlu0 %4842
      %4844 = vrot.lane.b32.xlu0 %v1862, 32
      %v4845 = vpop.permute.xlu0 %4844
      %4846 = vrot.lane.b32.xlu0 %v1864, 32
      %v4847 = vpop.permute.xlu0 %4846
      %4848 = vrot.lane.b32.xlu0 %v1867, 32
      %v4849 = vpop.permute.xlu0 %4848
      %4850 = vrot.lane.b32.xlu0 %v1869, 32
      %v4851 = vpop.permute.xlu0 %4850
      %4852 = vrot.lane.b32.xlu0 %v1871, 32
      %v4853 = vpop.permute.xlu0 %4852
      %4854 = vrot.lane.b32.xlu0 %v1873, 32
      %v4855 = vpop.permute.xlu0 %4854
      %4856 = vrot.lane.b32.xlu0 %v1876, 32
      %v4857 = vpop.permute.xlu0 %4856
      %4858 = vrot.lane.b32.xlu0 %v1878, 32
      %v4859 = vpop.permute.xlu0 %4858
      %4860 = vrot.lane.b32.xlu0 %v1880, 32
      %v4861 = vpop.permute.xlu0 %4860
      %4862 = vrot.lane.b32.xlu0 %v1882, 32
      %v4863 = vpop.permute.xlu0 %4862
      %4864 = vrot.lane.b32.xlu0 %v1885, 32
      %v4865 = vpop.permute.xlu0 %4864
      %4866 = vrot.lane.b32.xlu0 %v1887, 32
      %v4867 = vpop.permute.xlu0 %4866
      %4868 = vrot.lane.b32.xlu0 %v1889, 32
      %v4869 = vpop.permute.xlu0 %4868
      %4870 = vrot.lane.b32.xlu0 %v1891, 32
      %v4871 = vpop.permute.xlu0 %4870
      %4872 = vrot.lane.b32.xlu0 %v1894, 32
      %v4873 = vpop.permute.xlu0 %4872
      %4874 = vrot.lane.b32.xlu0 %v1896, 32
      %v4875 = vpop.permute.xlu0 %4874
      %4876 = vrot.lane.b32.xlu0 %v1898, 32
      %v4877 = vpop.permute.xlu0 %4876
      %4878 = vrot.lane.b32.xlu0 %v1900, 32
      %v4879 = vpop.permute.xlu0 %4878
      %4880 = vrot.lane.b32.xlu0 %v1903, 32
      %v4881 = vpop.permute.xlu0 %4880
      %4882 = vrot.lane.b32.xlu0 %v1905, 32
      %v4883 = vpop.permute.xlu0 %4882
      %4884 = vrot.lane.b32.xlu0 %v1907, 32
      %v4885 = vpop.permute.xlu0 %4884
      %4886 = vrot.lane.b32.xlu0 %v1909, 32
      %v4887 = vpop.permute.xlu0 %4886
      %4888 = vrot.lane.b32.xlu0 %v1912, 32
      %v4889 = vpop.permute.xlu0 %4888
      %4890 = vrot.lane.b32.xlu0 %v1914, 32
      %v4891 = vpop.permute.xlu0 %4890
      %4892 = vrot.lane.b32.xlu0 %v1916, 32
      %v4893 = vpop.permute.xlu0 %4892
      %4894 = vrot.lane.b32.xlu0 %v1918, 32
      %v4895 = vpop.permute.xlu0 %4894
      %4896 = vrot.lane.b32.xlu0 %v1921, 32
      %v4897 = vpop.permute.xlu0 %4896
      %4898 = vrot.lane.b32.xlu0 %v1923, 32
      %v4899 = vpop.permute.xlu0 %4898
      %4900 = vrot.lane.b32.xlu0 %v1925, 32
      %v4901 = vpop.permute.xlu0 %4900
      %4902 = vrot.lane.b32.xlu0 %v1927, 32
      %v4903 = vpop.permute.xlu0 %4902
      %4904 = vrot.lane.b32.xlu0 %v1930, 32
      %v4905 = vpop.permute.xlu0 %4904
      %4906 = vrot.lane.b32.xlu0 %v1932, 32
      %v4907 = vpop.permute.xlu0 %4906
      %4908 = vrot.lane.b32.xlu0 %v1934, 32
      %v4909 = vpop.permute.xlu0 %4908
      %4910 = vrot.lane.b32.xlu0 %v1936, 32
      %v4911 = vpop.permute.xlu0 %4910
      %4912 = vrot.lane.b32.xlu0 %v1939, 32
      %v4913 = vpop.permute.xlu0 %4912
      %4914 = vrot.lane.b32.xlu0 %v1941, 32
      %v4915 = vpop.permute.xlu0 %4914
      %4916 = vrot.lane.b32.xlu0 %v1943, 32
      %v4917 = vpop.permute.xlu0 %4916
      %4918 = vrot.lane.b32.xlu0 %v1945, 32
      %v4919 = vpop.permute.xlu0 %4918
      %4920 = vrot.lane.b32.xlu0 %v1962, 32
      %v4921 = vpop.permute.xlu0 %4920
      %4922 = vrot.lane.b32.xlu0 %v1964, 32
      %v4923 = vpop.permute.xlu0 %4922
      %4924 = vrot.lane.b32.xlu0 %v1966, 32
      %v4925 = vpop.permute.xlu0 %4924
      %4926 = vrot.lane.b32.xlu0 %v1968, 32
      %v4927 = vpop.permute.xlu0 %4926
      %4928 = vrot.lane.b32.xlu0 %v1985, 32
      %v4929 = vpop.permute.xlu0 %4928
      %4930 = vrot.lane.b32.xlu0 %v1987, 32
      %v4931 = vpop.permute.xlu0 %4930
      %4932 = vrot.lane.b32.xlu0 %v1989, 32
      %v4933 = vpop.permute.xlu0 %4932
      %4934 = vrot.lane.b32.xlu0 %v1991, 32
      %v4935 = vpop.permute.xlu0 %4934
      %v5064 = vsel %vm737, %v1038, %v1993
      %v5065 = vsel %vm737, %v1039, %v1995
      %v5066 = vsel %vm737, %v1040, %v1997
      %v5067 = vsel %vm737, %v1041, %v1999
      %v5068 = vsel %vm737, %v1043, %v2001
      %v5069 = vsel %vm737, %v1044, %v2003
      %v5070 = vsel %vm737, %v1045, %v2005
      %v5071 = vsel %vm737, %v1046, %v2007
      %v5072 = vsel %vm737, %v1048, %v2009
      %v5073 = vsel %vm737, %v1049, %v2011
      %v5074 = vsel %vm737, %v1050, %v2013
      %v5075 = vsel %vm737, %v1051, %v2015
      %v5076 = vsel %vm737, %v1053, %v2017
      %v5077 = vsel %vm737, %v1054, %v2019
      %v5078 = vsel %vm737, %v1055, %v2021
      %v5079 = vsel %vm737, %v1056, %v2023
      %v5080 = vsel %vm737, %v1058, %v2025
      %v5081 = vsel %vm737, %v1059, %v2027
      %v5082 = vsel %vm737, %v1060, %v2029
      %v5083 = vsel %vm737, %v1061, %v2031
      %v5084 = vsel %vm737, %v1063, %v2033
      %v5085 = vsel %vm737, %v1064, %v2035
      %v5086 = vsel %vm737, %v1065, %v2037
      %v5087 = vsel %vm737, %v1066, %v2039
      %v5088 = vsel %vm737, %v1068, %v2041
      %v5089 = vsel %vm737, %v1069, %v2043
      %v5090 = vsel %vm737, %v1070, %v2045
      %v5091 = vsel %vm737, %v1071, %v2047
      %v5092 = vsel %vm737, %v1073, %v2049
      %v5093 = vsel %vm737, %v1074, %v2051
      %v5094 = vsel %vm737, %v1075, %v2053
      %v5095 = vsel %vm737, %v1076, %v2055
      %v5096 = vsel %vm737, %v1078, %v2057
      %v5097 = vsel %vm737, %v1079, %v2059
      %v5098 = vsel %vm737, %v1080, %v2061
      %v5099 = vsel %vm737, %v1081, %v2063
      %v5100 = vsel %vm737, %v1083, %v2065
      %v5101 = vsel %vm737, %v1084, %v2067
      %v5102 = vsel %vm737, %v1085, %v2069
      %v5103 = vsel %vm737, %v1086, %v2071
      %v5104 = vsel %vm737, %v1088, %v2073
      %v5105 = vsel %vm737, %v1089, %v2075
      %v5106 = vsel %vm737, %v1090, %v2077
      %v5107 = vsel %vm737, %v1091, %v2079
      %v5108 = vsel %vm737, %v1093, %v2081
      %v5109 = vsel %vm737, %v1094, %v2083
      %v5110 = vsel %vm737, %v1095, %v2085
      %v5111 = vsel %vm737, %v1096, %v2087
      %v5112 = vsel %vm737, %v1098, %v2089
      %v5113 = vsel %vm737, %v1099, %v2091
      %v5114 = vsel %vm737, %v1100, %v2093
      %v5115 = vsel %vm737, %v1101, %v2095
      %v5116 = vsel %vm737, %v1103, %v2097
      %v5117 = vsel %vm737, %v1104, %v2099
      %v5118 = vsel %vm737, %v1105, %v2101
      %v5119 = vsel %vm737, %v1106, %v2103
      %v5120 = vsel %vm737, %v1108, %v2105
      %v5121 = vsel %vm737, %v1109, %v2107
      %v5122 = vsel %vm737, %v1110, %v2109
      %v5123 = vsel %vm737, %v1111, %v2111
      %v5124 = vsel %vm737, %v1113, %v2113
      %v5125 = vsel %vm737, %v1114, %v2115
      %v5126 = vsel %vm737, %v1115, %v2117
      %v5127 = vsel %vm737, %v1116, %v2119
      %v5128 = vsel %vm737, %v1118, %v2121
      %v5129 = vsel %vm737, %v1119, %v2123
      %v5130 = vsel %vm737, %v1120, %v2125
      %v5131 = vsel %vm737, %v1121, %v2127
      %v5132 = vsel %vm737, %v1123, %v2129
      %v5133 = vsel %vm737, %v1124, %v2131
      %v5134 = vsel %vm737, %v1125, %v2133
      %v5135 = vsel %vm737, %v1126, %v2135
      %v5136 = vsel %vm737, %v1128, %v2137
      %v5137 = vsel %vm737, %v1129, %v2139
      %v5138 = vsel %vm737, %v1130, %v2141
      %v5139 = vsel %vm737, %v1131, %v2143
      %v5140 = vsel %vm737, %v1133, %v2145
      %v5141 = vsel %vm737, %v1134, %v2147
      %v5142 = vsel %vm737, %v1135, %v2149
      %v5143 = vsel %vm737, %v1136, %v2151
      %v5144 = vsel %vm737, %v1138, %v2153
      %v5145 = vsel %vm737, %v1139, %v2155
      %v5146 = vsel %vm737, %v1140, %v2157
      %v5147 = vsel %vm737, %v1141, %v2159
      %v5148 = vsel %vm737, %v1143, %v2161
      %v5149 = vsel %vm737, %v1144, %v2163
      %v5150 = vsel %vm737, %v1145, %v2165
      %v5151 = vsel %vm737, %v1146, %v2167
      %v5152 = vsel %vm737, %v1148, %v2169
      %v5153 = vsel %vm737, %v1149, %v2171
      %v5154 = vsel %vm737, %v1150, %v2173
      %v5155 = vsel %vm737, %v1151, %v2175
      %v5156 = vsel %vm737, %v1153, %v2177
      %v5157 = vsel %vm737, %v1154, %v2179
      %v5158 = vsel %vm737, %v1155, %v2181
      %v5159 = vsel %vm737, %v1156, %v2183
      %v5160 = vsel %vm737, %v1158, %v2185
      %v5161 = vsel %vm737, %v1159, %v2187
      %v5162 = vsel %vm737, %v1160, %v2189
      %v5163 = vsel %vm737, %v1161, %v2191
      %v5164 = vsel %vm737, %v1163, %v2193
      %v5165 = vsel %vm737, %v1164, %v2195
      %v5166 = vsel %vm737, %v1165, %v2197
      %v5167 = vsel %vm737, %v1166, %v2199
      %v5168 = vsel %vm737, %v1168, %v2201
      %v5169 = vsel %vm737, %v1169, %v2203
      %v5170 = vsel %vm737, %v1170, %v2205
      %v5171 = vsel %vm737, %v1171, %v2207
      %v5172 = vsel %vm737, %v1173, %v2209
      %v5173 = vsel %vm737, %v1174, %v2211
      %v5174 = vsel %vm737, %v1175, %v2213
      %v5175 = vsel %vm737, %v1176, %v2215
      %v5176 = vsel %vm737, %v1178, %v2217
      %v5177 = vsel %vm737, %v1179, %v2219
      %v5178 = vsel %vm737, %v1180, %v2221
      %v5179 = vsel %vm737, %v1181, %v2223
      %v5180 = vsel %vm737, %v1183, %v2225
      %v5181 = vsel %vm737, %v1184, %v2227
      %v5182 = vsel %vm737, %v1185, %v2229
      %v5183 = vsel %vm737, %v1186, %v2231
      %v5184 = vsel %vm737, %v1188, %v2233
      %v5185 = vsel %vm737, %v1189, %v2235
      %v5186 = vsel %vm737, %v1190, %v2237
      %v5187 = vsel %vm737, %v1191, %v2239
      %v5188 = vsel %vm737, %v1193, %v2241
      %v5189 = vsel %vm737, %v1194, %v2243
      %v5190 = vsel %vm737, %v1195, %v2245
      %v5191 = vsel %vm737, %v1196, %v2247
      %vm5192 = vcmask 64512
      %v5193 = vsel %vm5192, %v5064, %v2377
      %v5194 = vsel %vm5192, %v5065, %v2379
      %v5195 = vsel %vm5192, %v5066, %v2381
      %v5196 = vsel %vm5192, %v5067, %v2383
      %v5197 = vsel %vm5192, %v5068, %v2385
      %v5198 = vsel %vm5192, %v5069, %v2387
      %v5199 = vsel %vm5192, %v5070, %v2389
      %v5200 = vsel %vm5192, %v5071, %v2391
      %v5201 = vsel %vm5192, %v5072, %v2393
      %v5202 = vsel %vm5192, %v5073, %v2395
      %v5203 = vsel %vm5192, %v5074, %v2397
      %v5204 = vsel %vm5192, %v5075, %v2399
      %v5205 = vsel %vm5192, %v5076, %v2401
      %v5206 = vsel %vm5192, %v5077, %v2403
      %v5207 = vsel %vm5192, %v5078, %v2405
      %v5208 = vsel %vm5192, %v5079, %v2407
      %v5209 = vsel %vm5192, %v5080, %v2409
      %v5210 = vsel %vm5192, %v5081, %v2411
      %v5211 = vsel %vm5192, %v5082, %v2413
      %v5212 = vsel %vm5192, %v5083, %v2415
      %v5213 = vsel %vm5192, %v5084, %v2417
      %v5214 = vsel %vm5192, %v5085, %v2419
      %v5215 = vsel %vm5192, %v5086, %v2421
      %v5216 = vsel %vm5192, %v5087, %v2423
      %v5217 = vsel %vm5192, %v5088, %v2425
      %v5218 = vsel %vm5192, %v5089, %v2427
      %v5219 = vsel %vm5192, %v5090, %v2429
      %v5220 = vsel %vm5192, %v5091, %v2431
      %v5221 = vsel %vm5192, %v5092, %v2433
      %v5222 = vsel %vm5192, %v5093, %v2435
      %v5223 = vsel %vm5192, %v5094, %v2437
      %v5224 = vsel %vm5192, %v5095, %v2439
      %v5225 = vsel %vm5192, %v5096, %v2441
      %v5226 = vsel %vm5192, %v5097, %v2443
      %v5227 = vsel %vm5192, %v5098, %v2445
      %v5228 = vsel %vm5192, %v5099, %v2447
      %v5229 = vsel %vm5192, %v5100, %v2449
      %v5230 = vsel %vm5192, %v5101, %v2451
      %v5231 = vsel %vm5192, %v5102, %v2453
      %v5232 = vsel %vm5192, %v5103, %v2455
      %v5233 = vsel %vm5192, %v5104, %v2457
      %v5234 = vsel %vm5192, %v5105, %v2459
      %v5235 = vsel %vm5192, %v5106, %v2461
      %v5236 = vsel %vm5192, %v5107, %v2463
      %v5237 = vsel %vm5192, %v5108, %v2465
      %v5238 = vsel %vm5192, %v5109, %v2467
      %v5239 = vsel %vm5192, %v5110, %v2469
      %v5240 = vsel %vm5192, %v5111, %v2471
      %v5241 = vsel %vm5192, %v5112, %v2473
      %v5242 = vsel %vm5192, %v5113, %v2475
      %v5243 = vsel %vm5192, %v5114, %v2477
      %v5244 = vsel %vm5192, %v5115, %v2479
      %v5245 = vsel %vm5192, %v5116, %v2481
      %v5246 = vsel %vm5192, %v5117, %v2483
      %v5247 = vsel %vm5192, %v5118, %v2485
      %v5248 = vsel %vm5192, %v5119, %v2487
      %v5249 = vsel %vm5192, %v5120, %v2489
      %v5250 = vsel %vm5192, %v5121, %v2491
      %v5251 = vsel %vm5192, %v5122, %v2493
      %v5252 = vsel %vm5192, %v5123, %v2495
      %v5253 = vsel %vm5192, %v5124, %v2497
      %v5254 = vsel %vm5192, %v5125, %v2499
      %v5255 = vsel %vm5192, %v5126, %v2501
      %v5256 = vsel %vm5192, %v5127, %v2503
      %v5257 = vsel %vm5192, %v5128, %v2505
      %v5258 = vsel %vm5192, %v5129, %v2507
      %v5259 = vsel %vm5192, %v5130, %v2509
      %v5260 = vsel %vm5192, %v5131, %v2511
      %v5261 = vsel %vm5192, %v5132, %v2513
      %v5262 = vsel %vm5192, %v5133, %v2515
      %v5263 = vsel %vm5192, %v5134, %v2517
      %v5264 = vsel %vm5192, %v5135, %v2519
      %v5265 = vsel %vm5192, %v5136, %v2521
      %v5266 = vsel %vm5192, %v5137, %v2523
      %v5267 = vsel %vm5192, %v5138, %v2525
      %v5268 = vsel %vm5192, %v5139, %v2527
      %v5269 = vsel %vm5192, %v5140, %v2529
      %v5270 = vsel %vm5192, %v5141, %v2531
      %v5271 = vsel %vm5192, %v5142, %v2533
      %v5272 = vsel %vm5192, %v5143, %v2535
      %v5273 = vsel %vm5192, %v5144, %v2537
      %v5274 = vsel %vm5192, %v5145, %v2539
      %v5275 = vsel %vm5192, %v5146, %v2541
      %v5276 = vsel %vm5192, %v5147, %v2543
      %v5277 = vsel %vm5192, %v5148, %v2545
      %v5278 = vsel %vm5192, %v5149, %v2547
      %v5279 = vsel %vm5192, %v5150, %v2549
      %v5280 = vsel %vm5192, %v5151, %v2551
      %v5281 = vsel %vm5192, %v5152, %v2553
      %v5282 = vsel %vm5192, %v5153, %v2555
      %v5283 = vsel %vm5192, %v5154, %v2557
      %v5284 = vsel %vm5192, %v5155, %v2559
      %v5285 = vsel %vm5192, %v5156, %v2561
      %v5286 = vsel %vm5192, %v5157, %v2563
      %v5287 = vsel %vm5192, %v5158, %v2565
      %v5288 = vsel %vm5192, %v5159, %v2567
      %v5289 = vsel %vm5192, %v5160, %v2569
      %v5290 = vsel %vm5192, %v5161, %v2571
      %v5291 = vsel %vm5192, %v5162, %v2573
      %v5292 = vsel %vm5192, %v5163, %v2575
      %v5293 = vsel %vm5192, %v5164, %v2577
      %v5294 = vsel %vm5192, %v5165, %v2579
      %v5295 = vsel %vm5192, %v5166, %v2581
      %v5296 = vsel %vm5192, %v5167, %v2583
      %v5297 = vsel %vm5192, %v5168, %v2585
      %v5298 = vsel %vm5192, %v5169, %v2587
      %v5299 = vsel %vm5192, %v5170, %v2589
      %v5300 = vsel %vm5192, %v5171, %v2591
      %v5301 = vsel %vm5192, %v5172, %v2593
      %v5302 = vsel %vm5192, %v5173, %v2595
      %v5303 = vsel %vm5192, %v5174, %v2597
      %v5304 = vsel %vm5192, %v5175, %v2599
      %v5305 = vsel %vm5192, %v5176, %v2601
      %v5306 = vsel %vm5192, %v5177, %v2603
      %v5307 = vsel %vm5192, %v5178, %v2605
      %v5308 = vsel %vm5192, %v5179, %v2607
      %v5309 = vsel %vm5192, %v5180, %v2609
      %v5310 = vsel %vm5192, %v5181, %v2611
      %v5311 = vsel %vm5192, %v5182, %v2613
      %v5312 = vsel %vm5192, %v5183, %v2615
      %v5313 = vsel %vm5192, %v5184, %v2617
      %v5314 = vsel %vm5192, %v5185, %v2619
      %v5315 = vsel %vm5192, %v5186, %v2621
      %v5316 = vsel %vm5192, %v5187, %v2623
      %v5317 = vsel %vm5192, %v5188, %v2625
      %v5318 = vsel %vm5192, %v5189, %v2627
      %v5319 = vsel %vm5192, %v5190, %v2629
      %v5320 = vsel %vm5192, %v5191, %v2631
      %vm5321 = vcmask 97280
      %v5322 = vsel %vm5321, %v5193, %v2761
      %v5323 = vsel %vm5321, %v5194, %v2763
      %v5324 = vsel %vm5321, %v5195, %v2765
      %v5325 = vsel %vm5321, %v5196, %v2767
      %v5326 = vsel %vm5321, %v5197, %v2769
      %v5327 = vsel %vm5321, %v5198, %v2771
      %v5328 = vsel %vm5321, %v5199, %v2773
      %v5329 = vsel %vm5321, %v5200, %v2775
      %v5330 = vsel %vm5321, %v5201, %v2777
      %v5331 = vsel %vm5321, %v5202, %v2779
      %v5332 = vsel %vm5321, %v5203, %v2781
      %v5333 = vsel %vm5321, %v5204, %v2783
      %v5334 = vsel %vm5321, %v5205, %v2785
      %v5335 = vsel %vm5321, %v5206, %v2787
      %v5336 = vsel %vm5321, %v5207, %v2789
      %v5337 = vsel %vm5321, %v5208, %v2791
      %v5338 = vsel %vm5321, %v5209, %v2793
      %v5339 = vsel %vm5321, %v5210, %v2795
      %v5340 = vsel %vm5321, %v5211, %v2797
      %v5341 = vsel %vm5321, %v5212, %v2799
      %v5342 = vsel %vm5321, %v5213, %v2801
      %v5343 = vsel %vm5321, %v5214, %v2803
      %v5344 = vsel %vm5321, %v5215, %v2805
      %v5345 = vsel %vm5321, %v5216, %v2807
      %v5346 = vsel %vm5321, %v5217, %v2809
      %v5347 = vsel %vm5321, %v5218, %v2811
      %v5348 = vsel %vm5321, %v5219, %v2813
      %v5349 = vsel %vm5321, %v5220, %v2815
      %v5350 = vsel %vm5321, %v5221, %v2817
      %v5351 = vsel %vm5321, %v5222, %v2819
      %v5352 = vsel %vm5321, %v5223, %v2821
      %v5353 = vsel %vm5321, %v5224, %v2823
      %v5354 = vsel %vm5321, %v5225, %v2825
      %v5355 = vsel %vm5321, %v5226, %v2827
      %v5356 = vsel %vm5321, %v5227, %v2829
      %v5357 = vsel %vm5321, %v5228, %v2831
      %v5358 = vsel %vm5321, %v5229, %v2833
      %v5359 = vsel %vm5321, %v5230, %v2835
      %v5360 = vsel %vm5321, %v5231, %v2837
      %v5361 = vsel %vm5321, %v5232, %v2839
      %v5362 = vsel %vm5321, %v5233, %v2841
      %v5363 = vsel %vm5321, %v5234, %v2843
      %v5364 = vsel %vm5321, %v5235, %v2845
      %v5365 = vsel %vm5321, %v5236, %v2847
      %v5366 = vsel %vm5321, %v5237, %v2849
      %v5367 = vsel %vm5321, %v5238, %v2851
      %v5368 = vsel %vm5321, %v5239, %v2853
      %v5369 = vsel %vm5321, %v5240, %v2855
      %v5370 = vsel %vm5321, %v5241, %v2857
      %v5371 = vsel %vm5321, %v5242, %v2859
      %v5372 = vsel %vm5321, %v5243, %v2861
      %v5373 = vsel %vm5321, %v5244, %v2863
      %v5374 = vsel %vm5321, %v5245, %v2865
      %v5375 = vsel %vm5321, %v5246, %v2867
      %v5376 = vsel %vm5321, %v5247, %v2869
      %v5377 = vsel %vm5321, %v5248, %v2871
      %v5378 = vsel %vm5321, %v5249, %v2873
      %v5379 = vsel %vm5321, %v5250, %v2875
      %v5380 = vsel %vm5321, %v5251, %v2877
      %v5381 = vsel %vm5321, %v5252, %v2879
      %v5382 = vsel %vm5321, %v5253, %v2881
      %v5383 = vsel %vm5321, %v5254, %v2883
      %v5384 = vsel %vm5321, %v5255, %v2885
      %v5385 = vsel %vm5321, %v5256, %v2887
      %v5386 = vsel %vm5321, %v5257, %v2889
      %v5387 = vsel %vm5321, %v5258, %v2891
      %v5388 = vsel %vm5321, %v5259, %v2893
      %v5389 = vsel %vm5321, %v5260, %v2895
      %v5390 = vsel %vm5321, %v5261, %v2897
      %v5391 = vsel %vm5321, %v5262, %v2899
      %v5392 = vsel %vm5321, %v5263, %v2901
      %v5393 = vsel %vm5321, %v5264, %v2903
      %v5394 = vsel %vm5321, %v5265, %v2905
      %v5395 = vsel %vm5321, %v5266, %v2907
      %v5396 = vsel %vm5321, %v5267, %v2909
      %v5397 = vsel %vm5321, %v5268, %v2911
      %v5398 = vsel %vm5321, %v5269, %v2913
      %v5399 = vsel %vm5321, %v5270, %v2915
      %v5400 = vsel %vm5321, %v5271, %v2917
      %v5401 = vsel %vm5321, %v5272, %v2919
      %v5402 = vsel %vm5321, %v5273, %v2921
      %v5403 = vsel %vm5321, %v5274, %v2923
      %v5404 = vsel %vm5321, %v5275, %v2925
      %v5405 = vsel %vm5321, %v5276, %v2927
      %v5406 = vsel %vm5321, %v5277, %v2929
      %v5407 = vsel %vm5321, %v5278, %v2931
      %v5408 = vsel %vm5321, %v5279, %v2933
      %v5409 = vsel %vm5321, %v5280, %v2935
      %v5410 = vsel %vm5321, %v5281, %v2937
      %v5411 = vsel %vm5321, %v5282, %v2939
      %v5412 = vsel %vm5321, %v5283, %v2941
      %v5413 = vsel %vm5321, %v5284, %v2943
      %v5414 = vsel %vm5321, %v5285, %v2945
      %v5415 = vsel %vm5321, %v5286, %v2947
      %v5416 = vsel %vm5321, %v5287, %v2949
      %v5417 = vsel %vm5321, %v5288, %v2951
      %v5418 = vsel %vm5321, %v5289, %v2953
      %v5419 = vsel %vm5321, %v5290, %v2955
      %v5420 = vsel %vm5321, %v5291, %v2957
      %v5421 = vsel %vm5321, %v5292, %v2959
      %v5422 = vsel %vm5321, %v5293, %v2961
      %v5423 = vsel %vm5321, %v5294, %v2963
      %v5424 = vsel %vm5321, %v5295, %v2965
      %v5425 = vsel %vm5321, %v5296, %v2967
      %v5426 = vsel %vm5321, %v5297, %v2969
      %v5427 = vsel %vm5321, %v5298, %v2971
      %v5428 = vsel %vm5321, %v5299, %v2973
      %v5429 = vsel %vm5321, %v5300, %v2975
      %v5430 = vsel %vm5321, %v5301, %v2977
      %v5431 = vsel %vm5321, %v5302, %v2979
      %v5432 = vsel %vm5321, %v5303, %v2981
      %v5433 = vsel %vm5321, %v5304, %v2983
      %v5434 = vsel %vm5321, %v5305, %v2985
      %v5435 = vsel %vm5321, %v5306, %v2987
      %v5436 = vsel %vm5321, %v5307, %v2989
      %v5437 = vsel %vm5321, %v5308, %v2991
      %v5438 = vsel %vm5321, %v5309, %v2993
      %v5439 = vsel %vm5321, %v5310, %v2995
      %v5440 = vsel %vm5321, %v5311, %v2997
      %v5441 = vsel %vm5321, %v5312, %v2999
      %v5442 = vsel %vm5321, %v5313, %v3001
      %v5443 = vsel %vm5321, %v5314, %v3003
      %v5444 = vsel %vm5321, %v5315, %v3005
      %v5445 = vsel %vm5321, %v5316, %v3007
      %v5446 = vsel %vm5321, %v5317, %v3009
      %v5447 = vsel %vm5321, %v5318, %v3011
      %v5448 = vsel %vm5321, %v5319, %v3013
      %v5449 = vsel %vm5321, %v5320, %v3015
      %vm5450 = vcmask 130048
      %v5451 = vsel %vm5450, %v5322, %v3145
      %v5452 = vsel %vm5450, %v5323, %v3147
      %v5453 = vsel %vm5450, %v5324, %v3149
      %v5454 = vsel %vm5450, %v5325, %v3151
      %v5455 = vsel %vm5450, %v5326, %v3153
      %v5456 = vsel %vm5450, %v5327, %v3155
      %v5457 = vsel %vm5450, %v5328, %v3157
      %v5458 = vsel %vm5450, %v5329, %v3159
      %v5459 = vsel %vm5450, %v5330, %v3161
      %v5460 = vsel %vm5450, %v5331, %v3163
      %v5461 = vsel %vm5450, %v5332, %v3165
      %v5462 = vsel %vm5450, %v5333, %v3167
      %v5463 = vsel %vm5450, %v5334, %v3169
      %v5464 = vsel %vm5450, %v5335, %v3171
      %v5465 = vsel %vm5450, %v5336, %v3173
      %v5466 = vsel %vm5450, %v5337, %v3175
      %v5467 = vsel %vm5450, %v5338, %v3177
      %v5468 = vsel %vm5450, %v5339, %v3179
      %v5469 = vsel %vm5450, %v5340, %v3181
      %v5470 = vsel %vm5450, %v5341, %v3183
      %v5471 = vsel %vm5450, %v5342, %v3185
      %v5472 = vsel %vm5450, %v5343, %v3187
      %v5473 = vsel %vm5450, %v5344, %v3189
      %v5474 = vsel %vm5450, %v5345, %v3191
      %v5475 = vsel %vm5450, %v5346, %v3193
      %v5476 = vsel %vm5450, %v5347, %v3195
      %v5477 = vsel %vm5450, %v5348, %v3197
      %v5478 = vsel %vm5450, %v5349, %v3199
      %v5479 = vsel %vm5450, %v5350, %v3201
      %v5480 = vsel %vm5450, %v5351, %v3203
      %v5481 = vsel %vm5450, %v5352, %v3205
      %v5482 = vsel %vm5450, %v5353, %v3207
      %v5483 = vsel %vm5450, %v5354, %v3209
      %v5484 = vsel %vm5450, %v5355, %v3211
      %v5485 = vsel %vm5450, %v5356, %v3213
      %v5486 = vsel %vm5450, %v5357, %v3215
      %v5487 = vsel %vm5450, %v5358, %v3217
      %v5488 = vsel %vm5450, %v5359, %v3219
      %v5489 = vsel %vm5450, %v5360, %v3221
      %v5490 = vsel %vm5450, %v5361, %v3223
      %v5491 = vsel %vm5450, %v5362, %v3225
      %v5492 = vsel %vm5450, %v5363, %v3227
      %v5493 = vsel %vm5450, %v5364, %v3229
      %v5494 = vsel %vm5450, %v5365, %v3231
      %v5495 = vsel %vm5450, %v5366, %v3233
      %v5496 = vsel %vm5450, %v5367, %v3235
      %v5497 = vsel %vm5450, %v5368, %v3237
      %v5498 = vsel %vm5450, %v5369, %v3239
      %v5499 = vsel %vm5450, %v5370, %v3241
      %v5500 = vsel %vm5450, %v5371, %v3243
      %v5501 = vsel %vm5450, %v5372, %v3245
      %v5502 = vsel %vm5450, %v5373, %v3247
      %v5503 = vsel %vm5450, %v5374, %v3249
      %v5504 = vsel %vm5450, %v5375, %v3251
      %v5505 = vsel %vm5450, %v5376, %v3253
      %v5506 = vsel %vm5450, %v5377, %v3255
      %v5507 = vsel %vm5450, %v5378, %v3257
      %v5508 = vsel %vm5450, %v5379, %v3259
      %v5509 = vsel %vm5450, %v5380, %v3261
      %v5510 = vsel %vm5450, %v5381, %v3263
      %v5511 = vsel %vm5450, %v5382, %v3265
      %v5512 = vsel %vm5450, %v5383, %v3267
      %v5513 = vsel %vm5450, %v5384, %v3269
      %v5514 = vsel %vm5450, %v5385, %v3271
      %v5515 = vsel %vm5450, %v5386, %v3273
      %v5516 = vsel %vm5450, %v5387, %v3275
      %v5517 = vsel %vm5450, %v5388, %v3277
      %v5518 = vsel %vm5450, %v5389, %v3279
      %v5519 = vsel %vm5450, %v5390, %v3281
      %v5520 = vsel %vm5450, %v5391, %v3283
      %v5521 = vsel %vm5450, %v5392, %v3285
      %v5522 = vsel %vm5450, %v5393, %v3287
      %v5523 = vsel %vm5450, %v5394, %v3289
      %v5524 = vsel %vm5450, %v5395, %v3291
      %v5525 = vsel %vm5450, %v5396, %v3293
      %v5526 = vsel %vm5450, %v5397, %v3295
      %v5527 = vsel %vm5450, %v5398, %v3297
      %v5528 = vsel %vm5450, %v5399, %v3299
      %v5529 = vsel %vm5450, %v5400, %v3301
      %v5530 = vsel %vm5450, %v5401, %v3303
      %v5531 = vsel %vm5450, %v5402, %v3305
      %v5532 = vsel %vm5450, %v5403, %v3307
      %v5533 = vsel %vm5450, %v5404, %v3309
      %v5534 = vsel %vm5450, %v5405, %v3311
      %v5535 = vsel %vm5450, %v5406, %v3313
      %v5536 = vsel %vm5450, %v5407, %v3315
      %v5537 = vsel %vm5450, %v5408, %v3317
      %v5538 = vsel %vm5450, %v5409, %v3319
      %v5539 = vsel %vm5450, %v5410, %v3321
      %v5540 = vsel %vm5450, %v5411, %v3323
      %v5541 = vsel %vm5450, %v5412, %v3325
      %v5542 = vsel %vm5450, %v5413, %v3327
      %v5543 = vsel %vm5450, %v5414, %v3329
      %v5544 = vsel %vm5450, %v5415, %v3331
      %v5545 = vsel %vm5450, %v5416, %v3333
      %v5546 = vsel %vm5450, %v5417, %v3335
      %v5547 = vsel %vm5450, %v5418, %v3337
      %v5548 = vsel %vm5450, %v5419, %v3339
      %v5549 = vsel %vm5450, %v5420, %v3341
      %v5550 = vsel %vm5450, %v5421, %v3343
      %v5551 = vsel %vm5450, %v5422, %v3345
      %v5552 = vsel %vm5450, %v5423, %v3347
      %v5553 = vsel %vm5450, %v5424, %v3349
      %v5554 = vsel %vm5450, %v5425, %v3351
      %v5555 = vsel %vm5450, %v5426, %v3353
      %v5556 = vsel %vm5450, %v5427, %v3355
      %v5557 = vsel %vm5450, %v5428, %v3357
      %v5558 = vsel %vm5450, %v5429, %v3359
      %v5559 = vsel %vm5450, %v5430, %v3361
      %v5560 = vsel %vm5450, %v5431, %v3363
      %v5561 = vsel %vm5450, %v5432, %v3365
      %v5562 = vsel %vm5450, %v5433, %v3367
      %v5563 = vsel %vm5450, %v5434, %v3369
      %v5564 = vsel %vm5450, %v5435, %v3371
      %v5565 = vsel %vm5450, %v5436, %v3373
      %v5566 = vsel %vm5450, %v5437, %v3375
      %v5567 = vsel %vm5450, %v5438, %v3377
      %v5568 = vsel %vm5450, %v5439, %v3379
      %v5569 = vsel %vm5450, %v5440, %v3381
      %v5570 = vsel %vm5450, %v5441, %v3383
      %v5571 = vsel %vm5450, %v5442, %v3385
      %v5572 = vsel %vm5450, %v5443, %v3387
      %v5573 = vsel %vm5450, %v5444, %v3389
      %v5574 = vsel %vm5450, %v5445, %v3391
      %v5575 = vsel %vm5450, %v5446, %v3393
      %v5576 = vsel %vm5450, %v5447, %v3395
      %v5577 = vsel %vm5450, %v5448, %v3397
      %v5578 = vsel %vm5450, %v5449, %v3399
      %vm5579 = vcmask 162816
      %v5580 = vsel %vm5579, %v5451, %v3529
      %v5581 = vsel %vm5579, %v5452, %v3531
      %v5582 = vsel %vm5579, %v5453, %v3533
      %v5583 = vsel %vm5579, %v5454, %v3535
      %v5584 = vsel %vm5579, %v5455, %v3537
      %v5585 = vsel %vm5579, %v5456, %v3539
      %v5586 = vsel %vm5579, %v5457, %v3541
      %v5587 = vsel %vm5579, %v5458, %v3543
      %v5588 = vsel %vm5579, %v5459, %v3545
      %v5589 = vsel %vm5579, %v5460, %v3547
      %v5590 = vsel %vm5579, %v5461, %v3549
      %v5591 = vsel %vm5579, %v5462, %v3551
      %v5592 = vsel %vm5579, %v5463, %v3553
      %v5593 = vsel %vm5579, %v5464, %v3555
      %v5594 = vsel %vm5579, %v5465, %v3557
      %v5595 = vsel %vm5579, %v5466, %v3559
      %v5596 = vsel %vm5579, %v5467, %v3561
      %v5597 = vsel %vm5579, %v5468, %v3563
      %v5598 = vsel %vm5579, %v5469, %v3565
      %v5599 = vsel %vm5579, %v5470, %v3567
      %v5600 = vsel %vm5579, %v5471, %v3569
      %v5601 = vsel %vm5579, %v5472, %v3571
      %v5602 = vsel %vm5579, %v5473, %v3573
      %v5603 = vsel %vm5579, %v5474, %v3575
      %v5604 = vsel %vm5579, %v5475, %v3577
      %v5605 = vsel %vm5579, %v5476, %v3579
      %v5606 = vsel %vm5579, %v5477, %v3581
      %v5607 = vsel %vm5579, %v5478, %v3583
      %v5608 = vsel %vm5579, %v5479, %v3585
      %v5609 = vsel %vm5579, %v5480, %v3587
      %v5610 = vsel %vm5579, %v5481, %v3589
      %v5611 = vsel %vm5579, %v5482, %v3591
      %v5612 = vsel %vm5579, %v5483, %v3593
      %v5613 = vsel %vm5579, %v5484, %v3595
      %v5614 = vsel %vm5579, %v5485, %v3597
      %v5615 = vsel %vm5579, %v5486, %v3599
      %v5616 = vsel %vm5579, %v5487, %v3601
      %v5617 = vsel %vm5579, %v5488, %v3603
      %v5618 = vsel %vm5579, %v5489, %v3605
      %v5619 = vsel %vm5579, %v5490, %v3607
      %v5620 = vsel %vm5579, %v5491, %v3609
      %v5621 = vsel %vm5579, %v5492, %v3611
      %v5622 = vsel %vm5579, %v5493, %v3613
      %v5623 = vsel %vm5579, %v5494, %v3615
      %v5624 = vsel %vm5579, %v5495, %v3617
      %v5625 = vsel %vm5579, %v5496, %v3619
      %v5626 = vsel %vm5579, %v5497, %v3621
      %v5627 = vsel %vm5579, %v5498, %v3623
      %v5628 = vsel %vm5579, %v5499, %v3625
      %v5629 = vsel %vm5579, %v5500, %v3627
      %v5630 = vsel %vm5579, %v5501, %v3629
      %v5631 = vsel %vm5579, %v5502, %v3631
      %v5632 = vsel %vm5579, %v5503, %v3633
      %v5633 = vsel %vm5579, %v5504, %v3635
      %v5634 = vsel %vm5579, %v5505, %v3637
      %v5635 = vsel %vm5579, %v5506, %v3639
      %v5636 = vsel %vm5579, %v5507, %v3641
      %v5637 = vsel %vm5579, %v5508, %v3643
      %v5638 = vsel %vm5579, %v5509, %v3645
      %v5639 = vsel %vm5579, %v5510, %v3647
      %v5640 = vsel %vm5579, %v5511, %v3649
      %v5641 = vsel %vm5579, %v5512, %v3651
      %v5642 = vsel %vm5579, %v5513, %v3653
      %v5643 = vsel %vm5579, %v5514, %v3655
      %v5644 = vsel %vm5579, %v5515, %v3657
      %v5645 = vsel %vm5579, %v5516, %v3659
      %v5646 = vsel %vm5579, %v5517, %v3661
      %v5647 = vsel %vm5579, %v5518, %v3663
      %v5648 = vsel %vm5579, %v5519, %v3665
      %v5649 = vsel %vm5579, %v5520, %v3667
      %v5650 = vsel %vm5579, %v5521, %v3669
      %v5651 = vsel %vm5579, %v5522, %v3671
      %v5652 = vsel %vm5579, %v5523, %v3673
      %v5653 = vsel %vm5579, %v5524, %v3675
      %v5654 = vsel %vm5579, %v5525, %v3677
      %v5655 = vsel %vm5579, %v5526, %v3679
      %v5656 = vsel %vm5579, %v5527, %v3681
      %v5657 = vsel %vm5579, %v5528, %v3683
      %v5658 = vsel %vm5579, %v5529, %v3685
      %v5659 = vsel %vm5579, %v5530, %v3687
      %v5660 = vsel %vm5579, %v5531, %v3689
      %v5661 = vsel %vm5579, %v5532, %v3691
      %v5662 = vsel %vm5579, %v5533, %v3693
      %v5663 = vsel %vm5579, %v5534, %v3695
      %v5664 = vsel %vm5579, %v5535, %v3697
      %v5665 = vsel %vm5579, %v5536, %v3699
      %v5666 = vsel %vm5579, %v5537, %v3701
      %v5667 = vsel %vm5579, %v5538, %v3703
      %v5668 = vsel %vm5579, %v5539, %v3705
      %v5669 = vsel %vm5579, %v5540, %v3707
      %v5670 = vsel %vm5579, %v5541, %v3709
      %v5671 = vsel %vm5579, %v5542, %v3711
      %v5672 = vsel %vm5579, %v5543, %v3713
      %v5673 = vsel %vm5579, %v5544, %v3715
      %v5674 = vsel %vm5579, %v5545, %v3717
      %v5675 = vsel %vm5579, %v5546, %v3719
      %v5676 = vsel %vm5579, %v5547, %v3721
      %v5677 = vsel %vm5579, %v5548, %v3723
      %v5678 = vsel %vm5579, %v5549, %v3725
      %v5679 = vsel %vm5579, %v5550, %v3727
      %v5680 = vsel %vm5579, %v5551, %v3729
      %v5681 = vsel %vm5579, %v5552, %v3731
      %v5682 = vsel %vm5579, %v5553, %v3733
      %v5683 = vsel %vm5579, %v5554, %v3735
      %v5684 = vsel %vm5579, %v5555, %v3737
      %v5685 = vsel %vm5579, %v5556, %v3739
      %v5686 = vsel %vm5579, %v5557, %v3741
      %v5687 = vsel %vm5579, %v5558, %v3743
      %v5688 = vsel %vm5579, %v5559, %v3745
      %v5689 = vsel %vm5579, %v5560, %v3747
      %v5690 = vsel %vm5579, %v5561, %v3749
      %v5691 = vsel %vm5579, %v5562, %v3751
      %v5692 = vsel %vm5579, %v5563, %v3753
      %v5693 = vsel %vm5579, %v5564, %v3755
      %v5694 = vsel %vm5579, %v5565, %v3757
      %v5695 = vsel %vm5579, %v5566, %v3759
      %v5696 = vsel %vm5579, %v5567, %v3761
      %v5697 = vsel %vm5579, %v5568, %v3763
      %v5698 = vsel %vm5579, %v5569, %v3765
      %v5699 = vsel %vm5579, %v5570, %v3767
      %v5700 = vsel %vm5579, %v5571, %v3769
      %v5701 = vsel %vm5579, %v5572, %v3771
      %v5702 = vsel %vm5579, %v5573, %v3773
      %v5703 = vsel %vm5579, %v5574, %v3775
      %v5704 = vsel %vm5579, %v5575, %v3777
      %v5705 = vsel %vm5579, %v5576, %v3779
      %v5706 = vsel %vm5579, %v5577, %v3781
      %v5707 = vsel %vm5579, %v5578, %v3783
      %vm5708 = vcmask 195584
      %v5709 = vsel %vm5708, %v5580, %v3913
      %v5710 = vsel %vm5708, %v5581, %v3915
      %v5711 = vsel %vm5708, %v5582, %v3917
      %v5712 = vsel %vm5708, %v5583, %v3919
      %v5713 = vsel %vm5708, %v5584, %v3921
      %v5714 = vsel %vm5708, %v5585, %v3923
      %v5715 = vsel %vm5708, %v5586, %v3925
      %v5716 = vsel %vm5708, %v5587, %v3927
      %v5717 = vsel %vm5708, %v5588, %v3929
      %v5718 = vsel %vm5708, %v5589, %v3931
      %v5719 = vsel %vm5708, %v5590, %v3933
      %v5720 = vsel %vm5708, %v5591, %v3935
      %v5721 = vsel %vm5708, %v5592, %v3937
      %v5722 = vsel %vm5708, %v5593, %v3939
      %v5723 = vsel %vm5708, %v5594, %v3941
      %v5724 = vsel %vm5708, %v5595, %v3943
      %v5725 = vsel %vm5708, %v5596, %v3945
      %v5726 = vsel %vm5708, %v5597, %v3947
      %v5727 = vsel %vm5708, %v5598, %v3949
      %v5728 = vsel %vm5708, %v5599, %v3951
      %v5729 = vsel %vm5708, %v5600, %v3953
      %v5730 = vsel %vm5708, %v5601, %v3955
      %v5731 = vsel %vm5708, %v5602, %v3957
      %v5732 = vsel %vm5708, %v5603, %v3959
      %v5733 = vsel %vm5708, %v5604, %v3961
      %v5734 = vsel %vm5708, %v5605, %v3963
      %v5735 = vsel %vm5708, %v5606, %v3965
      %v5736 = vsel %vm5708, %v5607, %v3967
      %v5737 = vsel %vm5708, %v5608, %v3969
      %v5738 = vsel %vm5708, %v5609, %v3971
      %v5739 = vsel %vm5708, %v5610, %v3973
      %v5740 = vsel %vm5708, %v5611, %v3975
      %v5741 = vsel %vm5708, %v5612, %v3977
      %v5742 = vsel %vm5708, %v5613, %v3979
      %v5743 = vsel %vm5708, %v5614, %v3981
      %v5744 = vsel %vm5708, %v5615, %v3983
      %v5745 = vsel %vm5708, %v5616, %v3985
      %v5746 = vsel %vm5708, %v5617, %v3987
      %v5747 = vsel %vm5708, %v5618, %v3989
      %v5748 = vsel %vm5708, %v5619, %v3991
      %v5749 = vsel %vm5708, %v5620, %v3993
      %v5750 = vsel %vm5708, %v5621, %v3995
      %v5751 = vsel %vm5708, %v5622, %v3997
      %v5752 = vsel %vm5708, %v5623, %v3999
      %v5753 = vsel %vm5708, %v5624, %v4001
      %v5754 = vsel %vm5708, %v5625, %v4003
      %v5755 = vsel %vm5708, %v5626, %v4005
      %v5756 = vsel %vm5708, %v5627, %v4007
      %v5757 = vsel %vm5708, %v5628, %v4009
      %v5758 = vsel %vm5708, %v5629, %v4011
      %v5759 = vsel %vm5708, %v5630, %v4013
      %v5760 = vsel %vm5708, %v5631, %v4015
      %v5761 = vsel %vm5708, %v5632, %v4017
      %v5762 = vsel %vm5708, %v5633, %v4019
      %v5763 = vsel %vm5708, %v5634, %v4021
      %v5764 = vsel %vm5708, %v5635, %v4023
      %v5765 = vsel %vm5708, %v5636, %v4025
      %v5766 = vsel %vm5708, %v5637, %v4027
      %v5767 = vsel %vm5708, %v5638, %v4029
      %v5768 = vsel %vm5708, %v5639, %v4031
      %v5769 = vsel %vm5708, %v5640, %v4033
      %v5770 = vsel %vm5708, %v5641, %v4035
      %v5771 = vsel %vm5708, %v5642, %v4037
      %v5772 = vsel %vm5708, %v5643, %v4039
      %v5773 = vsel %vm5708, %v5644, %v4041
      %v5774 = vsel %vm5708, %v5645, %v4043
      %v5775 = vsel %vm5708, %v5646, %v4045
      %v5776 = vsel %vm5708, %v5647, %v4047
      %v5777 = vsel %vm5708, %v5648, %v4049
      %v5778 = vsel %vm5708, %v5649, %v4051
      %v5779 = vsel %vm5708, %v5650, %v4053
      %v5780 = vsel %vm5708, %v5651, %v4055
      %v5781 = vsel %vm5708, %v5652, %v4057
      %v5782 = vsel %vm5708, %v5653, %v4059
      %v5783 = vsel %vm5708, %v5654, %v4061
      %v5784 = vsel %vm5708, %v5655, %v4063
      %v5785 = vsel %vm5708, %v5656, %v4065
      %v5786 = vsel %vm5708, %v5657, %v4067
      %v5787 = vsel %vm5708, %v5658, %v4069
      %v5788 = vsel %vm5708, %v5659, %v4071
      %v5789 = vsel %vm5708, %v5660, %v4073
      %v5790 = vsel %vm5708, %v5661, %v4075
      %v5791 = vsel %vm5708, %v5662, %v4077
      %v5792 = vsel %vm5708, %v5663, %v4079
      %v5793 = vsel %vm5708, %v5664, %v4081
      %v5794 = vsel %vm5708, %v5665, %v4083
      %v5795 = vsel %vm5708, %v5666, %v4085
      %v5796 = vsel %vm5708, %v5667, %v4087
      %v5797 = vsel %vm5708, %v5668, %v4089
      %v5798 = vsel %vm5708, %v5669, %v4091
      %v5799 = vsel %vm5708, %v5670, %v4093
      %v5800 = vsel %vm5708, %v5671, %v4095
      %v5801 = vsel %vm5708, %v5672, %v4097
      %v5802 = vsel %vm5708, %v5673, %v4099
      %v5803 = vsel %vm5708, %v5674, %v4101
      %v5804 = vsel %vm5708, %v5675, %v4103
      %v5805 = vsel %vm5708, %v5676, %v4105
      %v5806 = vsel %vm5708, %v5677, %v4107
      %v5807 = vsel %vm5708, %v5678, %v4109
      %v5808 = vsel %vm5708, %v5679, %v4111
      %v5809 = vsel %vm5708, %v5680, %v4113
      %v5810 = vsel %vm5708, %v5681, %v4115
      %v5811 = vsel %vm5708, %v5682, %v4117
      %v5812 = vsel %vm5708, %v5683, %v4119
      %v5813 = vsel %vm5708, %v5684, %v4121
      %v5814 = vsel %vm5708, %v5685, %v4123
      %v5815 = vsel %vm5708, %v5686, %v4125
      %v5816 = vsel %vm5708, %v5687, %v4127
      %v5817 = vsel %vm5708, %v5688, %v4129
      %v5818 = vsel %vm5708, %v5689, %v4131
      %v5819 = vsel %vm5708, %v5690, %v4133
      %v5820 = vsel %vm5708, %v5691, %v4135
      %v5821 = vsel %vm5708, %v5692, %v4137
      %v5822 = vsel %vm5708, %v5693, %v4139
      %v5823 = vsel %vm5708, %v5694, %v4141
      %v5824 = vsel %vm5708, %v5695, %v4143
      %v5825 = vsel %vm5708, %v5696, %v4145
      %v5826 = vsel %vm5708, %v5697, %v4147
      %v5827 = vsel %vm5708, %v5698, %v4149
      %v5828 = vsel %vm5708, %v5699, %v4151
      %v5829 = vsel %vm5708, %v5700, %v4153
      %v5830 = vsel %vm5708, %v5701, %v4155
      %v5831 = vsel %vm5708, %v5702, %v4157
      %v5832 = vsel %vm5708, %v5703, %v4159
      %v5833 = vsel %vm5708, %v5704, %v4161
      %v5834 = vsel %vm5708, %v5705, %v4163
      %v5835 = vsel %vm5708, %v5706, %v4165
      %v5836 = vsel %vm5708, %v5707, %v4167
      %vm5837 = vcmask 228352
      %v5838 = vsel %vm5837, %v5709, %v4297
      %v5839 = vsel %vm5837, %v5710, %v4299
      %v5840 = vsel %vm5837, %v5711, %v4301
      %v5841 = vsel %vm5837, %v5712, %v4303
      %v5842 = vsel %vm5837, %v5713, %v4305
      %v5843 = vsel %vm5837, %v5714, %v4307
      %v5844 = vsel %vm5837, %v5715, %v4309
      %v5845 = vsel %vm5837, %v5716, %v4311
      %v5846 = vsel %vm5837, %v5717, %v4313
      %v5847 = vsel %vm5837, %v5718, %v4315
      %v5848 = vsel %vm5837, %v5719, %v4317
      %v5849 = vsel %vm5837, %v5720, %v4319
      %v5850 = vsel %vm5837, %v5721, %v4321
      %v5851 = vsel %vm5837, %v5722, %v4323
      %v5852 = vsel %vm5837, %v5723, %v4325
      %v5853 = vsel %vm5837, %v5724, %v4327
      %v5854 = vsel %vm5837, %v5725, %v4329
      %v5855 = vsel %vm5837, %v5726, %v4331
      %v5856 = vsel %vm5837, %v5727, %v4333
      %v5857 = vsel %vm5837, %v5728, %v4335
      %v5858 = vsel %vm5837, %v5729, %v4337
      %v5859 = vsel %vm5837, %v5730, %v4339
      %v5860 = vsel %vm5837, %v5731, %v4341
      %v5861 = vsel %vm5837, %v5732, %v4343
      %v5862 = vsel %vm5837, %v5733, %v4345
      %v5863 = vsel %vm5837, %v5734, %v4347
      %v5864 = vsel %vm5837, %v5735, %v4349
      %v5865 = vsel %vm5837, %v5736, %v4351
      %v5866 = vsel %vm5837, %v5737, %v4353
      %v5867 = vsel %vm5837, %v5738, %v4355
      %v5868 = vsel %vm5837, %v5739, %v4357
      %v5869 = vsel %vm5837, %v5740, %v4359
      %v5870 = vsel %vm5837, %v5741, %v4361
      %v5871 = vsel %vm5837, %v5742, %v4363
      %v5872 = vsel %vm5837, %v5743, %v4365
      %v5873 = vsel %vm5837, %v5744, %v4367
      %v5874 = vsel %vm5837, %v5745, %v4369
      %v5875 = vsel %vm5837, %v5746, %v4371
      %v5876 = vsel %vm5837, %v5747, %v4373
      %v5877 = vsel %vm5837, %v5748, %v4375
      %v5878 = vsel %vm5837, %v5749, %v4377
      %v5879 = vsel %vm5837, %v5750, %v4379
      %v5880 = vsel %vm5837, %v5751, %v4381
      %v5881 = vsel %vm5837, %v5752, %v4383
      %v5882 = vsel %vm5837, %v5753, %v4385
      %v5883 = vsel %vm5837, %v5754, %v4387
      %v5884 = vsel %vm5837, %v5755, %v4389
      %v5885 = vsel %vm5837, %v5756, %v4391
      %v5886 = vsel %vm5837, %v5757, %v4393
      %v5887 = vsel %vm5837, %v5758, %v4395
      %v5888 = vsel %vm5837, %v5759, %v4397
      %v5889 = vsel %vm5837, %v5760, %v4399
      %v5890 = vsel %vm5837, %v5761, %v4401
      %v5891 = vsel %vm5837, %v5762, %v4403
      %v5892 = vsel %vm5837, %v5763, %v4405
      %v5893 = vsel %vm5837, %v5764, %v4407
      %v5894 = vsel %vm5837, %v5765, %v4409
      %v5895 = vsel %vm5837, %v5766, %v4411
      %v5896 = vsel %vm5837, %v5767, %v4413
      %v5897 = vsel %vm5837, %v5768, %v4415
      %v5898 = vsel %vm5837, %v5769, %v4417
      %v5899 = vsel %vm5837, %v5770, %v4419
      %v5900 = vsel %vm5837, %v5771, %v4421
      %v5901 = vsel %vm5837, %v5772, %v4423
      %v5902 = vsel %vm5837, %v5773, %v4425
      %v5903 = vsel %vm5837, %v5774, %v4427
      %v5904 = vsel %vm5837, %v5775, %v4429
      %v5905 = vsel %vm5837, %v5776, %v4431
      %v5906 = vsel %vm5837, %v5777, %v4433
      %v5907 = vsel %vm5837, %v5778, %v4435
      %v5908 = vsel %vm5837, %v5779, %v4437
      %v5909 = vsel %vm5837, %v5780, %v4439
      %v5910 = vsel %vm5837, %v5781, %v4441
      %v5911 = vsel %vm5837, %v5782, %v4443
      %v5912 = vsel %vm5837, %v5783, %v4445
      %v5913 = vsel %vm5837, %v5784, %v4447
      %v5914 = vsel %vm5837, %v5785, %v4449
      %v5915 = vsel %vm5837, %v5786, %v4451
      %v5916 = vsel %vm5837, %v5787, %v4453
      %v5917 = vsel %vm5837, %v5788, %v4455
      %v5918 = vsel %vm5837, %v5789, %v4457
      %v5919 = vsel %vm5837, %v5790, %v4459
      %v5920 = vsel %vm5837, %v5791, %v4461
      %v5921 = vsel %vm5837, %v5792, %v4463
      %v5922 = vsel %vm5837, %v5793, %v4465
      %v5923 = vsel %vm5837, %v5794, %v4467
      %v5924 = vsel %vm5837, %v5795, %v4469
      %v5925 = vsel %vm5837, %v5796, %v4471
      %v5926 = vsel %vm5837, %v5797, %v4473
      %v5927 = vsel %vm5837, %v5798, %v4475
      %v5928 = vsel %vm5837, %v5799, %v4477
      %v5929 = vsel %vm5837, %v5800, %v4479
      %v5930 = vsel %vm5837, %v5801, %v4481
      %v5931 = vsel %vm5837, %v5802, %v4483
      %v5932 = vsel %vm5837, %v5803, %v4485
      %v5933 = vsel %vm5837, %v5804, %v4487
      %v5934 = vsel %vm5837, %v5805, %v4489
      %v5935 = vsel %vm5837, %v5806, %v4491
      %v5936 = vsel %vm5837, %v5807, %v4493
      %v5937 = vsel %vm5837, %v5808, %v4495
      %v5938 = vsel %vm5837, %v5809, %v4497
      %v5939 = vsel %vm5837, %v5810, %v4499
      %v5940 = vsel %vm5837, %v5811, %v4501
      %v5941 = vsel %vm5837, %v5812, %v4503
      %v5942 = vsel %vm5837, %v5813, %v4505
      %v5943 = vsel %vm5837, %v5814, %v4507
      %v5944 = vsel %vm5837, %v5815, %v4509
      %v5945 = vsel %vm5837, %v5816, %v4511
      %v5946 = vsel %vm5837, %v5817, %v4513
      %v5947 = vsel %vm5837, %v5818, %v4515
      %v5948 = vsel %vm5837, %v5819, %v4517
      %v5949 = vsel %vm5837, %v5820, %v4519
      %v5950 = vsel %vm5837, %v5821, %v4521
      %v5951 = vsel %vm5837, %v5822, %v4523
      %v5952 = vsel %vm5837, %v5823, %v4525
      %v5953 = vsel %vm5837, %v5824, %v4527
      %v5954 = vsel %vm5837, %v5825, %v4529
      %v5955 = vsel %vm5837, %v5826, %v4531
      %v5956 = vsel %vm5837, %v5827, %v4533
      %v5957 = vsel %vm5837, %v5828, %v4535
      %v5958 = vsel %vm5837, %v5829, %v4537
      %v5959 = vsel %vm5837, %v5830, %v4539
      %v5960 = vsel %vm5837, %v5831, %v4541
      %v5961 = vsel %vm5837, %v5832, %v4543
      %v5962 = vsel %vm5837, %v5833, %v4545
      %v5963 = vsel %vm5837, %v5834, %v4547
      %v5964 = vsel %vm5837, %v5835, %v4549
      %v5965 = vsel %vm5837, %v5836, %v4551
      %vm5966 = vcmask 261120
      %v5967 = vsel %vm5966, %v5838, %v4681
      %v5968 = vsel %vm5966, %v5839, %v4683
      %v5969 = vsel %vm5966, %v5840, %v4685
      %v5970 = vsel %vm5966, %v5841, %v4687
      %v5971 = vsel %vm5966, %v5842, %v4689
      %v5972 = vsel %vm5966, %v5843, %v4691
      %v5973 = vsel %vm5966, %v5844, %v4693
      %v5974 = vsel %vm5966, %v5845, %v4695
      %v5975 = vsel %vm5966, %v5846, %v4697
      %v5976 = vsel %vm5966, %v5847, %v4699
      %v5977 = vsel %vm5966, %v5848, %v4701
      %v5978 = vsel %vm5966, %v5849, %v4703
      %v5979 = vsel %vm5966, %v5850, %v4705
      %v5980 = vsel %vm5966, %v5851, %v4707
      %v5981 = vsel %vm5966, %v5852, %v4709
      %v5982 = vsel %vm5966, %v5853, %v4711
      %v5983 = vsel %vm5966, %v5854, %v4713
      %v5984 = vsel %vm5966, %v5855, %v4715
      %v5985 = vsel %vm5966, %v5856, %v4717
      %v5986 = vsel %vm5966, %v5857, %v4719
      %v5987 = vsel %vm5966, %v5858, %v4721
      %v5988 = vsel %vm5966, %v5859, %v4723
      %v5989 = vsel %vm5966, %v5860, %v4725
      %v5990 = vsel %vm5966, %v5861, %v4727
      %v5991 = vsel %vm5966, %v5862, %v4729
      %v5992 = vsel %vm5966, %v5863, %v4731
      %v5993 = vsel %vm5966, %v5864, %v4733
      %v5994 = vsel %vm5966, %v5865, %v4735
      %v5995 = vsel %vm5966, %v5866, %v4737
      %v5996 = vsel %vm5966, %v5867, %v4739
      %v5997 = vsel %vm5966, %v5868, %v4741
      %v5998 = vsel %vm5966, %v5869, %v4743
      %v5999 = vsel %vm5966, %v5870, %v4745
      %v6000 = vsel %vm5966, %v5871, %v4747
      %v6001 = vsel %vm5966, %v5872, %v4749
      %v6002 = vsel %vm5966, %v5873, %v4751
      %v6003 = vsel %vm5966, %v5874, %v4753
      %v6004 = vsel %vm5966, %v5875, %v4755
      %v6005 = vsel %vm5966, %v5876, %v4757
      %v6006 = vsel %vm5966, %v5877, %v4759
      %v6007 = vsel %vm5966, %v5878, %v4761
      %v6008 = vsel %vm5966, %v5879, %v4763
      %v6009 = vsel %vm5966, %v5880, %v4765
      %v6010 = vsel %vm5966, %v5881, %v4767
      %v6011 = vsel %vm5966, %v5882, %v4769
      %v6012 = vsel %vm5966, %v5883, %v4771
      %v6013 = vsel %vm5966, %v5884, %v4773
      %v6014 = vsel %vm5966, %v5885, %v4775
      %v6015 = vsel %vm5966, %v5886, %v4777
      %v6016 = vsel %vm5966, %v5887, %v4779
      %v6017 = vsel %vm5966, %v5888, %v4781
      %v6018 = vsel %vm5966, %v5889, %v4783
      %v6019 = vsel %vm5966, %v5890, %v4785
      %v6020 = vsel %vm5966, %v5891, %v4787
      %v6021 = vsel %vm5966, %v5892, %v4789
      %v6022 = vsel %vm5966, %v5893, %v4791
      %v6023 = vsel %vm5966, %v5894, %v4793
      %v6024 = vsel %vm5966, %v5895, %v4795
      %v6025 = vsel %vm5966, %v5896, %v4797
      %v6026 = vsel %vm5966, %v5897, %v4799
      %v6027 = vsel %vm5966, %v5898, %v4801
      %v6028 = vsel %vm5966, %v5899, %v4803
      %v6029 = vsel %vm5966, %v5900, %v4805
      %v6030 = vsel %vm5966, %v5901, %v4807
      %v6031 = vsel %vm5966, %v5902, %v4809
      %v6032 = vsel %vm5966, %v5903, %v4811
      %v6033 = vsel %vm5966, %v5904, %v4813
      %v6034 = vsel %vm5966, %v5905, %v4815
      %v6035 = vsel %vm5966, %v5906, %v4817
      %v6036 = vsel %vm5966, %v5907, %v4819
      %v6037 = vsel %vm5966, %v5908, %v4821
      %v6038 = vsel %vm5966, %v5909, %v4823
      %v6039 = vsel %vm5966, %v5910, %v4825
      %v6040 = vsel %vm5966, %v5911, %v4827
      %v6041 = vsel %vm5966, %v5912, %v4829
      %v6042 = vsel %vm5966, %v5913, %v4831
      %v6043 = vsel %vm5966, %v5914, %v4833
      %v6044 = vsel %vm5966, %v5915, %v4835
      %v6045 = vsel %vm5966, %v5916, %v4837
      %v6046 = vsel %vm5966, %v5917, %v4839
      %v6047 = vsel %vm5966, %v5918, %v4841
      %v6048 = vsel %vm5966, %v5919, %v4843
      %v6049 = vsel %vm5966, %v5920, %v4845
      %v6050 = vsel %vm5966, %v5921, %v4847
      %v6051 = vsel %vm5966, %v5922, %v4849
      %v6052 = vsel %vm5966, %v5923, %v4851
      %v6053 = vsel %vm5966, %v5924, %v4853
      %v6054 = vsel %vm5966, %v5925, %v4855
      %v6055 = vsel %vm5966, %v5926, %v4857
      %v6056 = vsel %vm5966, %v5927, %v4859
      %v6057 = vsel %vm5966, %v5928, %v4861
      %v6058 = vsel %vm5966, %v5929, %v4863
      %v6059 = vsel %vm5966, %v5930, %v4865
      %v6060 = vsel %vm5966, %v5931, %v4867
      %v6061 = vsel %vm5966, %v5932, %v4869
      %v6062 = vsel %vm5966, %v5933, %v4871
      %v6063 = vsel %vm5966, %v5934, %v4873
      %v6064 = vsel %vm5966, %v5935, %v4875
      %v6065 = vsel %vm5966, %v5936, %v4877
      %v6066 = vsel %vm5966, %v5937, %v4879
      %v6067 = vsel %vm5966, %v5938, %v4881
      %v6068 = vsel %vm5966, %v5939, %v4883
      %v6069 = vsel %vm5966, %v5940, %v4885
      %v6070 = vsel %vm5966, %v5941, %v4887
      %v6071 = vsel %vm5966, %v5942, %v4889
      %v6072 = vsel %vm5966, %v5943, %v4891
      %v6073 = vsel %vm5966, %v5944, %v4893
      %v6074 = vsel %vm5966, %v5945, %v4895
      %v6075 = vsel %vm5966, %v5946, %v4897
      %v6076 = vsel %vm5966, %v5947, %v4899
      %v6077 = vsel %vm5966, %v5948, %v4901
      %v6078 = vsel %vm5966, %v5949, %v4903
      %v6079 = vsel %vm5966, %v5950, %v4905
      %v6080 = vsel %vm5966, %v5951, %v4907
      %v6081 = vsel %vm5966, %v5952, %v4909
      %v6082 = vsel %vm5966, %v5953, %v4911
      %v6083 = vsel %vm5966, %v5954, %v4913
      %v6084 = vsel %vm5966, %v5955, %v4915
      %v6085 = vsel %vm5966, %v5956, %v4917
      %v6086 = vsel %vm5966, %v5957, %v4919
      %v6087 = vsel %vm5966, %v5958, %v4921
      %v6088 = vsel %vm5966, %v5959, %v4923
      %v6089 = vsel %vm5966, %v5960, %v4925
      %v6090 = vsel %vm5966, %v5961, %v4927
      %v6091 = vsel %vm5966, %v5962, %v4929
      %v6092 = vsel %vm5966, %v5963, %v4931
      %v6093 = vsel %vm5966, %v5964, %v4933
      %v6094 = vsel %vm5966, %v5965, %v4935
      %v6095 = vld [vmem:[%s1] sm:$0xff]
      %v6096 = vld [vmem:[%s1 + $0x8] sm:$0xff]
      %v6097 = vld [vmem:[%s1 + $0x10] sm:$0xff]
      %v6098 = vld [vmem:[%s1 + $0x18] sm:$0xff]
      %v6099 = vld [vmem:[%s1 + $0x20] sm:$0xf]
      %v6100 = vld [vmem:[%s2] sm:$0x1]
      %v6102 = vlaneseq
      %v6103 = vshrl.u32 %v6102, 7
      %v6104 = vsub.s32 0, %v6103
      %v6105 = vrot.slane %v6100, %v6104
      %vm6107 = vcmask 293888
      %v6109 = vsel %vm6107, %v5967, 0
      %v6112 = vsel %vm6107, %v5968, 0
      %v6115 = vsel %vm6107, %v5969, 0
      %v6118 = vsel %vm6107, %v5970, 0
      %v6121 = vsel %vm6107, %v5971, 0
      %v6124 = vsel %vm6107, %v5972, 0
      %v6127 = vsel %vm6107, %v5973, 0
      %v6130 = vsel %vm6107, %v5974, 0
      %v6133 = vsel %vm6107, %v5975, 0
      %v6136 = vsel %vm6107, %v5976, 0
      %v6139 = vsel %vm6107, %v5977, 0
      %v6142 = vsel %vm6107, %v5978, 0
      %v6145 = vsel %vm6107, %v5979, 0
      %v6148 = vsel %vm6107, %v5980, 0
      %v6151 = vsel %vm6107, %v5981, 0
      %v6154 = vsel %vm6107, %v5982, 0
      %v6157 = vsel %vm6107, %v5983, 0
      %v6160 = vsel %vm6107, %v5984, 0
      %v6163 = vsel %vm6107, %v5985, 0
      %v6166 = vsel %vm6107, %v5986, 0
      %v6169 = vsel %vm6107, %v5987, 0
      %v6172 = vsel %vm6107, %v5988, 0
      %v6175 = vsel %vm6107, %v5989, 0
      %v6178 = vsel %vm6107, %v5990, 0
      %v6181 = vsel %vm6107, %v5991, 0
      %v6184 = vsel %vm6107, %v5992, 0
      %v6187 = vsel %vm6107, %v5993, 0
      %v6190 = vsel %vm6107, %v5994, 0
      %v6193 = vsel %vm6107, %v5995, 0
      %v6196 = vsel %vm6107, %v5996, 0
      %v6199 = vsel %vm6107, %v5997, 0
      %v6202 = vsel %vm6107, %v5998, 0
      %v6205 = vsel %vm6107, %v5999, 0
      %v6208 = vsel %vm6107, %v6000, 0
      %v6211 = vsel %vm6107, %v6001, 0
      %v6214 = vsel %vm6107, %v6002, 0
      %v6217 = vsel %vm6107, %v6003, 0
      %v6220 = vsel %vm6107, %v6004, 0
      %v6223 = vsel %vm6107, %v6005, 0
      %v6226 = vsel %vm6107, %v6006, 0
      %v6229 = vsel %vm6107, %v6007, 0
      %v6232 = vsel %vm6107, %v6008, 0
      %v6235 = vsel %vm6107, %v6009, 0
      %v6238 = vsel %vm6107, %v6010, 0
      %v6241 = vsel %vm6107, %v6011, 0
      %v6244 = vsel %vm6107, %v6012, 0
      %v6247 = vsel %vm6107, %v6013, 0
      %v6250 = vsel %vm6107, %v6014, 0
      %v6253 = vsel %vm6107, %v6015, 0
      %v6256 = vsel %vm6107, %v6016, 0
      %v6259 = vsel %vm6107, %v6017, 0
      %v6262 = vsel %vm6107, %v6018, 0
      %v6265 = vsel %vm6107, %v6019, 0
      %v6268 = vsel %vm6107, %v6020, 0
      %v6271 = vsel %vm6107, %v6021, 0
      %v6274 = vsel %vm6107, %v6022, 0
      %v6277 = vsel %vm6107, %v6023, 0
      %v6280 = vsel %vm6107, %v6024, 0
      %v6283 = vsel %vm6107, %v6025, 0
      %v6286 = vsel %vm6107, %v6026, 0
      %v6289 = vsel %vm6107, %v6027, 0
      %v6292 = vsel %vm6107, %v6028, 0
      %v6295 = vsel %vm6107, %v6029, 0
      %v6298 = vsel %vm6107, %v6030, 0
      %v6301 = vsel %vm6107, %v6031, 0
      %v6304 = vsel %vm6107, %v6032, 0
      %v6307 = vsel %vm6107, %v6033, 0
      %v6310 = vsel %vm6107, %v6034, 0
      %v6313 = vsel %vm6107, %v6035, 0
      %v6316 = vsel %vm6107, %v6036, 0
      %v6319 = vsel %vm6107, %v6037, 0
      %v6322 = vsel %vm6107, %v6038, 0
      %v6325 = vsel %vm6107, %v6039, 0
      %v6328 = vsel %vm6107, %v6040, 0
      %v6331 = vsel %vm6107, %v6041, 0
      %v6334 = vsel %vm6107, %v6042, 0
      %v6337 = vsel %vm6107, %v6043, 0
      %v6340 = vsel %vm6107, %v6044, 0
      %v6343 = vsel %vm6107, %v6045, 0
      %v6346 = vsel %vm6107, %v6046, 0
      %v6349 = vsel %vm6107, %v6047, 0
      %v6352 = vsel %vm6107, %v6048, 0
      %v6355 = vsel %vm6107, %v6049, 0
      %v6358 = vsel %vm6107, %v6050, 0
      %v6361 = vsel %vm6107, %v6051, 0
      %v6364 = vsel %vm6107, %v6052, 0
      %v6367 = vsel %vm6107, %v6053, 0
      %v6370 = vsel %vm6107, %v6054, 0
      %v6373 = vsel %vm6107, %v6055, 0
      %v6376 = vsel %vm6107, %v6056, 0
      %v6379 = vsel %vm6107, %v6057, 0
      %v6382 = vsel %vm6107, %v6058, 0
      %v6385 = vsel %vm6107, %v6059, 0
      %v6388 = vsel %vm6107, %v6060, 0
      %v6391 = vsel %vm6107, %v6061, 0
      %v6394 = vsel %vm6107, %v6062, 0
      %v6397 = vsel %vm6107, %v6063, 0
      %v6400 = vsel %vm6107, %v6064, 0
      %v6403 = vsel %vm6107, %v6065, 0
      %v6406 = vsel %vm6107, %v6066, 0
      %v6409 = vsel %vm6107, %v6067, 0
      %v6412 = vsel %vm6107, %v6068, 0
      %v6415 = vsel %vm6107, %v6069, 0
      %v6418 = vsel %vm6107, %v6070, 0
      %v6421 = vsel %vm6107, %v6071, 0
      %v6424 = vsel %vm6107, %v6072, 0
      %v6427 = vsel %vm6107, %v6073, 0
      %v6430 = vsel %vm6107, %v6074, 0
      %v6433 = vsel %vm6107, %v6075, 0
      %v6436 = vsel %vm6107, %v6076, 0
      %v6439 = vsel %vm6107, %v6077, 0
      %v6442 = vsel %vm6107, %v6078, 0
      %v6445 = vsel %vm6107, %v6079, 0
      %v6448 = vsel %vm6107, %v6080, 0
      %v6451 = vsel %vm6107, %v6081, 0
      %v6454 = vsel %vm6107, %v6082, 0
      %v6457 = vsel %vm6107, %v6083, 0
      %v6460 = vsel %vm6107, %v6084, 0
      %v6463 = vsel %vm6107, %v6085, 0
      %v6466 = vsel %vm6107, %v6086, 0
      %v6469 = vsel %vm6107, %v6087, 0
      %v6472 = vsel %vm6107, %v6088, 0
      %v6475 = vsel %vm6107, %v6089, 0
      %v6478 = vsel %vm6107, %v6090, 0
      %v6481 = vsel %vm6107, %v6091, 0
      %v6484 = vsel %vm6107, %v6092, 0
      %v6487 = vsel %vm6107, %v6093, 0
      %v6490 = vsel %vm6107, %v6094, 0
      %vm6492 = vcmask 1043456
      %v6494 = vsel %vm6492, %v6099, 0
      %6496 = vmatprep.subr.mxu0 0.0
      %6497 = vmatpush1.msra.mxu0 0.0
      %6498 = vmatprep.subr.mxu0 0.0
      %6499 = vmatpush1.msra.mxu0 0.0
      %6500 = vmatprep.subr.mxu0 0.0
      %6501 = vmatpush1.msra.mxu0 0.0
      %6502 = vmatprep.subr.mxu0 0.0
      %6503 = vmatpush1.msra.mxu0 0.0
      %6504 = vmatprep.subr.mxu0 0.0
      %6505 = vmatpush1.msra.mxu0 0.0
      %6506 = vmatprep.subr.mxu0 0.0
      %6507 = vmatpush1.msra.mxu0 0.0
      %6508 = vmatprep.subr.mxu0 0.0
      %6509 = vmatpush1.msra.mxu0 0.0
      %6510 = vmatprep.subr.mxu0 0.0
      %6511 = vmatpush1.msra.mxu0 0.0
      %6512 = vmatprep.subr.mxu0 0.0
      %6513 = vmatpush1.msra.mxu0 0.0
      %6514 = vmatprep.subr.mxu0 0.0
      %6515 = vmatpush1.msra.mxu0 0.0
      %6516 = vmatprep.subr.mxu0 0.0
      %6517 = vmatpush1.msra.mxu0 0.0
      %6518 = vmatprep.subr.mxu0 0.0
      %6519 = vmatpush1.msra.mxu0 %v6494
      %6520 = vmatprep.subr.mxu0 0.0
      %6521 = vmatpush1.msra.mxu0 %v6098
      %6522 = vmatprep.subr.mxu0 0.0
      %6523 = vmatpush1.msra.mxu0 %v6097
      %6524 = vmatprep.subr.mxu0 0.0
      %6525 = vmatpush1.msra.mxu0 %v6096
      %6526 = vmatprep.subr.mxu0 0.0
      %6527 = vmatpush1.msra.mxu0 %v6095
      %6528 = vmatprep.subr.mxu0 0.0
      %6529 = vmatpush2.msra.mxu0 0.0
      %6530 = vmatprep.subr.mxu0 0.0
      %6531 = vmatpush2.msra.mxu0 0.0
      %6532 = vmatprep.subr.mxu0 0.0
      %6533 = vmatpush2.msra.mxu0 0.0
      %6534 = vmatprep.subr.mxu0 0.0
      %6535 = vmatpush2.msra.mxu0 0.0
      %6536 = vmatprep.subr.mxu0 0.0
      %6537 = vmatpush2.msra.mxu0 0.0
      %6538 = vmatprep.subr.mxu0 0.0
      %6539 = vmatpush2.msra.mxu0 0.0
      %6540 = vmatprep.subr.mxu0 0.0
      %6541 = vmatpush2.msra.mxu0 0.0
      %6542 = vmatprep.subr.mxu0 0.0
      %6543 = vmatpush2.msra.mxu0 0.0
      %6544 = vmatprep.subr.mxu0 0.0
      %6545 = vmatpush2.msra.mxu0 0.0
      %6546 = vmatprep.subr.mxu0 0.0
      %6547 = vmatpush2.msra.mxu0 0.0
      %6548 = vmatprep.subr.mxu0 0.0
      %6549 = vmatpush2.msra.mxu0 0.0
      %6550 = vmatprep.subr.mxu0 0.0
      %6551 = vmatpush2.msra.mxu0 0.0
      %6552 = vmatprep.subr.mxu0 0.0
      %6553 = vmatpush2.msra.mxu0 0.0
      %6554 = vmatprep.subr.mxu0 0.0
      %6555 = vmatpush2.msra.mxu0 0.0
      %6556 = vmatprep.subr.mxu0 0.0
      %6557 = vmatpush2.msra.mxu0 0.0
      %6558 = vmatprep.subr.mxu0 0.0
      %6559 = vmatpush2.msra.mxu0 0.0
      %6560 = vmatprep.mubr.f32.mxu0 0.0
      %6561 = vmatmul.mubr.f32.gmra.mxu0 %v6109
      %v6562 = vpop.f32.mrf.mxu0
      %v6563 = vadd.f32 %v6105, %v6562
      %v6564 = vpop.f32.mrf.mxu0
      %6565 = vmatprep.mubr.f32.mxu0 0.0
      %6566 = vmatmul.mubr.f32.gmra.mxu0 %v6112
      %v6567 = vpop.f32.mrf.mxu0
      %v6568 = vadd.f32 %v6105, %v6567
      %v6569 = vpop.f32.mrf.mxu0
      %6570 = vmatprep.mubr.f32.mxu0 0.0
      %6571 = vmatmul.mubr.f32.gmra.mxu0 %v6115
      %v6572 = vpop.f32.mrf.mxu0
      %v6573 = vadd.f32 %v6105, %v6572
      %v6574 = vpop.f32.mrf.mxu0
      %6575 = vmatprep.mubr.f32.mxu0 0.0
      %6576 = vmatmul.mubr.f32.gmra.mxu0 %v6118
      %v6577 = vpop.f32.mrf.mxu0
      %v6578 = vadd.f32 %v6105, %v6577
      %v6579 = vpop.f32.mrf.mxu0
      %6580 = vmatprep.mubr.f32.mxu0 0.0
      %6581 = vmatmul.mubr.f32.gmra.mxu0 %v6121
      %v6582 = vpop.f32.mrf.mxu0
      %v6583 = vadd.f32 %v6105, %v6582
      %v6584 = vpop.f32.mrf.mxu0
      %6585 = vmatprep.mubr.f32.mxu0 0.0
      %6586 = vmatmul.mubr.f32.gmra.mxu0 %v6124
      %v6587 = vpop.f32.mrf.mxu0
      %v6588 = vadd.f32 %v6105, %v6587
      %v6589 = vpop.f32.mrf.mxu0
      %6590 = vmatprep.mubr.f32.mxu0 0.0
      %6591 = vmatmul.mubr.f32.gmra.mxu0 %v6127
      %v6592 = vpop.f32.mrf.mxu0
      %v6593 = vadd.f32 %v6105, %v6592
      %v6594 = vpop.f32.mrf.mxu0
      %6595 = vmatprep.mubr.f32.mxu0 0.0
      %6596 = vmatmul.mubr.f32.gmra.mxu0 %v6130
      %v6597 = vpop.f32.mrf.mxu0
      %v6598 = vadd.f32 %v6105, %v6597
      %v6599 = vpop.f32.mrf.mxu0
      %6600 = vmatprep.mubr.f32.mxu0 0.0
      %6601 = vmatmul.mubr.f32.gmra.mxu0 %v6133
      %v6602 = vpop.f32.mrf.mxu0
      %v6603 = vadd.f32 %v6105, %v6602
      %v6604 = vpop.f32.mrf.mxu0
      %6605 = vmatprep.mubr.f32.mxu0 0.0
      %6606 = vmatmul.mubr.f32.gmra.mxu0 %v6136
      %v6607 = vpop.f32.mrf.mxu0
      %v6608 = vadd.f32 %v6105, %v6607
      %v6609 = vpop.f32.mrf.mxu0
      %6610 = vmatprep.mubr.f32.mxu0 0.0
      %6611 = vmatmul.mubr.f32.gmra.mxu0 %v6139
      %v6612 = vpop.f32.mrf.mxu0
      %v6613 = vadd.f32 %v6105, %v6612
      %v6614 = vpop.f32.mrf.mxu0
      %6615 = vmatprep.mubr.f32.mxu0 0.0
      %6616 = vmatmul.mubr.f32.gmra.mxu0 %v6142
      %v6617 = vpop.f32.mrf.mxu0
      %v6618 = vadd.f32 %v6105, %v6617
      %v6619 = vpop.f32.mrf.mxu0
      %6620 = vmatprep.mubr.f32.mxu0 0.0
      %6621 = vmatmul.mubr.f32.gmra.mxu0 %v6145
      %v6622 = vpop.f32.mrf.mxu0
      %v6623 = vadd.f32 %v6105, %v6622
      %v6624 = vpop.f32.mrf.mxu0
      %6625 = vmatprep.mubr.f32.mxu0 0.0
      %6626 = vmatmul.mubr.f32.gmra.mxu0 %v6148
      %v6627 = vpop.f32.mrf.mxu0
      %v6628 = vadd.f32 %v6105, %v6627
      %v6629 = vpop.f32.mrf.mxu0
      %6630 = vmatprep.mubr.f32.mxu0 0.0
      %6631 = vmatmul.mubr.f32.gmra.mxu0 %v6151
      %v6632 = vpop.f32.mrf.mxu0
      %v6633 = vadd.f32 %v6105, %v6632
      %v6634 = vpop.f32.mrf.mxu0
      %6635 = vmatprep.mubr.f32.mxu0 0.0
      %6636 = vmatmul.mubr.f32.gmra.mxu0 %v6154
      %v6637 = vpop.f32.mrf.mxu0
      %v6638 = vadd.f32 %v6105, %v6637
      %v6639 = vpop.f32.mrf.mxu0
      %6640 = vmatprep.mubr.f32.mxu0 0.0
      %6641 = vmatmul.mubr.f32.gmra.mxu0 %v6157
      %v6642 = vpop.f32.mrf.mxu0
      %v6643 = vadd.f32 %v6105, %v6642
      %v6644 = vpop.f32.mrf.mxu0
      %6645 = vmatprep.mubr.f32.mxu0 0.0
      %6646 = vmatmul.mubr.f32.gmra.mxu0 %v6160
      %v6647 = vpop.f32.mrf.mxu0
      %v6648 = vadd.f32 %v6105, %v6647
      %v6649 = vpop.f32.mrf.mxu0
      %6650 = vmatprep.mubr.f32.mxu0 0.0
      %6651 = vmatmul.mubr.f32.gmra.mxu0 %v6163
      %v6652 = vpop.f32.mrf.mxu0
      %v6653 = vadd.f32 %v6105, %v6652
      %v6654 = vpop.f32.mrf.mxu0
      %6655 = vmatprep.mubr.f32.mxu0 0.0
      %6656 = vmatmul.mubr.f32.gmra.mxu0 %v6166
      %v6657 = vpop.f32.mrf.mxu0
      %v6658 = vadd.f32 %v6105, %v6657
      %v6659 = vpop.f32.mrf.mxu0
      %6660 = vmatprep.mubr.f32.mxu0 0.0
      %6661 = vmatmul.mubr.f32.gmra.mxu0 %v6169
      %v6662 = vpop.f32.mrf.mxu0
      %v6663 = vadd.f32 %v6105, %v6662
      %v6664 = vpop.f32.mrf.mxu0
      %6665 = vmatprep.mubr.f32.mxu0 0.0
      %6666 = vmatmul.mubr.f32.gmra.mxu0 %v6172
      %v6667 = vpop.f32.mrf.mxu0
      %v6668 = vadd.f32 %v6105, %v6667
      %v6669 = vpop.f32.mrf.mxu0
      %6670 = vmatprep.mubr.f32.mxu0 0.0
      %6671 = vmatmul.mubr.f32.gmra.mxu0 %v6175
      %v6672 = vpop.f32.mrf.mxu0
      %v6673 = vadd.f32 %v6105, %v6672
      %v6674 = vpop.f32.mrf.mxu0
      %6675 = vmatprep.mubr.f32.mxu0 0.0
      %6676 = vmatmul.mubr.f32.gmra.mxu0 %v6178
      %v6677 = vpop.f32.mrf.mxu0
      %v6678 = vadd.f32 %v6105, %v6677
      %v6679 = vpop.f32.mrf.mxu0
      %6680 = vmatprep.mubr.f32.mxu0 0.0
      %6681 = vmatmul.mubr.f32.gmra.mxu0 %v6181
      %v6682 = vpop.f32.mrf.mxu0
      %v6683 = vadd.f32 %v6105, %v6682
      %v6684 = vpop.f32.mrf.mxu0
      %6685 = vmatprep.mubr.f32.mxu0 0.0
      %6686 = vmatmul.mubr.f32.gmra.mxu0 %v6184
      %v6687 = vpop.f32.mrf.mxu0
      %v6688 = vadd.f32 %v6105, %v6687
      %v6689 = vpop.f32.mrf.mxu0
      %6690 = vmatprep.mubr.f32.mxu0 0.0
      %6691 = vmatmul.mubr.f32.gmra.mxu0 %v6187
      %v6692 = vpop.f32.mrf.mxu0
      %v6693 = vadd.f32 %v6105, %v6692
      %v6694 = vpop.f32.mrf.mxu0
      %6695 = vmatprep.mubr.f32.mxu0 0.0
      %6696 = vmatmul.mubr.f32.gmra.mxu0 %v6190
      %v6697 = vpop.f32.mrf.mxu0
      %v6698 = vadd.f32 %v6105, %v6697
      %v6699 = vpop.f32.mrf.mxu0
      %6700 = vmatprep.mubr.f32.mxu0 0.0
      %6701 = vmatmul.mubr.f32.gmra.mxu0 %v6193
      %v6702 = vpop.f32.mrf.mxu0
      %v6703 = vadd.f32 %v6105, %v6702
      %v6704 = vpop.f32.mrf.mxu0
      %6705 = vmatprep.mubr.f32.mxu0 0.0
      %6706 = vmatmul.mubr.f32.gmra.mxu0 %v6196
      %v6707 = vpop.f32.mrf.mxu0
      %v6708 = vadd.f32 %v6105, %v6707
      %v6709 = vpop.f32.mrf.mxu0
      %6710 = vmatprep.mubr.f32.mxu0 0.0
      %6711 = vmatmul.mubr.f32.gmra.mxu0 %v6199
      %v6712 = vpop.f32.mrf.mxu0
      %v6713 = vadd.f32 %v6105, %v6712
      %v6714 = vpop.f32.mrf.mxu0
      %6715 = vmatprep.mubr.f32.mxu0 0.0
      %6716 = vmatmul.mubr.f32.gmra.mxu0 %v6202
      %v6717 = vpop.f32.mrf.mxu0
      %v6718 = vadd.f32 %v6105, %v6717
      %v6719 = vpop.f32.mrf.mxu0
      %6720 = vmatprep.mubr.f32.mxu0 0.0
      %6721 = vmatmul.mubr.f32.gmra.mxu0 %v6205
      %v6722 = vpop.f32.mrf.mxu0
      %v6723 = vadd.f32 %v6105, %v6722
      %v6724 = vpop.f32.mrf.mxu0
      %6725 = vmatprep.mubr.f32.mxu0 0.0
      %6726 = vmatmul.mubr.f32.gmra.mxu0 %v6208
      %v6727 = vpop.f32.mrf.mxu0
      %v6728 = vadd.f32 %v6105, %v6727
      %v6729 = vpop.f32.mrf.mxu0
      %6730 = vmatprep.mubr.f32.mxu0 0.0
      %6731 = vmatmul.mubr.f32.gmra.mxu0 %v6211
      %v6732 = vpop.f32.mrf.mxu0
      %v6733 = vadd.f32 %v6105, %v6732
      %v6734 = vpop.f32.mrf.mxu0
      %6735 = vmatprep.mubr.f32.mxu0 0.0
      %6736 = vmatmul.mubr.f32.gmra.mxu0 %v6214
      %v6737 = vpop.f32.mrf.mxu0
      %v6738 = vadd.f32 %v6105, %v6737
      %v6739 = vpop.f32.mrf.mxu0
      %6740 = vmatprep.mubr.f32.mxu0 0.0
      %6741 = vmatmul.mubr.f32.gmra.mxu0 %v6217
      %v6742 = vpop.f32.mrf.mxu0
      %v6743 = vadd.f32 %v6105, %v6742
      %v6744 = vpop.f32.mrf.mxu0
      %6745 = vmatprep.mubr.f32.mxu0 0.0
      %6746 = vmatmul.mubr.f32.gmra.mxu0 %v6220
      %v6747 = vpop.f32.mrf.mxu0
      %v6748 = vadd.f32 %v6105, %v6747
      %v6749 = vpop.f32.mrf.mxu0
      %6750 = vmatprep.mubr.f32.mxu0 0.0
      %6751 = vmatmul.mubr.f32.gmra.mxu0 %v6223
      %v6752 = vpop.f32.mrf.mxu0
      %v6753 = vadd.f32 %v6105, %v6752
      %v6754 = vpop.f32.mrf.mxu0
      %6755 = vmatprep.mubr.f32.mxu0 0.0
      %6756 = vmatmul.mubr.f32.gmra.mxu0 %v6226
      %v6757 = vpop.f32.mrf.mxu0
      %v6758 = vadd.f32 %v6105, %v6757
      %v6759 = vpop.f32.mrf.mxu0
      %6760 = vmatprep.mubr.f32.mxu0 0.0
      %6761 = vmatmul.mubr.f32.gmra.mxu0 %v6229
      %v6762 = vpop.f32.mrf.mxu0
      %v6763 = vadd.f32 %v6105, %v6762
      %v6764 = vpop.f32.mrf.mxu0
      %6765 = vmatprep.mubr.f32.mxu0 0.0
      %6766 = vmatmul.mubr.f32.gmra.mxu0 %v6232
      %v6767 = vpop.f32.mrf.mxu0
      %v6768 = vadd.f32 %v6105, %v6767
      %v6769 = vpop.f32.mrf.mxu0
      %6770 = vmatprep.mubr.f32.mxu0 0.0
      %6771 = vmatmul.mubr.f32.gmra.mxu0 %v6235
      %v6772 = vpop.f32.mrf.mxu0
      %v6773 = vadd.f32 %v6105, %v6772
      %v6774 = vpop.f32.mrf.mxu0
      %6775 = vmatprep.mubr.f32.mxu0 0.0
      %6776 = vmatmul.mubr.f32.gmra.mxu0 %v6238
      %v6777 = vpop.f32.mrf.mxu0
      %v6778 = vadd.f32 %v6105, %v6777
      %v6779 = vpop.f32.mrf.mxu0
      %6780 = vmatprep.mubr.f32.mxu0 0.0
      %6781 = vmatmul.mubr.f32.gmra.mxu0 %v6241
      %v6782 = vpop.f32.mrf.mxu0
      %v6783 = vadd.f32 %v6105, %v6782
      %v6784 = vpop.f32.mrf.mxu0
      %6785 = vmatprep.mubr.f32.mxu0 0.0
      %6786 = vmatmul.mubr.f32.gmra.mxu0 %v6244
      %v6787 = vpop.f32.mrf.mxu0
      %v6788 = vadd.f32 %v6105, %v6787
      %v6789 = vpop.f32.mrf.mxu0
      %6790 = vmatprep.mubr.f32.mxu0 0.0
      %6791 = vmatmul.mubr.f32.gmra.mxu0 %v6247
      %v6792 = vpop.f32.mrf.mxu0
      %v6793 = vadd.f32 %v6105, %v6792
      %v6794 = vpop.f32.mrf.mxu0
      %6795 = vmatprep.mubr.f32.mxu0 0.0
      %6796 = vmatmul.mubr.f32.gmra.mxu0 %v6250
      %v6797 = vpop.f32.mrf.mxu0
      %v6798 = vadd.f32 %v6105, %v6797
      %v6799 = vpop.f32.mrf.mxu0
      %6800 = vmatprep.mubr.f32.mxu0 0.0
      %6801 = vmatmul.mubr.f32.gmra.mxu0 %v6253
      %v6802 = vpop.f32.mrf.mxu0
      %v6803 = vadd.f32 %v6105, %v6802
      %v6804 = vpop.f32.mrf.mxu0
      %6805 = vmatprep.mubr.f32.mxu0 0.0
      %6806 = vmatmul.mubr.f32.gmra.mxu0 %v6256
      %v6807 = vpop.f32.mrf.mxu0
      %v6808 = vadd.f32 %v6105, %v6807
      %v6809 = vpop.f32.mrf.mxu0
      %6810 = vmatprep.mubr.f32.mxu0 0.0
      %6811 = vmatmul.mubr.f32.gmra.mxu0 %v6259
      %v6812 = vpop.f32.mrf.mxu0
      %v6813 = vadd.f32 %v6105, %v6812
      %v6814 = vpop.f32.mrf.mxu0
      %6815 = vmatprep.mubr.f32.mxu0 0.0
      %6816 = vmatmul.mubr.f32.gmra.mxu0 %v6262
      %v6817 = vpop.f32.mrf.mxu0
      %v6818 = vadd.f32 %v6105, %v6817
      %v6819 = vpop.f32.mrf.mxu0
      %6820 = vmatprep.mubr.f32.mxu0 0.0
      %6821 = vmatmul.mubr.f32.gmra.mxu0 %v6265
      %v6822 = vpop.f32.mrf.mxu0
      %v6823 = vadd.f32 %v6105, %v6822
      %v6824 = vpop.f32.mrf.mxu0
      %6825 = vmatprep.mubr.f32.mxu0 0.0
      %6826 = vmatmul.mubr.f32.gmra.mxu0 %v6268
      %v6827 = vpop.f32.mrf.mxu0
      %v6828 = vadd.f32 %v6105, %v6827
      %v6829 = vpop.f32.mrf.mxu0
      %6830 = vmatprep.mubr.f32.mxu0 0.0
      %6831 = vmatmul.mubr.f32.gmra.mxu0 %v6271
      %v6832 = vpop.f32.mrf.mxu0
      %v6833 = vadd.f32 %v6105, %v6832
      %v6834 = vpop.f32.mrf.mxu0
      %6835 = vmatprep.mubr.f32.mxu0 0.0
      %6836 = vmatmul.mubr.f32.gmra.mxu0 %v6274
      %v6837 = vpop.f32.mrf.mxu0
      %v6838 = vadd.f32 %v6105, %v6837
      %v6839 = vpop.f32.mrf.mxu0
      %6840 = vmatprep.mubr.f32.mxu0 0.0
      %6841 = vmatmul.mubr.f32.gmra.mxu0 %v6277
      %v6842 = vpop.f32.mrf.mxu0
      %v6843 = vadd.f32 %v6105, %v6842
      %v6844 = vpop.f32.mrf.mxu0
      %6845 = vmatprep.mubr.f32.mxu0 0.0
      %6846 = vmatmul.mubr.f32.gmra.mxu0 %v6280
      %v6847 = vpop.f32.mrf.mxu0
      %v6848 = vadd.f32 %v6105, %v6847
      %v6849 = vpop.f32.mrf.mxu0
      %6850 = vmatprep.mubr.f32.mxu0 0.0
      %6851 = vmatmul.mubr.f32.gmra.mxu0 %v6283
      %v6852 = vpop.f32.mrf.mxu0
      %v6853 = vadd.f32 %v6105, %v6852
      %v6854 = vpop.f32.mrf.mxu0
      %6855 = vmatprep.mubr.f32.mxu0 0.0
      %6856 = vmatmul.mubr.f32.gmra.mxu0 %v6286
      %v6857 = vpop.f32.mrf.mxu0
      %v6858 = vadd.f32 %v6105, %v6857
      %v6859 = vpop.f32.mrf.mxu0
      %6860 = vmatprep.mubr.f32.mxu0 0.0
      %6861 = vmatmul.mubr.f32.gmra.mxu0 %v6289
      %v6862 = vpop.f32.mrf.mxu0
      %v6863 = vadd.f32 %v6105, %v6862
      %v6864 = vpop.f32.mrf.mxu0
      %6865 = vmatprep.mubr.f32.mxu0 0.0
      %6866 = vmatmul.mubr.f32.gmra.mxu0 %v6292
      %v6867 = vpop.f32.mrf.mxu0
      %v6868 = vadd.f32 %v6105, %v6867
      %v6869 = vpop.f32.mrf.mxu0
      %6870 = vmatprep.mubr.f32.mxu0 0.0
      %6871 = vmatmul.mubr.f32.gmra.mxu0 %v6295
      %v6872 = vpop.f32.mrf.mxu0
      %v6873 = vadd.f32 %v6105, %v6872
      %v6874 = vpop.f32.mrf.mxu0
      %6875 = vmatprep.mubr.f32.mxu0 0.0
      %6876 = vmatmul.mubr.f32.gmra.mxu0 %v6298
      %v6877 = vpop.f32.mrf.mxu0
      %v6878 = vadd.f32 %v6105, %v6877
      %v6879 = vpop.f32.mrf.mxu0
      %6880 = vmatprep.mubr.f32.mxu0 0.0
      %6881 = vmatmul.mubr.f32.gmra.mxu0 %v6301
      %v6882 = vpop.f32.mrf.mxu0
      %v6883 = vadd.f32 %v6105, %v6882
      %v6884 = vpop.f32.mrf.mxu0
      %6885 = vmatprep.mubr.f32.mxu0 0.0
      %6886 = vmatmul.mubr.f32.gmra.mxu0 %v6304
      %v6887 = vpop.f32.mrf.mxu0
      %v6888 = vadd.f32 %v6105, %v6887
      %v6889 = vpop.f32.mrf.mxu0
      %6890 = vmatprep.mubr.f32.mxu0 0.0
      %6891 = vmatmul.mubr.f32.gmra.mxu0 %v6307
      %v6892 = vpop.f32.mrf.mxu0
      %v6893 = vadd.f32 %v6105, %v6892
      %v6894 = vpop.f32.mrf.mxu0
      %6895 = vmatprep.mubr.f32.mxu0 0.0
      %6896 = vmatmul.mubr.f32.gmra.mxu0 %v6310
      %v6897 = vpop.f32.mrf.mxu0
      %v6898 = vadd.f32 %v6105, %v6897
      %v6899 = vpop.f32.mrf.mxu0
      %6900 = vmatprep.mubr.f32.mxu0 0.0
      %6901 = vmatmul.mubr.f32.gmra.mxu0 %v6313
      %v6902 = vpop.f32.mrf.mxu0
      %v6903 = vadd.f32 %v6105, %v6902
      %v6904 = vpop.f32.mrf.mxu0
      %6905 = vmatprep.mubr.f32.mxu0 0.0
      %6906 = vmatmul.mubr.f32.gmra.mxu0 %v6316
      %v6907 = vpop.f32.mrf.mxu0
      %v6908 = vadd.f32 %v6105, %v6907
      %v6909 = vpop.f32.mrf.mxu0
      %6910 = vmatprep.mubr.f32.mxu0 0.0
      %6911 = vmatmul.mubr.f32.gmra.mxu0 %v6319
      %v6912 = vpop.f32.mrf.mxu0
      %v6913 = vadd.f32 %v6105, %v6912
      %v6914 = vpop.f32.mrf.mxu0
      %6915 = vmatprep.mubr.f32.mxu0 0.0
      %6916 = vmatmul.mubr.f32.gmra.mxu0 %v6322
      %v6917 = vpop.f32.mrf.mxu0
      %v6918 = vadd.f32 %v6105, %v6917
      %v6919 = vpop.f32.mrf.mxu0
      %6920 = vmatprep.mubr.f32.mxu0 0.0
      %6921 = vmatmul.mubr.f32.gmra.mxu0 %v6325
      %v6922 = vpop.f32.mrf.mxu0
      %v6923 = vadd.f32 %v6105, %v6922
      %v6924 = vpop.f32.mrf.mxu0
      %6925 = vmatprep.mubr.f32.mxu0 0.0
      %6926 = vmatmul.mubr.f32.gmra.mxu0 %v6328
      %v6927 = vpop.f32.mrf.mxu0
      %v6928 = vadd.f32 %v6105, %v6927
      %v6929 = vpop.f32.mrf.mxu0
      %6930 = vmatprep.mubr.f32.mxu0 0.0
      %6931 = vmatmul.mubr.f32.gmra.mxu0 %v6331
      %v6932 = vpop.f32.mrf.mxu0
      %v6933 = vadd.f32 %v6105, %v6932
      %v6934 = vpop.f32.mrf.mxu0
      %6935 = vmatprep.mubr.f32.mxu0 0.0
      %6936 = vmatmul.mubr.f32.gmra.mxu0 %v6334
      %v6937 = vpop.f32.mrf.mxu0
      %v6938 = vadd.f32 %v6105, %v6937
      %v6939 = vpop.f32.mrf.mxu0
      %6940 = vmatprep.mubr.f32.mxu0 0.0
      %6941 = vmatmul.mubr.f32.gmra.mxu0 %v6337
      %v6942 = vpop.f32.mrf.mxu0
      %v6943 = vadd.f32 %v6105, %v6942
      %v6944 = vpop.f32.mrf.mxu0
      %6945 = vmatprep.mubr.f32.mxu0 0.0
      %6946 = vmatmul.mubr.f32.gmra.mxu0 %v6340
      %v6947 = vpop.f32.mrf.mxu0
      %v6948 = vadd.f32 %v6105, %v6947
      %v6949 = vpop.f32.mrf.mxu0
      %6950 = vmatprep.mubr.f32.mxu0 0.0
      %6951 = vmatmul.mubr.f32.gmra.mxu0 %v6343
      %v6952 = vpop.f32.mrf.mxu0
      %v6953 = vadd.f32 %v6105, %v6952
      %v6954 = vpop.f32.mrf.mxu0
      %6955 = vmatprep.mubr.f32.mxu0 0.0
      %6956 = vmatmul.mubr.f32.gmra.mxu0 %v6346
      %v6957 = vpop.f32.mrf.mxu0
      %v6958 = vadd.f32 %v6105, %v6957
      %v6959 = vpop.f32.mrf.mxu0
      %6960 = vmatprep.mubr.f32.mxu0 0.0
      %6961 = vmatmul.mubr.f32.gmra.mxu0 %v6349
      %v6962 = vpop.f32.mrf.mxu0
      %v6963 = vadd.f32 %v6105, %v6962
      %v6964 = vpop.f32.mrf.mxu0
      %6965 = vmatprep.mubr.f32.mxu0 0.0
      %6966 = vmatmul.mubr.f32.gmra.mxu0 %v6352
      %v6967 = vpop.f32.mrf.mxu0
      %v6968 = vadd.f32 %v6105, %v6967
      %v6969 = vpop.f32.mrf.mxu0
      %6970 = vmatprep.mubr.f32.mxu0 0.0
      %6971 = vmatmul.mubr.f32.gmra.mxu0 %v6355
      %v6972 = vpop.f32.mrf.mxu0
      %v6973 = vadd.f32 %v6105, %v6972
      %v6974 = vpop.f32.mrf.mxu0
      %6975 = vmatprep.mubr.f32.mxu0 0.0
      %6976 = vmatmul.mubr.f32.gmra.mxu0 %v6358
      %v6977 = vpop.f32.mrf.mxu0
      %v6978 = vadd.f32 %v6105, %v6977
      %v6979 = vpop.f32.mrf.mxu0
      %6980 = vmatprep.mubr.f32.mxu0 0.0
      %6981 = vmatmul.mubr.f32.gmra.mxu0 %v6361
      %v6982 = vpop.f32.mrf.mxu0
      %v6983 = vadd.f32 %v6105, %v6982
      %v6984 = vpop.f32.mrf.mxu0
      %6985 = vmatprep.mubr.f32.mxu0 0.0
      %6986 = vmatmul.mubr.f32.gmra.mxu0 %v6364
      %v6987 = vpop.f32.mrf.mxu0
      %v6988 = vadd.f32 %v6105, %v6987
      %v6989 = vpop.f32.mrf.mxu0
      %6990 = vmatprep.mubr.f32.mxu0 0.0
      %6991 = vmatmul.mubr.f32.gmra.mxu0 %v6367
      %v6992 = vpop.f32.mrf.mxu0
      %v6993 = vadd.f32 %v6105, %v6992
      %v6994 = vpop.f32.mrf.mxu0
      %6995 = vmatprep.mubr.f32.mxu0 0.0
      %6996 = vmatmul.mubr.f32.gmra.mxu0 %v6370
      %v6997 = vpop.f32.mrf.mxu0
      %v6998 = vadd.f32 %v6105, %v6997
      %v6999 = vpop.f32.mrf.mxu0
      %7000 = vmatprep.mubr.f32.mxu0 0.0
      %7001 = vmatmul.mubr.f32.gmra.mxu0 %v6373
      %v7002 = vpop.f32.mrf.mxu0
      %v7003 = vadd.f32 %v6105, %v7002
      %v7004 = vpop.f32.mrf.mxu0
      %7005 = vmatprep.mubr.f32.mxu0 0.0
      %7006 = vmatmul.mubr.f32.gmra.mxu0 %v6376
      %v7007 = vpop.f32.mrf.mxu0
      %v7008 = vadd.f32 %v6105, %v7007
      %v7009 = vpop.f32.mrf.mxu0
      %7010 = vmatprep.mubr.f32.mxu0 0.0
      %7011 = vmatmul.mubr.f32.gmra.mxu0 %v6379
      %v7012 = vpop.f32.mrf.mxu0
      %v7013 = vadd.f32 %v6105, %v7012
      %v7014 = vpop.f32.mrf.mxu0
      %7015 = vmatprep.mubr.f32.mxu0 0.0
      %7016 = vmatmul.mubr.f32.gmra.mxu0 %v6382
      %v7017 = vpop.f32.mrf.mxu0
      %v7018 = vadd.f32 %v6105, %v7017
      %v7019 = vpop.f32.mrf.mxu0
      %7020 = vmatprep.mubr.f32.mxu0 0.0
      %7021 = vmatmul.mubr.f32.gmra.mxu0 %v6385
      %v7022 = vpop.f32.mrf.mxu0
      %v7023 = vadd.f32 %v6105, %v7022
      %v7024 = vpop.f32.mrf.mxu0
      %7025 = vmatprep.mubr.f32.mxu0 0.0
      %7026 = vmatmul.mubr.f32.gmra.mxu0 %v6388
      %v7027 = vpop.f32.mrf.mxu0
      %v7028 = vadd.f32 %v6105, %v7027
      %v7029 = vpop.f32.mrf.mxu0
      %7030 = vmatprep.mubr.f32.mxu0 0.0
      %7031 = vmatmul.mubr.f32.gmra.mxu0 %v6391
      %v7032 = vpop.f32.mrf.mxu0
      %v7033 = vadd.f32 %v6105, %v7032
      %v7034 = vpop.f32.mrf.mxu0
      %7035 = vmatprep.mubr.f32.mxu0 0.0
      %7036 = vmatmul.mubr.f32.gmra.mxu0 %v6394
      %v7037 = vpop.f32.mrf.mxu0
      %v7038 = vadd.f32 %v6105, %v7037
      %v7039 = vpop.f32.mrf.mxu0
      %7040 = vmatprep.mubr.f32.mxu0 0.0
      %7041 = vmatmul.mubr.f32.gmra.mxu0 %v6397
      %v7042 = vpop.f32.mrf.mxu0
      %v7043 = vadd.f32 %v6105, %v7042
      %v7044 = vpop.f32.mrf.mxu0
      %7045 = vmatprep.mubr.f32.mxu0 0.0
      %7046 = vmatmul.mubr.f32.gmra.mxu0 %v6400
      %v7047 = vpop.f32.mrf.mxu0
      %v7048 = vadd.f32 %v6105, %v7047
      %v7049 = vpop.f32.mrf.mxu0
      %7050 = vmatprep.mubr.f32.mxu0 0.0
      %7051 = vmatmul.mubr.f32.gmra.mxu0 %v6403
      %v7052 = vpop.f32.mrf.mxu0
      %v7053 = vadd.f32 %v6105, %v7052
      %v7054 = vpop.f32.mrf.mxu0
      %7055 = vmatprep.mubr.f32.mxu0 0.0
      %7056 = vmatmul.mubr.f32.gmra.mxu0 %v6406
      %v7057 = vpop.f32.mrf.mxu0
      %v7058 = vadd.f32 %v6105, %v7057
      %v7059 = vpop.f32.mrf.mxu0
      %7060 = vmatprep.mubr.f32.mxu0 0.0
      %7061 = vmatmul.mubr.f32.gmra.mxu0 %v6409
      %v7062 = vpop.f32.mrf.mxu0
      %v7063 = vadd.f32 %v6105, %v7062
      %v7064 = vpop.f32.mrf.mxu0
      %7065 = vmatprep.mubr.f32.mxu0 0.0
      %7066 = vmatmul.mubr.f32.gmra.mxu0 %v6412
      %v7067 = vpop.f32.mrf.mxu0
      %v7068 = vadd.f32 %v6105, %v7067
      %v7069 = vpop.f32.mrf.mxu0
      %7070 = vmatprep.mubr.f32.mxu0 0.0
      %7071 = vmatmul.mubr.f32.gmra.mxu0 %v6415
      %v7072 = vpop.f32.mrf.mxu0
      %v7073 = vadd.f32 %v6105, %v7072
      %v7074 = vpop.f32.mrf.mxu0
      %7075 = vmatprep.mubr.f32.mxu0 0.0
      %7076 = vmatmul.mubr.f32.gmra.mxu0 %v6418
      %v7077 = vpop.f32.mrf.mxu0
      %v7078 = vadd.f32 %v6105, %v7077
      %v7079 = vpop.f32.mrf.mxu0
      %7080 = vmatprep.mubr.f32.mxu0 0.0
      %7081 = vmatmul.mubr.f32.gmra.mxu0 %v6421
      %v7082 = vpop.f32.mrf.mxu0
      %v7083 = vadd.f32 %v6105, %v7082
      %v7084 = vpop.f32.mrf.mxu0
      %7085 = vmatprep.mubr.f32.mxu0 0.0
      %7086 = vmatmul.mubr.f32.gmra.mxu0 %v6424
      %v7087 = vpop.f32.mrf.mxu0
      %v7088 = vadd.f32 %v6105, %v7087
      %v7089 = vpop.f32.mrf.mxu0
      %7090 = vmatprep.mubr.f32.mxu0 0.0
      %7091 = vmatmul.mubr.f32.gmra.mxu0 %v6427
      %v7092 = vpop.f32.mrf.mxu0
      %v7093 = vadd.f32 %v6105, %v7092
      %v7094 = vpop.f32.mrf.mxu0
      %7095 = vmatprep.mubr.f32.mxu0 0.0
      %7096 = vmatmul.mubr.f32.gmra.mxu0 %v6430
      %v7097 = vpop.f32.mrf.mxu0
      %v7098 = vadd.f32 %v6105, %v7097
      %v7099 = vpop.f32.mrf.mxu0
      %7100 = vmatprep.mubr.f32.mxu0 0.0
      %7101 = vmatmul.mubr.f32.gmra.mxu0 %v6433
      %v7102 = vpop.f32.mrf.mxu0
      %v7103 = vadd.f32 %v6105, %v7102
      %v7104 = vpop.f32.mrf.mxu0
      %7105 = vmatprep.mubr.f32.mxu0 0.0
      %7106 = vmatmul.mubr.f32.gmra.mxu0 %v6436
      %v7107 = vpop.f32.mrf.mxu0
      %v7108 = vadd.f32 %v6105, %v7107
      %v7109 = vpop.f32.mrf.mxu0
      %7110 = vmatprep.mubr.f32.mxu0 0.0
      %7111 = vmatmul.mubr.f32.gmra.mxu0 %v6439
      %v7112 = vpop.f32.mrf.mxu0
      %v7113 = vadd.f32 %v6105, %v7112
      %v7114 = vpop.f32.mrf.mxu0
      %7115 = vmatprep.mubr.f32.mxu0 0.0
      %7116 = vmatmul.mubr.f32.gmra.mxu0 %v6442
      %v7117 = vpop.f32.mrf.mxu0
      %v7118 = vadd.f32 %v6105, %v7117
      %v7119 = vpop.f32.mrf.mxu0
      %7120 = vmatprep.mubr.f32.mxu0 0.0
      %7121 = vmatmul.mubr.f32.gmra.mxu0 %v6445
      %v7122 = vpop.f32.mrf.mxu0
      %v7123 = vadd.f32 %v6105, %v7122
      %v7124 = vpop.f32.mrf.mxu0
      %7125 = vmatprep.mubr.f32.mxu0 0.0
      %7126 = vmatmul.mubr.f32.gmra.mxu0 %v6448
      %v7127 = vpop.f32.mrf.mxu0
      %v7128 = vadd.f32 %v6105, %v7127
      %v7129 = vpop.f32.mrf.mxu0
      %7130 = vmatprep.mubr.f32.mxu0 0.0
      %7131 = vmatmul.mubr.f32.gmra.mxu0 %v6451
      %v7132 = vpop.f32.mrf.mxu0
      %v7133 = vadd.f32 %v6105, %v7132
      %v7134 = vpop.f32.mrf.mxu0
      %7135 = vmatprep.mubr.f32.mxu0 0.0
      %7136 = vmatmul.mubr.f32.gmra.mxu0 %v6454
      %v7137 = vpop.f32.mrf.mxu0
      %v7138 = vadd.f32 %v6105, %v7137
      %v7139 = vpop.f32.mrf.mxu0
      %7140 = vmatprep.mubr.f32.mxu0 0.0
      %7141 = vmatmul.mubr.f32.gmra.mxu0 %v6457
      %v7142 = vpop.f32.mrf.mxu0
      %v7143 = vadd.f32 %v6105, %v7142
      %v7144 = vpop.f32.mrf.mxu0
      %7145 = vmatprep.mubr.f32.mxu0 0.0
      %7146 = vmatmul.mubr.f32.gmra.mxu0 %v6460
      %v7147 = vpop.f32.mrf.mxu0
      %v7148 = vadd.f32 %v6105, %v7147
      %v7149 = vpop.f32.mrf.mxu0
      %7150 = vmatprep.mubr.f32.mxu0 0.0
      %7151 = vmatmul.mubr.f32.gmra.mxu0 %v6463
      %v7152 = vpop.f32.mrf.mxu0
      %v7153 = vadd.f32 %v6105, %v7152
      %v7154 = vpop.f32.mrf.mxu0
      %7155 = vmatprep.mubr.f32.mxu0 0.0
      %7156 = vmatmul.mubr.f32.gmra.mxu0 %v6466
      %v7157 = vpop.f32.mrf.mxu0
      %v7158 = vadd.f32 %v6105, %v7157
      %v7159 = vpop.f32.mrf.mxu0
      %7160 = vmatprep.mubr.f32.mxu0 0.0
      %7161 = vmatmul.mubr.f32.gmra.mxu0 %v6469
      %v7162 = vpop.f32.mrf.mxu0
      %v7163 = vadd.f32 %v6105, %v7162
      %v7164 = vpop.f32.mrf.mxu0
      %7165 = vmatprep.mubr.f32.mxu0 0.0
      %7166 = vmatmul.mubr.f32.gmra.mxu0 %v6472
      %v7167 = vpop.f32.mrf.mxu0
      %v7168 = vadd.f32 %v6105, %v7167
      %v7169 = vpop.f32.mrf.mxu0
      %7170 = vmatprep.mubr.f32.mxu0 0.0
      %7171 = vmatmul.mubr.f32.gmra.mxu0 %v6475
      %v7172 = vpop.f32.mrf.mxu0
      %v7173 = vadd.f32 %v6105, %v7172
      %v7174 = vpop.f32.mrf.mxu0
      %7175 = vmatprep.mubr.f32.mxu0 0.0
      %7176 = vmatmul.mubr.f32.gmra.mxu0 %v6478
      %v7177 = vpop.f32.mrf.mxu0
      %v7178 = vadd.f32 %v6105, %v7177
      %v7179 = vpop.f32.mrf.mxu0
      %7180 = vmatprep.mubr.f32.mxu0 0.0
      %7181 = vmatmul.mubr.f32.gmra.mxu0 %v6481
      %v7182 = vpop.f32.mrf.mxu0
      %v7183 = vadd.f32 %v6105, %v7182
      %v7184 = vpop.f32.mrf.mxu0
      %7185 = vmatprep.mubr.f32.mxu0 0.0
      %7186 = vmatmul.mubr.f32.gmra.mxu0 %v6484
      %v7187 = vpop.f32.mrf.mxu0
      %v7188 = vadd.f32 %v6105, %v7187
      %v7189 = vpop.f32.mrf.mxu0
      %7190 = vmatprep.mubr.f32.mxu0 0.0
      %7191 = vmatmul.mubr.f32.gmra.mxu0 %v6487
      %v7192 = vpop.f32.mrf.mxu0
      %v7193 = vadd.f32 %v6105, %v7192
      %v7194 = vpop.f32.mrf.mxu0
      %7195 = vmatprep.mubr.f32.mxu0 0.0
      %7196 = vmatmul.mubr.f32.gmra.mxu0 %v6490
      %v7197 = vpop.f32.mrf.mxu0
      %v7198 = vadd.f32 %v6105, %v7197
      %v7199 = vpop.f32.mrf.mxu0
      %7200 = vdwg.mxu0
      %v7201 = vmul.f32 %v6563, %v6563
      %v7202 = vmul.f32 %v6568, %v6568
      %v7203 = vmul.f32 %v6573, %v6573
      %v7204 = vmul.f32 %v6578, %v6578
      %v7205 = vmul.f32 %v6583, %v6583
      %v7206 = vmul.f32 %v6588, %v6588
      %v7207 = vmul.f32 %v6593, %v6593
      %v7208 = vmul.f32 %v6598, %v6598
      %v7209 = vmul.f32 %v6603, %v6603
      %v7210 = vmul.f32 %v6608, %v6608
      %v7211 = vmul.f32 %v6613, %v6613
      %v7212 = vmul.f32 %v6618, %v6618
      %v7213 = vmul.f32 %v6623, %v6623
      %v7214 = vmul.f32 %v6628, %v6628
      %v7215 = vmul.f32 %v6633, %v6633
      %v7216 = vmul.f32 %v6638, %v6638
      %v7217 = vmul.f32 %v6643, %v6643
      %v7218 = vmul.f32 %v6648, %v6648
      %v7219 = vmul.f32 %v6653, %v6653
      %v7220 = vmul.f32 %v6658, %v6658
      %v7221 = vmul.f32 %v6663, %v6663
      %v7222 = vmul.f32 %v6668, %v6668
      %v7223 = vmul.f32 %v6673, %v6673
      %v7224 = vmul.f32 %v6678, %v6678
      %v7225 = vmul.f32 %v6683, %v6683
      %v7226 = vmul.f32 %v6688, %v6688
      %v7227 = vmul.f32 %v6693, %v6693
      %v7228 = vmul.f32 %v6698, %v6698
      %v7229 = vmul.f32 %v6703, %v6703
      %v7230 = vmul.f32 %v6708, %v6708
      %v7231 = vmul.f32 %v6713, %v6713
      %v7232 = vmul.f32 %v6718, %v6718
      %v7233 = vmul.f32 %v6723, %v6723
      %v7234 = vmul.f32 %v6728, %v6728
      %v7235 = vmul.f32 %v6733, %v6733
      %v7236 = vmul.f32 %v6738, %v6738
      %v7237 = vmul.f32 %v6743, %v6743
      %v7238 = vmul.f32 %v6748, %v6748
      %v7239 = vmul.f32 %v6753, %v6753
      %v7240 = vmul.f32 %v6758, %v6758
      %v7241 = vmul.f32 %v6763, %v6763
      %v7242 = vmul.f32 %v6768, %v6768
      %v7243 = vmul.f32 %v6773, %v6773
      %v7244 = vmul.f32 %v6778, %v6778
      %v7245 = vmul.f32 %v6783, %v6783
      %v7246 = vmul.f32 %v6788, %v6788
      %v7247 = vmul.f32 %v6793, %v6793
      %v7248 = vmul.f32 %v6798, %v6798
      %v7249 = vmul.f32 %v6803, %v6803
      %v7250 = vmul.f32 %v6808, %v6808
      %v7251 = vmul.f32 %v6813, %v6813
      %v7252 = vmul.f32 %v6818, %v6818
      %v7253 = vmul.f32 %v6823, %v6823
      %v7254 = vmul.f32 %v6828, %v6828
      %v7255 = vmul.f32 %v6833, %v6833
      %v7256 = vmul.f32 %v6838, %v6838
      %v7257 = vmul.f32 %v6843, %v6843
      %v7258 = vmul.f32 %v6848, %v6848
      %v7259 = vmul.f32 %v6853, %v6853
      %v7260 = vmul.f32 %v6858, %v6858
      %v7261 = vmul.f32 %v6863, %v6863
      %v7262 = vmul.f32 %v6868, %v6868
      %v7263 = vmul.f32 %v6873, %v6873
      %v7264 = vmul.f32 %v6878, %v6878
      %v7265 = vmul.f32 %v6883, %v6883
      %v7266 = vmul.f32 %v6888, %v6888
      %v7267 = vmul.f32 %v6893, %v6893
      %v7268 = vmul.f32 %v6898, %v6898
      %v7269 = vmul.f32 %v6903, %v6903
      %v7270 = vmul.f32 %v6908, %v6908
      %v7271 = vmul.f32 %v6913, %v6913
      %v7272 = vmul.f32 %v6918, %v6918
      %v7273 = vmul.f32 %v6923, %v6923
      %v7274 = vmul.f32 %v6928, %v6928
      %v7275 = vmul.f32 %v6933, %v6933
      %v7276 = vmul.f32 %v6938, %v6938
      %v7277 = vmul.f32 %v6943, %v6943
      %v7278 = vmul.f32 %v6948, %v6948
      %v7279 = vmul.f32 %v6953, %v6953
      %v7280 = vmul.f32 %v6958, %v6958
      %v7281 = vmul.f32 %v6963, %v6963
      %v7282 = vmul.f32 %v6968, %v6968
      %v7283 = vmul.f32 %v6973, %v6973
      %v7284 = vmul.f32 %v6978, %v6978
      %v7285 = vmul.f32 %v6983, %v6983
      %v7286 = vmul.f32 %v6988, %v6988
      %v7287 = vmul.f32 %v6993, %v6993
      %v7288 = vmul.f32 %v6998, %v6998
      %v7289 = vmul.f32 %v7003, %v7003
      %v7290 = vmul.f32 %v7008, %v7008
      %v7291 = vmul.f32 %v7013, %v7013
      %v7292 = vmul.f32 %v7018, %v7018
      %v7293 = vmul.f32 %v7023, %v7023
      %v7294 = vmul.f32 %v7028, %v7028
      %v7295 = vmul.f32 %v7033, %v7033
      %v7296 = vmul.f32 %v7038, %v7038
      %v7297 = vmul.f32 %v7043, %v7043
      %v7298 = vmul.f32 %v7048, %v7048
      %v7299 = vmul.f32 %v7053, %v7053
      %v7300 = vmul.f32 %v7058, %v7058
      %v7301 = vmul.f32 %v7063, %v7063
      %v7302 = vmul.f32 %v7068, %v7068
      %v7303 = vmul.f32 %v7073, %v7073
      %v7304 = vmul.f32 %v7078, %v7078
      %v7305 = vmul.f32 %v7083, %v7083
      %v7306 = vmul.f32 %v7088, %v7088
      %v7307 = vmul.f32 %v7093, %v7093
      %v7308 = vmul.f32 %v7098, %v7098
      %v7309 = vmul.f32 %v7103, %v7103
      %v7310 = vmul.f32 %v7108, %v7108
      %v7311 = vmul.f32 %v7113, %v7113
      %v7312 = vmul.f32 %v7118, %v7118
      %v7313 = vmul.f32 %v7123, %v7123
      %v7314 = vmul.f32 %v7128, %v7128
      %v7315 = vmul.f32 %v7133, %v7133
      %v7316 = vmul.f32 %v7138, %v7138
      %v7317 = vmul.f32 %v7143, %v7143
      %v7318 = vmul.f32 %v7148, %v7148
      %v7319 = vmul.f32 %v7153, %v7153
      %v7320 = vmul.f32 %v7158, %v7158
      %v7321 = vmul.f32 %v7163, %v7163
      %v7322 = vmul.f32 %v7168, %v7168
      %v7323 = vmul.f32 %v7173, %v7173
      %v7324 = vmul.f32 %v7178, %v7178
      %v7325 = vmul.f32 %v7183, %v7183
      %v7326 = vmul.f32 %v7188, %v7188
      %v7327 = vmul.f32 %v7193, %v7193
      %v7328 = vmul.f32 %v7198, %v7198
      %v7329 = vld [vmem:[%s3] sm:$0xf]
      %v7330 = vld [vmem:[%s4] sm:$0x1]
      %v7332 = vlaneseq
      %v7333 = vshrl.u32 %v7332, 7
      %v7334 = vsub.s32 0, %v7333
      %v7335 = vrot.slane %v7330, %v7334
      %v7338 = vsel %vm737, %v7201, 0
      %v7341 = vsel %vm737, %v7202, 0
      %v7344 = vsel %vm737, %v7203, 0
      %v7347 = vsel %vm737, %v7204, 0
      %v7350 = vsel %vm737, %v7205, 0
      %v7353 = vsel %vm737, %v7206, 0
      %v7356 = vsel %vm737, %v7207, 0
      %v7359 = vsel %vm737, %v7208, 0
      %v7362 = vsel %vm737, %v7209, 0
      %v7365 = vsel %vm737, %v7210, 0
      %v7368 = vsel %vm737, %v7211, 0
      %v7371 = vsel %vm737, %v7212, 0
      %v7374 = vsel %vm737, %v7213, 0
      %v7377 = vsel %vm737, %v7214, 0
      %v7380 = vsel %vm737, %v7215, 0
      %v7383 = vsel %vm737, %v7216, 0
      %v7386 = vsel %vm737, %v7217, 0
      %v7389 = vsel %vm737, %v7218, 0
      %v7392 = vsel %vm737, %v7219, 0
      %v7395 = vsel %vm737, %v7220, 0
      %v7398 = vsel %vm737, %v7221, 0
      %v7401 = vsel %vm737, %v7222, 0
      %v7404 = vsel %vm737, %v7223, 0
      %v7407 = vsel %vm737, %v7224, 0
      %v7410 = vsel %vm737, %v7225, 0
      %v7413 = vsel %vm737, %v7226, 0
      %v7416 = vsel %vm737, %v7227, 0
      %v7419 = vsel %vm737, %v7228, 0
      %v7422 = vsel %vm737, %v7229, 0
      %v7425 = vsel %vm737, %v7230, 0
      %v7428 = vsel %vm737, %v7231, 0
      %v7431 = vsel %vm737, %v7232, 0
      %v7434 = vsel %vm737, %v7233, 0
      %v7437 = vsel %vm737, %v7234, 0
      %v7440 = vsel %vm737, %v7235, 0
      %v7443 = vsel %vm737, %v7236, 0
      %v7446 = vsel %vm737, %v7237, 0
      %v7449 = vsel %vm737, %v7238, 0
      %v7452 = vsel %vm737, %v7239, 0
      %v7455 = vsel %vm737, %v7240, 0
      %v7458 = vsel %vm737, %v7241, 0
      %v7461 = vsel %vm737, %v7242, 0
      %v7464 = vsel %vm737, %v7243, 0
      %v7467 = vsel %vm737, %v7244, 0
      %v7470 = vsel %vm737, %v7245, 0
      %v7473 = vsel %vm737, %v7246, 0
      %v7476 = vsel %vm737, %v7247, 0
      %v7479 = vsel %vm737, %v7248, 0
      %v7482 = vsel %vm737, %v7249, 0
      %v7485 = vsel %vm737, %v7250, 0
      %v7488 = vsel %vm737, %v7251, 0
      %v7491 = vsel %vm737, %v7252, 0
      %v7494 = vsel %vm737, %v7253, 0
      %v7497 = vsel %vm737, %v7254, 0
      %v7500 = vsel %vm737, %v7255, 0
      %v7503 = vsel %vm737, %v7256, 0
      %v7506 = vsel %vm737, %v7257, 0
      %v7509 = vsel %vm737, %v7258, 0
      %v7512 = vsel %vm737, %v7259, 0
      %v7515 = vsel %vm737, %v7260, 0
      %v7518 = vsel %vm737, %v7261, 0
      %v7521 = vsel %vm737, %v7262, 0
      %v7524 = vsel %vm737, %v7263, 0
      %v7527 = vsel %vm737, %v7264, 0
      %v7530 = vsel %vm737, %v7265, 0
      %v7533 = vsel %vm737, %v7266, 0
      %v7536 = vsel %vm737, %v7267, 0
      %v7539 = vsel %vm737, %v7268, 0
      %v7542 = vsel %vm737, %v7269, 0
      %v7545 = vsel %vm737, %v7270, 0
      %v7548 = vsel %vm737, %v7271, 0
      %v7551 = vsel %vm737, %v7272, 0
      %v7554 = vsel %vm737, %v7273, 0
      %v7557 = vsel %vm737, %v7274, 0
      %v7560 = vsel %vm737, %v7275, 0
      %v7563 = vsel %vm737, %v7276, 0
      %v7566 = vsel %vm737, %v7277, 0
      %v7569 = vsel %vm737, %v7278, 0
      %v7572 = vsel %vm737, %v7279, 0
      %v7575 = vsel %vm737, %v7280, 0
      %v7578 = vsel %vm737, %v7281, 0
      %v7581 = vsel %vm737, %v7282, 0
      %v7584 = vsel %vm737, %v7283, 0
      %v7587 = vsel %vm737, %v7284, 0
      %v7590 = vsel %vm737, %v7285, 0
      %v7593 = vsel %vm737, %v7286, 0
      %v7596 = vsel %vm737, %v7287, 0
      %v7599 = vsel %vm737, %v7288, 0
      %v7602 = vsel %vm737, %v7289, 0
      %v7605 = vsel %vm737, %v7290, 0
      %v7608 = vsel %vm737, %v7291, 0
      %v7611 = vsel %vm737, %v7292, 0
      %v7614 = vsel %vm737, %v7293, 0
      %v7617 = vsel %vm737, %v7294, 0
      %v7620 = vsel %vm737, %v7295, 0
      %v7623 = vsel %vm737, %v7296, 0
      %v7626 = vsel %vm737, %v7297, 0
      %v7629 = vsel %vm737, %v7298, 0
      %v7632 = vsel %vm737, %v7299, 0
      %v7635 = vsel %vm737, %v7300, 0
      %v7638 = vsel %vm737, %v7301, 0
      %v7641 = vsel %vm737, %v7302, 0
      %v7644 = vsel %vm737, %v7303, 0
      %v7647 = vsel %vm737, %v7304, 0
      %v7650 = vsel %vm737, %v7305, 0
      %v7653 = vsel %vm737, %v7306, 0
      %v7656 = vsel %vm737, %v7307, 0
      %v7659 = vsel %vm737, %v7308, 0
      %v7662 = vsel %vm737, %v7309, 0
      %v7665 = vsel %vm737, %v7310, 0
      %v7668 = vsel %vm737, %v7311, 0
      %v7671 = vsel %vm737, %v7312, 0
      %v7674 = vsel %vm737, %v7313, 0
      %v7677 = vsel %vm737, %v7314, 0
      %v7680 = vsel %vm737, %v7315, 0
      %v7683 = vsel %vm737, %v7316, 0
      %v7686 = vsel %vm737, %v7317, 0
      %v7689 = vsel %vm737, %v7318, 0
      %v7692 = vsel %vm737, %v7319, 0
      %v7695 = vsel %vm737, %v7320, 0
      %v7698 = vsel %vm737, %v7321, 0
      %v7701 = vsel %vm737, %v7322, 0
      %v7704 = vsel %vm737, %v7323, 0
      %v7707 = vsel %vm737, %v7324, 0
      %v7710 = vsel %vm737, %v7325, 0
      %v7713 = vsel %vm737, %v7326, 0
      %v7716 = vsel %vm737, %v7327, 0
      %v7719 = vsel %vm737, %v7328, 0
      %v7722 = vsel %vm6492, %v7329, 0
      %7724 = vmatprep.subr.mxu0 0.0
      %7725 = vmatpush1.msra.mxu0 0.0
      %7726 = vmatprep.subr.mxu0 0.0
      %7727 = vmatpush1.msra.mxu0 0.0
      %7728 = vmatprep.subr.mxu0 0.0
      %7729 = vmatpush1.msra.mxu0 0.0
      %7730 = vmatprep.subr.mxu0 0.0
      %7731 = vmatpush1.msra.mxu0 0.0
      %7732 = vmatprep.subr.mxu0 0.0
      %7733 = vmatpush1.msra.mxu0 0.0
      %7734 = vmatprep.subr.mxu0 0.0
      %7735 = vmatpush1.msra.mxu0 0.0
      %7736 = vmatprep.subr.mxu0 0.0
      %7737 = vmatpush1.msra.mxu0 0.0
      %7738 = vmatprep.subr.mxu0 0.0
      %7739 = vmatpush1.msra.mxu0 0.0
      %7740 = vmatprep.subr.mxu0 0.0
      %7741 = vmatpush1.msra.mxu0 0.0
      %7742 = vmatprep.subr.mxu0 0.0
      %7743 = vmatpush1.msra.mxu0 0.0
      %7744 = vmatprep.subr.mxu0 0.0
      %7745 = vmatpush1.msra.mxu0 0.0
      %7746 = vmatprep.subr.mxu0 0.0
      %7747 = vmatpush1.msra.mxu0 0.0
      %7748 = vmatprep.subr.mxu0 0.0
      %7749 = vmatpush1.msra.mxu0 0.0
      %7750 = vmatprep.subr.mxu0 0.0
      %7751 = vmatpush1.msra.mxu0 0.0
      %7752 = vmatprep.subr.mxu0 0.0
      %7753 = vmatpush1.msra.mxu0 0.0
      %7754 = vmatprep.subr.mxu0 0.0
      %7755 = vmatpush1.msra.mxu0 %v7722
      %7756 = vmatprep.subr.mxu0 0.0
      %7757 = vmatpush2.msra.mxu0 0.0
      %7758 = vmatprep.subr.mxu0 0.0
      %7759 = vmatpush2.msra.mxu0 0.0
      %7760 = vmatprep.subr.mxu0 0.0
      %7761 = vmatpush2.msra.mxu0 0.0
      %7762 = vmatprep.subr.mxu0 0.0
      %7763 = vmatpush2.msra.mxu0 0.0
      %7764 = vmatprep.subr.mxu0 0.0
      %7765 = vmatpush2.msra.mxu0 0.0
      %7766 = vmatprep.subr.mxu0 0.0
      %7767 = vmatpush2.msra.mxu0 0.0
      %7768 = vmatprep.subr.mxu0 0.0
      %7769 = vmatpush2.msra.mxu0 0.0
      %7770 = vmatprep.subr.mxu0 0.0
      %7771 = vmatpush2.msra.mxu0 0.0
      %7772 = vmatprep.subr.mxu0 0.0
      %7773 = vmatpush2.msra.mxu0 0.0
      %7774 = vmatprep.subr.mxu0 0.0
      %7775 = vmatpush2.msra.mxu0 0.0
      %7776 = vmatprep.subr.mxu0 0.0
      %7777 = vmatpush2.msra.mxu0 0.0
      %7778 = vmatprep.subr.mxu0 0.0
      %7779 = vmatpush2.msra.mxu0 0.0
      %7780 = vmatprep.subr.mxu0 0.0
      %7781 = vmatpush2.msra.mxu0 0.0
      %7782 = vmatprep.subr.mxu0 0.0
      %7783 = vmatpush2.msra.mxu0 0.0
      %7784 = vmatprep.subr.mxu0 0.0
      %7785 = vmatpush2.msra.mxu0 0.0
      %7786 = vmatprep.subr.mxu0 0.0
      %7787 = vmatpush2.msra.mxu0 0.0
      %7788 = vmatprep.mubr.f32.mxu0 0.0
      %7789 = vmatmul.mubr.f32.gmra.mxu0 %v7338
      %v7790 = vpop.f32.mrf.mxu0
      %v7791 = vadd.f32 %v7335, %v7790
      %v7792 = vpop.f32.mrf.mxu0
      %7793 = vmatprep.mubr.f32.mxu0 0.0
      %7794 = vmatmul.mubr.f32.gmra.mxu0 %v7341
      %v7795 = vpop.f32.mrf.mxu0
      %v7796 = vadd.f32 %v7335, %v7795
      %v7797 = vpop.f32.mrf.mxu0
      %7798 = vmatprep.mubr.f32.mxu0 0.0
      %7799 = vmatmul.mubr.f32.gmra.mxu0 %v7344
      %v7800 = vpop.f32.mrf.mxu0
      %v7801 = vadd.f32 %v7335, %v7800
      %v7802 = vpop.f32.mrf.mxu0
      %7803 = vmatprep.mubr.f32.mxu0 0.0
      %7804 = vmatmul.mubr.f32.gmra.mxu0 %v7347
      %v7805 = vpop.f32.mrf.mxu0
      %v7806 = vadd.f32 %v7335, %v7805
      %v7807 = vpop.f32.mrf.mxu0
      %7808 = vmatprep.mubr.f32.mxu0 0.0
      %7809 = vmatmul.mubr.f32.gmra.mxu0 %v7350
      %v7810 = vpop.f32.mrf.mxu0
      %v7811 = vadd.f32 %v7335, %v7810
      %v7812 = vpop.f32.mrf.mxu0
      %7813 = vmatprep.mubr.f32.mxu0 0.0
      %7814 = vmatmul.mubr.f32.gmra.mxu0 %v7353
      %v7815 = vpop.f32.mrf.mxu0
      %v7816 = vadd.f32 %v7335, %v7815
      %v7817 = vpop.f32.mrf.mxu0
      %7818 = vmatprep.mubr.f32.mxu0 0.0
      %7819 = vmatmul.mubr.f32.gmra.mxu0 %v7356
      %v7820 = vpop.f32.mrf.mxu0
      %v7821 = vadd.f32 %v7335, %v7820
      %v7822 = vpop.f32.mrf.mxu0
      %7823 = vmatprep.mubr.f32.mxu0 0.0
      %7824 = vmatmul.mubr.f32.gmra.mxu0 %v7359
      %v7825 = vpop.f32.mrf.mxu0
      %v7826 = vadd.f32 %v7335, %v7825
      %v7827 = vpop.f32.mrf.mxu0
      %7828 = vmatprep.mubr.f32.mxu0 0.0
      %7829 = vmatmul.mubr.f32.gmra.mxu0 %v7362
      %v7830 = vpop.f32.mrf.mxu0
      %v7831 = vadd.f32 %v7335, %v7830
      %v7832 = vpop.f32.mrf.mxu0
      %7833 = vmatprep.mubr.f32.mxu0 0.0
      %7834 = vmatmul.mubr.f32.gmra.mxu0 %v7365
      %v7835 = vpop.f32.mrf.mxu0
      %v7836 = vadd.f32 %v7335, %v7835
      %v7837 = vpop.f32.mrf.mxu0
      %7838 = vmatprep.mubr.f32.mxu0 0.0
      %7839 = vmatmul.mubr.f32.gmra.mxu0 %v7368
      %v7840 = vpop.f32.mrf.mxu0
      %v7841 = vadd.f32 %v7335, %v7840
      %v7842 = vpop.f32.mrf.mxu0
      %7843 = vmatprep.mubr.f32.mxu0 0.0
      %7844 = vmatmul.mubr.f32.gmra.mxu0 %v7371
      %v7845 = vpop.f32.mrf.mxu0
      %v7846 = vadd.f32 %v7335, %v7845
      %v7847 = vpop.f32.mrf.mxu0
      %7848 = vmatprep.mubr.f32.mxu0 0.0
      %7849 = vmatmul.mubr.f32.gmra.mxu0 %v7374
      %v7850 = vpop.f32.mrf.mxu0
      %v7851 = vadd.f32 %v7335, %v7850
      %v7852 = vpop.f32.mrf.mxu0
      %7853 = vmatprep.mubr.f32.mxu0 0.0
      %7854 = vmatmul.mubr.f32.gmra.mxu0 %v7377
      %v7855 = vpop.f32.mrf.mxu0
      %v7856 = vadd.f32 %v7335, %v7855
      %v7857 = vpop.f32.mrf.mxu0
      %7858 = vmatprep.mubr.f32.mxu0 0.0
      %7859 = vmatmul.mubr.f32.gmra.mxu0 %v7380
      %v7860 = vpop.f32.mrf.mxu0
      %v7861 = vadd.f32 %v7335, %v7860
      %v7862 = vpop.f32.mrf.mxu0
      %7863 = vmatprep.mubr.f32.mxu0 0.0
      %7864 = vmatmul.mubr.f32.gmra.mxu0 %v7383
      %v7865 = vpop.f32.mrf.mxu0
      %v7866 = vadd.f32 %v7335, %v7865
      %v7867 = vpop.f32.mrf.mxu0
      %7868 = vmatprep.mubr.f32.mxu0 0.0
      %7869 = vmatmul.mubr.f32.gmra.mxu0 %v7386
      %v7870 = vpop.f32.mrf.mxu0
      %v7871 = vadd.f32 %v7335, %v7870
      %v7872 = vpop.f32.mrf.mxu0
      %7873 = vmatprep.mubr.f32.mxu0 0.0
      %7874 = vmatmul.mubr.f32.gmra.mxu0 %v7389
      %v7875 = vpop.f32.mrf.mxu0
      %v7876 = vadd.f32 %v7335, %v7875
      %v7877 = vpop.f32.mrf.mxu0
      %7878 = vmatprep.mubr.f32.mxu0 0.0
      %7879 = vmatmul.mubr.f32.gmra.mxu0 %v7392
      %v7880 = vpop.f32.mrf.mxu0
      %v7881 = vadd.f32 %v7335, %v7880
      %v7882 = vpop.f32.mrf.mxu0
      %7883 = vmatprep.mubr.f32.mxu0 0.0
      %7884 = vmatmul.mubr.f32.gmra.mxu0 %v7395
      %v7885 = vpop.f32.mrf.mxu0
      %v7886 = vadd.f32 %v7335, %v7885
      %v7887 = vpop.f32.mrf.mxu0
      %7888 = vmatprep.mubr.f32.mxu0 0.0
      %7889 = vmatmul.mubr.f32.gmra.mxu0 %v7398
      %v7890 = vpop.f32.mrf.mxu0
      %v7891 = vadd.f32 %v7335, %v7890
      %v7892 = vpop.f32.mrf.mxu0
      %7893 = vmatprep.mubr.f32.mxu0 0.0
      %7894 = vmatmul.mubr.f32.gmra.mxu0 %v7401
      %v7895 = vpop.f32.mrf.mxu0
      %v7896 = vadd.f32 %v7335, %v7895
      %v7897 = vpop.f32.mrf.mxu0
      %7898 = vmatprep.mubr.f32.mxu0 0.0
      %7899 = vmatmul.mubr.f32.gmra.mxu0 %v7404
      %v7900 = vpop.f32.mrf.mxu0
      %v7901 = vadd.f32 %v7335, %v7900
      %v7902 = vpop.f32.mrf.mxu0
      %7903 = vmatprep.mubr.f32.mxu0 0.0
      %7904 = vmatmul.mubr.f32.gmra.mxu0 %v7407
      %v7905 = vpop.f32.mrf.mxu0
      %v7906 = vadd.f32 %v7335, %v7905
      %v7907 = vpop.f32.mrf.mxu0
      %7908 = vmatprep.mubr.f32.mxu0 0.0
      %7909 = vmatmul.mubr.f32.gmra.mxu0 %v7410
      %v7910 = vpop.f32.mrf.mxu0
      %v7911 = vadd.f32 %v7335, %v7910
      %v7912 = vpop.f32.mrf.mxu0
      %7913 = vmatprep.mubr.f32.mxu0 0.0
      %7914 = vmatmul.mubr.f32.gmra.mxu0 %v7413
      %v7915 = vpop.f32.mrf.mxu0
      %v7916 = vadd.f32 %v7335, %v7915
      %v7917 = vpop.f32.mrf.mxu0
      %7918 = vmatprep.mubr.f32.mxu0 0.0
      %7919 = vmatmul.mubr.f32.gmra.mxu0 %v7416
      %v7920 = vpop.f32.mrf.mxu0
      %v7921 = vadd.f32 %v7335, %v7920
      %v7922 = vpop.f32.mrf.mxu0
      %7923 = vmatprep.mubr.f32.mxu0 0.0
      %7924 = vmatmul.mubr.f32.gmra.mxu0 %v7419
      %v7925 = vpop.f32.mrf.mxu0
      %v7926 = vadd.f32 %v7335, %v7925
      %v7927 = vpop.f32.mrf.mxu0
      %7928 = vmatprep.mubr.f32.mxu0 0.0
      %7929 = vmatmul.mubr.f32.gmra.mxu0 %v7422
      %v7930 = vpop.f32.mrf.mxu0
      %v7931 = vadd.f32 %v7335, %v7930
      %v7932 = vpop.f32.mrf.mxu0
      %7933 = vmatprep.mubr.f32.mxu0 0.0
      %7934 = vmatmul.mubr.f32.gmra.mxu0 %v7425
      %v7935 = vpop.f32.mrf.mxu0
      %v7936 = vadd.f32 %v7335, %v7935
      %v7937 = vpop.f32.mrf.mxu0
      %7938 = vmatprep.mubr.f32.mxu0 0.0
      %7939 = vmatmul.mubr.f32.gmra.mxu0 %v7428
      %v7940 = vpop.f32.mrf.mxu0
      %v7941 = vadd.f32 %v7335, %v7940
      %v7942 = vpop.f32.mrf.mxu0
      %7943 = vmatprep.mubr.f32.mxu0 0.0
      %7944 = vmatmul.mubr.f32.gmra.mxu0 %v7431
      %v7945 = vpop.f32.mrf.mxu0
      %v7946 = vadd.f32 %v7335, %v7945
      %v7947 = vpop.f32.mrf.mxu0
      %7948 = vmatprep.mubr.f32.mxu0 0.0
      %7949 = vmatmul.mubr.f32.gmra.mxu0 %v7434
      %v7950 = vpop.f32.mrf.mxu0
      %v7951 = vadd.f32 %v7335, %v7950
      %v7952 = vpop.f32.mrf.mxu0
      %7953 = vmatprep.mubr.f32.mxu0 0.0
      %7954 = vmatmul.mubr.f32.gmra.mxu0 %v7437
      %v7955 = vpop.f32.mrf.mxu0
      %v7956 = vadd.f32 %v7335, %v7955
      %v7957 = vpop.f32.mrf.mxu0
      %7958 = vmatprep.mubr.f32.mxu0 0.0
      %7959 = vmatmul.mubr.f32.gmra.mxu0 %v7440
      %v7960 = vpop.f32.mrf.mxu0
      %v7961 = vadd.f32 %v7335, %v7960
      %v7962 = vpop.f32.mrf.mxu0
      %7963 = vmatprep.mubr.f32.mxu0 0.0
      %7964 = vmatmul.mubr.f32.gmra.mxu0 %v7443
      %v7965 = vpop.f32.mrf.mxu0
      %v7966 = vadd.f32 %v7335, %v7965
      %v7967 = vpop.f32.mrf.mxu0
      %7968 = vmatprep.mubr.f32.mxu0 0.0
      %7969 = vmatmul.mubr.f32.gmra.mxu0 %v7446
      %v7970 = vpop.f32.mrf.mxu0
      %v7971 = vadd.f32 %v7335, %v7970
      %v7972 = vpop.f32.mrf.mxu0
      %7973 = vmatprep.mubr.f32.mxu0 0.0
      %7974 = vmatmul.mubr.f32.gmra.mxu0 %v7449
      %v7975 = vpop.f32.mrf.mxu0
      %v7976 = vadd.f32 %v7335, %v7975
      %v7977 = vpop.f32.mrf.mxu0
      %7978 = vmatprep.mubr.f32.mxu0 0.0
      %7979 = vmatmul.mubr.f32.gmra.mxu0 %v7452
      %v7980 = vpop.f32.mrf.mxu0
      %v7981 = vadd.f32 %v7335, %v7980
      %v7982 = vpop.f32.mrf.mxu0
      %7983 = vmatprep.mubr.f32.mxu0 0.0
      %7984 = vmatmul.mubr.f32.gmra.mxu0 %v7455
      %v7985 = vpop.f32.mrf.mxu0
      %v7986 = vadd.f32 %v7335, %v7985
      %v7987 = vpop.f32.mrf.mxu0
      %7988 = vmatprep.mubr.f32.mxu0 0.0
      %7989 = vmatmul.mubr.f32.gmra.mxu0 %v7458
      %v7990 = vpop.f32.mrf.mxu0
      %v7991 = vadd.f32 %v7335, %v7990
      %v7992 = vpop.f32.mrf.mxu0
      %7993 = vmatprep.mubr.f32.mxu0 0.0
      %7994 = vmatmul.mubr.f32.gmra.mxu0 %v7461
      %v7995 = vpop.f32.mrf.mxu0
      %v7996 = vadd.f32 %v7335, %v7995
      %v7997 = vpop.f32.mrf.mxu0
      %7998 = vmatprep.mubr.f32.mxu0 0.0
      %7999 = vmatmul.mubr.f32.gmra.mxu0 %v7464
      %v8000 = vpop.f32.mrf.mxu0
      %v8001 = vadd.f32 %v7335, %v8000
      %v8002 = vpop.f32.mrf.mxu0
      %8003 = vmatprep.mubr.f32.mxu0 0.0
      %8004 = vmatmul.mubr.f32.gmra.mxu0 %v7467
      %v8005 = vpop.f32.mrf.mxu0
      %v8006 = vadd.f32 %v7335, %v8005
      %v8007 = vpop.f32.mrf.mxu0
      %8008 = vmatprep.mubr.f32.mxu0 0.0
      %8009 = vmatmul.mubr.f32.gmra.mxu0 %v7470
      %v8010 = vpop.f32.mrf.mxu0
      %v8011 = vadd.f32 %v7335, %v8010
      %v8012 = vpop.f32.mrf.mxu0
      %8013 = vmatprep.mubr.f32.mxu0 0.0
      %8014 = vmatmul.mubr.f32.gmra.mxu0 %v7473
      %v8015 = vpop.f32.mrf.mxu0
      %v8016 = vadd.f32 %v7335, %v8015
      %v8017 = vpop.f32.mrf.mxu0
      %8018 = vmatprep.mubr.f32.mxu0 0.0
      %8019 = vmatmul.mubr.f32.gmra.mxu0 %v7476
      %v8020 = vpop.f32.mrf.mxu0
      %v8021 = vadd.f32 %v7335, %v8020
      %v8022 = vpop.f32.mrf.mxu0
      %8023 = vmatprep.mubr.f32.mxu0 0.0
      %8024 = vmatmul.mubr.f32.gmra.mxu0 %v7479
      %v8025 = vpop.f32.mrf.mxu0
      %v8026 = vadd.f32 %v7335, %v8025
      %v8027 = vpop.f32.mrf.mxu0
      %8028 = vmatprep.mubr.f32.mxu0 0.0
      %8029 = vmatmul.mubr.f32.gmra.mxu0 %v7482
      %v8030 = vpop.f32.mrf.mxu0
      %v8031 = vadd.f32 %v7335, %v8030
      %v8032 = vpop.f32.mrf.mxu0
      %8033 = vmatprep.mubr.f32.mxu0 0.0
      %8034 = vmatmul.mubr.f32.gmra.mxu0 %v7485
      %v8035 = vpop.f32.mrf.mxu0
      %v8036 = vadd.f32 %v7335, %v8035
      %v8037 = vpop.f32.mrf.mxu0
      %8038 = vmatprep.mubr.f32.mxu0 0.0
      %8039 = vmatmul.mubr.f32.gmra.mxu0 %v7488
      %v8040 = vpop.f32.mrf.mxu0
      %v8041 = vadd.f32 %v7335, %v8040
      %v8042 = vpop.f32.mrf.mxu0
      %8043 = vmatprep.mubr.f32.mxu0 0.0
      %8044 = vmatmul.mubr.f32.gmra.mxu0 %v7491
      %v8045 = vpop.f32.mrf.mxu0
      %v8046 = vadd.f32 %v7335, %v8045
      %v8047 = vpop.f32.mrf.mxu0
      %8048 = vmatprep.mubr.f32.mxu0 0.0
      %8049 = vmatmul.mubr.f32.gmra.mxu0 %v7494
      %v8050 = vpop.f32.mrf.mxu0
      %v8051 = vadd.f32 %v7335, %v8050
      %v8052 = vpop.f32.mrf.mxu0
      %8053 = vmatprep.mubr.f32.mxu0 0.0
      %8054 = vmatmul.mubr.f32.gmra.mxu0 %v7497
      %v8055 = vpop.f32.mrf.mxu0
      %v8056 = vadd.f32 %v7335, %v8055
      %v8057 = vpop.f32.mrf.mxu0
      %8058 = vmatprep.mubr.f32.mxu0 0.0
      %8059 = vmatmul.mubr.f32.gmra.mxu0 %v7500
      %v8060 = vpop.f32.mrf.mxu0
      %v8061 = vadd.f32 %v7335, %v8060
      %v8062 = vpop.f32.mrf.mxu0
      %8063 = vmatprep.mubr.f32.mxu0 0.0
      %8064 = vmatmul.mubr.f32.gmra.mxu0 %v7503
      %v8065 = vpop.f32.mrf.mxu0
      %v8066 = vadd.f32 %v7335, %v8065
      %v8067 = vpop.f32.mrf.mxu0
      %8068 = vmatprep.mubr.f32.mxu0 0.0
      %8069 = vmatmul.mubr.f32.gmra.mxu0 %v7506
      %v8070 = vpop.f32.mrf.mxu0
      %v8071 = vadd.f32 %v7335, %v8070
      %v8072 = vpop.f32.mrf.mxu0
      %8073 = vmatprep.mubr.f32.mxu0 0.0
      %8074 = vmatmul.mubr.f32.gmra.mxu0 %v7509
      %v8075 = vpop.f32.mrf.mxu0
      %v8076 = vadd.f32 %v7335, %v8075
      %v8077 = vpop.f32.mrf.mxu0
      %8078 = vmatprep.mubr.f32.mxu0 0.0
      %8079 = vmatmul.mubr.f32.gmra.mxu0 %v7512
      %v8080 = vpop.f32.mrf.mxu0
      %v8081 = vadd.f32 %v7335, %v8080
      %v8082 = vpop.f32.mrf.mxu0
      %8083 = vmatprep.mubr.f32.mxu0 0.0
      %8084 = vmatmul.mubr.f32.gmra.mxu0 %v7515
      %v8085 = vpop.f32.mrf.mxu0
      %v8086 = vadd.f32 %v7335, %v8085
      %v8087 = vpop.f32.mrf.mxu0
      %8088 = vmatprep.mubr.f32.mxu0 0.0
      %8089 = vmatmul.mubr.f32.gmra.mxu0 %v7518
      %v8090 = vpop.f32.mrf.mxu0
      %v8091 = vadd.f32 %v7335, %v8090
      %v8092 = vpop.f32.mrf.mxu0
      %8093 = vmatprep.mubr.f32.mxu0 0.0
      %8094 = vmatmul.mubr.f32.gmra.mxu0 %v7521
      %v8095 = vpop.f32.mrf.mxu0
      %v8096 = vadd.f32 %v7335, %v8095
      %v8097 = vpop.f32.mrf.mxu0
      %8098 = vmatprep.mubr.f32.mxu0 0.0
      %8099 = vmatmul.mubr.f32.gmra.mxu0 %v7524
      %v8100 = vpop.f32.mrf.mxu0
      %v8101 = vadd.f32 %v7335, %v8100
      %v8102 = vpop.f32.mrf.mxu0
      %8103 = vmatprep.mubr.f32.mxu0 0.0
      %8104 = vmatmul.mubr.f32.gmra.mxu0 %v7527
      %v8105 = vpop.f32.mrf.mxu0
      %v8106 = vadd.f32 %v7335, %v8105
      %v8107 = vpop.f32.mrf.mxu0
      %8108 = vmatprep.mubr.f32.mxu0 0.0
      %8109 = vmatmul.mubr.f32.gmra.mxu0 %v7530
      %v8110 = vpop.f32.mrf.mxu0
      %v8111 = vadd.f32 %v7335, %v8110
      %v8112 = vpop.f32.mrf.mxu0
      %8113 = vmatprep.mubr.f32.mxu0 0.0
      %8114 = vmatmul.mubr.f32.gmra.mxu0 %v7533
      %v8115 = vpop.f32.mrf.mxu0
      %v8116 = vadd.f32 %v7335, %v8115
      %v8117 = vpop.f32.mrf.mxu0
      %8118 = vmatprep.mubr.f32.mxu0 0.0
      %8119 = vmatmul.mubr.f32.gmra.mxu0 %v7536
      %v8120 = vpop.f32.mrf.mxu0
      %v8121 = vadd.f32 %v7335, %v8120
      %v8122 = vpop.f32.mrf.mxu0
      %8123 = vmatprep.mubr.f32.mxu0 0.0
      %8124 = vmatmul.mubr.f32.gmra.mxu0 %v7539
      %v8125 = vpop.f32.mrf.mxu0
      %v8126 = vadd.f32 %v7335, %v8125
      %v8127 = vpop.f32.mrf.mxu0
      %8128 = vmatprep.mubr.f32.mxu0 0.0
      %8129 = vmatmul.mubr.f32.gmra.mxu0 %v7542
      %v8130 = vpop.f32.mrf.mxu0
      %v8131 = vadd.f32 %v7335, %v8130
      %v8132 = vpop.f32.mrf.mxu0
      %8133 = vmatprep.mubr.f32.mxu0 0.0
      %8134 = vmatmul.mubr.f32.gmra.mxu0 %v7545
      %v8135 = vpop.f32.mrf.mxu0
      %v8136 = vadd.f32 %v7335, %v8135
      %v8137 = vpop.f32.mrf.mxu0
      %8138 = vmatprep.mubr.f32.mxu0 0.0
      %8139 = vmatmul.mubr.f32.gmra.mxu0 %v7548
      %v8140 = vpop.f32.mrf.mxu0
      %v8141 = vadd.f32 %v7335, %v8140
      %v8142 = vpop.f32.mrf.mxu0
      %8143 = vmatprep.mubr.f32.mxu0 0.0
      %8144 = vmatmul.mubr.f32.gmra.mxu0 %v7551
      %v8145 = vpop.f32.mrf.mxu0
      %v8146 = vadd.f32 %v7335, %v8145
      %v8147 = vpop.f32.mrf.mxu0
      %8148 = vmatprep.mubr.f32.mxu0 0.0
      %8149 = vmatmul.mubr.f32.gmra.mxu0 %v7554
      %v8150 = vpop.f32.mrf.mxu0
      %v8151 = vadd.f32 %v7335, %v8150
      %v8152 = vpop.f32.mrf.mxu0
      %8153 = vmatprep.mubr.f32.mxu0 0.0
      %8154 = vmatmul.mubr.f32.gmra.mxu0 %v7557
      %v8155 = vpop.f32.mrf.mxu0
      %v8156 = vadd.f32 %v7335, %v8155
      %v8157 = vpop.f32.mrf.mxu0
      %8158 = vmatprep.mubr.f32.mxu0 0.0
      %8159 = vmatmul.mubr.f32.gmra.mxu0 %v7560
      %v8160 = vpop.f32.mrf.mxu0
      %v8161 = vadd.f32 %v7335, %v8160
      %v8162 = vpop.f32.mrf.mxu0
      %8163 = vmatprep.mubr.f32.mxu0 0.0
      %8164 = vmatmul.mubr.f32.gmra.mxu0 %v7563
      %v8165 = vpop.f32.mrf.mxu0
      %v8166 = vadd.f32 %v7335, %v8165
      %v8167 = vpop.f32.mrf.mxu0
      %8168 = vmatprep.mubr.f32.mxu0 0.0
      %8169 = vmatmul.mubr.f32.gmra.mxu0 %v7566
      %v8170 = vpop.f32.mrf.mxu0
      %v8171 = vadd.f32 %v7335, %v8170
      %v8172 = vpop.f32.mrf.mxu0
      %8173 = vmatprep.mubr.f32.mxu0 0.0
      %8174 = vmatmul.mubr.f32.gmra.mxu0 %v7569
      %v8175 = vpop.f32.mrf.mxu0
      %v8176 = vadd.f32 %v7335, %v8175
      %v8177 = vpop.f32.mrf.mxu0
      %8178 = vmatprep.mubr.f32.mxu0 0.0
      %8179 = vmatmul.mubr.f32.gmra.mxu0 %v7572
      %v8180 = vpop.f32.mrf.mxu0
      %v8181 = vadd.f32 %v7335, %v8180
      %v8182 = vpop.f32.mrf.mxu0
      %8183 = vmatprep.mubr.f32.mxu0 0.0
      %8184 = vmatmul.mubr.f32.gmra.mxu0 %v7575
      %v8185 = vpop.f32.mrf.mxu0
      %v8186 = vadd.f32 %v7335, %v8185
      %v8187 = vpop.f32.mrf.mxu0
      %8188 = vmatprep.mubr.f32.mxu0 0.0
      %8189 = vmatmul.mubr.f32.gmra.mxu0 %v7578
      %v8190 = vpop.f32.mrf.mxu0
      %v8191 = vadd.f32 %v7335, %v8190
      %v8192 = vpop.f32.mrf.mxu0
      %8193 = vmatprep.mubr.f32.mxu0 0.0
      %8194 = vmatmul.mubr.f32.gmra.mxu0 %v7581
      %v8195 = vpop.f32.mrf.mxu0
      %v8196 = vadd.f32 %v7335, %v8195
      %v8197 = vpop.f32.mrf.mxu0
      %8198 = vmatprep.mubr.f32.mxu0 0.0
      %8199 = vmatmul.mubr.f32.gmra.mxu0 %v7584
      %v8200 = vpop.f32.mrf.mxu0
      %v8201 = vadd.f32 %v7335, %v8200
      %v8202 = vpop.f32.mrf.mxu0
      %8203 = vmatprep.mubr.f32.mxu0 0.0
      %8204 = vmatmul.mubr.f32.gmra.mxu0 %v7587
      %v8205 = vpop.f32.mrf.mxu0
      %v8206 = vadd.f32 %v7335, %v8205
      %v8207 = vpop.f32.mrf.mxu0
      %8208 = vmatprep.mubr.f32.mxu0 0.0
      %8209 = vmatmul.mubr.f32.gmra.mxu0 %v7590
      %v8210 = vpop.f32.mrf.mxu0
      %v8211 = vadd.f32 %v7335, %v8210
      %v8212 = vpop.f32.mrf.mxu0
      %8213 = vmatprep.mubr.f32.mxu0 0.0
      %8214 = vmatmul.mubr.f32.gmra.mxu0 %v7593
      %v8215 = vpop.f32.mrf.mxu0
      %v8216 = vadd.f32 %v7335, %v8215
      %v8217 = vpop.f32.mrf.mxu0
      %8218 = vmatprep.mubr.f32.mxu0 0.0
      %8219 = vmatmul.mubr.f32.gmra.mxu0 %v7596
      %v8220 = vpop.f32.mrf.mxu0
      %v8221 = vadd.f32 %v7335, %v8220
      %v8222 = vpop.f32.mrf.mxu0
      %8223 = vmatprep.mubr.f32.mxu0 0.0
      %8224 = vmatmul.mubr.f32.gmra.mxu0 %v7599
      %v8225 = vpop.f32.mrf.mxu0
      %v8226 = vadd.f32 %v7335, %v8225
      %v8227 = vpop.f32.mrf.mxu0
      %8228 = vmatprep.mubr.f32.mxu0 0.0
      %8229 = vmatmul.mubr.f32.gmra.mxu0 %v7602
      %v8230 = vpop.f32.mrf.mxu0
      %v8231 = vadd.f32 %v7335, %v8230
      %v8232 = vpop.f32.mrf.mxu0
      %8233 = vmatprep.mubr.f32.mxu0 0.0
      %8234 = vmatmul.mubr.f32.gmra.mxu0 %v7605
      %v8235 = vpop.f32.mrf.mxu0
      %v8236 = vadd.f32 %v7335, %v8235
      %v8237 = vpop.f32.mrf.mxu0
      %8238 = vmatprep.mubr.f32.mxu0 0.0
      %8239 = vmatmul.mubr.f32.gmra.mxu0 %v7608
      %v8240 = vpop.f32.mrf.mxu0
      %v8241 = vadd.f32 %v7335, %v8240
      %v8242 = vpop.f32.mrf.mxu0
      %8243 = vmatprep.mubr.f32.mxu0 0.0
      %8244 = vmatmul.mubr.f32.gmra.mxu0 %v7611
      %v8245 = vpop.f32.mrf.mxu0
      %v8246 = vadd.f32 %v7335, %v8245
      %v8247 = vpop.f32.mrf.mxu0
      %8248 = vmatprep.mubr.f32.mxu0 0.0
      %8249 = vmatmul.mubr.f32.gmra.mxu0 %v7614
      %v8250 = vpop.f32.mrf.mxu0
      %v8251 = vadd.f32 %v7335, %v8250
      %v8252 = vpop.f32.mrf.mxu0
      %8253 = vmatprep.mubr.f32.mxu0 0.0
      %8254 = vmatmul.mubr.f32.gmra.mxu0 %v7617
      %v8255 = vpop.f32.mrf.mxu0
      %v8256 = vadd.f32 %v7335, %v8255
      %v8257 = vpop.f32.mrf.mxu0
      %8258 = vmatprep.mubr.f32.mxu0 0.0
      %8259 = vmatmul.mubr.f32.gmra.mxu0 %v7620
      %v8260 = vpop.f32.mrf.mxu0
      %v8261 = vadd.f32 %v7335, %v8260
      %v8262 = vpop.f32.mrf.mxu0
      %8263 = vmatprep.mubr.f32.mxu0 0.0
      %8264 = vmatmul.mubr.f32.gmra.mxu0 %v7623
      %v8265 = vpop.f32.mrf.mxu0
      %v8266 = vadd.f32 %v7335, %v8265
      %v8267 = vpop.f32.mrf.mxu0
      %8268 = vmatprep.mubr.f32.mxu0 0.0
      %8269 = vmatmul.mubr.f32.gmra.mxu0 %v7626
      %v8270 = vpop.f32.mrf.mxu0
      %v8271 = vadd.f32 %v7335, %v8270
      %v8272 = vpop.f32.mrf.mxu0
      %8273 = vmatprep.mubr.f32.mxu0 0.0
      %8274 = vmatmul.mubr.f32.gmra.mxu0 %v7629
      %v8275 = vpop.f32.mrf.mxu0
      %v8276 = vadd.f32 %v7335, %v8275
      %v8277 = vpop.f32.mrf.mxu0
      %8278 = vmatprep.mubr.f32.mxu0 0.0
      %8279 = vmatmul.mubr.f32.gmra.mxu0 %v7632
      %v8280 = vpop.f32.mrf.mxu0
      %v8281 = vadd.f32 %v7335, %v8280
      %v8282 = vpop.f32.mrf.mxu0
      %8283 = vmatprep.mubr.f32.mxu0 0.0
      %8284 = vmatmul.mubr.f32.gmra.mxu0 %v7635
      %v8285 = vpop.f32.mrf.mxu0
      %v8286 = vadd.f32 %v7335, %v8285
      %v8287 = vpop.f32.mrf.mxu0
      %8288 = vmatprep.mubr.f32.mxu0 0.0
      %8289 = vmatmul.mubr.f32.gmra.mxu0 %v7638
      %v8290 = vpop.f32.mrf.mxu0
      %v8291 = vadd.f32 %v7335, %v8290
      %v8292 = vpop.f32.mrf.mxu0
      %8293 = vmatprep.mubr.f32.mxu0 0.0
      %8294 = vmatmul.mubr.f32.gmra.mxu0 %v7641
      %v8295 = vpop.f32.mrf.mxu0
      %v8296 = vadd.f32 %v7335, %v8295
      %v8297 = vpop.f32.mrf.mxu0
      %8298 = vmatprep.mubr.f32.mxu0 0.0
      %8299 = vmatmul.mubr.f32.gmra.mxu0 %v7644
      %v8300 = vpop.f32.mrf.mxu0
      %v8301 = vadd.f32 %v7335, %v8300
      %v8302 = vpop.f32.mrf.mxu0
      %8303 = vmatprep.mubr.f32.mxu0 0.0
      %8304 = vmatmul.mubr.f32.gmra.mxu0 %v7647
      %v8305 = vpop.f32.mrf.mxu0
      %v8306 = vadd.f32 %v7335, %v8305
      %v8307 = vpop.f32.mrf.mxu0
      %8308 = vmatprep.mubr.f32.mxu0 0.0
      %8309 = vmatmul.mubr.f32.gmra.mxu0 %v7650
      %v8310 = vpop.f32.mrf.mxu0
      %v8311 = vadd.f32 %v7335, %v8310
      %v8312 = vpop.f32.mrf.mxu0
      %8313 = vmatprep.mubr.f32.mxu0 0.0
      %8314 = vmatmul.mubr.f32.gmra.mxu0 %v7653
      %v8315 = vpop.f32.mrf.mxu0
      %v8316 = vadd.f32 %v7335, %v8315
      %v8317 = vpop.f32.mrf.mxu0
      %8318 = vmatprep.mubr.f32.mxu0 0.0
      %8319 = vmatmul.mubr.f32.gmra.mxu0 %v7656
      %v8320 = vpop.f32.mrf.mxu0
      %v8321 = vadd.f32 %v7335, %v8320
      %v8322 = vpop.f32.mrf.mxu0
      %8323 = vmatprep.mubr.f32.mxu0 0.0
      %8324 = vmatmul.mubr.f32.gmra.mxu0 %v7659
      %v8325 = vpop.f32.mrf.mxu0
      %v8326 = vadd.f32 %v7335, %v8325
      %v8327 = vpop.f32.mrf.mxu0
      %8328 = vmatprep.mubr.f32.mxu0 0.0
      %8329 = vmatmul.mubr.f32.gmra.mxu0 %v7662
      %v8330 = vpop.f32.mrf.mxu0
      %v8331 = vadd.f32 %v7335, %v8330
      %v8332 = vpop.f32.mrf.mxu0
      %8333 = vmatprep.mubr.f32.mxu0 0.0
      %8334 = vmatmul.mubr.f32.gmra.mxu0 %v7665
      %v8335 = vpop.f32.mrf.mxu0
      %v8336 = vadd.f32 %v7335, %v8335
      %v8337 = vpop.f32.mrf.mxu0
      %8338 = vmatprep.mubr.f32.mxu0 0.0
      %8339 = vmatmul.mubr.f32.gmra.mxu0 %v7668
      %v8340 = vpop.f32.mrf.mxu0
      %v8341 = vadd.f32 %v7335, %v8340
      %v8342 = vpop.f32.mrf.mxu0
      %8343 = vmatprep.mubr.f32.mxu0 0.0
      %8344 = vmatmul.mubr.f32.gmra.mxu0 %v7671
      %v8345 = vpop.f32.mrf.mxu0
      %v8346 = vadd.f32 %v7335, %v8345
      %v8347 = vpop.f32.mrf.mxu0
      %8348 = vmatprep.mubr.f32.mxu0 0.0
      %8349 = vmatmul.mubr.f32.gmra.mxu0 %v7674
      %v8350 = vpop.f32.mrf.mxu0
      %v8351 = vadd.f32 %v7335, %v8350
      %v8352 = vpop.f32.mrf.mxu0
      %8353 = vmatprep.mubr.f32.mxu0 0.0
      %8354 = vmatmul.mubr.f32.gmra.mxu0 %v7677
      %v8355 = vpop.f32.mrf.mxu0
      %v8356 = vadd.f32 %v7335, %v8355
      %v8357 = vpop.f32.mrf.mxu0
      %8358 = vmatprep.mubr.f32.mxu0 0.0
      %8359 = vmatmul.mubr.f32.gmra.mxu0 %v7680
      %v8360 = vpop.f32.mrf.mxu0
      %v8361 = vadd.f32 %v7335, %v8360
      %v8362 = vpop.f32.mrf.mxu0
      %8363 = vmatprep.mubr.f32.mxu0 0.0
      %8364 = vmatmul.mubr.f32.gmra.mxu0 %v7683
      %v8365 = vpop.f32.mrf.mxu0
      %v8366 = vadd.f32 %v7335, %v8365
      %v8367 = vpop.f32.mrf.mxu0
      %8368 = vmatprep.mubr.f32.mxu0 0.0
      %8369 = vmatmul.mubr.f32.gmra.mxu0 %v7686
      %v8370 = vpop.f32.mrf.mxu0
      %v8371 = vadd.f32 %v7335, %v8370
      %v8372 = vpop.f32.mrf.mxu0
      %8373 = vmatprep.mubr.f32.mxu0 0.0
      %8374 = vmatmul.mubr.f32.gmra.mxu0 %v7689
      %v8375 = vpop.f32.mrf.mxu0
      %v8376 = vadd.f32 %v7335, %v8375
      %v8377 = vpop.f32.mrf.mxu0
      %8378 = vmatprep.mubr.f32.mxu0 0.0
      %8379 = vmatmul.mubr.f32.gmra.mxu0 %v7692
      %v8380 = vpop.f32.mrf.mxu0
      %v8381 = vadd.f32 %v7335, %v8380
      %v8382 = vpop.f32.mrf.mxu0
      %8383 = vmatprep.mubr.f32.mxu0 0.0
      %8384 = vmatmul.mubr.f32.gmra.mxu0 %v7695
      %v8385 = vpop.f32.mrf.mxu0
      %v8386 = vadd.f32 %v7335, %v8385
      %v8387 = vpop.f32.mrf.mxu0
      %8388 = vmatprep.mubr.f32.mxu0 0.0
      %8389 = vmatmul.mubr.f32.gmra.mxu0 %v7698
      %v8390 = vpop.f32.mrf.mxu0
      %v8391 = vadd.f32 %v7335, %v8390
      %v8392 = vpop.f32.mrf.mxu0
      %8393 = vmatprep.mubr.f32.mxu0 0.0
      %8394 = vmatmul.mubr.f32.gmra.mxu0 %v7701
      %v8395 = vpop.f32.mrf.mxu0
      %v8396 = vadd.f32 %v7335, %v8395
      %v8397 = vpop.f32.mrf.mxu0
      %8398 = vmatprep.mubr.f32.mxu0 0.0
      %8399 = vmatmul.mubr.f32.gmra.mxu0 %v7704
      %v8400 = vpop.f32.mrf.mxu0
      %v8401 = vadd.f32 %v7335, %v8400
      %v8402 = vpop.f32.mrf.mxu0
      %8403 = vmatprep.mubr.f32.mxu0 0.0
      %8404 = vmatmul.mubr.f32.gmra.mxu0 %v7707
      %v8405 = vpop.f32.mrf.mxu0
      %v8406 = vadd.f32 %v7335, %v8405
      %v8407 = vpop.f32.mrf.mxu0
      %8408 = vmatprep.mubr.f32.mxu0 0.0
      %8409 = vmatmul.mubr.f32.gmra.mxu0 %v7710
      %v8410 = vpop.f32.mrf.mxu0
      %v8411 = vadd.f32 %v7335, %v8410
      %v8412 = vpop.f32.mrf.mxu0
      %8413 = vmatprep.mubr.f32.mxu0 0.0
      %8414 = vmatmul.mubr.f32.gmra.mxu0 %v7713
      %v8415 = vpop.f32.mrf.mxu0
      %v8416 = vadd.f32 %v7335, %v8415
      %v8417 = vpop.f32.mrf.mxu0
      %8418 = vmatprep.mubr.f32.mxu0 0.0
      %8419 = vmatmul.mubr.f32.gmra.mxu0 %v7716
      %v8420 = vpop.f32.mrf.mxu0
      %v8421 = vadd.f32 %v7335, %v8420
      %v8422 = vpop.f32.mrf.mxu0
      %8423 = vmatprep.mubr.f32.mxu0 0.0
      %8424 = vmatmul.mubr.f32.gmra.mxu0 %v7719
      %v8425 = vpop.f32.mrf.mxu0
      %v8426 = vadd.f32 %v7335, %v8425
      %v8427 = vpop.f32.mrf.mxu0
      %8428 = vdwg.mxu0
      %v8429 = vrsqrt.pop %v7791
      %v8430 = vmul.f32 %v7791, %v8429
      %vm8431 = vcmp.eq.f32.partialorder %v7791, inf
      %v8432 = vsel %vm8431, %v7791, %v8430
      %vm8433 = vcmp.eq.f32.partialorder %v7791, 0.0
      %v8434 = vand.u32 %v7791, 2147483648
      %v8435 = vsel %vm8433, %v8434, %v8432
      %v8436 = vrsqrt.pop %v7796
      %v8437 = vmul.f32 %v7796, %v8436
      %vm8438 = vcmp.eq.f32.partialorder %v7796, inf
      %v8439 = vsel %vm8438, %v7796, %v8437
      %vm8440 = vcmp.eq.f32.partialorder %v7796, 0.0
      %v8441 = vand.u32 %v7796, 2147483648
      %v8442 = vsel %vm8440, %v8441, %v8439
      %v8443 = vrsqrt.pop %v7801
      %v8444 = vmul.f32 %v7801, %v8443
      %vm8445 = vcmp.eq.f32.partialorder %v7801, inf
      %v8446 = vsel %vm8445, %v7801, %v8444
      %vm8447 = vcmp.eq.f32.partialorder %v7801, 0.0
      %v8448 = vand.u32 %v7801, 2147483648
      %v8449 = vsel %vm8447, %v8448, %v8446
      %v8450 = vrsqrt.pop %v7806
      %v8451 = vmul.f32 %v7806, %v8450
      %vm8452 = vcmp.eq.f32.partialorder %v7806, inf
      %v8453 = vsel %vm8452, %v7806, %v8451
      %vm8454 = vcmp.eq.f32.partialorder %v7806, 0.0
      %v8455 = vand.u32 %v7806, 2147483648
      %v8456 = vsel %vm8454, %v8455, %v8453
      %v8457 = vrsqrt.pop %v7811
      %v8458 = vmul.f32 %v7811, %v8457
      %vm8459 = vcmp.eq.f32.partialorder %v7811, inf
      %v8460 = vsel %vm8459, %v7811, %v8458
      %vm8461 = vcmp.eq.f32.partialorder %v7811, 0.0
      %v8462 = vand.u32 %v7811, 2147483648
      %v8463 = vsel %vm8461, %v8462, %v8460
      %v8464 = vrsqrt.pop %v7816
      %v8465 = vmul.f32 %v7816, %v8464
      %vm8466 = vcmp.eq.f32.partialorder %v7816, inf
      %v8467 = vsel %vm8466, %v7816, %v8465
      %vm8468 = vcmp.eq.f32.partialorder %v7816, 0.0
      %v8469 = vand.u32 %v7816, 2147483648
      %v8470 = vsel %vm8468, %v8469, %v8467
      %v8471 = vrsqrt.pop %v7821
      %v8472 = vmul.f32 %v7821, %v8471
      %vm8473 = vcmp.eq.f32.partialorder %v7821, inf
      %v8474 = vsel %vm8473, %v7821, %v8472
      %vm8475 = vcmp.eq.f32.partialorder %v7821, 0.0
      %v8476 = vand.u32 %v7821, 2147483648
      %v8477 = vsel %vm8475, %v8476, %v8474
      %v8478 = vrsqrt.pop %v7826
      %v8479 = vmul.f32 %v7826, %v8478
      %vm8480 = vcmp.eq.f32.partialorder %v7826, inf
      %v8481 = vsel %vm8480, %v7826, %v8479
      %vm8482 = vcmp.eq.f32.partialorder %v7826, 0.0
      %v8483 = vand.u32 %v7826, 2147483648
      %v8484 = vsel %vm8482, %v8483, %v8481
      %v8485 = vrsqrt.pop %v7831
      %v8486 = vmul.f32 %v7831, %v8485
      %vm8487 = vcmp.eq.f32.partialorder %v7831, inf
      %v8488 = vsel %vm8487, %v7831, %v8486
      %vm8489 = vcmp.eq.f32.partialorder %v7831, 0.0
      %v8490 = vand.u32 %v7831, 2147483648
      %v8491 = vsel %vm8489, %v8490, %v8488
      %v8492 = vrsqrt.pop %v7836
      %v8493 = vmul.f32 %v7836, %v8492
      %vm8494 = vcmp.eq.f32.partialorder %v7836, inf
      %v8495 = vsel %vm8494, %v7836, %v8493
      %vm8496 = vcmp.eq.f32.partialorder %v7836, 0.0
      %v8497 = vand.u32 %v7836, 2147483648
      %v8498 = vsel %vm8496, %v8497, %v8495
      %v8499 = vrsqrt.pop %v7841
      %v8500 = vmul.f32 %v7841, %v8499
      %vm8501 = vcmp.eq.f32.partialorder %v7841, inf
      %v8502 = vsel %vm8501, %v7841, %v8500
      %vm8503 = vcmp.eq.f32.partialorder %v7841, 0.0
      %v8504 = vand.u32 %v7841, 2147483648
      %v8505 = vsel %vm8503, %v8504, %v8502
      %v8506 = vrsqrt.pop %v7846
      %v8507 = vmul.f32 %v7846, %v8506
      %vm8508 = vcmp.eq.f32.partialorder %v7846, inf
      %v8509 = vsel %vm8508, %v7846, %v8507
      %vm8510 = vcmp.eq.f32.partialorder %v7846, 0.0
      %v8511 = vand.u32 %v7846, 2147483648
      %v8512 = vsel %vm8510, %v8511, %v8509
      %v8513 = vrsqrt.pop %v7851
      %v8514 = vmul.f32 %v7851, %v8513
      %vm8515 = vcmp.eq.f32.partialorder %v7851, inf
      %v8516 = vsel %vm8515, %v7851, %v8514
      %vm8517 = vcmp.eq.f32.partialorder %v7851, 0.0
      %v8518 = vand.u32 %v7851, 2147483648
      %v8519 = vsel %vm8517, %v8518, %v8516
      %v8520 = vrsqrt.pop %v7856
      %v8521 = vmul.f32 %v7856, %v8520
      %vm8522 = vcmp.eq.f32.partialorder %v7856, inf
      %v8523 = vsel %vm8522, %v7856, %v8521
      %vm8524 = vcmp.eq.f32.partialorder %v7856, 0.0
      %v8525 = vand.u32 %v7856, 2147483648
      %v8526 = vsel %vm8524, %v8525, %v8523
      %v8527 = vrsqrt.pop %v7861
      %v8528 = vmul.f32 %v7861, %v8527
      %vm8529 = vcmp.eq.f32.partialorder %v7861, inf
      %v8530 = vsel %vm8529, %v7861, %v8528
      %vm8531 = vcmp.eq.f32.partialorder %v7861, 0.0
      %v8532 = vand.u32 %v7861, 2147483648
      %v8533 = vsel %vm8531, %v8532, %v8530
      %v8534 = vrsqrt.pop %v7866
      %v8535 = vmul.f32 %v7866, %v8534
      %vm8536 = vcmp.eq.f32.partialorder %v7866, inf
      %v8537 = vsel %vm8536, %v7866, %v8535
      %vm8538 = vcmp.eq.f32.partialorder %v7866, 0.0
      %v8539 = vand.u32 %v7866, 2147483648
      %v8540 = vsel %vm8538, %v8539, %v8537
      %v8541 = vrsqrt.pop %v7871
      %v8542 = vmul.f32 %v7871, %v8541
      %vm8543 = vcmp.eq.f32.partialorder %v7871, inf
      %v8544 = vsel %vm8543, %v7871, %v8542
      %vm8545 = vcmp.eq.f32.partialorder %v7871, 0.0
      %v8546 = vand.u32 %v7871, 2147483648
      %v8547 = vsel %vm8545, %v8546, %v8544
      %v8548 = vrsqrt.pop %v7876
      %v8549 = vmul.f32 %v7876, %v8548
      %vm8550 = vcmp.eq.f32.partialorder %v7876, inf
      %v8551 = vsel %vm8550, %v7876, %v8549
      %vm8552 = vcmp.eq.f32.partialorder %v7876, 0.0
      %v8553 = vand.u32 %v7876, 2147483648
      %v8554 = vsel %vm8552, %v8553, %v8551
      %v8555 = vrsqrt.pop %v7881
      %v8556 = vmul.f32 %v7881, %v8555
      %vm8557 = vcmp.eq.f32.partialorder %v7881, inf
      %v8558 = vsel %vm8557, %v7881, %v8556
      %vm8559 = vcmp.eq.f32.partialorder %v7881, 0.0
      %v8560 = vand.u32 %v7881, 2147483648
      %v8561 = vsel %vm8559, %v8560, %v8558
      %v8562 = vrsqrt.pop %v7886
      %v8563 = vmul.f32 %v7886, %v8562
      %vm8564 = vcmp.eq.f32.partialorder %v7886, inf
      %v8565 = vsel %vm8564, %v7886, %v8563
      %vm8566 = vcmp.eq.f32.partialorder %v7886, 0.0
      %v8567 = vand.u32 %v7886, 2147483648
      %v8568 = vsel %vm8566, %v8567, %v8565
      %v8569 = vrsqrt.pop %v7891
      %v8570 = vmul.f32 %v7891, %v8569
      %vm8571 = vcmp.eq.f32.partialorder %v7891, inf
      %v8572 = vsel %vm8571, %v7891, %v8570
      %vm8573 = vcmp.eq.f32.partialorder %v7891, 0.0
      %v8574 = vand.u32 %v7891, 2147483648
      %v8575 = vsel %vm8573, %v8574, %v8572
      %v8576 = vrsqrt.pop %v7896
      %v8577 = vmul.f32 %v7896, %v8576
      %vm8578 = vcmp.eq.f32.partialorder %v7896, inf
      %v8579 = vsel %vm8578, %v7896, %v8577
      %vm8580 = vcmp.eq.f32.partialorder %v7896, 0.0
      %v8581 = vand.u32 %v7896, 2147483648
      %v8582 = vsel %vm8580, %v8581, %v8579
      %v8583 = vrsqrt.pop %v7901
      %v8584 = vmul.f32 %v7901, %v8583
      %vm8585 = vcmp.eq.f32.partialorder %v7901, inf
      %v8586 = vsel %vm8585, %v7901, %v8584
      %vm8587 = vcmp.eq.f32.partialorder %v7901, 0.0
      %v8588 = vand.u32 %v7901, 2147483648
      %v8589 = vsel %vm8587, %v8588, %v8586
      %v8590 = vrsqrt.pop %v7906
      %v8591 = vmul.f32 %v7906, %v8590
      %vm8592 = vcmp.eq.f32.partialorder %v7906, inf
      %v8593 = vsel %vm8592, %v7906, %v8591
      %vm8594 = vcmp.eq.f32.partialorder %v7906, 0.0
      %v8595 = vand.u32 %v7906, 2147483648
      %v8596 = vsel %vm8594, %v8595, %v8593
      %v8597 = vrsqrt.pop %v7911
      %v8598 = vmul.f32 %v7911, %v8597
      %vm8599 = vcmp.eq.f32.partialorder %v7911, inf
      %v8600 = vsel %vm8599, %v7911, %v8598
      %vm8601 = vcmp.eq.f32.partialorder %v7911, 0.0
      %v8602 = vand.u32 %v7911, 2147483648
      %v8603 = vsel %vm8601, %v8602, %v8600
      %v8604 = vrsqrt.pop %v7916
      %v8605 = vmul.f32 %v7916, %v8604
      %vm8606 = vcmp.eq.f32.partialorder %v7916, inf
      %v8607 = vsel %vm8606, %v7916, %v8605
      %vm8608 = vcmp.eq.f32.partialorder %v7916, 0.0
      %v8609 = vand.u32 %v7916, 2147483648
      %v8610 = vsel %vm8608, %v8609, %v8607
      %v8611 = vrsqrt.pop %v7921
      %v8612 = vmul.f32 %v7921, %v8611
      %vm8613 = vcmp.eq.f32.partialorder %v7921, inf
      %v8614 = vsel %vm8613, %v7921, %v8612
      %vm8615 = vcmp.eq.f32.partialorder %v7921, 0.0
      %v8616 = vand.u32 %v7921, 2147483648
      %v8617 = vsel %vm8615, %v8616, %v8614
      %v8618 = vrsqrt.pop %v7926
      %v8619 = vmul.f32 %v7926, %v8618
      %vm8620 = vcmp.eq.f32.partialorder %v7926, inf
      %v8621 = vsel %vm8620, %v7926, %v8619
      %vm8622 = vcmp.eq.f32.partialorder %v7926, 0.0
      %v8623 = vand.u32 %v7926, 2147483648
      %v8624 = vsel %vm8622, %v8623, %v8621
      %v8625 = vrsqrt.pop %v7931
      %v8626 = vmul.f32 %v7931, %v8625
      %vm8627 = vcmp.eq.f32.partialorder %v7931, inf
      %v8628 = vsel %vm8627, %v7931, %v8626
      %vm8629 = vcmp.eq.f32.partialorder %v7931, 0.0
      %v8630 = vand.u32 %v7931, 2147483648
      %v8631 = vsel %vm8629, %v8630, %v8628
      %v8632 = vrsqrt.pop %v7936
      %v8633 = vmul.f32 %v7936, %v8632
      %vm8634 = vcmp.eq.f32.partialorder %v7936, inf
      %v8635 = vsel %vm8634, %v7936, %v8633
      %vm8636 = vcmp.eq.f32.partialorder %v7936, 0.0
      %v8637 = vand.u32 %v7936, 2147483648
      %v8638 = vsel %vm8636, %v8637, %v8635
      %v8639 = vrsqrt.pop %v7941
      %v8640 = vmul.f32 %v7941, %v8639
      %vm8641 = vcmp.eq.f32.partialorder %v7941, inf
      %v8642 = vsel %vm8641, %v7941, %v8640
      %vm8643 = vcmp.eq.f32.partialorder %v7941, 0.0
      %v8644 = vand.u32 %v7941, 2147483648
      %v8645 = vsel %vm8643, %v8644, %v8642
      %v8646 = vrsqrt.pop %v7946
      %v8647 = vmul.f32 %v7946, %v8646
      %vm8648 = vcmp.eq.f32.partialorder %v7946, inf
      %v8649 = vsel %vm8648, %v7946, %v8647
      %vm8650 = vcmp.eq.f32.partialorder %v7946, 0.0
      %v8651 = vand.u32 %v7946, 2147483648
      %v8652 = vsel %vm8650, %v8651, %v8649
      %v8653 = vrsqrt.pop %v7951
      %v8654 = vmul.f32 %v7951, %v8653
      %vm8655 = vcmp.eq.f32.partialorder %v7951, inf
      %v8656 = vsel %vm8655, %v7951, %v8654
      %vm8657 = vcmp.eq.f32.partialorder %v7951, 0.0
      %v8658 = vand.u32 %v7951, 2147483648
      %v8659 = vsel %vm8657, %v8658, %v8656
      %v8660 = vrsqrt.pop %v7956
      %v8661 = vmul.f32 %v7956, %v8660
      %vm8662 = vcmp.eq.f32.partialorder %v7956, inf
      %v8663 = vsel %vm8662, %v7956, %v8661
      %vm8664 = vcmp.eq.f32.partialorder %v7956, 0.0
      %v8665 = vand.u32 %v7956, 2147483648
      %v8666 = vsel %vm8664, %v8665, %v8663
      %v8667 = vrsqrt.pop %v7961
      %v8668 = vmul.f32 %v7961, %v8667
      %vm8669 = vcmp.eq.f32.partialorder %v7961, inf
      %v8670 = vsel %vm8669, %v7961, %v8668
      %vm8671 = vcmp.eq.f32.partialorder %v7961, 0.0
      %v8672 = vand.u32 %v7961, 2147483648
      %v8673 = vsel %vm8671, %v8672, %v8670
      %v8674 = vrsqrt.pop %v7966
      %v8675 = vmul.f32 %v7966, %v8674
      %vm8676 = vcmp.eq.f32.partialorder %v7966, inf
      %v8677 = vsel %vm8676, %v7966, %v8675
      %vm8678 = vcmp.eq.f32.partialorder %v7966, 0.0
      %v8679 = vand.u32 %v7966, 2147483648
      %v8680 = vsel %vm8678, %v8679, %v8677
      %v8681 = vrsqrt.pop %v7971
      %v8682 = vmul.f32 %v7971, %v8681
      %vm8683 = vcmp.eq.f32.partialorder %v7971, inf
      %v8684 = vsel %vm8683, %v7971, %v8682
      %vm8685 = vcmp.eq.f32.partialorder %v7971, 0.0
      %v8686 = vand.u32 %v7971, 2147483648
      %v8687 = vsel %vm8685, %v8686, %v8684
      %v8688 = vrsqrt.pop %v7976
      %v8689 = vmul.f32 %v7976, %v8688
      %vm8690 = vcmp.eq.f32.partialorder %v7976, inf
      %v8691 = vsel %vm8690, %v7976, %v8689
      %vm8692 = vcmp.eq.f32.partialorder %v7976, 0.0
      %v8693 = vand.u32 %v7976, 2147483648
      %v8694 = vsel %vm8692, %v8693, %v8691
      %v8695 = vrsqrt.pop %v7981
      %v8696 = vmul.f32 %v7981, %v8695
      %vm8697 = vcmp.eq.f32.partialorder %v7981, inf
      %v8698 = vsel %vm8697, %v7981, %v8696
      %vm8699 = vcmp.eq.f32.partialorder %v7981, 0.0
      %v8700 = vand.u32 %v7981, 2147483648
      %v8701 = vsel %vm8699, %v8700, %v8698
      %v8702 = vrsqrt.pop %v7986
      %v8703 = vmul.f32 %v7986, %v8702
      %vm8704 = vcmp.eq.f32.partialorder %v7986, inf
      %v8705 = vsel %vm8704, %v7986, %v8703
      %vm8706 = vcmp.eq.f32.partialorder %v7986, 0.0
      %v8707 = vand.u32 %v7986, 2147483648
      %v8708 = vsel %vm8706, %v8707, %v8705
      %v8709 = vrsqrt.pop %v7991
      %v8710 = vmul.f32 %v7991, %v8709
      %vm8711 = vcmp.eq.f32.partialorder %v7991, inf
      %v8712 = vsel %vm8711, %v7991, %v8710
      %vm8713 = vcmp.eq.f32.partialorder %v7991, 0.0
      %v8714 = vand.u32 %v7991, 2147483648
      %v8715 = vsel %vm8713, %v8714, %v8712
      %v8716 = vrsqrt.pop %v7996
      %v8717 = vmul.f32 %v7996, %v8716
      %vm8718 = vcmp.eq.f32.partialorder %v7996, inf
      %v8719 = vsel %vm8718, %v7996, %v8717
      %vm8720 = vcmp.eq.f32.partialorder %v7996, 0.0
      %v8721 = vand.u32 %v7996, 2147483648
      %v8722 = vsel %vm8720, %v8721, %v8719
      %v8723 = vrsqrt.pop %v8001
      %v8724 = vmul.f32 %v8001, %v8723
      %vm8725 = vcmp.eq.f32.partialorder %v8001, inf
      %v8726 = vsel %vm8725, %v8001, %v8724
      %vm8727 = vcmp.eq.f32.partialorder %v8001, 0.0
      %v8728 = vand.u32 %v8001, 2147483648
      %v8729 = vsel %vm8727, %v8728, %v8726
      %v8730 = vrsqrt.pop %v8006
      %v8731 = vmul.f32 %v8006, %v8730
      %vm8732 = vcmp.eq.f32.partialorder %v8006, inf
      %v8733 = vsel %vm8732, %v8006, %v8731
      %vm8734 = vcmp.eq.f32.partialorder %v8006, 0.0
      %v8735 = vand.u32 %v8006, 2147483648
      %v8736 = vsel %vm8734, %v8735, %v8733
      %v8737 = vrsqrt.pop %v8011
      %v8738 = vmul.f32 %v8011, %v8737
      %vm8739 = vcmp.eq.f32.partialorder %v8011, inf
      %v8740 = vsel %vm8739, %v8011, %v8738
      %vm8741 = vcmp.eq.f32.partialorder %v8011, 0.0
      %v8742 = vand.u32 %v8011, 2147483648
      %v8743 = vsel %vm8741, %v8742, %v8740
      %v8744 = vrsqrt.pop %v8016
      %v8745 = vmul.f32 %v8016, %v8744
      %vm8746 = vcmp.eq.f32.partialorder %v8016, inf
      %v8747 = vsel %vm8746, %v8016, %v8745
      %vm8748 = vcmp.eq.f32.partialorder %v8016, 0.0
      %v8749 = vand.u32 %v8016, 2147483648
      %v8750 = vsel %vm8748, %v8749, %v8747
      %v8751 = vrsqrt.pop %v8021
      %v8752 = vmul.f32 %v8021, %v8751
      %vm8753 = vcmp.eq.f32.partialorder %v8021, inf
      %v8754 = vsel %vm8753, %v8021, %v8752
      %vm8755 = vcmp.eq.f32.partialorder %v8021, 0.0
      %v8756 = vand.u32 %v8021, 2147483648
      %v8757 = vsel %vm8755, %v8756, %v8754
      %v8758 = vrsqrt.pop %v8026
      %v8759 = vmul.f32 %v8026, %v8758
      %vm8760 = vcmp.eq.f32.partialorder %v8026, inf
      %v8761 = vsel %vm8760, %v8026, %v8759
      %vm8762 = vcmp.eq.f32.partialorder %v8026, 0.0
      %v8763 = vand.u32 %v8026, 2147483648
      %v8764 = vsel %vm8762, %v8763, %v8761
      %v8765 = vrsqrt.pop %v8031
      %v8766 = vmul.f32 %v8031, %v8765
      %vm8767 = vcmp.eq.f32.partialorder %v8031, inf
      %v8768 = vsel %vm8767, %v8031, %v8766
      %vm8769 = vcmp.eq.f32.partialorder %v8031, 0.0
      %v8770 = vand.u32 %v8031, 2147483648
      %v8771 = vsel %vm8769, %v8770, %v8768
      %v8772 = vrsqrt.pop %v8036
      %v8773 = vmul.f32 %v8036, %v8772
      %vm8774 = vcmp.eq.f32.partialorder %v8036, inf
      %v8775 = vsel %vm8774, %v8036, %v8773
      %vm8776 = vcmp.eq.f32.partialorder %v8036, 0.0
      %v8777 = vand.u32 %v8036, 2147483648
      %v8778 = vsel %vm8776, %v8777, %v8775
      %v8779 = vrsqrt.pop %v8041
      %v8780 = vmul.f32 %v8041, %v8779
      %vm8781 = vcmp.eq.f32.partialorder %v8041, inf
      %v8782 = vsel %vm8781, %v8041, %v8780
      %vm8783 = vcmp.eq.f32.partialorder %v8041, 0.0
      %v8784 = vand.u32 %v8041, 2147483648
      %v8785 = vsel %vm8783, %v8784, %v8782
      %v8786 = vrsqrt.pop %v8046
      %v8787 = vmul.f32 %v8046, %v8786
      %vm8788 = vcmp.eq.f32.partialorder %v8046, inf
      %v8789 = vsel %vm8788, %v8046, %v8787
      %vm8790 = vcmp.eq.f32.partialorder %v8046, 0.0
      %v8791 = vand.u32 %v8046, 2147483648
      %v8792 = vsel %vm8790, %v8791, %v8789
      %v8793 = vrsqrt.pop %v8051
      %v8794 = vmul.f32 %v8051, %v8793
      %vm8795 = vcmp.eq.f32.partialorder %v8051, inf
      %v8796 = vsel %vm8795, %v8051, %v8794
      %vm8797 = vcmp.eq.f32.partialorder %v8051, 0.0
      %v8798 = vand.u32 %v8051, 2147483648
      %v8799 = vsel %vm8797, %v8798, %v8796
      %v8800 = vrsqrt.pop %v8056
      %v8801 = vmul.f32 %v8056, %v8800
      %vm8802 = vcmp.eq.f32.partialorder %v8056, inf
      %v8803 = vsel %vm8802, %v8056, %v8801
      %vm8804 = vcmp.eq.f32.partialorder %v8056, 0.0
      %v8805 = vand.u32 %v8056, 2147483648
      %v8806 = vsel %vm8804, %v8805, %v8803
      %v8807 = vrsqrt.pop %v8061
      %v8808 = vmul.f32 %v8061, %v8807
      %vm8809 = vcmp.eq.f32.partialorder %v8061, inf
      %v8810 = vsel %vm8809, %v8061, %v8808
      %vm8811 = vcmp.eq.f32.partialorder %v8061, 0.0
      %v8812 = vand.u32 %v8061, 2147483648
      %v8813 = vsel %vm8811, %v8812, %v8810
      %v8814 = vrsqrt.pop %v8066
      %v8815 = vmul.f32 %v8066, %v8814
      %vm8816 = vcmp.eq.f32.partialorder %v8066, inf
      %v8817 = vsel %vm8816, %v8066, %v8815
      %vm8818 = vcmp.eq.f32.partialorder %v8066, 0.0
      %v8819 = vand.u32 %v8066, 2147483648
      %v8820 = vsel %vm8818, %v8819, %v8817
      %v8821 = vrsqrt.pop %v8071
      %v8822 = vmul.f32 %v8071, %v8821
      %vm8823 = vcmp.eq.f32.partialorder %v8071, inf
      %v8824 = vsel %vm8823, %v8071, %v8822
      %vm8825 = vcmp.eq.f32.partialorder %v8071, 0.0
      %v8826 = vand.u32 %v8071, 2147483648
      %v8827 = vsel %vm8825, %v8826, %v8824
      %v8828 = vrsqrt.pop %v8076
      %v8829 = vmul.f32 %v8076, %v8828
      %vm8830 = vcmp.eq.f32.partialorder %v8076, inf
      %v8831 = vsel %vm8830, %v8076, %v8829
      %vm8832 = vcmp.eq.f32.partialorder %v8076, 0.0
      %v8833 = vand.u32 %v8076, 2147483648
      %v8834 = vsel %vm8832, %v8833, %v8831
      %v8835 = vrsqrt.pop %v8081
      %v8836 = vmul.f32 %v8081, %v8835
      %vm8837 = vcmp.eq.f32.partialorder %v8081, inf
      %v8838 = vsel %vm8837, %v8081, %v8836
      %vm8839 = vcmp.eq.f32.partialorder %v8081, 0.0
      %v8840 = vand.u32 %v8081, 2147483648
      %v8841 = vsel %vm8839, %v8840, %v8838
      %v8842 = vrsqrt.pop %v8086
      %v8843 = vmul.f32 %v8086, %v8842
      %vm8844 = vcmp.eq.f32.partialorder %v8086, inf
      %v8845 = vsel %vm8844, %v8086, %v8843
      %vm8846 = vcmp.eq.f32.partialorder %v8086, 0.0
      %v8847 = vand.u32 %v8086, 2147483648
      %v8848 = vsel %vm8846, %v8847, %v8845
      %v8849 = vrsqrt.pop %v8091
      %v8850 = vmul.f32 %v8091, %v8849
      %vm8851 = vcmp.eq.f32.partialorder %v8091, inf
      %v8852 = vsel %vm8851, %v8091, %v8850
      %vm8853 = vcmp.eq.f32.partialorder %v8091, 0.0
      %v8854 = vand.u32 %v8091, 2147483648
      %v8855 = vsel %vm8853, %v8854, %v8852
      %v8856 = vrsqrt.pop %v8096
      %v8857 = vmul.f32 %v8096, %v8856
      %vm8858 = vcmp.eq.f32.partialorder %v8096, inf
      %v8859 = vsel %vm8858, %v8096, %v8857
      %vm8860 = vcmp.eq.f32.partialorder %v8096, 0.0
      %v8861 = vand.u32 %v8096, 2147483648
      %v8862 = vsel %vm8860, %v8861, %v8859
      %v8863 = vrsqrt.pop %v8101
      %v8864 = vmul.f32 %v8101, %v8863
      %vm8865 = vcmp.eq.f32.partialorder %v8101, inf
      %v8866 = vsel %vm8865, %v8101, %v8864
      %vm8867 = vcmp.eq.f32.partialorder %v8101, 0.0
      %v8868 = vand.u32 %v8101, 2147483648
      %v8869 = vsel %vm8867, %v8868, %v8866
      %v8870 = vrsqrt.pop %v8106
      %v8871 = vmul.f32 %v8106, %v8870
      %vm8872 = vcmp.eq.f32.partialorder %v8106, inf
      %v8873 = vsel %vm8872, %v8106, %v8871
      %vm8874 = vcmp.eq.f32.partialorder %v8106, 0.0
      %v8875 = vand.u32 %v8106, 2147483648
      %v8876 = vsel %vm8874, %v8875, %v8873
      %v8877 = vrsqrt.pop %v8111
      %v8878 = vmul.f32 %v8111, %v8877
      %vm8879 = vcmp.eq.f32.partialorder %v8111, inf
      %v8880 = vsel %vm8879, %v8111, %v8878
      %vm8881 = vcmp.eq.f32.partialorder %v8111, 0.0
      %v8882 = vand.u32 %v8111, 2147483648
      %v8883 = vsel %vm8881, %v8882, %v8880
      %v8884 = vrsqrt.pop %v8116
      %v8885 = vmul.f32 %v8116, %v8884
      %vm8886 = vcmp.eq.f32.partialorder %v8116, inf
      %v8887 = vsel %vm8886, %v8116, %v8885
      %vm8888 = vcmp.eq.f32.partialorder %v8116, 0.0
      %v8889 = vand.u32 %v8116, 2147483648
      %v8890 = vsel %vm8888, %v8889, %v8887
      %v8891 = vrsqrt.pop %v8121
      %v8892 = vmul.f32 %v8121, %v8891
      %vm8893 = vcmp.eq.f32.partialorder %v8121, inf
      %v8894 = vsel %vm8893, %v8121, %v8892
      %vm8895 = vcmp.eq.f32.partialorder %v8121, 0.0
      %v8896 = vand.u32 %v8121, 2147483648
      %v8897 = vsel %vm8895, %v8896, %v8894
      %v8898 = vrsqrt.pop %v8126
      %v8899 = vmul.f32 %v8126, %v8898
      %vm8900 = vcmp.eq.f32.partialorder %v8126, inf
      %v8901 = vsel %vm8900, %v8126, %v8899
      %vm8902 = vcmp.eq.f32.partialorder %v8126, 0.0
      %v8903 = vand.u32 %v8126, 2147483648
      %v8904 = vsel %vm8902, %v8903, %v8901
      %v8905 = vrsqrt.pop %v8131
      %v8906 = vmul.f32 %v8131, %v8905
      %vm8907 = vcmp.eq.f32.partialorder %v8131, inf
      %v8908 = vsel %vm8907, %v8131, %v8906
      %vm8909 = vcmp.eq.f32.partialorder %v8131, 0.0
      %v8910 = vand.u32 %v8131, 2147483648
      %v8911 = vsel %vm8909, %v8910, %v8908
      %v8912 = vrsqrt.pop %v8136
      %v8913 = vmul.f32 %v8136, %v8912
      %vm8914 = vcmp.eq.f32.partialorder %v8136, inf
      %v8915 = vsel %vm8914, %v8136, %v8913
      %vm8916 = vcmp.eq.f32.partialorder %v8136, 0.0
      %v8917 = vand.u32 %v8136, 2147483648
      %v8918 = vsel %vm8916, %v8917, %v8915
      %v8919 = vrsqrt.pop %v8141
      %v8920 = vmul.f32 %v8141, %v8919
      %vm8921 = vcmp.eq.f32.partialorder %v8141, inf
      %v8922 = vsel %vm8921, %v8141, %v8920
      %vm8923 = vcmp.eq.f32.partialorder %v8141, 0.0
      %v8924 = vand.u32 %v8141, 2147483648
      %v8925 = vsel %vm8923, %v8924, %v8922
      %v8926 = vrsqrt.pop %v8146
      %v8927 = vmul.f32 %v8146, %v8926
      %vm8928 = vcmp.eq.f32.partialorder %v8146, inf
      %v8929 = vsel %vm8928, %v8146, %v8927
      %vm8930 = vcmp.eq.f32.partialorder %v8146, 0.0
      %v8931 = vand.u32 %v8146, 2147483648
      %v8932 = vsel %vm8930, %v8931, %v8929
      %v8933 = vrsqrt.pop %v8151
      %v8934 = vmul.f32 %v8151, %v8933
      %vm8935 = vcmp.eq.f32.partialorder %v8151, inf
      %v8936 = vsel %vm8935, %v8151, %v8934
      %vm8937 = vcmp.eq.f32.partialorder %v8151, 0.0
      %v8938 = vand.u32 %v8151, 2147483648
      %v8939 = vsel %vm8937, %v8938, %v8936
      %v8940 = vrsqrt.pop %v8156
      %v8941 = vmul.f32 %v8156, %v8940
      %vm8942 = vcmp.eq.f32.partialorder %v8156, inf
      %v8943 = vsel %vm8942, %v8156, %v8941
      %vm8944 = vcmp.eq.f32.partialorder %v8156, 0.0
      %v8945 = vand.u32 %v8156, 2147483648
      %v8946 = vsel %vm8944, %v8945, %v8943
      %v8947 = vrsqrt.pop %v8161
      %v8948 = vmul.f32 %v8161, %v8947
      %vm8949 = vcmp.eq.f32.partialorder %v8161, inf
      %v8950 = vsel %vm8949, %v8161, %v8948
      %vm8951 = vcmp.eq.f32.partialorder %v8161, 0.0
      %v8952 = vand.u32 %v8161, 2147483648
      %v8953 = vsel %vm8951, %v8952, %v8950
      %v8954 = vrsqrt.pop %v8166
      %v8955 = vmul.f32 %v8166, %v8954
      %vm8956 = vcmp.eq.f32.partialorder %v8166, inf
      %v8957 = vsel %vm8956, %v8166, %v8955
      %vm8958 = vcmp.eq.f32.partialorder %v8166, 0.0
      %v8959 = vand.u32 %v8166, 2147483648
      %v8960 = vsel %vm8958, %v8959, %v8957
      %v8961 = vrsqrt.pop %v8171
      %v8962 = vmul.f32 %v8171, %v8961
      %vm8963 = vcmp.eq.f32.partialorder %v8171, inf
      %v8964 = vsel %vm8963, %v8171, %v8962
      %vm8965 = vcmp.eq.f32.partialorder %v8171, 0.0
      %v8966 = vand.u32 %v8171, 2147483648
      %v8967 = vsel %vm8965, %v8966, %v8964
      %v8968 = vrsqrt.pop %v8176
      %v8969 = vmul.f32 %v8176, %v8968
      %vm8970 = vcmp.eq.f32.partialorder %v8176, inf
      %v8971 = vsel %vm8970, %v8176, %v8969
      %vm8972 = vcmp.eq.f32.partialorder %v8176, 0.0
      %v8973 = vand.u32 %v8176, 2147483648
      %v8974 = vsel %vm8972, %v8973, %v8971
      %v8975 = vrsqrt.pop %v8181
      %v8976 = vmul.f32 %v8181, %v8975
      %vm8977 = vcmp.eq.f32.partialorder %v8181, inf
      %v8978 = vsel %vm8977, %v8181, %v8976
      %vm8979 = vcmp.eq.f32.partialorder %v8181, 0.0
      %v8980 = vand.u32 %v8181, 2147483648
      %v8981 = vsel %vm8979, %v8980, %v8978
      %v8982 = vrsqrt.pop %v8186
      %v8983 = vmul.f32 %v8186, %v8982
      %vm8984 = vcmp.eq.f32.partialorder %v8186, inf
      %v8985 = vsel %vm8984, %v8186, %v8983
      %vm8986 = vcmp.eq.f32.partialorder %v8186, 0.0
      %v8987 = vand.u32 %v8186, 2147483648
      %v8988 = vsel %vm8986, %v8987, %v8985
      %v8989 = vrsqrt.pop %v8191
      %v8990 = vmul.f32 %v8191, %v8989
      %vm8991 = vcmp.eq.f32.partialorder %v8191, inf
      %v8992 = vsel %vm8991, %v8191, %v8990
      %vm8993 = vcmp.eq.f32.partialorder %v8191, 0.0
      %v8994 = vand.u32 %v8191, 2147483648
      %v8995 = vsel %vm8993, %v8994, %v8992
      %v8996 = vrsqrt.pop %v8196
      %v8997 = vmul.f32 %v8196, %v8996
      %vm8998 = vcmp.eq.f32.partialorder %v8196, inf
      %v8999 = vsel %vm8998, %v8196, %v8997
      %vm9000 = vcmp.eq.f32.partialorder %v8196, 0.0
      %v9001 = vand.u32 %v8196, 2147483648
      %v9002 = vsel %vm9000, %v9001, %v8999
      %v9003 = vrsqrt.pop %v8201
      %v9004 = vmul.f32 %v8201, %v9003
      %vm9005 = vcmp.eq.f32.partialorder %v8201, inf
      %v9006 = vsel %vm9005, %v8201, %v9004
      %vm9007 = vcmp.eq.f32.partialorder %v8201, 0.0
      %v9008 = vand.u32 %v8201, 2147483648
      %v9009 = vsel %vm9007, %v9008, %v9006
      %v9010 = vrsqrt.pop %v8206
      %v9011 = vmul.f32 %v8206, %v9010
      %vm9012 = vcmp.eq.f32.partialorder %v8206, inf
      %v9013 = vsel %vm9012, %v8206, %v9011
      %vm9014 = vcmp.eq.f32.partialorder %v8206, 0.0
      %v9015 = vand.u32 %v8206, 2147483648
      %v9016 = vsel %vm9014, %v9015, %v9013
      %v9017 = vrsqrt.pop %v8211
      %v9018 = vmul.f32 %v8211, %v9017
      %vm9019 = vcmp.eq.f32.partialorder %v8211, inf
      %v9020 = vsel %vm9019, %v8211, %v9018
      %vm9021 = vcmp.eq.f32.partialorder %v8211, 0.0
      %v9022 = vand.u32 %v8211, 2147483648
      %v9023 = vsel %vm9021, %v9022, %v9020
      %v9024 = vrsqrt.pop %v8216
      %v9025 = vmul.f32 %v8216, %v9024
      %vm9026 = vcmp.eq.f32.partialorder %v8216, inf
      %v9027 = vsel %vm9026, %v8216, %v9025
      %vm9028 = vcmp.eq.f32.partialorder %v8216, 0.0
      %v9029 = vand.u32 %v8216, 2147483648
      %v9030 = vsel %vm9028, %v9029, %v9027
      %v9031 = vrsqrt.pop %v8221
      %v9032 = vmul.f32 %v8221, %v9031
      %vm9033 = vcmp.eq.f32.partialorder %v8221, inf
      %v9034 = vsel %vm9033, %v8221, %v9032
      %vm9035 = vcmp.eq.f32.partialorder %v8221, 0.0
      %v9036 = vand.u32 %v8221, 2147483648
      %v9037 = vsel %vm9035, %v9036, %v9034
      %v9038 = vrsqrt.pop %v8226
      %v9039 = vmul.f32 %v8226, %v9038
      %vm9040 = vcmp.eq.f32.partialorder %v8226, inf
      %v9041 = vsel %vm9040, %v8226, %v9039
      %vm9042 = vcmp.eq.f32.partialorder %v8226, 0.0
      %v9043 = vand.u32 %v8226, 2147483648
      %v9044 = vsel %vm9042, %v9043, %v9041
      %v9045 = vrsqrt.pop %v8231
      %v9046 = vmul.f32 %v8231, %v9045
      %vm9047 = vcmp.eq.f32.partialorder %v8231, inf
      %v9048 = vsel %vm9047, %v8231, %v9046
      %vm9049 = vcmp.eq.f32.partialorder %v8231, 0.0
      %v9050 = vand.u32 %v8231, 2147483648
      %v9051 = vsel %vm9049, %v9050, %v9048
      %v9052 = vrsqrt.pop %v8236
      %v9053 = vmul.f32 %v8236, %v9052
      %vm9054 = vcmp.eq.f32.partialorder %v8236, inf
      %v9055 = vsel %vm9054, %v8236, %v9053
      %vm9056 = vcmp.eq.f32.partialorder %v8236, 0.0
      %v9057 = vand.u32 %v8236, 2147483648
      %v9058 = vsel %vm9056, %v9057, %v9055
      %v9059 = vrsqrt.pop %v8241
      %v9060 = vmul.f32 %v8241, %v9059
      %vm9061 = vcmp.eq.f32.partialorder %v8241, inf
      %v9062 = vsel %vm9061, %v8241, %v9060
      %vm9063 = vcmp.eq.f32.partialorder %v8241, 0.0
      %v9064 = vand.u32 %v8241, 2147483648
      %v9065 = vsel %vm9063, %v9064, %v9062
      %v9066 = vrsqrt.pop %v8246
      %v9067 = vmul.f32 %v8246, %v9066
      %vm9068 = vcmp.eq.f32.partialorder %v8246, inf
      %v9069 = vsel %vm9068, %v8246, %v9067
      %vm9070 = vcmp.eq.f32.partialorder %v8246, 0.0
      %v9071 = vand.u32 %v8246, 2147483648
      %v9072 = vsel %vm9070, %v9071, %v9069
      %v9073 = vrsqrt.pop %v8251
      %v9074 = vmul.f32 %v8251, %v9073
      %vm9075 = vcmp.eq.f32.partialorder %v8251, inf
      %v9076 = vsel %vm9075, %v8251, %v9074
      %vm9077 = vcmp.eq.f32.partialorder %v8251, 0.0
      %v9078 = vand.u32 %v8251, 2147483648
      %v9079 = vsel %vm9077, %v9078, %v9076
      %v9080 = vrsqrt.pop %v8256
      %v9081 = vmul.f32 %v8256, %v9080
      %vm9082 = vcmp.eq.f32.partialorder %v8256, inf
      %v9083 = vsel %vm9082, %v8256, %v9081
      %vm9084 = vcmp.eq.f32.partialorder %v8256, 0.0
      %v9085 = vand.u32 %v8256, 2147483648
      %v9086 = vsel %vm9084, %v9085, %v9083
      %v9087 = vrsqrt.pop %v8261
      %v9088 = vmul.f32 %v8261, %v9087
      %vm9089 = vcmp.eq.f32.partialorder %v8261, inf
      %v9090 = vsel %vm9089, %v8261, %v9088
      %vm9091 = vcmp.eq.f32.partialorder %v8261, 0.0
      %v9092 = vand.u32 %v8261, 2147483648
      %v9093 = vsel %vm9091, %v9092, %v9090
      %v9094 = vrsqrt.pop %v8266
      %v9095 = vmul.f32 %v8266, %v9094
      %vm9096 = vcmp.eq.f32.partialorder %v8266, inf
      %v9097 = vsel %vm9096, %v8266, %v9095
      %vm9098 = vcmp.eq.f32.partialorder %v8266, 0.0
      %v9099 = vand.u32 %v8266, 2147483648
      %v9100 = vsel %vm9098, %v9099, %v9097
      %v9101 = vrsqrt.pop %v8271
      %v9102 = vmul.f32 %v8271, %v9101
      %vm9103 = vcmp.eq.f32.partialorder %v8271, inf
      %v9104 = vsel %vm9103, %v8271, %v9102
      %vm9105 = vcmp.eq.f32.partialorder %v8271, 0.0
      %v9106 = vand.u32 %v8271, 2147483648
      %v9107 = vsel %vm9105, %v9106, %v9104
      %v9108 = vrsqrt.pop %v8276
      %v9109 = vmul.f32 %v8276, %v9108
      %vm9110 = vcmp.eq.f32.partialorder %v8276, inf
      %v9111 = vsel %vm9110, %v8276, %v9109
      %vm9112 = vcmp.eq.f32.partialorder %v8276, 0.0
      %v9113 = vand.u32 %v8276, 2147483648
      %v9114 = vsel %vm9112, %v9113, %v9111
      %v9115 = vrsqrt.pop %v8281
      %v9116 = vmul.f32 %v8281, %v9115
      %vm9117 = vcmp.eq.f32.partialorder %v8281, inf
      %v9118 = vsel %vm9117, %v8281, %v9116
      %vm9119 = vcmp.eq.f32.partialorder %v8281, 0.0
      %v9120 = vand.u32 %v8281, 2147483648
      %v9121 = vsel %vm9119, %v9120, %v9118
      %v9122 = vrsqrt.pop %v8286
      %v9123 = vmul.f32 %v8286, %v9122
      %vm9124 = vcmp.eq.f32.partialorder %v8286, inf
      %v9125 = vsel %vm9124, %v8286, %v9123
      %vm9126 = vcmp.eq.f32.partialorder %v8286, 0.0
      %v9127 = vand.u32 %v8286, 2147483648
      %v9128 = vsel %vm9126, %v9127, %v9125
      %v9129 = vrsqrt.pop %v8291
      %v9130 = vmul.f32 %v8291, %v9129
      %vm9131 = vcmp.eq.f32.partialorder %v8291, inf
      %v9132 = vsel %vm9131, %v8291, %v9130
      %vm9133 = vcmp.eq.f32.partialorder %v8291, 0.0
      %v9134 = vand.u32 %v8291, 2147483648
      %v9135 = vsel %vm9133, %v9134, %v9132
      %v9136 = vrsqrt.pop %v8296
      %v9137 = vmul.f32 %v8296, %v9136
      %vm9138 = vcmp.eq.f32.partialorder %v8296, inf
      %v9139 = vsel %vm9138, %v8296, %v9137
      %vm9140 = vcmp.eq.f32.partialorder %v8296, 0.0
      %v9141 = vand.u32 %v8296, 2147483648
      %v9142 = vsel %vm9140, %v9141, %v9139
      %v9143 = vrsqrt.pop %v8301
      %v9144 = vmul.f32 %v8301, %v9143
      %vm9145 = vcmp.eq.f32.partialorder %v8301, inf
      %v9146 = vsel %vm9145, %v8301, %v9144
      %vm9147 = vcmp.eq.f32.partialorder %v8301, 0.0
      %v9148 = vand.u32 %v8301, 2147483648
      %v9149 = vsel %vm9147, %v9148, %v9146
      %v9150 = vrsqrt.pop %v8306
      %v9151 = vmul.f32 %v8306, %v9150
      %vm9152 = vcmp.eq.f32.partialorder %v8306, inf
      %v9153 = vsel %vm9152, %v8306, %v9151
      %vm9154 = vcmp.eq.f32.partialorder %v8306, 0.0
      %v9155 = vand.u32 %v8306, 2147483648
      %v9156 = vsel %vm9154, %v9155, %v9153
      %v9157 = vrsqrt.pop %v8311
      %v9158 = vmul.f32 %v8311, %v9157
      %vm9159 = vcmp.eq.f32.partialorder %v8311, inf
      %v9160 = vsel %vm9159, %v8311, %v9158
      %vm9161 = vcmp.eq.f32.partialorder %v8311, 0.0
      %v9162 = vand.u32 %v8311, 2147483648
      %v9163 = vsel %vm9161, %v9162, %v9160
      %v9164 = vrsqrt.pop %v8316
      %v9165 = vmul.f32 %v8316, %v9164
      %vm9166 = vcmp.eq.f32.partialorder %v8316, inf
      %v9167 = vsel %vm9166, %v8316, %v9165
      %vm9168 = vcmp.eq.f32.partialorder %v8316, 0.0
      %v9169 = vand.u32 %v8316, 2147483648
      %v9170 = vsel %vm9168, %v9169, %v9167
      %v9171 = vrsqrt.pop %v8321
      %v9172 = vmul.f32 %v8321, %v9171
      %vm9173 = vcmp.eq.f32.partialorder %v8321, inf
      %v9174 = vsel %vm9173, %v8321, %v9172
      %vm9175 = vcmp.eq.f32.partialorder %v8321, 0.0
      %v9176 = vand.u32 %v8321, 2147483648
      %v9177 = vsel %vm9175, %v9176, %v9174
      %v9178 = vrsqrt.pop %v8326
      %v9179 = vmul.f32 %v8326, %v9178
      %vm9180 = vcmp.eq.f32.partialorder %v8326, inf
      %v9181 = vsel %vm9180, %v8326, %v9179
      %vm9182 = vcmp.eq.f32.partialorder %v8326, 0.0
      %v9183 = vand.u32 %v8326, 2147483648
      %v9184 = vsel %vm9182, %v9183, %v9181
      %v9185 = vrsqrt.pop %v8331
      %v9186 = vmul.f32 %v8331, %v9185
      %vm9187 = vcmp.eq.f32.partialorder %v8331, inf
      %v9188 = vsel %vm9187, %v8331, %v9186
      %vm9189 = vcmp.eq.f32.partialorder %v8331, 0.0
      %v9190 = vand.u32 %v8331, 2147483648
      %v9191 = vsel %vm9189, %v9190, %v9188
      %v9192 = vrsqrt.pop %v8336
      %v9193 = vmul.f32 %v8336, %v9192
      %vm9194 = vcmp.eq.f32.partialorder %v8336, inf
      %v9195 = vsel %vm9194, %v8336, %v9193
      %vm9196 = vcmp.eq.f32.partialorder %v8336, 0.0
      %v9197 = vand.u32 %v8336, 2147483648
      %v9198 = vsel %vm9196, %v9197, %v9195
      %v9199 = vrsqrt.pop %v8341
      %v9200 = vmul.f32 %v8341, %v9199
      %vm9201 = vcmp.eq.f32.partialorder %v8341, inf
      %v9202 = vsel %vm9201, %v8341, %v9200
      %vm9203 = vcmp.eq.f32.partialorder %v8341, 0.0
      %v9204 = vand.u32 %v8341, 2147483648
      %v9205 = vsel %vm9203, %v9204, %v9202
      %v9206 = vrsqrt.pop %v8346
      %v9207 = vmul.f32 %v8346, %v9206
      %vm9208 = vcmp.eq.f32.partialorder %v8346, inf
      %v9209 = vsel %vm9208, %v8346, %v9207
      %vm9210 = vcmp.eq.f32.partialorder %v8346, 0.0
      %v9211 = vand.u32 %v8346, 2147483648
      %v9212 = vsel %vm9210, %v9211, %v9209
      %v9213 = vrsqrt.pop %v8351
      %v9214 = vmul.f32 %v8351, %v9213
      %vm9215 = vcmp.eq.f32.partialorder %v8351, inf
      %v9216 = vsel %vm9215, %v8351, %v9214
      %vm9217 = vcmp.eq.f32.partialorder %v8351, 0.0
      %v9218 = vand.u32 %v8351, 2147483648
      %v9219 = vsel %vm9217, %v9218, %v9216
      %v9220 = vrsqrt.pop %v8356
      %v9221 = vmul.f32 %v8356, %v9220
      %vm9222 = vcmp.eq.f32.partialorder %v8356, inf
      %v9223 = vsel %vm9222, %v8356, %v9221
      %vm9224 = vcmp.eq.f32.partialorder %v8356, 0.0
      %v9225 = vand.u32 %v8356, 2147483648
      %v9226 = vsel %vm9224, %v9225, %v9223
      %v9227 = vrsqrt.pop %v8361
      %v9228 = vmul.f32 %v8361, %v9227
      %vm9229 = vcmp.eq.f32.partialorder %v8361, inf
      %v9230 = vsel %vm9229, %v8361, %v9228
      %vm9231 = vcmp.eq.f32.partialorder %v8361, 0.0
      %v9232 = vand.u32 %v8361, 2147483648
      %v9233 = vsel %vm9231, %v9232, %v9230
      %v9234 = vrsqrt.pop %v8366
      %v9235 = vmul.f32 %v8366, %v9234
      %vm9236 = vcmp.eq.f32.partialorder %v8366, inf
      %v9237 = vsel %vm9236, %v8366, %v9235
      %vm9238 = vcmp.eq.f32.partialorder %v8366, 0.0
      %v9239 = vand.u32 %v8366, 2147483648
      %v9240 = vsel %vm9238, %v9239, %v9237
      %v9241 = vrsqrt.pop %v8371
      %v9242 = vmul.f32 %v8371, %v9241
      %vm9243 = vcmp.eq.f32.partialorder %v8371, inf
      %v9244 = vsel %vm9243, %v8371, %v9242
      %vm9245 = vcmp.eq.f32.partialorder %v8371, 0.0
      %v9246 = vand.u32 %v8371, 2147483648
      %v9247 = vsel %vm9245, %v9246, %v9244
      %v9248 = vrsqrt.pop %v8376
      %v9249 = vmul.f32 %v8376, %v9248
      %vm9250 = vcmp.eq.f32.partialorder %v8376, inf
      %v9251 = vsel %vm9250, %v8376, %v9249
      %vm9252 = vcmp.eq.f32.partialorder %v8376, 0.0
      %v9253 = vand.u32 %v8376, 2147483648
      %v9254 = vsel %vm9252, %v9253, %v9251
      %v9255 = vrsqrt.pop %v8381
      %v9256 = vmul.f32 %v8381, %v9255
      %vm9257 = vcmp.eq.f32.partialorder %v8381, inf
      %v9258 = vsel %vm9257, %v8381, %v9256
      %vm9259 = vcmp.eq.f32.partialorder %v8381, 0.0
      %v9260 = vand.u32 %v8381, 2147483648
      %v9261 = vsel %vm9259, %v9260, %v9258
      %v9262 = vrsqrt.pop %v8386
      %v9263 = vmul.f32 %v8386, %v9262
      %vm9264 = vcmp.eq.f32.partialorder %v8386, inf
      %v9265 = vsel %vm9264, %v8386, %v9263
      %vm9266 = vcmp.eq.f32.partialorder %v8386, 0.0
      %v9267 = vand.u32 %v8386, 2147483648
      %v9268 = vsel %vm9266, %v9267, %v9265
      %v9269 = vrsqrt.pop %v8391
      %v9270 = vmul.f32 %v8391, %v9269
      %vm9271 = vcmp.eq.f32.partialorder %v8391, inf
      %v9272 = vsel %vm9271, %v8391, %v9270
      %vm9273 = vcmp.eq.f32.partialorder %v8391, 0.0
      %v9274 = vand.u32 %v8391, 2147483648
      %v9275 = vsel %vm9273, %v9274, %v9272
      %v9276 = vrsqrt.pop %v8396
      %v9277 = vmul.f32 %v8396, %v9276
      %vm9278 = vcmp.eq.f32.partialorder %v8396, inf
      %v9279 = vsel %vm9278, %v8396, %v9277
      %vm9280 = vcmp.eq.f32.partialorder %v8396, 0.0
      %v9281 = vand.u32 %v8396, 2147483648
      %v9282 = vsel %vm9280, %v9281, %v9279
      %v9283 = vrsqrt.pop %v8401
      %v9284 = vmul.f32 %v8401, %v9283
      %vm9285 = vcmp.eq.f32.partialorder %v8401, inf
      %v9286 = vsel %vm9285, %v8401, %v9284
      %vm9287 = vcmp.eq.f32.partialorder %v8401, 0.0
      %v9288 = vand.u32 %v8401, 2147483648
      %v9289 = vsel %vm9287, %v9288, %v9286
      %v9290 = vrsqrt.pop %v8406
      %v9291 = vmul.f32 %v8406, %v9290
      %vm9292 = vcmp.eq.f32.partialorder %v8406, inf
      %v9293 = vsel %vm9292, %v8406, %v9291
      %vm9294 = vcmp.eq.f32.partialorder %v8406, 0.0
      %v9295 = vand.u32 %v8406, 2147483648
      %v9296 = vsel %vm9294, %v9295, %v9293
      %v9297 = vrsqrt.pop %v8411
      %v9298 = vmul.f32 %v8411, %v9297
      %vm9299 = vcmp.eq.f32.partialorder %v8411, inf
      %v9300 = vsel %vm9299, %v8411, %v9298
      %vm9301 = vcmp.eq.f32.partialorder %v8411, 0.0
      %v9302 = vand.u32 %v8411, 2147483648
      %v9303 = vsel %vm9301, %v9302, %v9300
      %v9304 = vrsqrt.pop %v8416
      %v9305 = vmul.f32 %v8416, %v9304
      %vm9306 = vcmp.eq.f32.partialorder %v8416, inf
      %v9307 = vsel %vm9306, %v8416, %v9305
      %vm9308 = vcmp.eq.f32.partialorder %v8416, 0.0
      %v9309 = vand.u32 %v8416, 2147483648
      %v9310 = vsel %vm9308, %v9309, %v9307
      %v9311 = vrsqrt.pop %v8421
      %v9312 = vmul.f32 %v8421, %v9311
      %vm9313 = vcmp.eq.f32.partialorder %v8421, inf
      %v9314 = vsel %vm9313, %v8421, %v9312
      %vm9315 = vcmp.eq.f32.partialorder %v8421, 0.0
      %v9316 = vand.u32 %v8421, 2147483648
      %v9317 = vsel %vm9315, %v9316, %v9314
      %v9318 = vrsqrt.pop %v8426
      %v9319 = vmul.f32 %v8426, %v9318
      %vm9320 = vcmp.eq.f32.partialorder %v8426, inf
      %v9321 = vsel %vm9320, %v8426, %v9319
      %vm9322 = vcmp.eq.f32.partialorder %v8426, 0.0
      %v9323 = vand.u32 %v8426, 2147483648
      %v9324 = vsel %vm9322, %v9323, %v9321
      %v9325 = vmul.f32 %v6563, %v8435
      %v9326 = vmul.f32 %v6568, %v8442
      %v9327 = vmul.f32 %v6573, %v8449
      %v9328 = vmul.f32 %v6578, %v8456
      %v9329 = vmul.f32 %v6583, %v8463
      %v9330 = vmul.f32 %v6588, %v8470
      %v9331 = vmul.f32 %v6593, %v8477
      %v9332 = vmul.f32 %v6598, %v8484
      %v9333 = vmul.f32 %v6603, %v8491
      %v9334 = vmul.f32 %v6608, %v8498
      %v9335 = vmul.f32 %v6613, %v8505
      %v9336 = vmul.f32 %v6618, %v8512
      %v9337 = vmul.f32 %v6623, %v8519
      %v9338 = vmul.f32 %v6628, %v8526
      %v9339 = vmul.f32 %v6633, %v8533
      %v9340 = vmul.f32 %v6638, %v8540
      %v9341 = vmul.f32 %v6643, %v8547
      %v9342 = vmul.f32 %v6648, %v8554
      %v9343 = vmul.f32 %v6653, %v8561
      %v9344 = vmul.f32 %v6658, %v8568
      %v9345 = vmul.f32 %v6663, %v8575
      %v9346 = vmul.f32 %v6668, %v8582
      %v9347 = vmul.f32 %v6673, %v8589
      %v9348 = vmul.f32 %v6678, %v8596
      %v9349 = vmul.f32 %v6683, %v8603
      %v9350 = vmul.f32 %v6688, %v8610
      %v9351 = vmul.f32 %v6693, %v8617
      %v9352 = vmul.f32 %v6698, %v8624
      %v9353 = vmul.f32 %v6703, %v8631
      %v9354 = vmul.f32 %v6708, %v8638
      %v9355 = vmul.f32 %v6713, %v8645
      %v9356 = vmul.f32 %v6718, %v8652
      %v9357 = vmul.f32 %v6723, %v8659
      %v9358 = vmul.f32 %v6728, %v8666
      %v9359 = vmul.f32 %v6733, %v8673
      %v9360 = vmul.f32 %v6738, %v8680
      %v9361 = vmul.f32 %v6743, %v8687
      %v9362 = vmul.f32 %v6748, %v8694
      %v9363 = vmul.f32 %v6753, %v8701
      %v9364 = vmul.f32 %v6758, %v8708
      %v9365 = vmul.f32 %v6763, %v8715
      %v9366 = vmul.f32 %v6768, %v8722
      %v9367 = vmul.f32 %v6773, %v8729
      %v9368 = vmul.f32 %v6778, %v8736
      %v9369 = vmul.f32 %v6783, %v8743
      %v9370 = vmul.f32 %v6788, %v8750
      %v9371 = vmul.f32 %v6793, %v8757
      %v9372 = vmul.f32 %v6798, %v8764
      %v9373 = vmul.f32 %v6803, %v8771
      %v9374 = vmul.f32 %v6808, %v8778
      %v9375 = vmul.f32 %v6813, %v8785
      %v9376 = vmul.f32 %v6818, %v8792
      %v9377 = vmul.f32 %v6823, %v8799
      %v9378 = vmul.f32 %v6828, %v8806
      %v9379 = vmul.f32 %v6833, %v8813
      %v9380 = vmul.f32 %v6838, %v8820
      %v9381 = vmul.f32 %v6843, %v8827
      %v9382 = vmul.f32 %v6848, %v8834
      %v9383 = vmul.f32 %v6853, %v8841
      %v9384 = vmul.f32 %v6858, %v8848
      %v9385 = vmul.f32 %v6863, %v8855
      %v9386 = vmul.f32 %v6868, %v8862
      %v9387 = vmul.f32 %v6873, %v8869
      %v9388 = vmul.f32 %v6878, %v8876
      %v9389 = vmul.f32 %v6883, %v8883
      %v9390 = vmul.f32 %v6888, %v8890
      %v9391 = vmul.f32 %v6893, %v8897
      %v9392 = vmul.f32 %v6898, %v8904
      %v9393 = vmul.f32 %v6903, %v8911
      %v9394 = vmul.f32 %v6908, %v8918
      %v9395 = vmul.f32 %v6913, %v8925
      %v9396 = vmul.f32 %v6918, %v8932
      %v9397 = vmul.f32 %v6923, %v8939
      %v9398 = vmul.f32 %v6928, %v8946
      %v9399 = vmul.f32 %v6933, %v8953
      %v9400 = vmul.f32 %v6938, %v8960
      %v9401 = vmul.f32 %v6943, %v8967
      %v9402 = vmul.f32 %v6948, %v8974
      %v9403 = vmul.f32 %v6953, %v8981
      %v9404 = vmul.f32 %v6958, %v8988
      %v9405 = vmul.f32 %v6963, %v8995
      %v9406 = vmul.f32 %v6968, %v9002
      %v9407 = vmul.f32 %v6973, %v9009
      %v9408 = vmul.f32 %v6978, %v9016
      %v9409 = vmul.f32 %v6983, %v9023
      %v9410 = vmul.f32 %v6988, %v9030
      %v9411 = vmul.f32 %v6993, %v9037
      %v9412 = vmul.f32 %v6998, %v9044
      %v9413 = vmul.f32 %v7003, %v9051
      %v9414 = vmul.f32 %v7008, %v9058
      %v9415 = vmul.f32 %v7013, %v9065
      %v9416 = vmul.f32 %v7018, %v9072
      %v9417 = vmul.f32 %v7023, %v9079
      %v9418 = vmul.f32 %v7028, %v9086
      %v9419 = vmul.f32 %v7033, %v9093
      %v9420 = vmul.f32 %v7038, %v9100
      %v9421 = vmul.f32 %v7043, %v9107
      %v9422 = vmul.f32 %v7048, %v9114
      %v9423 = vmul.f32 %v7053, %v9121
      %v9424 = vmul.f32 %v7058, %v9128
      %v9425 = vmul.f32 %v7063, %v9135
      %v9426 = vmul.f32 %v7068, %v9142
      %v9427 = vmul.f32 %v7073, %v9149
      %v9428 = vmul.f32 %v7078, %v9156
      %v9429 = vmul.f32 %v7083, %v9163
      %v9430 = vmul.f32 %v7088, %v9170
      %v9431 = vmul.f32 %v7093, %v9177
      %v9432 = vmul.f32 %v7098, %v9184
      %v9433 = vmul.f32 %v7103, %v9191
      %v9434 = vmul.f32 %v7108, %v9198
      %v9435 = vmul.f32 %v7113, %v9205
      %v9436 = vmul.f32 %v7118, %v9212
      %v9437 = vmul.f32 %v7123, %v9219
      %v9438 = vmul.f32 %v7128, %v9226
      %v9439 = vmul.f32 %v7133, %v9233
      %v9440 = vmul.f32 %v7138, %v9240
      %v9441 = vmul.f32 %v7143, %v9247
      %v9442 = vmul.f32 %v7148, %v9254
      %v9443 = vmul.f32 %v7153, %v9261
      %v9444 = vmul.f32 %v7158, %v9268
      %v9445 = vmul.f32 %v7163, %v9275
      %v9446 = vmul.f32 %v7168, %v9282
      %v9447 = vmul.f32 %v7173, %v9289
      %v9448 = vmul.f32 %v7178, %v9296
      %v9449 = vmul.f32 %v7183, %v9303
      %v9450 = vmul.f32 %v7188, %v9310
      %v9451 = vmul.f32 %v7193, %v9317
      %v9452 = vmul.f32 %v7198, %v9324
      %9581 = vrot.lane.b32.xlu0 %v225, 124
      %v9582 = vpop.permute.xlu0 %9581
      %9583 = vrot.lane.b32.xlu0 %v226, 124
      %v9584 = vpop.permute.xlu0 %9583
      %9585 = vrot.lane.b32.xlu0 %v227, 124
      %v9586 = vpop.permute.xlu0 %9585
      %9587 = vrot.lane.b32.xlu0 %v228, 124
      %v9588 = vpop.permute.xlu0 %9587
      %9589 = vrot.lane.b32.xlu0 %v229, 124
      %v9590 = vpop.permute.xlu0 %9589
      %9591 = vrot.lane.b32.xlu0 %v230, 124
      %v9592 = vpop.permute.xlu0 %9591
      %9593 = vrot.lane.b32.xlu0 %v231, 124
      %v9594 = vpop.permute.xlu0 %9593
      %9595 = vrot.lane.b32.xlu0 %v232, 124
      %v9596 = vpop.permute.xlu0 %9595
      %9597 = vrot.lane.b32.xlu0 %v233, 124
      %v9598 = vpop.permute.xlu0 %9597
      %9599 = vrot.lane.b32.xlu0 %v234, 124
      %v9600 = vpop.permute.xlu0 %9599
      %9601 = vrot.lane.b32.xlu0 %v235, 124
      %v9602 = vpop.permute.xlu0 %9601
      %9603 = vrot.lane.b32.xlu0 %v236, 124
      %v9604 = vpop.permute.xlu0 %9603
      %9605 = vrot.lane.b32.xlu0 %v237, 124
      %v9606 = vpop.permute.xlu0 %9605
      %9607 = vrot.lane.b32.xlu0 %v238, 124
      %v9608 = vpop.permute.xlu0 %9607
      %9609 = vrot.lane.b32.xlu0 %v239, 124
      %v9610 = vpop.permute.xlu0 %9609
      %9611 = vrot.lane.b32.xlu0 %v240, 124
      %v9612 = vpop.permute.xlu0 %9611
      %9613 = vrot.lane.b32.xlu0 %v241, 124
      %v9614 = vpop.permute.xlu0 %9613
      %9615 = vrot.lane.b32.xlu0 %v242, 124
      %v9616 = vpop.permute.xlu0 %9615
      %9617 = vrot.lane.b32.xlu0 %v243, 124
      %v9618 = vpop.permute.xlu0 %9617
      %9619 = vrot.lane.b32.xlu0 %v244, 124
      %v9620 = vpop.permute.xlu0 %9619
      %9621 = vrot.lane.b32.xlu0 %v245, 124
      %v9622 = vpop.permute.xlu0 %9621
      %9623 = vrot.lane.b32.xlu0 %v246, 124
      %v9624 = vpop.permute.xlu0 %9623
      %9625 = vrot.lane.b32.xlu0 %v247, 124
      %v9626 = vpop.permute.xlu0 %9625
      %9627 = vrot.lane.b32.xlu0 %v248, 124
      %v9628 = vpop.permute.xlu0 %9627
      %9629 = vrot.lane.b32.xlu0 %v249, 124
      %v9630 = vpop.permute.xlu0 %9629
      %9631 = vrot.lane.b32.xlu0 %v250, 124
      %v9632 = vpop.permute.xlu0 %9631
      %9633 = vrot.lane.b32.xlu0 %v251, 124
      %v9634 = vpop.permute.xlu0 %9633
      %9635 = vrot.lane.b32.xlu0 %v252, 124
      %v9636 = vpop.permute.xlu0 %9635
      %9637 = vrot.lane.b32.xlu0 %v253, 124
      %v9638 = vpop.permute.xlu0 %9637
      %9639 = vrot.lane.b32.xlu0 %v254, 124
      %v9640 = vpop.permute.xlu0 %9639
      %9641 = vrot.lane.b32.xlu0 %v255, 124
      %v9642 = vpop.permute.xlu0 %9641
      %9643 = vrot.lane.b32.xlu0 %v256, 124
      %v9644 = vpop.permute.xlu0 %9643
      %9645 = vrot.lane.b32.xlu0 %v257, 124
      %v9646 = vpop.permute.xlu0 %9645
      %9647 = vrot.lane.b32.xlu0 %v258, 124
      %v9648 = vpop.permute.xlu0 %9647
      %9649 = vrot.lane.b32.xlu0 %v259, 124
      %v9650 = vpop.permute.xlu0 %9649
      %9651 = vrot.lane.b32.xlu0 %v260, 124
      %v9652 = vpop.permute.xlu0 %9651
      %9653 = vrot.lane.b32.xlu0 %v261, 124
      %v9654 = vpop.permute.xlu0 %9653
      %9655 = vrot.lane.b32.xlu0 %v262, 124
      %v9656 = vpop.permute.xlu0 %9655
      %9657 = vrot.lane.b32.xlu0 %v263, 124
      %v9658 = vpop.permute.xlu0 %9657
      %9659 = vrot.lane.b32.xlu0 %v264, 124
      %v9660 = vpop.permute.xlu0 %9659
      %9661 = vrot.lane.b32.xlu0 %v265, 124
      %v9662 = vpop.permute.xlu0 %9661
      %9663 = vrot.lane.b32.xlu0 %v266, 124
      %v9664 = vpop.permute.xlu0 %9663
      %9665 = vrot.lane.b32.xlu0 %v267, 124
      %v9666 = vpop.permute.xlu0 %9665
      %9667 = vrot.lane.b32.xlu0 %v268, 124
      %v9668 = vpop.permute.xlu0 %9667
      %9669 = vrot.lane.b32.xlu0 %v269, 124
      %v9670 = vpop.permute.xlu0 %9669
      %9671 = vrot.lane.b32.xlu0 %v270, 124
      %v9672 = vpop.permute.xlu0 %9671
      %9673 = vrot.lane.b32.xlu0 %v271, 124
      %v9674 = vpop.permute.xlu0 %9673
      %9675 = vrot.lane.b32.xlu0 %v272, 124
      %v9676 = vpop.permute.xlu0 %9675
      %9677 = vrot.lane.b32.xlu0 %v273, 124
      %v9678 = vpop.permute.xlu0 %9677
      %9679 = vrot.lane.b32.xlu0 %v274, 124
      %v9680 = vpop.permute.xlu0 %9679
      %9681 = vrot.lane.b32.xlu0 %v275, 124
      %v9682 = vpop.permute.xlu0 %9681
      %9683 = vrot.lane.b32.xlu0 %v276, 124
      %v9684 = vpop.permute.xlu0 %9683
      %9685 = vrot.lane.b32.xlu0 %v277, 124
      %v9686 = vpop.permute.xlu0 %9685
      %9687 = vrot.lane.b32.xlu0 %v278, 124
      %v9688 = vpop.permute.xlu0 %9687
      %9689 = vrot.lane.b32.xlu0 %v279, 124
      %v9690 = vpop.permute.xlu0 %9689
      %9691 = vrot.lane.b32.xlu0 %v280, 124
      %v9692 = vpop.permute.xlu0 %9691
      %9693 = vrot.lane.b32.xlu0 %v281, 124
      %v9694 = vpop.permute.xlu0 %9693
      %9695 = vrot.lane.b32.xlu0 %v282, 124
      %v9696 = vpop.permute.xlu0 %9695
      %9697 = vrot.lane.b32.xlu0 %v283, 124
      %v9698 = vpop.permute.xlu0 %9697
      %9699 = vrot.lane.b32.xlu0 %v284, 124
      %v9700 = vpop.permute.xlu0 %9699
      %9701 = vrot.lane.b32.xlu0 %v285, 124
      %v9702 = vpop.permute.xlu0 %9701
      %9703 = vrot.lane.b32.xlu0 %v286, 124
      %v9704 = vpop.permute.xlu0 %9703
      %9705 = vrot.lane.b32.xlu0 %v287, 124
      %v9706 = vpop.permute.xlu0 %9705
      %9707 = vrot.lane.b32.xlu0 %v288, 124
      %v9708 = vpop.permute.xlu0 %9707
      %9709 = vrot.lane.b32.xlu0 %v289, 124
      %v9710 = vpop.permute.xlu0 %9709
      %9711 = vrot.lane.b32.xlu0 %v290, 124
      %v9712 = vpop.permute.xlu0 %9711
      %9713 = vrot.lane.b32.xlu0 %v291, 124
      %v9714 = vpop.permute.xlu0 %9713
      %9715 = vrot.lane.b32.xlu0 %v292, 124
      %v9716 = vpop.permute.xlu0 %9715
      %9717 = vrot.lane.b32.xlu0 %v293, 124
      %v9718 = vpop.permute.xlu0 %9717
      %9719 = vrot.lane.b32.xlu0 %v294, 124
      %v9720 = vpop.permute.xlu0 %9719
      %9721 = vrot.lane.b32.xlu0 %v295, 124
      %v9722 = vpop.permute.xlu0 %9721
      %9723 = vrot.lane.b32.xlu0 %v296, 124
      %v9724 = vpop.permute.xlu0 %9723
      %9725 = vrot.lane.b32.xlu0 %v297, 124
      %v9726 = vpop.permute.xlu0 %9725
      %9727 = vrot.lane.b32.xlu0 %v298, 124
      %v9728 = vpop.permute.xlu0 %9727
      %9729 = vrot.lane.b32.xlu0 %v299, 124
      %v9730 = vpop.permute.xlu0 %9729
      %9731 = vrot.lane.b32.xlu0 %v300, 124
      %v9732 = vpop.permute.xlu0 %9731
      %9733 = vrot.lane.b32.xlu0 %v301, 124
      %v9734 = vpop.permute.xlu0 %9733
      %9735 = vrot.lane.b32.xlu0 %v302, 124
      %v9736 = vpop.permute.xlu0 %9735
      %9737 = vrot.lane.b32.xlu0 %v303, 124
      %v9738 = vpop.permute.xlu0 %9737
      %9739 = vrot.lane.b32.xlu0 %v304, 124
      %v9740 = vpop.permute.xlu0 %9739
      %9741 = vrot.lane.b32.xlu0 %v305, 124
      %v9742 = vpop.permute.xlu0 %9741
      %9743 = vrot.lane.b32.xlu0 %v306, 124
      %v9744 = vpop.permute.xlu0 %9743
      %9745 = vrot.lane.b32.xlu0 %v307, 124
      %v9746 = vpop.permute.xlu0 %9745
      %9747 = vrot.lane.b32.xlu0 %v308, 124
      %v9748 = vpop.permute.xlu0 %9747
      %9749 = vrot.lane.b32.xlu0 %v309, 124
      %v9750 = vpop.permute.xlu0 %9749
      %9751 = vrot.lane.b32.xlu0 %v310, 124
      %v9752 = vpop.permute.xlu0 %9751
      %9753 = vrot.lane.b32.xlu0 %v311, 124
      %v9754 = vpop.permute.xlu0 %9753
      %9755 = vrot.lane.b32.xlu0 %v312, 124
      %v9756 = vpop.permute.xlu0 %9755
      %9757 = vrot.lane.b32.xlu0 %v313, 124
      %v9758 = vpop.permute.xlu0 %9757
      %9759 = vrot.lane.b32.xlu0 %v314, 124
      %v9760 = vpop.permute.xlu0 %9759
      %9761 = vrot.lane.b32.xlu0 %v315, 124
      %v9762 = vpop.permute.xlu0 %9761
      %9763 = vrot.lane.b32.xlu0 %v316, 124
      %v9764 = vpop.permute.xlu0 %9763
      %9765 = vrot.lane.b32.xlu0 %v317, 124
      %v9766 = vpop.permute.xlu0 %9765
      %9767 = vrot.lane.b32.xlu0 %v318, 124
      %v9768 = vpop.permute.xlu0 %9767
      %9769 = vrot.lane.b32.xlu0 %v319, 124
      %v9770 = vpop.permute.xlu0 %9769
      %9771 = vrot.lane.b32.xlu0 %v320, 124
      %v9772 = vpop.permute.xlu0 %9771
      %9773 = vrot.lane.b32.xlu0 %v321, 124
      %v9774 = vpop.permute.xlu0 %9773
      %9775 = vrot.lane.b32.xlu0 %v322, 124
      %v9776 = vpop.permute.xlu0 %9775
      %9777 = vrot.lane.b32.xlu0 %v323, 124
      %v9778 = vpop.permute.xlu0 %9777
      %9779 = vrot.lane.b32.xlu0 %v324, 124
      %v9780 = vpop.permute.xlu0 %9779
      %9781 = vrot.lane.b32.xlu0 %v325, 124
      %v9782 = vpop.permute.xlu0 %9781
      %9783 = vrot.lane.b32.xlu0 %v326, 124
      %v9784 = vpop.permute.xlu0 %9783
      %9785 = vrot.lane.b32.xlu0 %v327, 124
      %v9786 = vpop.permute.xlu0 %9785
      %9787 = vrot.lane.b32.xlu0 %v328, 124
      %v9788 = vpop.permute.xlu0 %9787
      %9789 = vrot.lane.b32.xlu0 %v329, 124
      %v9790 = vpop.permute.xlu0 %9789
      %9791 = vrot.lane.b32.xlu0 %v330, 124
      %v9792 = vpop.permute.xlu0 %9791
      %9793 = vrot.lane.b32.xlu0 %v331, 124
      %v9794 = vpop.permute.xlu0 %9793
      %9795 = vrot.lane.b32.xlu0 %v332, 124
      %v9796 = vpop.permute.xlu0 %9795
      %9797 = vrot.lane.b32.xlu0 %v333, 124
      %v9798 = vpop.permute.xlu0 %9797
      %9799 = vrot.lane.b32.xlu0 %v334, 124
      %v9800 = vpop.permute.xlu0 %9799
      %9801 = vrot.lane.b32.xlu0 %v335, 124
      %v9802 = vpop.permute.xlu0 %9801
      %9803 = vrot.lane.b32.xlu0 %v336, 124
      %v9804 = vpop.permute.xlu0 %9803
      %9805 = vrot.lane.b32.xlu0 %v337, 124
      %v9806 = vpop.permute.xlu0 %9805
      %9807 = vrot.lane.b32.xlu0 %v338, 124
      %v9808 = vpop.permute.xlu0 %9807
      %9809 = vrot.lane.b32.xlu0 %v339, 124
      %v9810 = vpop.permute.xlu0 %9809
      %9811 = vrot.lane.b32.xlu0 %v340, 124
      %v9812 = vpop.permute.xlu0 %9811
      %9813 = vrot.lane.b32.xlu0 %v341, 124
      %v9814 = vpop.permute.xlu0 %9813
      %9815 = vrot.lane.b32.xlu0 %v342, 124
      %v9816 = vpop.permute.xlu0 %9815
      %9817 = vrot.lane.b32.xlu0 %v343, 124
      %v9818 = vpop.permute.xlu0 %9817
      %9819 = vrot.lane.b32.xlu0 %v344, 124
      %v9820 = vpop.permute.xlu0 %9819
      %9821 = vrot.lane.b32.xlu0 %v345, 124
      %v9822 = vpop.permute.xlu0 %9821
      %9823 = vrot.lane.b32.xlu0 %v346, 124
      %v9824 = vpop.permute.xlu0 %9823
      %9825 = vrot.lane.b32.xlu0 %v347, 124
      %v9826 = vpop.permute.xlu0 %9825
      %9827 = vrot.lane.b32.xlu0 %v348, 124
      %v9828 = vpop.permute.xlu0 %9827
      %9829 = vrot.lane.b32.xlu0 %v349, 124
      %v9830 = vpop.permute.xlu0 %9829
      %9831 = vrot.lane.b32.xlu0 %v350, 124
      %v9832 = vpop.permute.xlu0 %9831
      %9833 = vrot.lane.b32.xlu0 %v351, 124
      %v9834 = vpop.permute.xlu0 %9833
      %9835 = vrot.lane.b32.xlu0 %v352, 124
      %v9836 = vpop.permute.xlu0 %9835
      %v9965 = vadd.f32 %v9325, %v9582
      %v9966 = vadd.f32 %v9326, %v9584
      %v9967 = vadd.f32 %v9327, %v9586
      %v9968 = vadd.f32 %v9328, %v9588
      %v9969 = vadd.f32 %v9329, %v9590
      %v9970 = vadd.f32 %v9330, %v9592
      %v9971 = vadd.f32 %v9331, %v9594
      %v9972 = vadd.f32 %v9332, %v9596
      %v9973 = vadd.f32 %v9333, %v9598
      %v9974 = vadd.f32 %v9334, %v9600
      %v9975 = vadd.f32 %v9335, %v9602
      %v9976 = vadd.f32 %v9336, %v9604
      %v9977 = vadd.f32 %v9337, %v9606
      %v9978 = vadd.f32 %v9338, %v9608
      %v9979 = vadd.f32 %v9339, %v9610
      %v9980 = vadd.f32 %v9340, %v9612
      %v9981 = vadd.f32 %v9341, %v9614
      %v9982 = vadd.f32 %v9342, %v9616
      %v9983 = vadd.f32 %v9343, %v9618
      %v9984 = vadd.f32 %v9344, %v9620
      %v9985 = vadd.f32 %v9345, %v9622
      %v9986 = vadd.f32 %v9346, %v9624
      %v9987 = vadd.f32 %v9347, %v9626
      %v9988 = vadd.f32 %v9348, %v9628
      %v9989 = vadd.f32 %v9349, %v9630
      %v9990 = vadd.f32 %v9350, %v9632
      %v9991 = vadd.f32 %v9351, %v9634
      %v9992 = vadd.f32 %v9352, %v9636
      %v9993 = vadd.f32 %v9353, %v9638
      %v9994 = vadd.f32 %v9354, %v9640
      %v9995 = vadd.f32 %v9355, %v9642
      %v9996 = vadd.f32 %v9356, %v9644
      %v9997 = vadd.f32 %v9357, %v9646
      %v9998 = vadd.f32 %v9358, %v9648
      %v9999 = vadd.f32 %v9359, %v9650
      %v10000 = vadd.f32 %v9360, %v9652
      %v10001 = vadd.f32 %v9361, %v9654
      %v10002 = vadd.f32 %v9362, %v9656
      %v10003 = vadd.f32 %v9363, %v9658
      %v10004 = vadd.f32 %v9364, %v9660
      %v10005 = vadd.f32 %v9365, %v9662
      %v10006 = vadd.f32 %v9366, %v9664
      %v10007 = vadd.f32 %v9367, %v9666
      %v10008 = vadd.f32 %v9368, %v9668
      %v10009 = vadd.f32 %v9369, %v9670
      %v10010 = vadd.f32 %v9370, %v9672
      %v10011 = vadd.f32 %v9371, %v9674
      %v10012 = vadd.f32 %v9372, %v9676
      %v10013 = vadd.f32 %v9373, %v9678
      %v10014 = vadd.f32 %v9374, %v9680
      %v10015 = vadd.f32 %v9375, %v9682
      %v10016 = vadd.f32 %v9376, %v9684
      %v10017 = vadd.f32 %v9377, %v9686
      %v10018 = vadd.f32 %v9378, %v9688
      %v10019 = vadd.f32 %v9379, %v9690
      %v10020 = vadd.f32 %v9380, %v9692
      %v10021 = vadd.f32 %v9381, %v9694
      %v10022 = vadd.f32 %v9382, %v9696
      %v10023 = vadd.f32 %v9383, %v9698
      %v10024 = vadd.f32 %v9384, %v9700
      %v10025 = vadd.f32 %v9385, %v9702
      %v10026 = vadd.f32 %v9386, %v9704
      %v10027 = vadd.f32 %v9387, %v9706
      %v10028 = vadd.f32 %v9388, %v9708
      %v10029 = vadd.f32 %v9389, %v9710
      %v10030 = vadd.f32 %v9390, %v9712
      %v10031 = vadd.f32 %v9391, %v9714
      %v10032 = vadd.f32 %v9392, %v9716
      %v10033 = vadd.f32 %v9393, %v9718
      %v10034 = vadd.f32 %v9394, %v9720
      %v10035 = vadd.f32 %v9395, %v9722
      %v10036 = vadd.f32 %v9396, %v9724
      %v10037 = vadd.f32 %v9397, %v9726
      %v10038 = vadd.f32 %v9398, %v9728
      %v10039 = vadd.f32 %v9399, %v9730
      %v10040 = vadd.f32 %v9400, %v9732
      %v10041 = vadd.f32 %v9401, %v9734
      %v10042 = vadd.f32 %v9402, %v9736
      %v10043 = vadd.f32 %v9403, %v9738
      %v10044 = vadd.f32 %v9404, %v9740
      %v10045 = vadd.f32 %v9405, %v9742
      %v10046 = vadd.f32 %v9406, %v9744
      %v10047 = vadd.f32 %v9407, %v9746
      %v10048 = vadd.f32 %v9408, %v9748
      %v10049 = vadd.f32 %v9409, %v9750
      %v10050 = vadd.f32 %v9410, %v9752
      %v10051 = vadd.f32 %v9411, %v9754
      %v10052 = vadd.f32 %v9412, %v9756
      %v10053 = vadd.f32 %v9413, %v9758
      %v10054 = vadd.f32 %v9414, %v9760
      %v10055 = vadd.f32 %v9415, %v9762
      %v10056 = vadd.f32 %v9416, %v9764
      %v10057 = vadd.f32 %v9417, %v9766
      %v10058 = vadd.f32 %v9418, %v9768
      %v10059 = vadd.f32 %v9419, %v9770
      %v10060 = vadd.f32 %v9420, %v9772
      %v10061 = vadd.f32 %v9421, %v9774
      %v10062 = vadd.f32 %v9422, %v9776
      %v10063 = vadd.f32 %v9423, %v9778
      %v10064 = vadd.f32 %v9424, %v9780
      %v10065 = vadd.f32 %v9425, %v9782
      %v10066 = vadd.f32 %v9426, %v9784
      %v10067 = vadd.f32 %v9427, %v9786
      %v10068 = vadd.f32 %v9428, %v9788
      %v10069 = vadd.f32 %v9429, %v9790
      %v10070 = vadd.f32 %v9430, %v9792
      %v10071 = vadd.f32 %v9431, %v9794
      %v10072 = vadd.f32 %v9432, %v9796
      %v10073 = vadd.f32 %v9433, %v9798
      %v10074 = vadd.f32 %v9434, %v9800
      %v10075 = vadd.f32 %v9435, %v9802
      %v10076 = vadd.f32 %v9436, %v9804
      %v10077 = vadd.f32 %v9437, %v9806
      %v10078 = vadd.f32 %v9438, %v9808
      %v10079 = vadd.f32 %v9439, %v9810
      %v10080 = vadd.f32 %v9440, %v9812
      %v10081 = vadd.f32 %v9441, %v9814
      %v10082 = vadd.f32 %v9442, %v9816
      %v10083 = vadd.f32 %v9443, %v9818
      %v10084 = vadd.f32 %v9444, %v9820
      %v10085 = vadd.f32 %v9445, %v9822
      %v10086 = vadd.f32 %v9446, %v9824
      %v10087 = vadd.f32 %v9447, %v9826
      %v10088 = vadd.f32 %v9448, %v9828
      %v10089 = vadd.f32 %v9449, %v9830
      %v10090 = vadd.f32 %v9450, %v9832
      %v10091 = vadd.f32 %v9451, %v9834
      %v10092 = vadd.f32 %v9452, %v9836
      %10093 = vst.msk [vmem:[%s224] sm:$0xff] %vm737, %v9965
      %10094 = vst.msk [vmem:[%s224 + $0x8] sm:$0xff] %vm737, %v9966
      %10095 = vst.msk [vmem:[%s224 + $0x10] sm:$0xff] %vm737, %v9967
      %10096 = vst.msk [vmem:[%s224 + $0x18] sm:$0xff] %vm737, %v9968
      %10097 = vst.msk [vmem:[%s224 + $0x20] sm:$0xff] %vm737, %v9969
      %10098 = vst.msk [vmem:[%s224 + $0x28] sm:$0xff] %vm737, %v9970
      %10099 = vst.msk [vmem:[%s224 + $0x30] sm:$0xff] %vm737, %v9971
      %10100 = vst.msk [vmem:[%s224 + $0x38] sm:$0xff] %vm737, %v9972
      %10101 = vst.msk [vmem:[%s224 + $0x40] sm:$0xff] %vm737, %v9973
      %10102 = vst.msk [vmem:[%s224 + $0x48] sm:$0xff] %vm737, %v9974
      %10103 = vst.msk [vmem:[%s224 + $0x50] sm:$0xff] %vm737, %v9975
      %10104 = vst.msk [vmem:[%s224 + $0x58] sm:$0xff] %vm737, %v9976
      %10105 = vst.msk [vmem:[%s224 + $0x60] sm:$0xff] %vm737, %v9977
      %10106 = vst.msk [vmem:[%s224 + $0x68] sm:$0xff] %vm737, %v9978
      %10107 = vst.msk [vmem:[%s224 + $0x70] sm:$0xff] %vm737, %v9979
      %10108 = vst.msk [vmem:[%s224 + $0x78] sm:$0xff] %vm737, %v9980
      %10109 = vst.msk [vmem:[%s224 + $0x80] sm:$0xff] %vm737, %v9981
      %10110 = vst.msk [vmem:[%s224 + $0x88] sm:$0xff] %vm737, %v9982
      %10111 = vst.msk [vmem:[%s224 + $0x90] sm:$0xff] %vm737, %v9983
      %10112 = vst.msk [vmem:[%s224 + $0x98] sm:$0xff] %vm737, %v9984
      %10113 = vst.msk [vmem:[%s224 + $0xa0] sm:$0xff] %vm737, %v9985
      %10114 = vst.msk [vmem:[%s224 + $0xa8] sm:$0xff] %vm737, %v9986
      %10115 = vst.msk [vmem:[%s224 + $0xb0] sm:$0xff] %vm737, %v9987
      %10116 = vst.msk [vmem:[%s224 + $0xb8] sm:$0xff] %vm737, %v9988
      %10117 = vst.msk [vmem:[%s224 + $0xc0] sm:$0xff] %vm737, %v9989
      %10118 = vst.msk [vmem:[%s224 + $0xc8] sm:$0xff] %vm737, %v9990
      %10119 = vst.msk [vmem:[%s224 + $0xd0] sm:$0xff] %vm737, %v9991
      %10120 = vst.msk [vmem:[%s224 + $0xd8] sm:$0xff] %vm737, %v9992
      %10121 = vst.msk [vmem:[%s224 + $0xe0] sm:$0xff] %vm737, %v9993
      %10122 = vst.msk [vmem:[%s224 + $0xe8] sm:$0xff] %vm737, %v9994
      %10123 = vst.msk [vmem:[%s224 + $0xf0] sm:$0xff] %vm737, %v9995
      %10124 = vst.msk [vmem:[%s224 + $0xf8] sm:$0xff] %vm737, %v9996
      %10125 = vst.msk [vmem:[%s224 + $0x100] sm:$0xff] %vm737, %v9997
      %10126 = vst.msk [vmem:[%s224 + $0x108] sm:$0xff] %vm737, %v9998
      %10127 = vst.msk [vmem:[%s224 + $0x110] sm:$0xff] %vm737, %v9999
      %10128 = vst.msk [vmem:[%s224 + $0x118] sm:$0xff] %vm737, %v10000
      %10129 = vst.msk [vmem:[%s224 + $0x120] sm:$0xff] %vm737, %v10001
      %10130 = vst.msk [vmem:[%s224 + $0x128] sm:$0xff] %vm737, %v10002
      %10131 = vst.msk [vmem:[%s224 + $0x130] sm:$0xff] %vm737, %v10003
      %10132 = vst.msk [vmem:[%s224 + $0x138] sm:$0xff] %vm737, %v10004
      %10133 = vst.msk [vmem:[%s224 + $0x140] sm:$0xff] %vm737, %v10005
      %10134 = vst.msk [vmem:[%s224 + $0x148] sm:$0xff] %vm737, %v10006
      %10135 = vst.msk [vmem:[%s224 + $0x150] sm:$0xff] %vm737, %v10007
      %10136 = vst.msk [vmem:[%s224 + $0x158] sm:$0xff] %vm737, %v10008
      %10137 = vst.msk [vmem:[%s224 + $0x160] sm:$0xff] %vm737, %v10009
      %10138 = vst.msk [vmem:[%s224 + $0x168] sm:$0xff] %vm737, %v10010
      %10139 = vst.msk [vmem:[%s224 + $0x170] sm:$0xff] %vm737, %v10011
      %10140 = vst.msk [vmem:[%s224 + $0x178] sm:$0xff] %vm737, %v10012
      %10141 = vst.msk [vmem:[%s224 + $0x180] sm:$0xff] %vm737, %v10013
      %10142 = vst.msk [vmem:[%s224 + $0x188] sm:$0xff] %vm737, %v10014
      %10143 = vst.msk [vmem:[%s224 + $0x190] sm:$0xff] %vm737, %v10015
      %10144 = vst.msk [vmem:[%s224 + $0x198] sm:$0xff] %vm737, %v10016
      %10145 = vst.msk [vmem:[%s224 + $0x1a0] sm:$0xff] %vm737, %v10017
      %10146 = vst.msk [vmem:[%s224 + $0x1a8] sm:$0xff] %vm737, %v10018
      %10147 = vst.msk [vmem:[%s224 + $0x1b0] sm:$0xff] %vm737, %v10019
      %10148 = vst.msk [vmem:[%s224 + $0x1b8] sm:$0xff] %vm737, %v10020
      %10149 = vst.msk [vmem:[%s224 + $0x1c0] sm:$0xff] %vm737, %v10021
      %10150 = vst.msk [vmem:[%s224 + $0x1c8] sm:$0xff] %vm737, %v10022
      %10151 = vst.msk [vmem:[%s224 + $0x1d0] sm:$0xff] %vm737, %v10023
      %10152 = vst.msk [vmem:[%s224 + $0x1d8] sm:$0xff] %vm737, %v10024
      %10153 = vst.msk [vmem:[%s224 + $0x1e0] sm:$0xff] %vm737, %v10025
      %10154 = vst.msk [vmem:[%s224 + $0x1e8] sm:$0xff] %vm737, %v10026
      %10155 = vst.msk [vmem:[%s224 + $0x1f0] sm:$0xff] %vm737, %v10027
      %10156 = vst.msk [vmem:[%s224 + $0x1f8] sm:$0xff] %vm737, %v10028
      %10157 = vst.msk [vmem:[%s224 + $0x200] sm:$0xff] %vm737, %v10029
      %10158 = vst.msk [vmem:[%s224 + $0x208] sm:$0xff] %vm737, %v10030
      %10159 = vst.msk [vmem:[%s224 + $0x210] sm:$0xff] %vm737, %v10031
      %10160 = vst.msk [vmem:[%s224 + $0x218] sm:$0xff] %vm737, %v10032
      %10161 = vst.msk [vmem:[%s224 + $0x220] sm:$0xff] %vm737, %v10033
      %10162 = vst.msk [vmem:[%s224 + $0x228] sm:$0xff] %vm737, %v10034
      %10163 = vst.msk [vmem:[%s224 + $0x230] sm:$0xff] %vm737, %v10035
      %10164 = vst.msk [vmem:[%s224 + $0x238] sm:$0xff] %vm737, %v10036
      %10165 = vst.msk [vmem:[%s224 + $0x240] sm:$0xff] %vm737, %v10037
      %10166 = vst.msk [vmem:[%s224 + $0x248] sm:$0xff] %vm737, %v10038
      %10167 = vst.msk [vmem:[%s224 + $0x250] sm:$0xff] %vm737, %v10039
      %10168 = vst.msk [vmem:[%s224 + $0x258] sm:$0xff] %vm737, %v10040
      %10169 = vst.msk [vmem:[%s224 + $0x260] sm:$0xff] %vm737, %v10041
      %10170 = vst.msk [vmem:[%s224 + $0x268] sm:$0xff] %vm737, %v10042
      %10171 = vst.msk [vmem:[%s224 + $0x270] sm:$0xff] %vm737, %v10043
      %10172 = vst.msk [vmem:[%s224 + $0x278] sm:$0xff] %vm737, %v10044
      %10173 = vst.msk [vmem:[%s224 + $0x280] sm:$0xff] %vm737, %v10045
      %10174 = vst.msk [vmem:[%s224 + $0x288] sm:$0xff] %vm737, %v10046
      %10175 = vst.msk [vmem:[%s224 + $0x290] sm:$0xff] %vm737, %v10047
      %10176 = vst.msk [vmem:[%s224 + $0x298] sm:$0xff] %vm737, %v10048
      %10177 = vst.msk [vmem:[%s224 + $0x2a0] sm:$0xff] %vm737, %v10049
      %10178 = vst.msk [vmem:[%s224 + $0x2a8] sm:$0xff] %vm737, %v10050
      %10179 = vst.msk [vmem:[%s224 + $0x2b0] sm:$0xff] %vm737, %v10051
      %10180 = vst.msk [vmem:[%s224 + $0x2b8] sm:$0xff] %vm737, %v10052
      %10181 = vst.msk [vmem:[%s224 + $0x2c0] sm:$0xff] %vm737, %v10053
      %10182 = vst.msk [vmem:[%s224 + $0x2c8] sm:$0xff] %vm737, %v10054
      %10183 = vst.msk [vmem:[%s224 + $0x2d0] sm:$0xff] %vm737, %v10055
      %10184 = vst.msk [vmem:[%s224 + $0x2d8] sm:$0xff] %vm737, %v10056
      %10185 = vst.msk [vmem:[%s224 + $0x2e0] sm:$0xff] %vm737, %v10057
      %10186 = vst.msk [vmem:[%s224 + $0x2e8] sm:$0xff] %vm737, %v10058
      %10187 = vst.msk [vmem:[%s224 + $0x2f0] sm:$0xff] %vm737, %v10059
      %10188 = vst.msk [vmem:[%s224 + $0x2f8] sm:$0xff] %vm737, %v10060
      %10189 = vst.msk [vmem:[%s224 + $0x300] sm:$0xff] %vm737, %v10061
      %10190 = vst.msk [vmem:[%s224 + $0x308] sm:$0xff] %vm737, %v10062
      %10191 = vst.msk [vmem:[%s224 + $0x310] sm:$0xff] %vm737, %v10063
      %10192 = vst.msk [vmem:[%s224 + $0x318] sm:$0xff] %vm737, %v10064
      %10193 = vst.msk [vmem:[%s224 + $0x320] sm:$0xff] %vm737, %v10065
      %10194 = vst.msk [vmem:[%s224 + $0x328] sm:$0xff] %vm737, %v10066
      %10195 = vst.msk [vmem:[%s224 + $0x330] sm:$0xff] %vm737, %v10067
      %10196 = vst.msk [vmem:[%s224 + $0x338] sm:$0xff] %vm737, %v10068
      %10197 = vst.msk [vmem:[%s224 + $0x340] sm:$0xff] %vm737, %v10069
      %10198 = vst.msk [vmem:[%s224 + $0x348] sm:$0xff] %vm737, %v10070
      %10199 = vst.msk [vmem:[%s224 + $0x350] sm:$0xff] %vm737, %v10071
      %10200 = vst.msk [vmem:[%s224 + $0x358] sm:$0xff] %vm737, %v10072
      %10201 = vst.msk [vmem:[%s224 + $0x360] sm:$0xff] %vm737, %v10073
      %10202 = vst.msk [vmem:[%s224 + $0x368] sm:$0xff] %vm737, %v10074
      %10203 = vst.msk [vmem:[%s224 + $0x370] sm:$0xff] %vm737, %v10075
      %10204 = vst.msk [vmem:[%s224 + $0x378] sm:$0xff] %vm737, %v10076
      %10205 = vst.msk [vmem:[%s224 + $0x380] sm:$0xff] %vm737, %v10077
      %10206 = vst.msk [vmem:[%s224 + $0x388] sm:$0xff] %vm737, %v10078
      %10207 = vst.msk [vmem:[%s224 + $0x390] sm:$0xff] %vm737, %v10079
      %10208 = vst.msk [vmem:[%s224 + $0x398] sm:$0xff] %vm737, %v10080
      %10209 = vst.msk [vmem:[%s224 + $0x3a0] sm:$0xff] %vm737, %v10081
      %10210 = vst.msk [vmem:[%s224 + $0x3a8] sm:$0xff] %vm737, %v10082
      %10211 = vst.msk [vmem:[%s224 + $0x3b0] sm:$0xff] %vm737, %v10083
      %10212 = vst.msk [vmem:[%s224 + $0x3b8] sm:$0xff] %vm737, %v10084
      %10213 = vst.msk [vmem:[%s224 + $0x3c0] sm:$0xff] %vm737, %v10085
      %10214 = vst.msk [vmem:[%s224 + $0x3c8] sm:$0xff] %vm737, %v10086
      %10215 = vst.msk [vmem:[%s224 + $0x3d0] sm:$0xff] %vm737, %v10087
      %10216 = vst.msk [vmem:[%s224 + $0x3d8] sm:$0xff] %vm737, %v10088
      %10217 = vst.msk [vmem:[%s224 + $0x3e0] sm:$0xff] %vm737, %v10089
      %10218 = vst.msk [vmem:[%s224 + $0x3e8] sm:$0xff] %vm737, %v10090
      %10219 = vst.msk [vmem:[%s224 + $0x3f0] sm:$0xff] %vm737, %v10091
      %10220 = vst.msk [vmem:[%s224 + $0x3f8] sm:$0xff] %vm737, %v10092
      %p10221 = scmp.lt.s32.totalorder %s16, 1
      %s10222 = scalar_select %p10221, %s16, 1
      %s10223 = smul.addr %s10222, 128
      %s10224 = smul.addr %s10223, 8
      %s10225 = scalar_lea.vmem %s5, %s10224
      // Predicated region
      $region41: #{residual_block_upsample.3} parent=39 // pred_check
        %p10226 = pneg %p144
      $region42: #{residual_block_upsample.3} parent=39 // pred_check_branch
        %10228 = sbr.rel (%p10226) target = $region44
      $region43: #{residual_block_upsample.3} parent=39 // pred_region
        _
      $region44: #{residual_block_upsample.3} parent=39 // pred_fallthru
        _
    $region40: #{residual_block_upsample.3} parent=5 // pred_fallthru
      _
    %p10229 = scmp.le.s32.totalorder 2, %s11
    // Predicated region
    $region45: #{residual_block_upsample.3} parent=5 // pred_check
      %p10230 = pneg %p10229
    $region46: #{residual_block_upsample.3} parent=5 // pred_check_branch
      %10232 = sbr.rel (%p10230) target = $region48
    $region47: #{residual_block_upsample.3} parent=5 // pred_region
      %s10233 = ssub.s32 %s11, 2
      // Predicated region
      $region49: #{residual_block_upsample.3} parent=47 // pred_check
        %p10234 = pneg %p150
      $region50: #{residual_block_upsample.3} parent=47 // pred_check_branch
        %10236 = sbr.rel (%p10234) target = $region52
      $region51: #{residual_block_upsample.3} parent=47 // pred_region
        %p10237 = scmp.lt.s32.totalorder %s17, 1
        %s10238 = scalar_select %p10237, %s17, 1
        %s10239 = smul.addr %s10238, 128
        %s10240 = smul.addr %s10239, 8
        %s10241 = scalar_lea.vmem %s5, %s10240
      $region52: #{residual_block_upsample.3} parent=47 // pred_fallthru
        _
    $region48: #{residual_block_upsample.3} parent=5 // pred_fallthru
      _
  $region6: #{residual_block_upsample.3} parent=0 // loop_footer
    %s15 = sadd.s32 1, %s11
  $region7: #{residual_block_upsample.3} parent=0 // loop_footer_branch
    %10 = sbr.rel target = $region3
  $region8: #{residual_block_upsample.3} parent=0 // loop_exit
    _

</llo_original>
